<compile_context>
chip_gen: v7x
topology: tpu7x:2x2x1
jax: 0.10.0
libtpu: 0.0.40
codegen_flags: <defaults>
</compile_context>

<pallas_src>
import jax
import jax.numpy as jnp
from jax import lax
from jax.experimental import pallas as pl
from jax.experimental.pallas import tpu as pltpu

D_IN = 512
D_HID = 2048
EPS = 1e-5
_INV_SQRT2 = 0.7071067811865476


def fused_kernel(x1_ref, x2_ref, gamma_ref, beta_ref,
                 w1_ref, b1_ref, w2_ref, b2_ref, o_ref, xn_ref):
    p = pl.program_id(0)          # partial / TensorCore index  ("parallel")
    k = pl.program_id(1)          # hidden-dim tile index       ("arbitrary")

    # ---- first k-step of this partial: residual add + LayerNorm in f32,
    #      cache normalized activations in bf16, seed the resident output
    #      block (bias only on partial 0 so the cross-partial sum adds it once).
    @pl.when(k == 0)
    def _():
        x = x1_ref[...].astype(jnp.float32) + x2_ref[...].astype(jnp.float32)
        mean = jnp.mean(x, axis=-1, keepdims=True)
        centered = x - mean
        var = jnp.mean(centered * centered, axis=-1, keepdims=True)
        inv = lax.rsqrt(var + EPS)
        xn = centered * inv * gamma_ref[...] + beta_ref[...]
        xn_ref[...] = xn.astype(xn_ref.dtype)                 # bf16, MXU-native
        sel = (p == 0).astype(jnp.float32)
        o_ref[...] = jnp.broadcast_to(b2_ref[...] * sel, o_ref.shape)

    # ---- every step: one hidden-dim slice of Linear1 + exact GELU + Linear2
    #      partial, accumulated directly into the resident f32 output block.
    h = jnp.dot(xn_ref[...], w1_ref[...],
                preferred_element_type=jnp.float32)           # (rows, TK) f32
    h = h + b1_ref[...]
    # exact erf-based GELU (approximate='none')
    h = 0.5 * h * (1.0 + lax.erf(h * _INV_SQRT2))
    # Dropout(p=0.0) is identity -> elided
    o_ref[...] += jnp.dot(h.astype(w2_ref.dtype), w2_ref[...],
                          preferred_element_type=jnp.float32)


def _select_config():
    """Pick (hidden tile TK, #output partials) from the TPU generation."""
    tk, partials = 1024, 1                      # default: v6e-style single TC
    try:
        kind = jax.devices()[0].device_kind.lower()
    except Exception:
        return tk, partials
    if "v7" in kind:
        # 2 TensorCores: split hidden dim across cores; TK=512 keeps 2
        # pipelined weight tiles per core.
        return 512, 2
    if "v5" in kind:
        # v5e: compute/DMA per step are comparable; 4 smaller steps overlap better.
        return 512, 1
    return tk, partials


def fused_forward(x1, x2, gamma, beta, w1, b1, w2, b2, *, tk=None, num_partials=None):
    """x1, x2: [N, H, W, 512]. w1: (512, 2048), w2: (2048, 512). Returns f32 [N, H, W, 512]."""
    orig_shape = x1.shape
    rows = 1
    for s in orig_shape[:-1]:
        rows *= s

    cfg_tk, cfg_p = _select_config()
    tk = cfg_tk if tk is None else tk
    P = cfg_p if num_partials is None else num_partials
    assert D_HID % tk == 0
    nk = D_HID // tk
    assert nk % P == 0
    nkp = nk // P

    # bf16 activations + weights halve the dominant HBM->VMEM DMA.  LayerNorm
    # and both matmul accumulations stay in f32 inside the kernel.
    x1f = x1.reshape(rows, D_IN).astype(jnp.bfloat16)
    x2f = x2.reshape(rows, D_IN).astype(jnp.bfloat16)
    w1b = w1.astype(jnp.bfloat16)
    w2b = w2.astype(jnp.bfloat16)
    gamma2 = gamma.reshape(1, D_IN).astype(jnp.float32)
    beta2 = beta.reshape(1, D_IN).astype(jnp.float32)
    b1_2 = b1.reshape(1, D_HID).astype(jnp.float32)
    b2_2 = b2.reshape(1, D_IN).astype(jnp.float32)

    cost = pl.CostEstimate(
        flops=2 * rows * D_IN * D_HID * 2,                    # two matmuls
        transcendentals=rows * D_HID,                         # erf
        bytes_accessed=(2 * D_IN * D_HID) * 2                 # bf16 w1 + w2
                       + 2 * rows * D_IN * 2                  # bf16 x1, x2
                       + P * rows * D_IN * 4                  # f32 partial outputs
                       + (2 * D_IN + D_HID + D_IN) * 4,       # ln params + biases
    )

    grid_spec = pltpu.PrefetchScalarGridSpec(
        num_scalar_prefetch=0,
        grid=(P, nkp),
        in_specs=[
            pl.BlockSpec((rows, D_IN), lambda p, k: (0, 0)),          # x1 (resident)
            pl.BlockSpec((rows, D_IN), lambda p, k: (0, 0)),          # x2 (resident)
            pl.BlockSpec((1, D_IN), lambda p, k: (0, 0)),             # gamma
            pl.BlockSpec((1, D_IN), lambda p, k: (0, 0)),             # beta
            pl.BlockSpec((D_IN, tk), lambda p, k: (0, p * nkp + k)),  # w1 slice (streamed)
            pl.BlockSpec((1, tk), lambda p, k: (0, p * nkp + k)),     # b1 slice
            pl.BlockSpec((tk, D_IN), lambda p, k: (p * nkp + k, 0)),  # w2 slice (streamed)
            pl.BlockSpec((1, D_IN), lambda p, k: (0, 0)),             # b2
        ],
        out_specs=pl.BlockSpec((None, rows, D_IN), lambda p, k: (p, 0, 0)),
        scratch_shapes=[
            pltpu.VMEM((rows, D_IN), jnp.bfloat16),           # cached LN output
        ],
    )

    partials = pl.pallas_call(
        fused_kernel,
        out_shape=jax.ShapeDtypeStruct((P, rows, D_IN), jnp.float32),
        grid_spec=grid_spec,
        compiler_params=pltpu.CompilerParams(
            dimension_semantics=("parallel", "arbitrary"),
            vmem_limit_bytes=16 << 20,
        ),
        cost_estimate=cost,
    )(x1f, x2f, gamma2, beta2, w1b, b1_2, w2b, b2_2)

    out = partials[0] if P == 1 else jnp.sum(partials, axis=0)
    return out.reshape(orig_shape)


def init_params(key):
    """Deterministic parameter init matching nn.Module shapes.

    PyTorch Linear stores weight as (out, in); we store the transposed
    (in, out) layout so the kernel can do x @ W directly.
    """
    k1, k2, k3, k4 = jax.random.split(key, 4)
    gamma = jnp.ones((D_IN,), jnp.float32)
    beta = jnp.zeros((D_IN,), jnp.float32)
    w1 = jax.random.normal(k1, (D_IN, D_HID), jnp.float32) * 0.02
    b1 = jax.random.normal(k2, (D_HID,), jnp.float32) * 0.02
    w2 = jax.random.normal(k3, (D_HID, D_IN), jnp.float32) * 0.02
    b2 = jax.random.normal(k4, (D_IN,), jnp.float32) * 0.02
    return gamma, beta, w1, b1, w2, b2


def reference_forward(x1, x2, gamma, beta, w1, b1, w2, b2):
    """Pure-JAX f32 reference for a sanity check."""
    x = x1 + x2
    mean = jnp.mean(x, axis=-1, keepdims=True)
    var = jnp.mean((x - mean) ** 2, axis=-1, keepdims=True)
    xn = (x - mean) / jnp.sqrt(var + EPS) * gamma + beta
    h = xn @ w1 + b1
    h = 0.5 * h * (1.0 + lax.erf(h / jnp.sqrt(2.0)))
    return h @ w2 + b2


if __name__ == "__main__":
    key = jax.random.PRNGKey(0)
    kx1, kx2, kp = jax.random.split(key, 3)

    # Shapes implied by the module: [1, 14, 14, 512]
    x410 = jax.random.normal(kx1, (1, 14, 14, D_IN), jnp.float32)
    x424 = jax.random.normal(kx2, (1, 14, 14, D_IN), jnp.float32)
    gamma, beta, w1, b1, w2, b2 = init_params(kp)

    # Matmul weights stored/passed in bf16 so the wrapper cast is free and the
    # kernel's weight DMA (the binding resource) is halved on every TPU gen.
    w1_bf = w1.astype(jnp.bfloat16)
    w2_bf = w2.astype(jnp.bfloat16)

    out = fused_forward(x410, x424, gamma, beta, w1_bf, b1, w2_bf, b2)
    out = jax.block_until_ready(out)
    assert out.shape == (1, 14, 14, D_IN)

    # Loose check vs full-precision reference: bf16 inputs + bf16 weights +
    # bf16 MXU operands (with f32 accumulation) give ~1-2e-2 abs error on
    # outputs of O(0.3) magnitude.
    ref = reference_forward(x410, x424, gamma, beta, w1, b1, w2, b2)
    assert jnp.allclose(out, ref, atol=5e-2, rtol=5e-2), "mismatch vs reference"

    # Tight check against a reference using the same quantized inputs/weights,
    # to validate the kernel math itself.
    x410_q = x410.astype(jnp.bfloat16).astype(jnp.float32)
    x424_q = x424.astype(jnp.bfloat16).astype(jnp.float32)
    ref_q = reference_forward(x410_q, x424_q, gamma, beta,
                              w1_bf.astype(jnp.float32), b1,
                              w2_bf.astype(jnp.float32), b2)
    assert jnp.allclose(out, ref_q, atol=2e-2, rtol=2e-2), "mismatch vs bf16-quantized reference"

    print("KERNEL_OK")
</pallas_src>

<mosaic_0001>
module attributes {stable_mosaic.version = 11 : i64} {
  func.func @fused_kernel(%arg0: i32, %arg1: i32, %arg2: memref<196x512xbf16, #tpu.memory_space<vmem>>, %arg3: memref<196x512xbf16, #tpu.memory_space<vmem>>, %arg4: memref<1x512xf32, #tpu.memory_space<vmem>>, %arg5: memref<1x512xf32, #tpu.memory_space<vmem>>, %arg6: memref<512x1024xbf16, #tpu.memory_space<vmem>>, %arg7: memref<1x1024xf32, #tpu.memory_space<vmem>>, %arg8: memref<1024x512xbf16, #tpu.memory_space<vmem>>, %arg9: memref<1x512xf32, #tpu.memory_space<vmem>>, %arg10: memref<1x196x512xf32, #tpu.memory_space<vmem>>, %arg11: memref<196x512xbf16, #tpu.memory_space<vmem>>) attributes {dimension_semantics = [#tpu.dimension_semantics<parallel>, #tpu.dimension_semantics<arbitrary>], iteration_bounds = array<i64: 1, 2>, scalar_prefetch = 0 : i64, scratch_operands = 1 : i64, tpu.core_type = #tpu.core_type<tc>, window_params = [{pipeline_mode = #tpu.pipeline_mode<synchronous>, transform_indices = @transform_0, window_bounds = array<i64: 196, 512>}, {pipeline_mode = #tpu.pipeline_mode<synchronous>, transform_indices = @transform_1, window_bounds = array<i64: 196, 512>}, {pipeline_mode = #tpu.pipeline_mode<synchronous>, transform_indices = @transform_2, window_bounds = array<i64: 1, 512>}, {pipeline_mode = #tpu.pipeline_mode<synchronous>, transform_indices = @transform_3, window_bounds = array<i64: 1, 512>}, {transform_indices = @transform_4, window_bounds = array<i64: 512, 1024>}, {transform_indices = @transform_5, window_bounds = array<i64: 1, 1024>}, {transform_indices = @transform_6, window_bounds = array<i64: 1024, 512>}, {pipeline_mode = #tpu.pipeline_mode<synchronous>, transform_indices = @transform_7, window_bounds = array<i64: 1, 512>}, {transform_indices = @transform_8, window_bounds = array<i64: 1, 196, 512>}]} {
    %c0_i32 = arith.constant 0 : i32
    %0 = arith.cmpi eq, %arg1, %c0_i32 : i32
    %1 = arith.extui %0 : i1 to i32
    %c0_i32_0 = arith.constant 0 : i32
    %2 = arith.cmpi ne, %1, %c0_i32_0 : i32
    scf.if %2 {
      %c0_18 = arith.constant 0 : index
      %c0_19 = arith.constant 0 : index
      %26 = vector.load %arg2[%c0_18, %c0_19] : memref<196x512xbf16, #tpu.memory_space<vmem>>, vector<196x512xbf16>
      %27 = arith.extf %26 : vector<196x512xbf16> to vector<196x512xf32>
      %c0_20 = arith.constant 0 : index
      %c0_21 = arith.constant 0 : index
      %28 = vector.load %arg3[%c0_20, %c0_21] : memref<196x512xbf16, #tpu.memory_space<vmem>>, vector<196x512xbf16>
      %29 = arith.extf %28 : vector<196x512xbf16> to vector<196x512xf32>
      %30 = arith.addf %27, %29 : vector<196x512xf32>
      %cst_22 = arith.constant dense<0.000000e+00> : vector<196xf32>
      %31 = vector.multi_reduction <add>, %30, %cst_22 [1] : vector<196x512xf32> to vector<196xf32>
      %32 = vector.shape_cast %31 : vector<196xf32> to vector<196x1xf32>
      %cst_23 = arith.constant 5.120000e+02 : f32
      %33 = vector.broadcast %cst_23 : f32 to vector<196x1xf32>
      %34 = arith.divf %32, %33 : vector<196x1xf32>
      %35 = vector.broadcast %34 : vector<196x1xf32> to vector<196x512xf32>
      %36 = arith.subf %30, %35 : vector<196x512xf32>
      %37 = arith.mulf %36, %36 : vector<196x512xf32>
      %cst_24 = arith.constant dense<0.000000e+00> : vector<196xf32>
      %38 = vector.multi_reduction <add>, %37, %cst_24 [1] : vector<196x512xf32> to vector<196xf32>
      %39 = vector.shape_cast %38 : vector<196xf32> to vector<196x1xf32>
      %cst_25 = arith.constant 5.120000e+02 : f32
      %40 = vector.broadcast %cst_25 : f32 to vector<196x1xf32>
      %41 = arith.divf %39, %40 : vector<196x1xf32>
      %cst_26 = arith.constant 9.99999974E-6 : f32
      %42 = vector.broadcast %cst_26 : f32 to vector<196x1xf32>
      %43 = arith.addf %41, %42 : vector<196x1xf32>
      %44 = math.rsqrt %43 : vector<196x1xf32>
      %45 = vector.broadcast %44 : vector<196x1xf32> to vector<196x512xf32>
      %46 = arith.mulf %36, %45 : vector<196x512xf32>
      %c0_27 = arith.constant 0 : index
      %c0_28 = arith.constant 0 : index
      %47 = vector.load %arg4[%c0_27, %c0_28] : memref<1x512xf32, #tpu.memory_space<vmem>>, vector<1x512xf32>
      %48 = vector.broadcast %47 : vector<1x512xf32> to vector<196x512xf32>
      %49 = arith.mulf %46, %48 : vector<196x512xf32>
      %c0_29 = arith.constant 0 : index
      %c0_30 = arith.constant 0 : index
      %50 = vector.load %arg5[%c0_29, %c0_30] : memref<1x512xf32, #tpu.memory_space<vmem>>, vector<1x512xf32>
      %51 = vector.broadcast %50 : vector<1x512xf32> to vector<196x512xf32>
      %52 = arith.addf %49, %51 : vector<196x512xf32>
      %53 = arith.truncf %52 : vector<196x512xf32> to vector<196x512xbf16>
      %c0_31 = arith.constant 0 : index
      %c0_32 = arith.constant 0 : index
      %54 = vector.load %arg11[%c0_31, %c0_32] : memref<196x512xbf16, #tpu.memory_space<vmem>>, vector<196x512xbf16>
      tpu.vector_store %arg11[%c0_31, %c0_32], %53 {strides = array<i32>} : memref<196x512xbf16, #tpu.memory_space<vmem>>, vector<196x512xbf16>,
      %c0_i32_33 = arith.constant 0 : i32
      %55 = arith.cmpi eq, %arg0, %c0_i32_33 : i32
      %56 = arith.extui %55 : i1 to i32
      %57 = arith.sitofp %56 : i32 to f32
      %c0_34 = arith.constant 0 : index
      %c0_35 = arith.constant 0 : index
      %58 = vector.load %arg9[%c0_34, %c0_35] : memref<1x512xf32, #tpu.memory_space<vmem>>, vector<1x512xf32>
      %59 = vector.broadcast %57 : f32 to vector<1x512xf32>
      %60 = arith.mulf %58, %59 : vector<1x512xf32>
      %61 = vector.shape_cast %60 : vector<1x512xf32> to vector<1x512xf32>
      %62 = vector.broadcast %61 : vector<1x512xf32> to vector<196x512xf32>
      %c0_36 = arith.constant 0 : index
      %c0_37 = arith.constant 0 : index
      %c0_38 = arith.constant 0 : index
      %63 = vector.load %arg10[%c0_36, %c0_37, %c0_38] : memref<1x196x512xf32, #tpu.memory_space<vmem>>, vector<1x196x512xf32>
      %64 = vector.shape_cast %63 : vector<1x196x512xf32> to vector<196x512xf32>
      %65 = vector.shape_cast %62 : vector<196x512xf32> to vector<1x196x512xf32>
      tpu.vector_store %arg10[%c0_36, %c0_37, %c0_38], %65 {strides = array<i32>} : memref<1x196x512xf32, #tpu.memory_space<vmem>>, vector<1x196x512xf32>,
    } else {
    }
    %c0 = arith.constant 0 : index
    %c0_1 = arith.constant 0 : index
    %3 = vector.load %arg11[%c0, %c0_1] : memref<196x512xbf16, #tpu.memory_space<vmem>>, vector<196x512xbf16>
    %c0_2 = arith.constant 0 : index
    %c0_3 = arith.constant 0 : index
    %4 = vector.load %arg6[%c0_2, %c0_3] : memref<512x1024xbf16, #tpu.memory_space<vmem>>, vector<512x1024xbf16>
    %cst = arith.constant dense<0.000000e+00> : vector<196x1024xf32>
    %5 = tpu.matmul %3, %4, %cst {dimension_numbers = #tpu.dot_dimension_numbers<[1], [0], [0], [1], [0, 0, 1, 1], [], []>} : vector<196x512xbf16>, vector<512x1024xbf16>, vector<196x1024xf32> -> vector<196x1024xf32>
    %c0_4 = arith.constant 0 : index
    %c0_5 = arith.constant 0 : index
    %6 = vector.load %arg7[%c0_4, %c0_5] : memref<1x1024xf32, #tpu.memory_space<vmem>>, vector<1x1024xf32>
    %7 = vector.broadcast %6 : vector<1x1024xf32> to vector<196x1024xf32>
    %8 = arith.addf %5, %7 : vector<196x1024xf32>
    %cst_6 = arith.constant 5.000000e-01 : f32
    %9 = vector.broadcast %cst_6 : f32 to vector<196x1024xf32>
    %10 = arith.mulf %9, %8 : vector<196x1024xf32>
    %cst_7 = arith.constant 0.707106769 : f32
    %11 = vector.broadcast %cst_7 : f32 to vector<196x1024xf32>
    %12 = arith.mulf %8, %11 : vector<196x1024xf32>
    %13 = math.erf %12 : vector<196x1024xf32>
    %cst_8 = arith.constant 1.000000e+00 : f32
    %14 = vector.broadcast %cst_8 : f32 to vector<196x1024xf32>
    %15 = arith.addf %14, %13 : vector<196x1024xf32>
    %16 = arith.mulf %10, %15 : vector<196x1024xf32>
    %c0_9 = arith.constant 0 : index
    %c0_10 = arith.constant 0 : index
    %c0_11 = arith.constant 0 : index
    %17 = vector.load %arg10[%c0_9, %c0_10, %c0_11] : memref<1x196x512xf32, #tpu.memory_space<vmem>>, vector<1x196x512xf32>
    %18 = vector.shape_cast %17 : vector<1x196x512xf32> to vector<196x512xf32>
    %19 = arith.truncf %16 : vector<196x1024xf32> to vector<196x1024xbf16>
    %c0_12 = arith.constant 0 : index
    %c0_13 = arith.constant 0 : index
    %20 = vector.load %arg8[%c0_12, %c0_13] : memref<1024x512xbf16, #tpu.memory_space<vmem>>, vector<1024x512xbf16>
    %cst_14 = arith.constant dense<0.000000e+00> : vector<196x512xf32>
    %21 = tpu.matmul %19, %20, %cst_14 {dimension_numbers = #tpu.dot_dimension_numbers<[1], [0], [0], [1], [0, 0, 1, 1], [], []>} : vector<196x1024xbf16>, vector<1024x512xbf16>, vector<196x512xf32> -> vector<196x512xf32>
    %22 = arith.addf %18, %21 : vector<196x512xf32>
    %c0_15 = arith.constant 0 : index
    %c0_16 = arith.constant 0 : index
    %c0_17 = arith.constant 0 : index
    %23 = vector.load %arg10[%c0_15, %c0_16, %c0_17] : memref<1x196x512xf32, #tpu.memory_space<vmem>>, vector<1x196x512xf32>
    %24 = vector.shape_cast %23 : vector<1x196x512xf32> to vector<196x512xf32>
    %25 = vector.shape_cast %22 : vector<196x512xf32> to vector<1x196x512xf32>
    tpu.vector_store %arg10[%c0_15, %c0_16, %c0_17], %25 {strides = array<i32>} : memref<1x196x512xf32, #tpu.memory_space<vmem>>, vector<1x196x512xf32>,
    return
  }
  func.func @transform_0(%arg0: i32, %arg1: i32) -> (i32, i32) {
    %c0_i32 = arith.constant 0 : i32
    %c0_i32_0 = arith.constant 0 : i32
    %c0_i32_1 = arith.constant 0 : i32
    return %c0_i32, %c0_i32_0 : i32, i32
  }
  func.func @transform_1(%arg0: i32, %arg1: i32) -> (i32, i32) {
    %c0_i32 = arith.constant 0 : i32
    %c0_i32_0 = arith.constant 0 : i32
    %c0_i32_1 = arith.constant 0 : i32
    return %c0_i32, %c0_i32_0 : i32, i32
  }
  func.func @transform_2(%arg0: i32, %arg1: i32) -> (i32, i32) {
    %c0_i32 = arith.constant 0 : i32
    %c0_i32_0 = arith.constant 0 : i32
    %c0_i32_1 = arith.constant 0 : i32
    return %c0_i32, %c0_i32_0 : i32, i32
  }
  func.func @transform_3(%arg0: i32, %arg1: i32) -> (i32, i32) {
    %c0_i32 = arith.constant 0 : i32
    %c0_i32_0 = arith.constant 0 : i32
    %c0_i32_1 = arith.constant 0 : i32
    return %c0_i32, %c0_i32_0 : i32, i32
  }
  func.func @transform_4(%arg0: i32, %arg1: i32) -> (i32, i32) {
    %c2_i32 = arith.constant 2 : i32
    %0 = arith.muli %arg0, %c2_i32 : i32
    %1 = arith.addi %0, %arg1 : i32
    %c0_i32 = arith.constant 0 : i32
    %c0_i32_0 = arith.constant 0 : i32
    return %c0_i32, %1 : i32, i32
  }
  func.func @transform_5(%arg0: i32, %arg1: i32) -> (i32, i32) {
    %c2_i32 = arith.constant 2 : i32
    %0 = arith.muli %arg0, %c2_i32 : i32
    %1 = arith.addi %0, %arg1 : i32
    %c0_i32 = arith.constant 0 : i32
    %c0_i32_0 = arith.constant 0 : i32
    return %c0_i32, %1 : i32, i32
  }
  func.func @transform_6(%arg0: i32, %arg1: i32) -> (i32, i32) {
    %c2_i32 = arith.constant 2 : i32
    %0 = arith.muli %arg0, %c2_i32 : i32
    %1 = arith.addi %0, %arg1 : i32
    %c0_i32 = arith.constant 0 : i32
    %c0_i32_0 = arith.constant 0 : i32
    return %1, %c0_i32 : i32, i32
  }
  func.func @transform_7(%arg0: i32, %arg1: i32) -> (i32, i32) {
    %c0_i32 = arith.constant 0 : i32
    %c0_i32_0 = arith.constant 0 : i32
    %c0_i32_1 = arith.constant 0 : i32
    return %c0_i32, %c0_i32_0 : i32, i32
  }
  func.func @transform_8(%arg0: i32, %arg1: i32) -> (i32, i32, i32) {
    %c0_i32 = arith.constant 0 : i32
    %c0_i32_0 = arith.constant 0 : i32
    %c0_i32_1 = arith.constant 0 : i32
    return %arg0, %c0_i32, %c0_i32_0 : i32, i32, i32
  }
}

</mosaic_0001>

<llo_original>
// kernel: tpu_custom_call.1
$region0: #{tpu_custom_call.1}
  #allocation0 [shape = 'u32[]', space=smem, size = 0x4, offset = 0x4, fixed_abs, tag = 'smem constant byte address 0x4 - core index']
  #allocation1 [shape = 'u32[144,128]{1,0:T(1,128)}', space=vmem, size = 0x12000, scoped, tag = 'internal scratch']
  #allocation2 [shape = 'bf16[196,512]{1,0:T(8,128)(2,1)}', space=vmem, size = 0x32000, scoped, tag = 'scratch operand']
  %s0 = inlined_call_operand.hbm [shape: bf16[196,512], index: 0, kind: input, shape index: {}]
  %s1 = inlined_call_operand.hbm [shape: bf16[196,512], index: 1, kind: input, shape index: {}]
  %s2 = inlined_call_operand.hbm [shape: f32[1,512], index: 2, kind: input, shape index: {}]
  %s3 = inlined_call_operand.hbm [shape: f32[1,512], index: 3, kind: input, shape index: {}]
  %s4 = inlined_call_operand.hbm [shape: bf16[512,2048], index: 4, kind: input, shape index: {}]
  %s5 = inlined_call_operand.hbm [shape: f32[1,2048], index: 5, kind: input, shape index: {}]
  %s6 = inlined_call_operand.hbm [shape: bf16[2048,512], index: 6, kind: input, shape index: {}]
  %s7 = inlined_call_operand.hbm [shape: f32[1,512], index: 7, kind: input, shape index: {}]
  %s8 = inlined_call_operand.vmem [shape: f32[1,196,512], index: 8, kind: output, shape index: {}]
  %s9 = sld [smem:[#allocation0]]
  $region101: #{tpu_custom_call.1} parent=0
    _
  %s11 = ssub.s32 1, %s9
  %s12 = scalar_select 0, %s11, %s9
  $region1: #{tpu_custom_call.1} parent=0
    #allocation3 [shape = 'u8[204800]{0}', space=vmem, size = 0x32000, scoped, tag = 'input window, operand 0, single buffered']
    #allocation4 [shape = 's32[2]{0}', space=sflag, size = 0x8, scoped, tag = 'scoped memory for tpu_custom_call.1']
    #allocation5 [shape = 'u8[204800]{0}', space=vmem, size = 0x32000, scoped, tag = 'input window, operand 1, single buffered']
    #allocation6 [shape = 's32[1]{0}', space=sflag, size = 0x4, scoped, tag = 'scoped memory for tpu_custom_call.1']
    #allocation7 [shape = 'u8[2048]{0}', space=vmem, size = 0x800, scoped, tag = 'input window, operand 2, single buffered']
    #allocation8 [shape = 'u8[2048]{0}', space=vmem, size = 0x800, scoped, tag = 'input window, operand 3, single buffered']
    #allocation9 [shape = 's32[1]{0}', space=sflag, size = 0x4, scoped, tag = 'scoped memory for tpu_custom_call.1']
    #allocation10 [shape = 'u8[2097152]{0}', space=vmem, size = 0x200000, scoped, tag = 'input window, operand 4']
    #allocation11 [shape = 'u8[8192]{0}', space=vmem, size = 0x2000, scoped, tag = 'input window, operand 5']
    #allocation12 [shape = 'u8[2097152]{0}', space=vmem, size = 0x200000, scoped, tag = 'input window, operand 6']
    #allocation13 [shape = 'u8[2048]{0}', space=vmem, size = 0x800, scoped, tag = 'input window, operand 7, single buffered']
    %13 = vsyncpa [#allocation4], 0
    %14 = vsyncpa [#allocation6], 0
    %15 = vsyncpa [#allocation9], 0
    loop: start=0, step=1, limit=4
    $region2: #{tpu_custom_call.1} parent=1 // loop_pre_header
      _
    $region3: #{tpu_custom_call.1} parent=1 // loop_header
      %s17 = sphi 0, %s21
      %p18 = scmp.ge.s32.totalorder %s17, 4
      %s24 = sphi 0, %s36
      %s25 = sphi 0, %s32
      %s26 = sphi 0, %s24
      %s27 = sphi 0, %s25
      %s28 = sphi 0, %s26
      %s29 = sphi 0, %s27
      %s37 = sphi 0, %s37
      %s39 = sphi 0, %s37
      %s40 = sphi 0, %s39
      %s54 = sphi 0, %s40
      %s58 = sphi 0, %s58
      %s60 = sphi 0, %s58
      %s61 = sphi 0, %s60
      %s75 = sphi 0, %s61
      %s79 = sphi 0, %s79
      %s81 = sphi 0, %s79
      %s82 = sphi 0, %s81
      %s96 = sphi 0, %s82
      %s100 = sphi 0, %s100
      %s102 = sphi 0, %s100
      %s103 = sphi 0, %s102
      %s117 = sphi 0, %s103
      %s127 = sphi 0, %s129
      %s130 = sphi 0, %s127
      %s131 = sphi 0, %s130
      %s147 = sphi 0, %s131
      %s157 = sphi 0, %s159
      %s160 = sphi 0, %s157
      %s161 = sphi 0, %s160
      %s177 = sphi 0, %s161
      %s187 = sphi 0, %s189
      %s190 = sphi 0, %s187
      %s191 = sphi 0, %s190
      %s207 = sphi 0, %s191
      %s211 = sphi 0, %s211
      %s213 = sphi 0, %s211
      %s214 = sphi 0, %s213
      %s228 = sphi 0, %s214
      %s234 = sphi 0, %s236
      %s237 = sphi 0, %s234
      %s238 = sphi 0, %s237
      %s254 = sphi 0, %s238
    $region4: #{tpu_custom_call.1} parent=1 // loop_header_branch
      %20 = sbr.rel (%p18) target = $region8
    $region5: #{tpu_custom_call.1} parent=1 // loop_body
      %s22 = ssub.s32 %s17, 1
      %s23 = ssub.s32 %s17, 2
      %s30 = sadd.s32 1, %s25
      %p31 = scmp.ge.s32.totalorder %s30, 2
      %s32 = scalar_select %p31, 0, %s30
      %s33 = sadd.s32 1, %s24
      %s34 = scalar_select %p31, %s33, %s24
      %p35 = scmp.ge.s32.totalorder %s34, 1
      %s36 = scalar_select %p35, 0, %s34
      %s38 = sadd.s32 %s37, 1
      %p41 = scmp.eq.s32.totalorder %s17, 1
      %p42 = scmp.ne.s32.totalorder %s37, %s39
      %p43 = scmp.eq.s32.totalorder %s17, 0
      %p44 = por %p42, %p43
      %p45 = scmp.ne.s32.totalorder %s37, %s39
      %p46 = scmp.eq.s32.totalorder %s22, 1
      %p47 = por %p45, %p46
      %p48 = scmp.ne.s32.totalorder %s39, %s40
      %p49 = scmp.eq.s32.totalorder %s22, 0
      %p50 = por %p48, %p49
      %p51 = scmp.ne.s32.totalorder %s39, %s40
      %p52 = scmp.eq.s32.totalorder %s23, 1
      %p53 = por %p51, %p52
      %p55 = scmp.ne.s32.totalorder %s40, %s54
      %p56 = scmp.eq.s32.totalorder %s23, 0
      %p57 = por %p55, %p56
      %s59 = sadd.s32 %s58, 1
      %p62 = scmp.eq.s32.totalorder %s17, 1
      %p63 = scmp.ne.s32.totalorder %s58, %s60
      %p64 = scmp.eq.s32.totalorder %s17, 0
      %p65 = por %p63, %p64
      %p66 = scmp.ne.s32.totalorder %s58, %s60
      %p67 = scmp.eq.s32.totalorder %s22, 1
      %p68 = por %p66, %p67
      %p69 = scmp.ne.s32.totalorder %s60, %s61
      %p70 = scmp.eq.s32.totalorder %s22, 0
      %p71 = por %p69, %p70
      %p72 = scmp.ne.s32.totalorder %s60, %s61
      %p73 = scmp.eq.s32.totalorder %s23, 1
      %p74 = por %p72, %p73
      %p76 = scmp.ne.s32.totalorder %s61, %s75
      %p77 = scmp.eq.s32.totalorder %s23, 0
      %p78 = por %p76, %p77
      %s80 = sadd.s32 %s79, 1
      %p83 = scmp.eq.s32.totalorder %s17, 1
      %p84 = scmp.ne.s32.totalorder %s79, %s81
      %p85 = scmp.eq.s32.totalorder %s17, 0
      %p86 = por %p84, %p85
      %p87 = scmp.ne.s32.totalorder %s79, %s81
      %p88 = scmp.eq.s32.totalorder %s22, 1
      %p89 = por %p87, %p88
      %p90 = scmp.ne.s32.totalorder %s81, %s82
      %p91 = scmp.eq.s32.totalorder %s22, 0
      %p92 = por %p90, %p91
      %p93 = scmp.ne.s32.totalorder %s81, %s82
      %p94 = scmp.eq.s32.totalorder %s23, 1
      %p95 = por %p93, %p94
      %p97 = scmp.ne.s32.totalorder %s82, %s96
      %p98 = scmp.eq.s32.totalorder %s23, 0
      %p99 = por %p97, %p98
      %s101 = sadd.s32 %s100, 1
      %p104 = scmp.eq.s32.totalorder %s17, 1
      %p105 = scmp.ne.s32.totalorder %s100, %s102
      %p106 = scmp.eq.s32.totalorder %s17, 0
      %p107 = por %p105, %p106
      %p108 = scmp.ne.s32.totalorder %s100, %s102
      %p109 = scmp.eq.s32.totalorder %s22, 1
      %p110 = por %p108, %p109
      %p111 = scmp.ne.s32.totalorder %s102, %s103
      %p112 = scmp.eq.s32.totalorder %s22, 0
      %p113 = por %p111, %p112
      %p114 = scmp.ne.s32.totalorder %s102, %s103
      %p115 = scmp.eq.s32.totalorder %s23, 1
      %p116 = por %p114, %p115
      %p118 = scmp.ne.s32.totalorder %s103, %s117
      %p119 = scmp.eq.s32.totalorder %s23, 0
      %p120 = por %p118, %p119
      %s121 = smul.u32 %s24, 2
      %s122 = sadd.s32 %s121, %s25
      %s123 = smul.u32 %s36, 2
      %s124 = sadd.s32 %s123, %s32
      %s125 = ssub.s32 %s122, %s124
      %p126 = scmp.eq.s32.totalorder %s125, 0
      %s128 = sadd.s32 %s127, 1
      %s129 = scalar_select %p126, %s127, %s128
      %p132 = pneg %p126
      %p133 = scmp.eq.s32.totalorder %s17, 1
      %p134 = por %p132, %p133
      %p135 = scmp.ne.s32.totalorder %s127, %s130
      %p136 = scmp.eq.s32.totalorder %s17, 0
      %p137 = por %p135, %p136
      %p138 = scmp.ne.s32.totalorder %s127, %s130
      %p139 = scmp.eq.s32.totalorder %s22, 1
      %p140 = por %p138, %p139
      %p141 = scmp.ne.s32.totalorder %s130, %s131
      %p142 = scmp.eq.s32.totalorder %s22, 0
      %p143 = por %p141, %p142
      %p144 = scmp.ne.s32.totalorder %s130, %s131
      %p145 = scmp.eq.s32.totalorder %s23, 1
      %p146 = por %p144, %p145
      %p148 = scmp.ne.s32.totalorder %s131, %s147
      %p149 = scmp.eq.s32.totalorder %s23, 0
      %p150 = por %p148, %p149
      %s151 = smul.u32 %s24, 2
      %s152 = sadd.s32 %s151, %s25
      %s153 = smul.u32 %s36, 2
      %s154 = sadd.s32 %s153, %s32
      %s155 = ssub.s32 %s152, %s154
      %p156 = scmp.eq.s32.totalorder %s155, 0
      %s158 = sadd.s32 %s157, 1
      %s159 = scalar_select %p156, %s157, %s158
      %p162 = pneg %p156
      %p163 = scmp.eq.s32.totalorder %s17, 1
      %p164 = por %p162, %p163
      %p165 = scmp.ne.s32.totalorder %s157, %s160
      %p166 = scmp.eq.s32.totalorder %s17, 0
      %p167 = por %p165, %p166
      %p168 = scmp.ne.s32.totalorder %s157, %s160
      %p169 = scmp.eq.s32.totalorder %s22, 1
      %p170 = por %p168, %p169
      %p171 = scmp.ne.s32.totalorder %s160, %s161
      %p172 = scmp.eq.s32.totalorder %s22, 0
      %p173 = por %p171, %p172
      %p174 = scmp.ne.s32.totalorder %s160, %s161
      %p175 = scmp.eq.s32.totalorder %s23, 1
      %p176 = por %p174, %p175
      %p178 = scmp.ne.s32.totalorder %s161, %s177
      %p179 = scmp.eq.s32.totalorder %s23, 0
      %p180 = por %p178, %p179
      %s181 = smul.u32 %s24, 2
      %s182 = sadd.s32 %s181, %s25
      %s183 = smul.u32 %s36, 2
      %s184 = sadd.s32 %s183, %s32
      %s185 = ssub.s32 %s182, %s184
      %p186 = scmp.eq.s32.totalorder %s185, 0
      %s188 = sadd.s32 %s187, 1
      %s189 = scalar_select %p186, %s187, %s188
      %p192 = pneg %p186
      %p193 = scmp.eq.s32.totalorder %s17, 1
      %p194 = por %p192, %p193
      %p195 = scmp.ne.s32.totalorder %s187, %s190
      %p196 = scmp.eq.s32.totalorder %s17, 0
      %p197 = por %p195, %p196
      %p198 = scmp.ne.s32.totalorder %s187, %s190
      %p199 = scmp.eq.s32.totalorder %s22, 1
      %p200 = por %p198, %p199
      %p201 = scmp.ne.s32.totalorder %s190, %s191
      %p202 = scmp.eq.s32.totalorder %s22, 0
      %p203 = por %p201, %p202
      %p204 = scmp.ne.s32.totalorder %s190, %s191
      %p205 = scmp.eq.s32.totalorder %s23, 1
      %p206 = por %p204, %p205
      %p208 = scmp.ne.s32.totalorder %s191, %s207
      %p209 = scmp.eq.s32.totalorder %s23, 0
      %p210 = por %p208, %p209
      %s212 = sadd.s32 %s211, 1
      %p215 = scmp.eq.s32.totalorder %s17, 1
      %p216 = scmp.ne.s32.totalorder %s211, %s213
      %p217 = scmp.eq.s32.totalorder %s17, 0
      %p218 = por %p216, %p217
      %p219 = scmp.ne.s32.totalorder %s211, %s213
      %p220 = scmp.eq.s32.totalorder %s22, 1
      %p221 = por %p219, %p220
      %p222 = scmp.ne.s32.totalorder %s213, %s214
      %p223 = scmp.eq.s32.totalorder %s22, 0
      %p224 = por %p222, %p223
      %p225 = scmp.ne.s32.totalorder %s213, %s214
      %p226 = scmp.eq.s32.totalorder %s23, 1
      %p227 = por %p225, %p226
      %p229 = scmp.ne.s32.totalorder %s214, %s228
      %p230 = scmp.eq.s32.totalorder %s23, 0
      %p231 = por %p229, %p230
      %s232 = ssub.s32 %s24, %s36
      %p233 = scmp.eq.s32.totalorder %s232, 0
      %s235 = sadd.s32 %s234, 1
      %s236 = scalar_select %p233, %s234, %s235
      %p239 = pneg %p233
      %p240 = scmp.eq.s32.totalorder %s17, 1
      %p241 = por %p239, %p240
      %p242 = scmp.ne.s32.totalorder %s234, %s237
      %p243 = scmp.eq.s32.totalorder %s17, 0
      %p244 = por %p242, %p243
      %p245 = scmp.ne.s32.totalorder %s234, %s237
      %p246 = scmp.eq.s32.totalorder %s22, 1
      %p247 = por %p245, %p246
      %p248 = scmp.ne.s32.totalorder %s237, %s238
      %p249 = scmp.eq.s32.totalorder %s22, 0
      %p250 = por %p248, %p249
      %p251 = scmp.ne.s32.totalorder %s237, %s238
      %p252 = scmp.eq.s32.totalorder %s23, 1
      %p253 = por %p251, %p252
      %p255 = scmp.ne.s32.totalorder %s238, %s254
      %p256 = scmp.eq.s32.totalorder %s23, 0
      %p257 = por %p255, %p256
      %p258 = scmp.le.s32.totalorder 1, %s17
      %p259 = scmp.lt.s32.totalorder %s17, 3
      %p260 = pnand %p258, %p259
      %p261 = pneg %p260
      // Predicated region
      $region9: #{tpu_custom_call.1} parent=5 // pred_check
        _
      $region10: #{tpu_custom_call.1} parent=5 // pred_check_branch
        %263 = sbr.rel (%p260) target = $region12
      $region11: #{tpu_custom_call.1} parent=5 // pred_region
        %s264 = ssub.s32 %s17, 1
        // Predicated region
        $region13: #{tpu_custom_call.1} parent=11 // pred_check
          %p265 = pneg %p50
        $region14: #{tpu_custom_call.1} parent=11 // pred_check_branch
          %267 = sbr.rel (%p265) target = $region16
        $region15: #{tpu_custom_call.1} parent=11 // pred_region
          %s269 = ssub.s32 6400, 6400
          %270 = vsyncadd [#allocation4], %s269
          %s271 = sshll.u32 [#allocation3], 4
          %s272 = int_to_ptr.vmem [resolvable:$true] %s271
          %277 = dma.hbm_to_vmem [thread:$0]  %s0, 6400, %s272, [#allocation4], 256, 256, 16
        $region16: #{tpu_custom_call.1} parent=11 // pred_fallthru
          _
        // Predicated region
        $region17: #{tpu_custom_call.1} parent=11 // pred_check
          %p278 = pneg %p71
        $region18: #{tpu_custom_call.1} parent=11 // pred_check_branch
          %280 = sbr.rel (%p278) target = $region20
        $region19: #{tpu_custom_call.1} parent=11 // pred_region
          %s282 = ssub.s32 6400, 6400
          %283 = vsyncadd [#allocation6], %s282
          %s284 = sshll.u32 [#allocation5], 4
          %s285 = int_to_ptr.vmem [resolvable:$true] %s284
          %290 = dma.hbm_to_vmem [thread:$0]  %s1, 6400, %s285, [#allocation6], 256, 256, 16
        $region20: #{tpu_custom_call.1} parent=11 // pred_fallthru
          _
        // Predicated region
        $region21: #{tpu_custom_call.1} parent=11 // pred_check
          %p291 = pneg %p92
        $region22: #{tpu_custom_call.1} parent=11 // pred_check_branch
          %293 = sbr.rel (%p291) target = $region24
        $region23: #{tpu_custom_call.1} parent=11 // pred_region
          %s295 = ssub.s32 64, 64
          %296 = vsyncadd [#allocation6], %s295
          %s298 = sshll.u32 [#allocation7], 4
          %s299 = int_to_ptr.vmem [resolvable:$true] %s298
          %301 = dma.hbm_to_vmem [thread:$0]  %s2, 64, %s299, [#allocation6]
        $region24: #{tpu_custom_call.1} parent=11 // pred_fallthru
          _
        // Predicated region
        $region25: #{tpu_custom_call.1} parent=11 // pred_check
          %p302 = pneg %p113
        $region26: #{tpu_custom_call.1} parent=11 // pred_check_branch
          %304 = sbr.rel (%p302) target = $region28
        $region27: #{tpu_custom_call.1} parent=11 // pred_region
          %s306 = ssub.s32 64, 64
          %307 = vsyncadd [#allocation9], %s306
          %s309 = sshll.u32 [#allocation8], 4
          %s310 = int_to_ptr.vmem [resolvable:$true] %s309
          %312 = dma.hbm_to_vmem [thread:$0]  %s3, 64, %s310, [#allocation9]
        $region28: #{tpu_custom_call.1} parent=11 // pred_fallthru
          _
        // Predicated region
        $region29: #{tpu_custom_call.1} parent=11 // pred_check
          %p313 = pneg %p224
        $region30: #{tpu_custom_call.1} parent=11 // pred_check_branch
          %315 = sbr.rel (%p313) target = $region32
        $region31: #{tpu_custom_call.1} parent=11 // pred_region
          %s317 = ssub.s32 64, 64
          %318 = vsyncadd [#allocation6], %s317
          %s320 = sshll.u32 [#allocation13], 4
          %s321 = int_to_ptr.vmem [resolvable:$true] %s320
          %323 = dma.hbm_to_vmem [thread:$0]  %s7, 64, %s321, [#allocation6]
        $region32: #{tpu_custom_call.1} parent=11 // pred_fallthru
          _
      $region12: #{tpu_custom_call.1} parent=5 // pred_fallthru
        _
      %p324 = scmp.lt.s32.totalorder %s17, 2
      // Predicated region
      $region33: #{tpu_custom_call.1} parent=5 // pred_check
        %p325 = pneg %p324
      $region34: #{tpu_custom_call.1} parent=5 // pred_check_branch
        %327 = sbr.rel (%p325) target = $region36
      $region35: #{tpu_custom_call.1} parent=5 // pred_region
        // Predicated region
        $region37: #{tpu_custom_call.1} parent=35 // pred_check
          %p328 = pneg %p137
        $region38: #{tpu_custom_call.1} parent=35 // pred_check_branch
          %330 = sbr.rel (%p328) target = $region40
        $region39: #{tpu_custom_call.1} parent=35 // pred_region
          %s331 = sand.u32 %s17, 1
          %s332 = scalar_lea.sflag [#allocation4], %s331
          %s333 = sand.u32 %s127, 1
          %s334 = smul.addr %s333, 2048
          %s335 = scalar_lea.vmem [#allocation10], %s334
          %s336 = smul.u32 %s24, 2
          %s337 = sadd.s32 %s336, %s25
          %s338 = smul.u32 8, %s337
          %s340 = ssub.s32 32768, 32768
          %341 = vsyncadd %s332, %s340
          %s342 = smul.addr %s338, 64
          %s343 = scalar_lea.hbm %s4, %s342
          %s344 = sshll.u32 %s335, 4
          %s345 = int_to_ptr.vmem [resolvable:$true] %s344
          %350 = dma.hbm_to_vmem [thread:$0]  %s343, 32768, %s345, %s332, 1024, 512, 32
        $region40: #{tpu_custom_call.1} parent=35 // pred_fallthru
          _
        // Predicated region
        $region41: #{tpu_custom_call.1} parent=35 // pred_check
          %p351 = pneg %p167
        $region42: #{tpu_custom_call.1} parent=35 // pred_check_branch
          %353 = sbr.rel (%p351) target = $region44
        $region43: #{tpu_custom_call.1} parent=35 // pred_region
          %s354 = sand.u32 %s17, 1
          %s355 = scalar_lea.sflag [#allocation4], %s354
          %s356 = sand.u32 %s157, 1
          %s357 = smul.addr %s356, 8
          %s358 = scalar_lea.vmem [#allocation11], %s357
          %s359 = smul.u32 %s24, 2
          %s360 = sadd.s32 %s359, %s25
          %s361 = smul.u32 8, %s360
          %s363 = ssub.s32 128, 128
          %364 = vsyncadd %s355, %s363
          %s365 = smul.addr %s361, 16
          %s366 = scalar_lea.hbm %s5, %s365
          %s368 = sshll.u32 %s358, 4
          %s369 = int_to_ptr.vmem [resolvable:$true] %s368
          %371 = dma.hbm_to_vmem [thread:$0]  %s366, 128, %s369, %s355
        $region44: #{tpu_custom_call.1} parent=35 // pred_fallthru
          _
        // Predicated region
        $region45: #{tpu_custom_call.1} parent=35 // pred_check
          %p372 = pneg %p197
        $region46: #{tpu_custom_call.1} parent=35 // pred_check_branch
          %374 = sbr.rel (%p372) target = $region48
        $region47: #{tpu_custom_call.1} parent=35 // pred_region
          %s375 = sand.u32 %s17, 1
          %s376 = scalar_lea.sflag [#allocation4], %s375
          %s377 = sand.u32 %s187, 1
          %s378 = smul.addr %s377, 2048
          %s379 = scalar_lea.vmem [#allocation12], %s378
          %s380 = smul.u32 %s24, 2
          %s381 = sadd.s32 %s380, %s25
          %s382 = smul.u32 128, %s381
          %s384 = ssub.s32 32768, 32768
          %385 = vsyncadd %s376, %s384
          %s386 = smul.addr %s382, 4
          %s387 = smul.addr %s386, 64
          %s388 = scalar_lea.hbm %s6, %s387
          %s389 = sshll.u32 %s379, 4
          %s390 = int_to_ptr.vmem [resolvable:$true] %s389
          %395 = dma.hbm_to_vmem [thread:$0]  %s388, 32768, %s390, %s376, 256, 256, 16
        $region48: #{tpu_custom_call.1} parent=35 // pred_fallthru
          _
      $region36: #{tpu_custom_call.1} parent=5 // pred_fallthru
        _
      %p396 = scmp.le.s32.totalorder 1, %s17
      %p397 = scmp.lt.s32.totalorder %s17, 3
      %p398 = pnand %p396, %p397
      %p399 = pneg %p398
      // Predicated region
      $region49: #{tpu_custom_call.1} parent=5 // pred_check
        _
      $region50: #{tpu_custom_call.1} parent=5 // pred_check_branch
        %401 = sbr.rel (%p398) target = $region52
      $region51: #{tpu_custom_call.1} parent=5 // pred_region
        %s402 = ssub.s32 %s17, 1
        // Predicated region
        $region53: #{tpu_custom_call.1} parent=51 // pred_check
          %p403 = pneg %p50
        $region54: #{tpu_custom_call.1} parent=51 // pred_check_branch
          %405 = sbr.rel (%p403) target = $region56
        $region55: #{tpu_custom_call.1} parent=51 // pred_region
          %406 = dma.done [#allocation4], 6400
        $region56: #{tpu_custom_call.1} parent=51 // pred_fallthru
          _
        // Predicated region
        $region57: #{tpu_custom_call.1} parent=51 // pred_check
          %p407 = pneg %p71
        $region58: #{tpu_custom_call.1} parent=51 // pred_check_branch
          %409 = sbr.rel (%p407) target = $region60
        $region59: #{tpu_custom_call.1} parent=51 // pred_region
          %410 = dma.done [#allocation6], 6400
        $region60: #{tpu_custom_call.1} parent=51 // pred_fallthru
          _
        // Predicated region
        $region61: #{tpu_custom_call.1} parent=51 // pred_check
          %p411 = pneg %p92
        $region62: #{tpu_custom_call.1} parent=51 // pred_check_branch
          %413 = sbr.rel (%p411) target = $region64
        $region63: #{tpu_custom_call.1} parent=51 // pred_region
          %414 = dma.done [#allocation6], 64
        $region64: #{tpu_custom_call.1} parent=51 // pred_fallthru
          _
        // Predicated region
        $region65: #{tpu_custom_call.1} parent=51 // pred_check
          %p415 = pneg %p113
        $region66: #{tpu_custom_call.1} parent=51 // pred_check_branch
          %417 = sbr.rel (%p415) target = $region68
        $region67: #{tpu_custom_call.1} parent=51 // pred_region
          %418 = dma.done [#allocation9], 64
        $region68: #{tpu_custom_call.1} parent=51 // pred_fallthru
          _
        %s419 = sand.u32 %s22, 1
        %s420 = scalar_lea.sflag [#allocation4], %s419
        %s421 = sand.u32 %s130, 1
        %s422 = smul.addr %s421, 2048
        %s423 = scalar_lea.vmem [#allocation10], %s422
        // Predicated region
        $region69: #{tpu_custom_call.1} parent=51 // pred_check
          %p424 = pneg %p143
        $region70: #{tpu_custom_call.1} parent=51 // pred_check_branch
          %426 = sbr.rel (%p424) target = $region72
        $region71: #{tpu_custom_call.1} parent=51 // pred_region
          %427 = dma.done %s420, 32768
        $region72: #{tpu_custom_call.1} parent=51 // pred_fallthru
          _
        %s428 = sand.u32 %s22, 1
        %s429 = scalar_lea.sflag [#allocation4], %s428
        %s430 = sand.u32 %s160, 1
        %s431 = smul.addr %s430, 8
        %s432 = scalar_lea.vmem [#allocation11], %s431
        // Predicated region
        $region73: #{tpu_custom_call.1} parent=51 // pred_check
          %p433 = pneg %p173
        $region74: #{tpu_custom_call.1} parent=51 // pred_check_branch
          %435 = sbr.rel (%p433) target = $region76
        $region75: #{tpu_custom_call.1} parent=51 // pred_region
          %436 = dma.done %s429, 128
        $region76: #{tpu_custom_call.1} parent=51 // pred_fallthru
          _
        %s437 = sand.u32 %s22, 1
        %s438 = scalar_lea.sflag [#allocation4], %s437
        %s439 = sand.u32 %s190, 1
        %s440 = smul.addr %s439, 2048
        %s441 = scalar_lea.vmem [#allocation12], %s440
        // Predicated region
        $region77: #{tpu_custom_call.1} parent=51 // pred_check
          %p442 = pneg %p203
        $region78: #{tpu_custom_call.1} parent=51 // pred_check_branch
          %444 = sbr.rel (%p442) target = $region80
        $region79: #{tpu_custom_call.1} parent=51 // pred_region
          %445 = dma.done %s438, 32768
        $region80: #{tpu_custom_call.1} parent=51 // pred_fallthru
          _
        // Predicated region
        $region81: #{tpu_custom_call.1} parent=51 // pred_check
          %p446 = pneg %p224
        $region82: #{tpu_custom_call.1} parent=51 // pred_check_branch
          %448 = sbr.rel (%p446) target = $region84
        $region83: #{tpu_custom_call.1} parent=51 // pred_region
          %449 = dma.done [#allocation6], 64
        $region84: #{tpu_custom_call.1} parent=51 // pred_fallthru
          _
        %p450 = pneg %p50
        %p451 = pneg %p47
        %p452 = pneg %p71
        %p453 = pneg %p68
        %p454 = pneg %p92
        %p455 = pneg %p89
        %p456 = pneg %p113
        %p457 = pneg %p110
        %s458 = sand.u32 %s22, 1
        %s459 = scalar_lea.sflag [#allocation4], %s458
        %s460 = sand.u32 %s130, 1
        %s461 = smul.addr %s460, 2048
        %s462 = scalar_lea.vmem [#allocation10], %s461
        %p463 = pneg %p143
        %p464 = pneg %p140
        %s465 = sand.u32 %s22, 1
        %s466 = scalar_lea.sflag [#allocation4], %s465
        %s467 = sand.u32 %s160, 1
        %s468 = smul.addr %s467, 8
        %s469 = scalar_lea.vmem [#allocation11], %s468
        %p470 = pneg %p173
        %p471 = pneg %p170
        %s472 = sand.u32 %s22, 1
        %s473 = scalar_lea.sflag [#allocation4], %s472
        %s474 = sand.u32 %s190, 1
        %s475 = smul.addr %s474, 2048
        %s476 = scalar_lea.vmem [#allocation12], %s475
        %p477 = pneg %p203
        %p478 = pneg %p200
        %p479 = pneg %p224
        %p480 = pneg %p221
        %p481 = pneg %p250
        %p482 = pneg %p247
        %p483 = scmp.lt.s32.totalorder %s26, 0
        %s484 = scalar_select %p483, %s26, 0
        %s485 = smul.addr %s484, 100
        %s486 = smul.addr %s485, 8
        %s487 = scalar_lea.vmem %s8, %s486
        %s488 = smul.u32 %s26, 2
        %s489 = sadd.s32 %s488, %s27
        %s490 = smul.u32 8, %s489
        %s491 = smul.u32 %s26, 2
        %s492 = sadd.s32 %s491, %s27
        %s493 = smul.u32 8, %s492
        %s494 = smul.u32 %s26, 2
        %s495 = sadd.s32 %s494, %s27
        %s496 = smul.u32 128, %s495
        %p497 = scmp.lt.s32.totalorder %s26, 0
        %s498 = scalar_select %p497, %s26, 0
        %s499 = smul.addr %s498, 100
        %s500 = smul.addr %s499, 8
        %s501 = scalar_lea.vmem %s8, %s500
        %p502 = scmp.eq.s32.totalorder %s27, 0
        // Predicated region
        $region85: #{tpu_custom_call.1} parent=51 // pred_check
          %p503 = pneg %p502
        $region86: #{tpu_custom_call.1} parent=51 // pred_check_branch
          %505 = sbr.rel (%p503) target = $region88
        $region87: #{tpu_custom_call.1} parent=51 // pred_region
          %v506 = vld [vmem:[#allocation3] sm:$0xff]
          %v507 = vld [vmem:[#allocation3 + $0x8] sm:$0xff]
          %v508 = vld [vmem:[#allocation3 + $0x10] sm:$0xff]
          %v509 = vld [vmem:[#allocation3 + $0x18] sm:$0xff]
          %v510 = vld [vmem:[#allocation3 + $0x20] sm:$0xff]
          %v511 = vld [vmem:[#allocation3 + $0x28] sm:$0xff]
          %v512 = vld [vmem:[#allocation3 + $0x30] sm:$0xff]
          %v513 = vld [vmem:[#allocation3 + $0x38] sm:$0xff]
          %v514 = vld [vmem:[#allocation3 + $0x40] sm:$0xff]
          %v515 = vld [vmem:[#allocation3 + $0x48] sm:$0xff]
          %v516 = vld [vmem:[#allocation3 + $0x50] sm:$0xff]
          %v517 = vld [vmem:[#allocation3 + $0x58] sm:$0xff]
          %v518 = vld [vmem:[#allocation3 + $0x60] sm:$0xff]
          %v519 = vld [vmem:[#allocation3 + $0x68] sm:$0xff]
          %v520 = vld [vmem:[#allocation3 + $0x70] sm:$0xff]
          %v521 = vld [vmem:[#allocation3 + $0x78] sm:$0xff]
          %v522 = vld [vmem:[#allocation3 + $0x80] sm:$0xff]
          %v523 = vld [vmem:[#allocation3 + $0x88] sm:$0xff]
          %v524 = vld [vmem:[#allocation3 + $0x90] sm:$0xff]
          %v525 = vld [vmem:[#allocation3 + $0x98] sm:$0xff]
          %v526 = vld [vmem:[#allocation3 + $0xa0] sm:$0xff]
          %v527 = vld [vmem:[#allocation3 + $0xa8] sm:$0xff]
          %v528 = vld [vmem:[#allocation3 + $0xb0] sm:$0xff]
          %v529 = vld [vmem:[#allocation3 + $0xb8] sm:$0xff]
          %v530 = vld [vmem:[#allocation3 + $0xc0] sm:$0xff]
          %v531 = vld [vmem:[#allocation3 + $0xc8] sm:$0xff]
          %v532 = vld [vmem:[#allocation3 + $0xd0] sm:$0xff]
          %v533 = vld [vmem:[#allocation3 + $0xd8] sm:$0xff]
          %v534 = vld [vmem:[#allocation3 + $0xe0] sm:$0xff]
          %v535 = vld [vmem:[#allocation3 + $0xe8] sm:$0xff]
          %v536 = vld [vmem:[#allocation3 + $0xf0] sm:$0xff]
          %v537 = vld [vmem:[#allocation3 + $0xf8] sm:$0xff]
          %v538 = vld [vmem:[#allocation3 + $0x100] sm:$0xff]
          %v539 = vld [vmem:[#allocation3 + $0x108] sm:$0xff]
          %v540 = vld [vmem:[#allocation3 + $0x110] sm:$0xff]
          %v541 = vld [vmem:[#allocation3 + $0x118] sm:$0xff]
          %v542 = vld [vmem:[#allocation3 + $0x120] sm:$0xff]
          %v543 = vld [vmem:[#allocation3 + $0x128] sm:$0xff]
          %v544 = vld [vmem:[#allocation3 + $0x130] sm:$0xff]
          %v545 = vld [vmem:[#allocation3 + $0x138] sm:$0xff]
          %v546 = vld [vmem:[#allocation3 + $0x140] sm:$0xff]
          %v547 = vld [vmem:[#allocation3 + $0x148] sm:$0xff]
          %v548 = vld [vmem:[#allocation3 + $0x150] sm:$0xff]
          %v549 = vld [vmem:[#allocation3 + $0x158] sm:$0xff]
          %v550 = vld [vmem:[#allocation3 + $0x160] sm:$0xff]
          %v551 = vld [vmem:[#allocation3 + $0x168] sm:$0xff]
          %v552 = vld [vmem:[#allocation3 + $0x170] sm:$0xff]
          %v553 = vld [vmem:[#allocation3 + $0x178] sm:$0xff]
          %v554 = vld [vmem:[#allocation3 + $0x180] sm:$0x33]
          %v555 = vld [vmem:[#allocation3 + $0x188] sm:$0x33]
          %v556 = vunpack.c.l.bf16 %v506
          %v557 = vunpack.c.h.bf16 %v506
          %v558 = vunpack.c.l.bf16 %v507
          %v559 = vunpack.c.h.bf16 %v507
          %v560 = vunpack.c.l.bf16 %v508
          %v561 = vunpack.c.h.bf16 %v508
          %v562 = vunpack.c.l.bf16 %v509
          %v563 = vunpack.c.h.bf16 %v509
          %v564 = vunpack.c.l.bf16 %v510
          %v565 = vunpack.c.h.bf16 %v510
          %v566 = vunpack.c.l.bf16 %v511
          %v567 = vunpack.c.h.bf16 %v511
          %v568 = vunpack.c.l.bf16 %v512
          %v569 = vunpack.c.h.bf16 %v512
          %v570 = vunpack.c.l.bf16 %v513
          %v571 = vunpack.c.h.bf16 %v513
          %v572 = vunpack.c.l.bf16 %v514
          %v573 = vunpack.c.h.bf16 %v514
          %v574 = vunpack.c.l.bf16 %v515
          %v575 = vunpack.c.h.bf16 %v515
          %v576 = vunpack.c.l.bf16 %v516
          %v577 = vunpack.c.h.bf16 %v516
          %v578 = vunpack.c.l.bf16 %v517
          %v579 = vunpack.c.h.bf16 %v517
          %v580 = vunpack.c.l.bf16 %v518
          %v581 = vunpack.c.h.bf16 %v518
          %v582 = vunpack.c.l.bf16 %v519
          %v583 = vunpack.c.h.bf16 %v519
          %v584 = vunpack.c.l.bf16 %v520
          %v585 = vunpack.c.h.bf16 %v520
          %v586 = vunpack.c.l.bf16 %v521
          %v587 = vunpack.c.h.bf16 %v521
          %v588 = vunpack.c.l.bf16 %v522
          %v589 = vunpack.c.h.bf16 %v522
          %v590 = vunpack.c.l.bf16 %v523
          %v591 = vunpack.c.h.bf16 %v523
          %v592 = vunpack.c.l.bf16 %v524
          %v593 = vunpack.c.h.bf16 %v524
          %v594 = vunpack.c.l.bf16 %v525
          %v595 = vunpack.c.h.bf16 %v525
          %v596 = vunpack.c.l.bf16 %v526
          %v597 = vunpack.c.h.bf16 %v526
          %v598 = vunpack.c.l.bf16 %v527
          %v599 = vunpack.c.h.bf16 %v527
          %v600 = vunpack.c.l.bf16 %v528
          %v601 = vunpack.c.h.bf16 %v528
          %v602 = vunpack.c.l.bf16 %v529
          %v603 = vunpack.c.h.bf16 %v529
          %v604 = vunpack.c.l.bf16 %v530
          %v605 = vunpack.c.h.bf16 %v530
          %v606 = vunpack.c.l.bf16 %v531
          %v607 = vunpack.c.h.bf16 %v531
          %v608 = vunpack.c.l.bf16 %v532
          %v609 = vunpack.c.h.bf16 %v532
          %v610 = vunpack.c.l.bf16 %v533
          %v611 = vunpack.c.h.bf16 %v533
          %v612 = vunpack.c.l.bf16 %v534
          %v613 = vunpack.c.h.bf16 %v534
          %v614 = vunpack.c.l.bf16 %v535
          %v615 = vunpack.c.h.bf16 %v535
          %v616 = vunpack.c.l.bf16 %v536
          %v617 = vunpack.c.h.bf16 %v536
          %v618 = vunpack.c.l.bf16 %v537
          %v619 = vunpack.c.h.bf16 %v537
          %v620 = vunpack.c.l.bf16 %v538
          %v621 = vunpack.c.h.bf16 %v538
          %v622 = vunpack.c.l.bf16 %v539
          %v623 = vunpack.c.h.bf16 %v539
          %v624 = vunpack.c.l.bf16 %v540
          %v625 = vunpack.c.h.bf16 %v540
          %v626 = vunpack.c.l.bf16 %v541
          %v627 = vunpack.c.h.bf16 %v541
          %v628 = vunpack.c.l.bf16 %v542
          %v629 = vunpack.c.h.bf16 %v542
          %v630 = vunpack.c.l.bf16 %v543
          %v631 = vunpack.c.h.bf16 %v543
          %v632 = vunpack.c.l.bf16 %v544
          %v633 = vunpack.c.h.bf16 %v544
          %v634 = vunpack.c.l.bf16 %v545
          %v635 = vunpack.c.h.bf16 %v545
          %v636 = vunpack.c.l.bf16 %v546
          %v637 = vunpack.c.h.bf16 %v546
          %v638 = vunpack.c.l.bf16 %v547
          %v639 = vunpack.c.h.bf16 %v547
          %v640 = vunpack.c.l.bf16 %v548
          %v641 = vunpack.c.h.bf16 %v548
          %v642 = vunpack.c.l.bf16 %v549
          %v643 = vunpack.c.h.bf16 %v549
          %v644 = vunpack.c.l.bf16 %v550
          %v645 = vunpack.c.h.bf16 %v550
          %v646 = vunpack.c.l.bf16 %v551
          %v647 = vunpack.c.h.bf16 %v551
          %v648 = vunpack.c.l.bf16 %v552
          %v649 = vunpack.c.h.bf16 %v552
          %v650 = vunpack.c.l.bf16 %v553
          %v651 = vunpack.c.h.bf16 %v553
          %v652 = vunpack.c.l.bf16 %v554
          %v653 = vunpack.c.h.bf16 %v554
          %v654 = vunpack.c.l.bf16 %v555
          %v655 = vunpack.c.h.bf16 %v555
          %v656 = vld [vmem:[#allocation5] sm:$0xff]
          %v657 = vld [vmem:[#allocation5 + $0x8] sm:$0xff]
          %v658 = vld [vmem:[#allocation5 + $0x10] sm:$0xff]
          %v659 = vld [vmem:[#allocation5 + $0x18] sm:$0xff]
          %v660 = vld [vmem:[#allocation5 + $0x20] sm:$0xff]
          %v661 = vld [vmem:[#allocation5 + $0x28] sm:$0xff]
          %v662 = vld [vmem:[#allocation5 + $0x30] sm:$0xff]
          %v663 = vld [vmem:[#allocation5 + $0x38] sm:$0xff]
          %v664 = vld [vmem:[#allocation5 + $0x40] sm:$0xff]
          %v665 = vld [vmem:[#allocation5 + $0x48] sm:$0xff]
          %v666 = vld [vmem:[#allocation5 + $0x50] sm:$0xff]
          %v667 = vld [vmem:[#allocation5 + $0x58] sm:$0xff]
          %v668 = vld [vmem:[#allocation5 + $0x60] sm:$0xff]
          %v669 = vld [vmem:[#allocation5 + $0x68] sm:$0xff]
          %v670 = vld [vmem:[#allocation5 + $0x70] sm:$0xff]
          %v671 = vld [vmem:[#allocation5 + $0x78] sm:$0xff]
          %v672 = vld [vmem:[#allocation5 + $0x80] sm:$0xff]
          %v673 = vld [vmem:[#allocation5 + $0x88] sm:$0xff]
          %v674 = vld [vmem:[#allocation5 + $0x90] sm:$0xff]
          %v675 = vld [vmem:[#allocation5 + $0x98] sm:$0xff]
          %v676 = vld [vmem:[#allocation5 + $0xa0] sm:$0xff]
          %v677 = vld [vmem:[#allocation5 + $0xa8] sm:$0xff]
          %v678 = vld [vmem:[#allocation5 + $0xb0] sm:$0xff]
          %v679 = vld [vmem:[#allocation5 + $0xb8] sm:$0xff]
          %v680 = vld [vmem:[#allocation5 + $0xc0] sm:$0xff]
          %v681 = vld [vmem:[#allocation5 + $0xc8] sm:$0xff]
          %v682 = vld [vmem:[#allocation5 + $0xd0] sm:$0xff]
          %v683 = vld [vmem:[#allocation5 + $0xd8] sm:$0xff]
          %v684 = vld [vmem:[#allocation5 + $0xe0] sm:$0xff]
          %v685 = vld [vmem:[#allocation5 + $0xe8] sm:$0xff]
          %v686 = vld [vmem:[#allocation5 + $0xf0] sm:$0xff]
          %v687 = vld [vmem:[#allocation5 + $0xf8] sm:$0xff]
          %v688 = vld [vmem:[#allocation5 + $0x100] sm:$0xff]
          %v689 = vld [vmem:[#allocation5 + $0x108] sm:$0xff]
          %v690 = vld [vmem:[#allocation5 + $0x110] sm:$0xff]
          %v691 = vld [vmem:[#allocation5 + $0x118] sm:$0xff]
          %v692 = vld [vmem:[#allocation5 + $0x120] sm:$0xff]
          %v693 = vld [vmem:[#allocation5 + $0x128] sm:$0xff]
          %v694 = vld [vmem:[#allocation5 + $0x130] sm:$0xff]
          %v695 = vld [vmem:[#allocation5 + $0x138] sm:$0xff]
          %v696 = vld [vmem:[#allocation5 + $0x140] sm:$0xff]
          %v697 = vld [vmem:[#allocation5 + $0x148] sm:$0xff]
          %v698 = vld [vmem:[#allocation5 + $0x150] sm:$0xff]
          %v699 = vld [vmem:[#allocation5 + $0x158] sm:$0xff]
          %v700 = vld [vmem:[#allocation5 + $0x160] sm:$0xff]
          %v701 = vld [vmem:[#allocation5 + $0x168] sm:$0xff]
          %v702 = vld [vmem:[#allocation5 + $0x170] sm:$0xff]
          %v703 = vld [vmem:[#allocation5 + $0x178] sm:$0xff]
          %v704 = vld [vmem:[#allocation5 + $0x180] sm:$0x33]
          %v705 = vld [vmem:[#allocation5 + $0x188] sm:$0x33]
          %v706 = vunpack.c.l.bf16 %v656
          %v707 = vunpack.c.h.bf16 %v656
          %v708 = vunpack.c.l.bf16 %v657
          %v709 = vunpack.c.h.bf16 %v657
          %v710 = vunpack.c.l.bf16 %v658
          %v711 = vunpack.c.h.bf16 %v658
          %v712 = vunpack.c.l.bf16 %v659
          %v713 = vunpack.c.h.bf16 %v659
          %v714 = vunpack.c.l.bf16 %v660
          %v715 = vunpack.c.h.bf16 %v660
          %v716 = vunpack.c.l.bf16 %v661
          %v717 = vunpack.c.h.bf16 %v661
          %v718 = vunpack.c.l.bf16 %v662
          %v719 = vunpack.c.h.bf16 %v662
          %v720 = vunpack.c.l.bf16 %v663
          %v721 = vunpack.c.h.bf16 %v663
          %v722 = vunpack.c.l.bf16 %v664
          %v723 = vunpack.c.h.bf16 %v664
          %v724 = vunpack.c.l.bf16 %v665
          %v725 = vunpack.c.h.bf16 %v665
          %v726 = vunpack.c.l.bf16 %v666
          %v727 = vunpack.c.h.bf16 %v666
          %v728 = vunpack.c.l.bf16 %v667
          %v729 = vunpack.c.h.bf16 %v667
          %v730 = vunpack.c.l.bf16 %v668
          %v731 = vunpack.c.h.bf16 %v668
          %v732 = vunpack.c.l.bf16 %v669
          %v733 = vunpack.c.h.bf16 %v669
          %v734 = vunpack.c.l.bf16 %v670
          %v735 = vunpack.c.h.bf16 %v670
          %v736 = vunpack.c.l.bf16 %v671
          %v737 = vunpack.c.h.bf16 %v671
          %v738 = vunpack.c.l.bf16 %v672
          %v739 = vunpack.c.h.bf16 %v672
          %v740 = vunpack.c.l.bf16 %v673
          %v741 = vunpack.c.h.bf16 %v673
          %v742 = vunpack.c.l.bf16 %v674
          %v743 = vunpack.c.h.bf16 %v674
          %v744 = vunpack.c.l.bf16 %v675
          %v745 = vunpack.c.h.bf16 %v675
          %v746 = vunpack.c.l.bf16 %v676
          %v747 = vunpack.c.h.bf16 %v676
          %v748 = vunpack.c.l.bf16 %v677
          %v749 = vunpack.c.h.bf16 %v677
          %v750 = vunpack.c.l.bf16 %v678
          %v751 = vunpack.c.h.bf16 %v678
          %v752 = vunpack.c.l.bf16 %v679
          %v753 = vunpack.c.h.bf16 %v679
          %v754 = vunpack.c.l.bf16 %v680
          %v755 = vunpack.c.h.bf16 %v680
          %v756 = vunpack.c.l.bf16 %v681
          %v757 = vunpack.c.h.bf16 %v681
          %v758 = vunpack.c.l.bf16 %v682
          %v759 = vunpack.c.h.bf16 %v682
          %v760 = vunpack.c.l.bf16 %v683
          %v761 = vunpack.c.h.bf16 %v683
          %v762 = vunpack.c.l.bf16 %v684
          %v763 = vunpack.c.h.bf16 %v684
          %v764 = vunpack.c.l.bf16 %v685
          %v765 = vunpack.c.h.bf16 %v685
          %v766 = vunpack.c.l.bf16 %v686
          %v767 = vunpack.c.h.bf16 %v686
          %v768 = vunpack.c.l.bf16 %v687
          %v769 = vunpack.c.h.bf16 %v687
          %v770 = vunpack.c.l.bf16 %v688
          %v771 = vunpack.c.h.bf16 %v688
          %v772 = vunpack.c.l.bf16 %v689
          %v773 = vunpack.c.h.bf16 %v689
          %v774 = vunpack.c.l.bf16 %v690
          %v775 = vunpack.c.h.bf16 %v690
          %v776 = vunpack.c.l.bf16 %v691
          %v777 = vunpack.c.h.bf16 %v691
          %v778 = vunpack.c.l.bf16 %v692
          %v779 = vunpack.c.h.bf16 %v692
          %v780 = vunpack.c.l.bf16 %v693
          %v781 = vunpack.c.h.bf16 %v693
          %v782 = vunpack.c.l.bf16 %v694
          %v783 = vunpack.c.h.bf16 %v694
          %v784 = vunpack.c.l.bf16 %v695
          %v785 = vunpack.c.h.bf16 %v695
          %v786 = vunpack.c.l.bf16 %v696
          %v787 = vunpack.c.h.bf16 %v696
          %v788 = vunpack.c.l.bf16 %v697
          %v789 = vunpack.c.h.bf16 %v697
          %v790 = vunpack.c.l.bf16 %v698
          %v791 = vunpack.c.h.bf16 %v698
          %v792 = vunpack.c.l.bf16 %v699
          %v793 = vunpack.c.h.bf16 %v699
          %v794 = vunpack.c.l.bf16 %v700
          %v795 = vunpack.c.h.bf16 %v700
          %v796 = vunpack.c.l.bf16 %v701
          %v797 = vunpack.c.h.bf16 %v701
          %v798 = vunpack.c.l.bf16 %v702
          %v799 = vunpack.c.h.bf16 %v702
          %v800 = vunpack.c.l.bf16 %v703
          %v801 = vunpack.c.h.bf16 %v703
          %v802 = vunpack.c.l.bf16 %v704
          %v803 = vunpack.c.h.bf16 %v704
          %v804 = vunpack.c.l.bf16 %v705
          %v805 = vunpack.c.h.bf16 %v705
          %v806 = vadd.f32 %v556, %v706
          %v807 = vadd.f32 %v557, %v707
          %v808 = vadd.f32 %v558, %v708
          %v809 = vadd.f32 %v559, %v709
          %v810 = vadd.f32 %v560, %v710
          %v811 = vadd.f32 %v561, %v711
          %v812 = vadd.f32 %v562, %v712
          %v813 = vadd.f32 %v563, %v713
          %v814 = vadd.f32 %v564, %v714
          %v815 = vadd.f32 %v565, %v715
          %v816 = vadd.f32 %v566, %v716
          %v817 = vadd.f32 %v567, %v717
          %v818 = vadd.f32 %v568, %v718
          %v819 = vadd.f32 %v569, %v719
          %v820 = vadd.f32 %v570, %v720
          %v821 = vadd.f32 %v571, %v721
          %v822 = vadd.f32 %v572, %v722
          %v823 = vadd.f32 %v573, %v723
          %v824 = vadd.f32 %v574, %v724
          %v825 = vadd.f32 %v575, %v725
          %v826 = vadd.f32 %v576, %v726
          %v827 = vadd.f32 %v577, %v727
          %v828 = vadd.f32 %v578, %v728
          %v829 = vadd.f32 %v579, %v729
          %v830 = vadd.f32 %v580, %v730
          %v831 = vadd.f32 %v581, %v731
          %v832 = vadd.f32 %v582, %v732
          %v833 = vadd.f32 %v583, %v733
          %v834 = vadd.f32 %v584, %v734
          %v835 = vadd.f32 %v585, %v735
          %v836 = vadd.f32 %v586, %v736
          %v837 = vadd.f32 %v587, %v737
          %v838 = vadd.f32 %v588, %v738
          %v839 = vadd.f32 %v589, %v739
          %v840 = vadd.f32 %v590, %v740
          %v841 = vadd.f32 %v591, %v741
          %v842 = vadd.f32 %v592, %v742
          %v843 = vadd.f32 %v593, %v743
          %v844 = vadd.f32 %v594, %v744
          %v845 = vadd.f32 %v595, %v745
          %v846 = vadd.f32 %v596, %v746
          %v847 = vadd.f32 %v597, %v747
          %v848 = vadd.f32 %v598, %v748
          %v849 = vadd.f32 %v599, %v749
          %v850 = vadd.f32 %v600, %v750
          %v851 = vadd.f32 %v601, %v751
          %v852 = vadd.f32 %v602, %v752
          %v853 = vadd.f32 %v603, %v753
          %v854 = vadd.f32 %v604, %v754
          %v855 = vadd.f32 %v605, %v755
          %v856 = vadd.f32 %v606, %v756
          %v857 = vadd.f32 %v607, %v757
          %v858 = vadd.f32 %v608, %v758
          %v859 = vadd.f32 %v609, %v759
          %v860 = vadd.f32 %v610, %v760
          %v861 = vadd.f32 %v611, %v761
          %v862 = vadd.f32 %v612, %v762
          %v863 = vadd.f32 %v613, %v763
          %v864 = vadd.f32 %v614, %v764
          %v865 = vadd.f32 %v615, %v765
          %v866 = vadd.f32 %v616, %v766
          %v867 = vadd.f32 %v617, %v767
          %v868 = vadd.f32 %v618, %v768
          %v869 = vadd.f32 %v619, %v769
          %v870 = vadd.f32 %v620, %v770
          %v871 = vadd.f32 %v621, %v771
          %v872 = vadd.f32 %v622, %v772
          %v873 = vadd.f32 %v623, %v773
          %v874 = vadd.f32 %v624, %v774
          %v875 = vadd.f32 %v625, %v775
          %v876 = vadd.f32 %v626, %v776
          %v877 = vadd.f32 %v627, %v777
          %v878 = vadd.f32 %v628, %v778
          %v879 = vadd.f32 %v629, %v779
          %v880 = vadd.f32 %v630, %v780
          %v881 = vadd.f32 %v631, %v781
          %v882 = vadd.f32 %v632, %v782
          %v883 = vadd.f32 %v633, %v783
          %v884 = vadd.f32 %v634, %v784
          %v885 = vadd.f32 %v635, %v785
          %v886 = vadd.f32 %v636, %v786
          %v887 = vadd.f32 %v637, %v787
          %v888 = vadd.f32 %v638, %v788
          %v889 = vadd.f32 %v639, %v789
          %v890 = vadd.f32 %v640, %v790
          %v891 = vadd.f32 %v641, %v791
          %v892 = vadd.f32 %v642, %v792
          %v893 = vadd.f32 %v643, %v793
          %v894 = vadd.f32 %v644, %v794
          %v895 = vadd.f32 %v645, %v795
          %v896 = vadd.f32 %v646, %v796
          %v897 = vadd.f32 %v647, %v797
          %v898 = vadd.f32 %v648, %v798
          %v899 = vadd.f32 %v649, %v799
          %v900 = vadd.f32 %v650, %v800
          %v901 = vadd.f32 %v651, %v801
          %v902 = vadd.f32 %v652, %v802
          %v903 = vadd.f32 %v653, %v803
          %v904 = vadd.f32 %v654, %v804
          %v905 = vadd.f32 %v655, %v805
          %v906 = vadd.f32 %v806, %v807
          %v907 = vadd.f32 %v906, %v808
          %v908 = vadd.f32 %v907, %v809
          %909 = vadd.xlane.f32.xlu0 %v908
          %v910 = vpop.xlane.xlu0 %909
          %v911 = vadd.f32 %v810, %v811
          %v912 = vadd.f32 %v911, %v812
          %v913 = vadd.f32 %v912, %v813
          %914 = vadd.xlane.f32.xlu0 %v913
          %v915 = vpop.xlane.xlu0 %914
          %v916 = vadd.f32 %v814, %v815
          %v917 = vadd.f32 %v916, %v816
          %v918 = vadd.f32 %v917, %v817
          %919 = vadd.xlane.f32.xlu0 %v918
          %v920 = vpop.xlane.xlu0 %919
          %v921 = vadd.f32 %v818, %v819
          %v922 = vadd.f32 %v921, %v820
          %v923 = vadd.f32 %v922, %v821
          %924 = vadd.xlane.f32.xlu0 %v923
          %v925 = vpop.xlane.xlu0 %924
          %v926 = vadd.f32 %v822, %v823
          %v927 = vadd.f32 %v926, %v824
          %v928 = vadd.f32 %v927, %v825
          %929 = vadd.xlane.f32.xlu0 %v928
          %v930 = vpop.xlane.xlu0 %929
          %v931 = vadd.f32 %v826, %v827
          %v932 = vadd.f32 %v931, %v828
          %v933 = vadd.f32 %v932, %v829
          %934 = vadd.xlane.f32.xlu0 %v933
          %v935 = vpop.xlane.xlu0 %934
          %v936 = vadd.f32 %v830, %v831
          %v937 = vadd.f32 %v936, %v832
          %v938 = vadd.f32 %v937, %v833
          %939 = vadd.xlane.f32.xlu0 %v938
          %v940 = vpop.xlane.xlu0 %939
          %v941 = vadd.f32 %v834, %v835
          %v942 = vadd.f32 %v941, %v836
          %v943 = vadd.f32 %v942, %v837
          %944 = vadd.xlane.f32.xlu0 %v943
          %v945 = vpop.xlane.xlu0 %944
          %v946 = vadd.f32 %v838, %v839
          %v947 = vadd.f32 %v946, %v840
          %v948 = vadd.f32 %v947, %v841
          %949 = vadd.xlane.f32.xlu0 %v948
          %v950 = vpop.xlane.xlu0 %949
          %v951 = vadd.f32 %v842, %v843
          %v952 = vadd.f32 %v951, %v844
          %v953 = vadd.f32 %v952, %v845
          %954 = vadd.xlane.f32.xlu0 %v953
          %v955 = vpop.xlane.xlu0 %954
          %v956 = vadd.f32 %v846, %v847
          %v957 = vadd.f32 %v956, %v848
          %v958 = vadd.f32 %v957, %v849
          %959 = vadd.xlane.f32.xlu0 %v958
          %v960 = vpop.xlane.xlu0 %959
          %v961 = vadd.f32 %v850, %v851
          %v962 = vadd.f32 %v961, %v852
          %v963 = vadd.f32 %v962, %v853
          %964 = vadd.xlane.f32.xlu0 %v963
          %v965 = vpop.xlane.xlu0 %964
          %v966 = vadd.f32 %v854, %v855
          %v967 = vadd.f32 %v966, %v856
          %v968 = vadd.f32 %v967, %v857
          %969 = vadd.xlane.f32.xlu0 %v968
          %v970 = vpop.xlane.xlu0 %969
          %v971 = vadd.f32 %v858, %v859
          %v972 = vadd.f32 %v971, %v860
          %v973 = vadd.f32 %v972, %v861
          %974 = vadd.xlane.f32.xlu0 %v973
          %v975 = vpop.xlane.xlu0 %974
          %v976 = vadd.f32 %v862, %v863
          %v977 = vadd.f32 %v976, %v864
          %v978 = vadd.f32 %v977, %v865
          %979 = vadd.xlane.f32.xlu0 %v978
          %v980 = vpop.xlane.xlu0 %979
          %v981 = vadd.f32 %v866, %v867
          %v982 = vadd.f32 %v981, %v868
          %v983 = vadd.f32 %v982, %v869
          %984 = vadd.xlane.f32.xlu0 %v983
          %v985 = vpop.xlane.xlu0 %984
          %v986 = vadd.f32 %v870, %v871
          %v987 = vadd.f32 %v986, %v872
          %v988 = vadd.f32 %v987, %v873
          %989 = vadd.xlane.f32.xlu0 %v988
          %v990 = vpop.xlane.xlu0 %989
          %v991 = vadd.f32 %v874, %v875
          %v992 = vadd.f32 %v991, %v876
          %v993 = vadd.f32 %v992, %v877
          %994 = vadd.xlane.f32.xlu0 %v993
          %v995 = vpop.xlane.xlu0 %994
          %v996 = vadd.f32 %v878, %v879
          %v997 = vadd.f32 %v996, %v880
          %v998 = vadd.f32 %v997, %v881
          %999 = vadd.xlane.f32.xlu0 %v998
          %v1000 = vpop.xlane.xlu0 %999
          %v1001 = vadd.f32 %v882, %v883
          %v1002 = vadd.f32 %v1001, %v884
          %v1003 = vadd.f32 %v1002, %v885
          %1004 = vadd.xlane.f32.xlu0 %v1003
          %v1005 = vpop.xlane.xlu0 %1004
          %v1006 = vadd.f32 %v886, %v887
          %v1007 = vadd.f32 %v1006, %v888
          %v1008 = vadd.f32 %v1007, %v889
          %1009 = vadd.xlane.f32.xlu0 %v1008
          %v1010 = vpop.xlane.xlu0 %1009
          %v1011 = vadd.f32 %v890, %v891
          %v1012 = vadd.f32 %v1011, %v892
          %v1013 = vadd.f32 %v1012, %v893
          %1014 = vadd.xlane.f32.xlu0 %v1013
          %v1015 = vpop.xlane.xlu0 %1014
          %v1016 = vadd.f32 %v894, %v895
          %v1017 = vadd.f32 %v1016, %v896
          %v1018 = vadd.f32 %v1017, %v897
          %1019 = vadd.xlane.f32.xlu0 %v1018
          %v1020 = vpop.xlane.xlu0 %1019
          %v1021 = vadd.f32 %v898, %v899
          %v1022 = vadd.f32 %v1021, %v900
          %v1023 = vadd.f32 %v1022, %v901
          %1024 = vadd.xlane.f32.xlu0 %v1023
          %v1025 = vpop.xlane.xlu0 %1024
          %vm1026 = vcmask 1043456
          %v1027 = vsel %vm1026, %v902, 0.0
          %v1028 = vsel %vm1026, %v903, 0.0
          %v1029 = vadd.f32 %v1027, %v1028
          %v1030 = vsel %vm1026, %v904, 0.0
          %v1031 = vadd.f32 %v1029, %v1030
          %v1032 = vsel %vm1026, %v905, 0.0
          %v1033 = vadd.f32 %v1031, %v1032
          %1034 = vadd.xlane.f32.xlu0 %v1033
          %v1035 = vpop.xlane.xlu0 %1034
          %v1036 = vrcp.pop 512.0
          %v1037 = vmul.f32 %v910, %v1036
          %v1038 = vmul.f32 %v915, %v1036
          %v1039 = vmul.f32 %v920, %v1036
          %v1040 = vmul.f32 %v925, %v1036
          %v1041 = vmul.f32 %v930, %v1036
          %v1042 = vmul.f32 %v935, %v1036
          %v1043 = vmul.f32 %v940, %v1036
          %v1044 = vmul.f32 %v945, %v1036
          %v1045 = vmul.f32 %v950, %v1036
          %v1046 = vmul.f32 %v955, %v1036
          %v1047 = vmul.f32 %v960, %v1036
          %v1048 = vmul.f32 %v965, %v1036
          %v1049 = vmul.f32 %v970, %v1036
          %v1050 = vmul.f32 %v975, %v1036
          %v1051 = vmul.f32 %v980, %v1036
          %v1052 = vmul.f32 %v985, %v1036
          %v1053 = vmul.f32 %v990, %v1036
          %v1054 = vmul.f32 %v995, %v1036
          %v1055 = vmul.f32 %v1000, %v1036
          %v1056 = vmul.f32 %v1005, %v1036
          %v1057 = vmul.f32 %v1010, %v1036
          %v1058 = vmul.f32 %v1015, %v1036
          %v1059 = vmul.f32 %v1020, %v1036
          %v1060 = vmul.f32 %v1025, %v1036
          %v1061 = vmul.f32 %v1035, %v1036
          %v1062 = vsub.f32 %v806, %v1037
          %v1063 = vsub.f32 %v807, %v1037
          %v1064 = vsub.f32 %v808, %v1037
          %v1065 = vsub.f32 %v809, %v1037
          %v1066 = vsub.f32 %v810, %v1038
          %v1067 = vsub.f32 %v811, %v1038
          %v1068 = vsub.f32 %v812, %v1038
          %v1069 = vsub.f32 %v813, %v1038
          %v1070 = vsub.f32 %v814, %v1039
          %v1071 = vsub.f32 %v815, %v1039
          %v1072 = vsub.f32 %v816, %v1039
          %v1073 = vsub.f32 %v817, %v1039
          %v1074 = vsub.f32 %v818, %v1040
          %v1075 = vsub.f32 %v819, %v1040
          %v1076 = vsub.f32 %v820, %v1040
          %v1077 = vsub.f32 %v821, %v1040
          %v1078 = vsub.f32 %v822, %v1041
          %v1079 = vsub.f32 %v823, %v1041
          %v1080 = vsub.f32 %v824, %v1041
          %v1081 = vsub.f32 %v825, %v1041
          %v1082 = vsub.f32 %v826, %v1042
          %v1083 = vsub.f32 %v827, %v1042
          %v1084 = vsub.f32 %v828, %v1042
          %v1085 = vsub.f32 %v829, %v1042
          %v1086 = vsub.f32 %v830, %v1043
          %v1087 = vsub.f32 %v831, %v1043
          %v1088 = vsub.f32 %v832, %v1043
          %v1089 = vsub.f32 %v833, %v1043
          %v1090 = vsub.f32 %v834, %v1044
          %v1091 = vsub.f32 %v835, %v1044
          %v1092 = vsub.f32 %v836, %v1044
          %v1093 = vsub.f32 %v837, %v1044
          %v1094 = vsub.f32 %v838, %v1045
          %v1095 = vsub.f32 %v839, %v1045
          %v1096 = vsub.f32 %v840, %v1045
          %v1097 = vsub.f32 %v841, %v1045
          %v1098 = vsub.f32 %v842, %v1046
          %v1099 = vsub.f32 %v843, %v1046
          %v1100 = vsub.f32 %v844, %v1046
          %v1101 = vsub.f32 %v845, %v1046
          %v1102 = vsub.f32 %v846, %v1047
          %v1103 = vsub.f32 %v847, %v1047
          %v1104 = vsub.f32 %v848, %v1047
          %v1105 = vsub.f32 %v849, %v1047
          %v1106 = vsub.f32 %v850, %v1048
          %v1107 = vsub.f32 %v851, %v1048
          %v1108 = vsub.f32 %v852, %v1048
          %v1109 = vsub.f32 %v853, %v1048
          %v1110 = vsub.f32 %v854, %v1049
          %v1111 = vsub.f32 %v855, %v1049
          %v1112 = vsub.f32 %v856, %v1049
          %v1113 = vsub.f32 %v857, %v1049
          %v1114 = vsub.f32 %v858, %v1050
          %v1115 = vsub.f32 %v859, %v1050
          %v1116 = vsub.f32 %v860, %v1050
          %v1117 = vsub.f32 %v861, %v1050
          %v1118 = vsub.f32 %v862, %v1051
          %v1119 = vsub.f32 %v863, %v1051
          %v1120 = vsub.f32 %v864, %v1051
          %v1121 = vsub.f32 %v865, %v1051
          %v1122 = vsub.f32 %v866, %v1052
          %v1123 = vsub.f32 %v867, %v1052
          %v1124 = vsub.f32 %v868, %v1052
          %v1125 = vsub.f32 %v869, %v1052
          %v1126 = vsub.f32 %v870, %v1053
          %v1127 = vsub.f32 %v871, %v1053
          %v1128 = vsub.f32 %v872, %v1053
          %v1129 = vsub.f32 %v873, %v1053
          %v1130 = vsub.f32 %v874, %v1054
          %v1131 = vsub.f32 %v875, %v1054
          %v1132 = vsub.f32 %v876, %v1054
          %v1133 = vsub.f32 %v877, %v1054
          %v1134 = vsub.f32 %v878, %v1055
          %v1135 = vsub.f32 %v879, %v1055
          %v1136 = vsub.f32 %v880, %v1055
          %v1137 = vsub.f32 %v881, %v1055
          %v1138 = vsub.f32 %v882, %v1056
          %v1139 = vsub.f32 %v883, %v1056
          %v1140 = vsub.f32 %v884, %v1056
          %v1141 = vsub.f32 %v885, %v1056
          %v1142 = vsub.f32 %v886, %v1057
          %v1143 = vsub.f32 %v887, %v1057
          %v1144 = vsub.f32 %v888, %v1057
          %v1145 = vsub.f32 %v889, %v1057
          %v1146 = vsub.f32 %v890, %v1058
          %v1147 = vsub.f32 %v891, %v1058
          %v1148 = vsub.f32 %v892, %v1058
          %v1149 = vsub.f32 %v893, %v1058
          %v1150 = vsub.f32 %v894, %v1059
          %v1151 = vsub.f32 %v895, %v1059
          %v1152 = vsub.f32 %v896, %v1059
          %v1153 = vsub.f32 %v897, %v1059
          %v1154 = vsub.f32 %v898, %v1060
          %v1155 = vsub.f32 %v899, %v1060
          %v1156 = vsub.f32 %v900, %v1060
          %v1157 = vsub.f32 %v901, %v1060
          %v1158 = vsub.f32 %v902, %v1061
          %v1159 = vsub.f32 %v903, %v1061
          %v1160 = vsub.f32 %v904, %v1061
          %v1161 = vsub.f32 %v905, %v1061
          %v1162 = vmul.f32 %v1062, %v1062
          %v1163 = vmul.f32 %v1063, %v1063
          %v1164 = vmul.f32 %v1064, %v1064
          %v1165 = vmul.f32 %v1065, %v1065
          %v1166 = vmul.f32 %v1066, %v1066
          %v1167 = vmul.f32 %v1067, %v1067
          %v1168 = vmul.f32 %v1068, %v1068
          %v1169 = vmul.f32 %v1069, %v1069
          %v1170 = vmul.f32 %v1070, %v1070
          %v1171 = vmul.f32 %v1071, %v1071
          %v1172 = vmul.f32 %v1072, %v1072
          %v1173 = vmul.f32 %v1073, %v1073
          %v1174 = vmul.f32 %v1074, %v1074
          %v1175 = vmul.f32 %v1075, %v1075
          %v1176 = vmul.f32 %v1076, %v1076
          %v1177 = vmul.f32 %v1077, %v1077
          %v1178 = vmul.f32 %v1078, %v1078
          %v1179 = vmul.f32 %v1079, %v1079
          %v1180 = vmul.f32 %v1080, %v1080
          %v1181 = vmul.f32 %v1081, %v1081
          %v1182 = vmul.f32 %v1082, %v1082
          %v1183 = vmul.f32 %v1083, %v1083
          %v1184 = vmul.f32 %v1084, %v1084
          %v1185 = vmul.f32 %v1085, %v1085
          %v1186 = vmul.f32 %v1086, %v1086
          %v1187 = vmul.f32 %v1087, %v1087
          %v1188 = vmul.f32 %v1088, %v1088
          %v1189 = vmul.f32 %v1089, %v1089
          %v1190 = vmul.f32 %v1090, %v1090
          %v1191 = vmul.f32 %v1091, %v1091
          %v1192 = vmul.f32 %v1092, %v1092
          %v1193 = vmul.f32 %v1093, %v1093
          %v1194 = vmul.f32 %v1094, %v1094
          %v1195 = vmul.f32 %v1095, %v1095
          %v1196 = vmul.f32 %v1096, %v1096
          %v1197 = vmul.f32 %v1097, %v1097
          %v1198 = vmul.f32 %v1098, %v1098
          %v1199 = vmul.f32 %v1099, %v1099
          %v1200 = vmul.f32 %v1100, %v1100
          %v1201 = vmul.f32 %v1101, %v1101
          %v1202 = vmul.f32 %v1102, %v1102
          %v1203 = vmul.f32 %v1103, %v1103
          %v1204 = vmul.f32 %v1104, %v1104
          %v1205 = vmul.f32 %v1105, %v1105
          %v1206 = vmul.f32 %v1106, %v1106
          %v1207 = vmul.f32 %v1107, %v1107
          %v1208 = vmul.f32 %v1108, %v1108
          %v1209 = vmul.f32 %v1109, %v1109
          %v1210 = vmul.f32 %v1110, %v1110
          %v1211 = vmul.f32 %v1111, %v1111
          %v1212 = vmul.f32 %v1112, %v1112
          %v1213 = vmul.f32 %v1113, %v1113
          %v1214 = vmul.f32 %v1114, %v1114
          %v1215 = vmul.f32 %v1115, %v1115
          %v1216 = vmul.f32 %v1116, %v1116
          %v1217 = vmul.f32 %v1117, %v1117
          %v1218 = vmul.f32 %v1118, %v1118
          %v1219 = vmul.f32 %v1119, %v1119
          %v1220 = vmul.f32 %v1120, %v1120
          %v1221 = vmul.f32 %v1121, %v1121
          %v1222 = vmul.f32 %v1122, %v1122
          %v1223 = vmul.f32 %v1123, %v1123
          %v1224 = vmul.f32 %v1124, %v1124
          %v1225 = vmul.f32 %v1125, %v1125
          %v1226 = vmul.f32 %v1126, %v1126
          %v1227 = vmul.f32 %v1127, %v1127
          %v1228 = vmul.f32 %v1128, %v1128
          %v1229 = vmul.f32 %v1129, %v1129
          %v1230 = vmul.f32 %v1130, %v1130
          %v1231 = vmul.f32 %v1131, %v1131
          %v1232 = vmul.f32 %v1132, %v1132
          %v1233 = vmul.f32 %v1133, %v1133
          %v1234 = vmul.f32 %v1134, %v1134
          %v1235 = vmul.f32 %v1135, %v1135
          %v1236 = vmul.f32 %v1136, %v1136
          %v1237 = vmul.f32 %v1137, %v1137
          %v1238 = vmul.f32 %v1138, %v1138
          %v1239 = vmul.f32 %v1139, %v1139
          %v1240 = vmul.f32 %v1140, %v1140
          %v1241 = vmul.f32 %v1141, %v1141
          %v1242 = vmul.f32 %v1142, %v1142
          %v1243 = vmul.f32 %v1143, %v1143
          %v1244 = vmul.f32 %v1144, %v1144
          %v1245 = vmul.f32 %v1145, %v1145
          %v1246 = vmul.f32 %v1146, %v1146
          %v1247 = vmul.f32 %v1147, %v1147
          %v1248 = vmul.f32 %v1148, %v1148
          %v1249 = vmul.f32 %v1149, %v1149
          %v1250 = vmul.f32 %v1150, %v1150
          %v1251 = vmul.f32 %v1151, %v1151
          %v1252 = vmul.f32 %v1152, %v1152
          %v1253 = vmul.f32 %v1153, %v1153
          %v1254 = vmul.f32 %v1154, %v1154
          %v1255 = vmul.f32 %v1155, %v1155
          %v1256 = vmul.f32 %v1156, %v1156
          %v1257 = vmul.f32 %v1157, %v1157
          %v1258 = vmul.f32 %v1158, %v1158
          %v1259 = vmul.f32 %v1159, %v1159
          %v1260 = vmul.f32 %v1160, %v1160
          %v1261 = vmul.f32 %v1161, %v1161
          %v1262 = vadd.f32 %v1162, %v1163
          %v1263 = vadd.f32 %v1262, %v1164
          %v1264 = vadd.f32 %v1263, %v1165
          %1265 = vadd.xlane.f32.xlu0 %v1264
          %v1266 = vpop.xlane.xlu0 %1265
          %v1267 = vadd.f32 %v1166, %v1167
          %v1268 = vadd.f32 %v1267, %v1168
          %v1269 = vadd.f32 %v1268, %v1169
          %1270 = vadd.xlane.f32.xlu0 %v1269
          %v1271 = vpop.xlane.xlu0 %1270
          %v1272 = vadd.f32 %v1170, %v1171
          %v1273 = vadd.f32 %v1272, %v1172
          %v1274 = vadd.f32 %v1273, %v1173
          %1275 = vadd.xlane.f32.xlu0 %v1274
          %v1276 = vpop.xlane.xlu0 %1275
          %v1277 = vadd.f32 %v1174, %v1175
          %v1278 = vadd.f32 %v1277, %v1176
          %v1279 = vadd.f32 %v1278, %v1177
          %1280 = vadd.xlane.f32.xlu0 %v1279
          %v1281 = vpop.xlane.xlu0 %1280
          %v1282 = vadd.f32 %v1178, %v1179
          %v1283 = vadd.f32 %v1282, %v1180
          %v1284 = vadd.f32 %v1283, %v1181
          %1285 = vadd.xlane.f32.xlu0 %v1284
          %v1286 = vpop.xlane.xlu0 %1285
          %v1287 = vadd.f32 %v1182, %v1183
          %v1288 = vadd.f32 %v1287, %v1184
          %v1289 = vadd.f32 %v1288, %v1185
          %1290 = vadd.xlane.f32.xlu0 %v1289
          %v1291 = vpop.xlane.xlu0 %1290
          %v1292 = vadd.f32 %v1186, %v1187
          %v1293 = vadd.f32 %v1292, %v1188
          %v1294 = vadd.f32 %v1293, %v1189
          %1295 = vadd.xlane.f32.xlu0 %v1294
          %v1296 = vpop.xlane.xlu0 %1295
          %v1297 = vadd.f32 %v1190, %v1191
          %v1298 = vadd.f32 %v1297, %v1192
          %v1299 = vadd.f32 %v1298, %v1193
          %1300 = vadd.xlane.f32.xlu0 %v1299
          %v1301 = vpop.xlane.xlu0 %1300
          %v1302 = vadd.f32 %v1194, %v1195
          %v1303 = vadd.f32 %v1302, %v1196
          %v1304 = vadd.f32 %v1303, %v1197
          %1305 = vadd.xlane.f32.xlu0 %v1304
          %v1306 = vpop.xlane.xlu0 %1305
          %v1307 = vadd.f32 %v1198, %v1199
          %v1308 = vadd.f32 %v1307, %v1200
          %v1309 = vadd.f32 %v1308, %v1201
          %1310 = vadd.xlane.f32.xlu0 %v1309
          %v1311 = vpop.xlane.xlu0 %1310
          %v1312 = vadd.f32 %v1202, %v1203
          %v1313 = vadd.f32 %v1312, %v1204
          %v1314 = vadd.f32 %v1313, %v1205
          %1315 = vadd.xlane.f32.xlu0 %v1314
          %v1316 = vpop.xlane.xlu0 %1315
          %v1317 = vadd.f32 %v1206, %v1207
          %v1318 = vadd.f32 %v1317, %v1208
          %v1319 = vadd.f32 %v1318, %v1209
          %1320 = vadd.xlane.f32.xlu0 %v1319
          %v1321 = vpop.xlane.xlu0 %1320
          %v1322 = vadd.f32 %v1210, %v1211
          %v1323 = vadd.f32 %v1322, %v1212
          %v1324 = vadd.f32 %v1323, %v1213
          %1325 = vadd.xlane.f32.xlu0 %v1324
          %v1326 = vpop.xlane.xlu0 %1325
          %v1327 = vadd.f32 %v1214, %v1215
          %v1328 = vadd.f32 %v1327, %v1216
          %v1329 = vadd.f32 %v1328, %v1217
          %1330 = vadd.xlane.f32.xlu0 %v1329
          %v1331 = vpop.xlane.xlu0 %1330
          %v1332 = vadd.f32 %v1218, %v1219
          %v1333 = vadd.f32 %v1332, %v1220
          %v1334 = vadd.f32 %v1333, %v1221
          %1335 = vadd.xlane.f32.xlu0 %v1334
          %v1336 = vpop.xlane.xlu0 %1335
          %v1337 = vadd.f32 %v1222, %v1223
          %v1338 = vadd.f32 %v1337, %v1224
          %v1339 = vadd.f32 %v1338, %v1225
          %1340 = vadd.xlane.f32.xlu0 %v1339
          %v1341 = vpop.xlane.xlu0 %1340
          %v1342 = vadd.f32 %v1226, %v1227
          %v1343 = vadd.f32 %v1342, %v1228
          %v1344 = vadd.f32 %v1343, %v1229
          %1345 = vadd.xlane.f32.xlu0 %v1344
          %v1346 = vpop.xlane.xlu0 %1345
          %v1347 = vadd.f32 %v1230, %v1231
          %v1348 = vadd.f32 %v1347, %v1232
          %v1349 = vadd.f32 %v1348, %v1233
          %1350 = vadd.xlane.f32.xlu0 %v1349
          %v1351 = vpop.xlane.xlu0 %1350
          %v1352 = vadd.f32 %v1234, %v1235
          %v1353 = vadd.f32 %v1352, %v1236
          %v1354 = vadd.f32 %v1353, %v1237
          %1355 = vadd.xlane.f32.xlu0 %v1354
          %v1356 = vpop.xlane.xlu0 %1355
          %v1357 = vadd.f32 %v1238, %v1239
          %v1358 = vadd.f32 %v1357, %v1240
          %v1359 = vadd.f32 %v1358, %v1241
          %1360 = vadd.xlane.f32.xlu0 %v1359
          %v1361 = vpop.xlane.xlu0 %1360
          %v1362 = vadd.f32 %v1242, %v1243
          %v1363 = vadd.f32 %v1362, %v1244
          %v1364 = vadd.f32 %v1363, %v1245
          %1365 = vadd.xlane.f32.xlu0 %v1364
          %v1366 = vpop.xlane.xlu0 %1365
          %v1367 = vadd.f32 %v1246, %v1247
          %v1368 = vadd.f32 %v1367, %v1248
          %v1369 = vadd.f32 %v1368, %v1249
          %1370 = vadd.xlane.f32.xlu0 %v1369
          %v1371 = vpop.xlane.xlu0 %1370
          %v1372 = vadd.f32 %v1250, %v1251
          %v1373 = vadd.f32 %v1372, %v1252
          %v1374 = vadd.f32 %v1373, %v1253
          %1375 = vadd.xlane.f32.xlu0 %v1374
          %v1376 = vpop.xlane.xlu0 %1375
          %v1377 = vadd.f32 %v1254, %v1255
          %v1378 = vadd.f32 %v1377, %v1256
          %v1379 = vadd.f32 %v1378, %v1257
          %1380 = vadd.xlane.f32.xlu0 %v1379
          %v1381 = vpop.xlane.xlu0 %1380
          %v1382 = vsel %vm1026, %v1258, 0.0
          %v1383 = vsel %vm1026, %v1259, 0.0
          %v1384 = vadd.f32 %v1382, %v1383
          %v1385 = vsel %vm1026, %v1260, 0.0
          %v1386 = vadd.f32 %v1384, %v1385
          %v1387 = vsel %vm1026, %v1261, 0.0
          %v1388 = vadd.f32 %v1386, %v1387
          %1389 = vadd.xlane.f32.xlu0 %v1388
          %v1390 = vpop.xlane.xlu0 %1389
          %v1391 = vmul.f32 %v1266, %v1036
          %v1392 = vmul.f32 %v1271, %v1036
          %v1393 = vmul.f32 %v1276, %v1036
          %v1394 = vmul.f32 %v1281, %v1036
          %v1395 = vmul.f32 %v1286, %v1036
          %v1396 = vmul.f32 %v1291, %v1036
          %v1397 = vmul.f32 %v1296, %v1036
          %v1398 = vmul.f32 %v1301, %v1036
          %v1399 = vmul.f32 %v1306, %v1036
          %v1400 = vmul.f32 %v1311, %v1036
          %v1401 = vmul.f32 %v1316, %v1036
          %v1402 = vmul.f32 %v1321, %v1036
          %v1403 = vmul.f32 %v1326, %v1036
          %v1404 = vmul.f32 %v1331, %v1036
          %v1405 = vmul.f32 %v1336, %v1036
          %v1406 = vmul.f32 %v1341, %v1036
          %v1407 = vmul.f32 %v1346, %v1036
          %v1408 = vmul.f32 %v1351, %v1036
          %v1409 = vmul.f32 %v1356, %v1036
          %v1410 = vmul.f32 %v1361, %v1036
          %v1411 = vmul.f32 %v1366, %v1036
          %v1412 = vmul.f32 %v1371, %v1036
          %v1413 = vmul.f32 %v1376, %v1036
          %v1414 = vmul.f32 %v1381, %v1036
          %v1415 = vmul.f32 %v1390, %v1036
          %v1416 = vadd.f32 %v1391, 1e-05
          %v1417 = vadd.f32 %v1392, 1e-05
          %v1418 = vadd.f32 %v1393, 1e-05
          %v1419 = vadd.f32 %v1394, 1e-05
          %v1420 = vadd.f32 %v1395, 1e-05
          %v1421 = vadd.f32 %v1396, 1e-05
          %v1422 = vadd.f32 %v1397, 1e-05
          %v1423 = vadd.f32 %v1398, 1e-05
          %v1424 = vadd.f32 %v1399, 1e-05
          %v1425 = vadd.f32 %v1400, 1e-05
          %v1426 = vadd.f32 %v1401, 1e-05
          %v1427 = vadd.f32 %v1402, 1e-05
          %v1428 = vadd.f32 %v1403, 1e-05
          %v1429 = vadd.f32 %v1404, 1e-05
          %v1430 = vadd.f32 %v1405, 1e-05
          %v1431 = vadd.f32 %v1406, 1e-05
          %v1432 = vadd.f32 %v1407, 1e-05
          %v1433 = vadd.f32 %v1408, 1e-05
          %v1434 = vadd.f32 %v1409, 1e-05
          %v1435 = vadd.f32 %v1410, 1e-05
          %v1436 = vadd.f32 %v1411, 1e-05
          %v1437 = vadd.f32 %v1412, 1e-05
          %v1438 = vadd.f32 %v1413, 1e-05
          %v1439 = vadd.f32 %v1414, 1e-05
          %v1440 = vadd.f32 %v1415, 1e-05
          %v1441 = vrsqrt.pop %v1416
          %v1442 = vrsqrt.pop %v1417
          %v1443 = vrsqrt.pop %v1418
          %v1444 = vrsqrt.pop %v1419
          %v1445 = vrsqrt.pop %v1420
          %v1446 = vrsqrt.pop %v1421
          %v1447 = vrsqrt.pop %v1422
          %v1448 = vrsqrt.pop %v1423
          %v1449 = vrsqrt.pop %v1424
          %v1450 = vrsqrt.pop %v1425
          %v1451 = vrsqrt.pop %v1426
          %v1452 = vrsqrt.pop %v1427
          %v1453 = vrsqrt.pop %v1428
          %v1454 = vrsqrt.pop %v1429
          %v1455 = vrsqrt.pop %v1430
          %v1456 = vrsqrt.pop %v1431
          %v1457 = vrsqrt.pop %v1432
          %v1458 = vrsqrt.pop %v1433
          %v1459 = vrsqrt.pop %v1434
          %v1460 = vrsqrt.pop %v1435
          %v1461 = vrsqrt.pop %v1436
          %v1462 = vrsqrt.pop %v1437
          %v1463 = vrsqrt.pop %v1438
          %v1464 = vrsqrt.pop %v1439
          %v1465 = vrsqrt.pop %v1440
          %v1466 = vmul.f32 %v1062, %v1441
          %v1467 = vmul.f32 %v1063, %v1441
          %v1468 = vmul.f32 %v1064, %v1441
          %v1469 = vmul.f32 %v1065, %v1441
          %v1470 = vmul.f32 %v1066, %v1442
          %v1471 = vmul.f32 %v1067, %v1442
          %v1472 = vmul.f32 %v1068, %v1442
          %v1473 = vmul.f32 %v1069, %v1442
          %v1474 = vmul.f32 %v1070, %v1443
          %v1475 = vmul.f32 %v1071, %v1443
          %v1476 = vmul.f32 %v1072, %v1443
          %v1477 = vmul.f32 %v1073, %v1443
          %v1478 = vmul.f32 %v1074, %v1444
          %v1479 = vmul.f32 %v1075, %v1444
          %v1480 = vmul.f32 %v1076, %v1444
          %v1481 = vmul.f32 %v1077, %v1444
          %v1482 = vmul.f32 %v1078, %v1445
          %v1483 = vmul.f32 %v1079, %v1445
          %v1484 = vmul.f32 %v1080, %v1445
          %v1485 = vmul.f32 %v1081, %v1445
          %v1486 = vmul.f32 %v1082, %v1446
          %v1487 = vmul.f32 %v1083, %v1446
          %v1488 = vmul.f32 %v1084, %v1446
          %v1489 = vmul.f32 %v1085, %v1446
          %v1490 = vmul.f32 %v1086, %v1447
          %v1491 = vmul.f32 %v1087, %v1447
          %v1492 = vmul.f32 %v1088, %v1447
          %v1493 = vmul.f32 %v1089, %v1447
          %v1494 = vmul.f32 %v1090, %v1448
          %v1495 = vmul.f32 %v1091, %v1448
          %v1496 = vmul.f32 %v1092, %v1448
          %v1497 = vmul.f32 %v1093, %v1448
          %v1498 = vmul.f32 %v1094, %v1449
          %v1499 = vmul.f32 %v1095, %v1449
          %v1500 = vmul.f32 %v1096, %v1449
          %v1501 = vmul.f32 %v1097, %v1449
          %v1502 = vmul.f32 %v1098, %v1450
          %v1503 = vmul.f32 %v1099, %v1450
          %v1504 = vmul.f32 %v1100, %v1450
          %v1505 = vmul.f32 %v1101, %v1450
          %v1506 = vmul.f32 %v1102, %v1451
          %v1507 = vmul.f32 %v1103, %v1451
          %v1508 = vmul.f32 %v1104, %v1451
          %v1509 = vmul.f32 %v1105, %v1451
          %v1510 = vmul.f32 %v1106, %v1452
          %v1511 = vmul.f32 %v1107, %v1452
          %v1512 = vmul.f32 %v1108, %v1452
          %v1513 = vmul.f32 %v1109, %v1452
          %v1514 = vmul.f32 %v1110, %v1453
          %v1515 = vmul.f32 %v1111, %v1453
          %v1516 = vmul.f32 %v1112, %v1453
          %v1517 = vmul.f32 %v1113, %v1453
          %v1518 = vmul.f32 %v1114, %v1454
          %v1519 = vmul.f32 %v1115, %v1454
          %v1520 = vmul.f32 %v1116, %v1454
          %v1521 = vmul.f32 %v1117, %v1454
          %v1522 = vmul.f32 %v1118, %v1455
          %v1523 = vmul.f32 %v1119, %v1455
          %v1524 = vmul.f32 %v1120, %v1455
          %v1525 = vmul.f32 %v1121, %v1455
          %v1526 = vmul.f32 %v1122, %v1456
          %v1527 = vmul.f32 %v1123, %v1456
          %v1528 = vmul.f32 %v1124, %v1456
          %v1529 = vmul.f32 %v1125, %v1456
          %v1530 = vmul.f32 %v1126, %v1457
          %v1531 = vmul.f32 %v1127, %v1457
          %v1532 = vmul.f32 %v1128, %v1457
          %v1533 = vmul.f32 %v1129, %v1457
          %v1534 = vmul.f32 %v1130, %v1458
          %v1535 = vmul.f32 %v1131, %v1458
          %v1536 = vmul.f32 %v1132, %v1458
          %v1537 = vmul.f32 %v1133, %v1458
          %v1538 = vmul.f32 %v1134, %v1459
          %v1539 = vmul.f32 %v1135, %v1459
          %v1540 = vmul.f32 %v1136, %v1459
          %v1541 = vmul.f32 %v1137, %v1459
          %v1542 = vmul.f32 %v1138, %v1460
          %v1543 = vmul.f32 %v1139, %v1460
          %v1544 = vmul.f32 %v1140, %v1460
          %v1545 = vmul.f32 %v1141, %v1460
          %v1546 = vmul.f32 %v1142, %v1461
          %v1547 = vmul.f32 %v1143, %v1461
          %v1548 = vmul.f32 %v1144, %v1461
          %v1549 = vmul.f32 %v1145, %v1461
          %v1550 = vmul.f32 %v1146, %v1462
          %v1551 = vmul.f32 %v1147, %v1462
          %v1552 = vmul.f32 %v1148, %v1462
          %v1553 = vmul.f32 %v1149, %v1462
          %v1554 = vmul.f32 %v1150, %v1463
          %v1555 = vmul.f32 %v1151, %v1463
          %v1556 = vmul.f32 %v1152, %v1463
          %v1557 = vmul.f32 %v1153, %v1463
          %v1558 = vmul.f32 %v1154, %v1464
          %v1559 = vmul.f32 %v1155, %v1464
          %v1560 = vmul.f32 %v1156, %v1464
          %v1561 = vmul.f32 %v1157, %v1464
          %v1562 = vmul.f32 %v1158, %v1465
          %v1563 = vmul.f32 %v1159, %v1465
          %v1564 = vmul.f32 %v1160, %v1465
          %v1565 = vmul.f32 %v1161, %v1465
          %v1566 = vld [vmem:[#allocation7] sm:$0xf]
          %v1568 = vlaneseq
          %v1569 = vshrl.u32 %v1568, 7
          %v1570 = vsub.s32 0, %v1569
          %v1571 = vrot.slane %v1566, %v1570
          %v1572 = vlaneseq
          %v1573 = vshrl.u32 %v1572, 7
          %v1574 = vsub.s32 1, %v1573
          %v1575 = vrot.slane %v1566, %v1574
          %v1576 = vlaneseq
          %v1577 = vshrl.u32 %v1576, 7
          %v1578 = vsub.s32 2, %v1577
          %v1579 = vrot.slane %v1566, %v1578
          %v1580 = vlaneseq
          %v1581 = vshrl.u32 %v1580, 7
          %v1582 = vsub.s32 3, %v1581
          %v1583 = vrot.slane %v1566, %v1582
          %v1588 = vmul.f32 %v1466, %v1571
          %v1589 = vmul.f32 %v1467, %v1575
          %v1590 = vmul.f32 %v1468, %v1579
          %v1591 = vmul.f32 %v1469, %v1583
          %v1592 = vmul.f32 %v1470, %v1571
          %v1593 = vmul.f32 %v1471, %v1575
          %v1594 = vmul.f32 %v1472, %v1579
          %v1595 = vmul.f32 %v1473, %v1583
          %v1596 = vmul.f32 %v1474, %v1571
          %v1597 = vmul.f32 %v1475, %v1575
          %v1598 = vmul.f32 %v1476, %v1579
          %v1599 = vmul.f32 %v1477, %v1583
          %v1600 = vmul.f32 %v1478, %v1571
          %v1601 = vmul.f32 %v1479, %v1575
          %v1602 = vmul.f32 %v1480, %v1579
          %v1603 = vmul.f32 %v1481, %v1583
          %v1604 = vmul.f32 %v1482, %v1571
          %v1605 = vmul.f32 %v1483, %v1575
          %v1606 = vmul.f32 %v1484, %v1579
          %v1607 = vmul.f32 %v1485, %v1583
          %v1608 = vmul.f32 %v1486, %v1571
          %v1609 = vmul.f32 %v1487, %v1575
          %v1610 = vmul.f32 %v1488, %v1579
          %v1611 = vmul.f32 %v1489, %v1583
          %v1612 = vmul.f32 %v1490, %v1571
          %v1613 = vmul.f32 %v1491, %v1575
          %v1614 = vmul.f32 %v1492, %v1579
          %v1615 = vmul.f32 %v1493, %v1583
          %v1616 = vmul.f32 %v1494, %v1571
          %v1617 = vmul.f32 %v1495, %v1575
          %v1618 = vmul.f32 %v1496, %v1579
          %v1619 = vmul.f32 %v1497, %v1583
          %v1620 = vmul.f32 %v1498, %v1571
          %v1621 = vmul.f32 %v1499, %v1575
          %v1622 = vmul.f32 %v1500, %v1579
          %v1623 = vmul.f32 %v1501, %v1583
          %v1624 = vmul.f32 %v1502, %v1571
          %v1625 = vmul.f32 %v1503, %v1575
          %v1626 = vmul.f32 %v1504, %v1579
          %v1627 = vmul.f32 %v1505, %v1583
          %v1628 = vmul.f32 %v1506, %v1571
          %v1629 = vmul.f32 %v1507, %v1575
          %v1630 = vmul.f32 %v1508, %v1579
          %v1631 = vmul.f32 %v1509, %v1583
          %v1632 = vmul.f32 %v1510, %v1571
          %v1633 = vmul.f32 %v1511, %v1575
          %v1634 = vmul.f32 %v1512, %v1579
          %v1635 = vmul.f32 %v1513, %v1583
          %v1636 = vmul.f32 %v1514, %v1571
          %v1637 = vmul.f32 %v1515, %v1575
          %v1638 = vmul.f32 %v1516, %v1579
          %v1639 = vmul.f32 %v1517, %v1583
          %v1640 = vmul.f32 %v1518, %v1571
          %v1641 = vmul.f32 %v1519, %v1575
          %v1642 = vmul.f32 %v1520, %v1579
          %v1643 = vmul.f32 %v1521, %v1583
          %v1644 = vmul.f32 %v1522, %v1571
          %v1645 = vmul.f32 %v1523, %v1575
          %v1646 = vmul.f32 %v1524, %v1579
          %v1647 = vmul.f32 %v1525, %v1583
          %v1648 = vmul.f32 %v1526, %v1571
          %v1649 = vmul.f32 %v1527, %v1575
          %v1650 = vmul.f32 %v1528, %v1579
          %v1651 = vmul.f32 %v1529, %v1583
          %v1652 = vmul.f32 %v1530, %v1571
          %v1653 = vmul.f32 %v1531, %v1575
          %v1654 = vmul.f32 %v1532, %v1579
          %v1655 = vmul.f32 %v1533, %v1583
          %v1656 = vmul.f32 %v1534, %v1571
          %v1657 = vmul.f32 %v1535, %v1575
          %v1658 = vmul.f32 %v1536, %v1579
          %v1659 = vmul.f32 %v1537, %v1583
          %v1660 = vmul.f32 %v1538, %v1571
          %v1661 = vmul.f32 %v1539, %v1575
          %v1662 = vmul.f32 %v1540, %v1579
          %v1663 = vmul.f32 %v1541, %v1583
          %v1664 = vmul.f32 %v1542, %v1571
          %v1665 = vmul.f32 %v1543, %v1575
          %v1666 = vmul.f32 %v1544, %v1579
          %v1667 = vmul.f32 %v1545, %v1583
          %v1668 = vmul.f32 %v1546, %v1571
          %v1669 = vmul.f32 %v1547, %v1575
          %v1670 = vmul.f32 %v1548, %v1579
          %v1671 = vmul.f32 %v1549, %v1583
          %v1672 = vmul.f32 %v1550, %v1571
          %v1673 = vmul.f32 %v1551, %v1575
          %v1674 = vmul.f32 %v1552, %v1579
          %v1675 = vmul.f32 %v1553, %v1583
          %v1676 = vmul.f32 %v1554, %v1571
          %v1677 = vmul.f32 %v1555, %v1575
          %v1678 = vmul.f32 %v1556, %v1579
          %v1679 = vmul.f32 %v1557, %v1583
          %v1680 = vmul.f32 %v1558, %v1571
          %v1681 = vmul.f32 %v1559, %v1575
          %v1682 = vmul.f32 %v1560, %v1579
          %v1683 = vmul.f32 %v1561, %v1583
          %v1684 = vmul.f32 %v1562, %v1571
          %v1685 = vmul.f32 %v1563, %v1575
          %v1686 = vmul.f32 %v1564, %v1579
          %v1687 = vmul.f32 %v1565, %v1583
          %v1688 = vld [vmem:[#allocation8] sm:$0xf]
          %v1690 = vlaneseq
          %v1691 = vshrl.u32 %v1690, 7
          %v1692 = vsub.s32 0, %v1691
          %v1693 = vrot.slane %v1688, %v1692
          %v1694 = vlaneseq
          %v1695 = vshrl.u32 %v1694, 7
          %v1696 = vsub.s32 1, %v1695
          %v1697 = vrot.slane %v1688, %v1696
          %v1698 = vlaneseq
          %v1699 = vshrl.u32 %v1698, 7
          %v1700 = vsub.s32 2, %v1699
          %v1701 = vrot.slane %v1688, %v1700
          %v1702 = vlaneseq
          %v1703 = vshrl.u32 %v1702, 7
          %v1704 = vsub.s32 3, %v1703
          %v1705 = vrot.slane %v1688, %v1704
          %v1710 = vadd.f32 %v1588, %v1693
          %v1711 = vadd.f32 %v1589, %v1697
          %v1712 = vadd.f32 %v1590, %v1701
          %v1713 = vadd.f32 %v1591, %v1705
          %v1714 = vadd.f32 %v1592, %v1693
          %v1715 = vadd.f32 %v1593, %v1697
          %v1716 = vadd.f32 %v1594, %v1701
          %v1717 = vadd.f32 %v1595, %v1705
          %v1718 = vadd.f32 %v1596, %v1693
          %v1719 = vadd.f32 %v1597, %v1697
          %v1720 = vadd.f32 %v1598, %v1701
          %v1721 = vadd.f32 %v1599, %v1705
          %v1722 = vadd.f32 %v1600, %v1693
          %v1723 = vadd.f32 %v1601, %v1697
          %v1724 = vadd.f32 %v1602, %v1701
          %v1725 = vadd.f32 %v1603, %v1705
          %v1726 = vadd.f32 %v1604, %v1693
          %v1727 = vadd.f32 %v1605, %v1697
          %v1728 = vadd.f32 %v1606, %v1701
          %v1729 = vadd.f32 %v1607, %v1705
          %v1730 = vadd.f32 %v1608, %v1693
          %v1731 = vadd.f32 %v1609, %v1697
          %v1732 = vadd.f32 %v1610, %v1701
          %v1733 = vadd.f32 %v1611, %v1705
          %v1734 = vadd.f32 %v1612, %v1693
          %v1735 = vadd.f32 %v1613, %v1697
          %v1736 = vadd.f32 %v1614, %v1701
          %v1737 = vadd.f32 %v1615, %v1705
          %v1738 = vadd.f32 %v1616, %v1693
          %v1739 = vadd.f32 %v1617, %v1697
          %v1740 = vadd.f32 %v1618, %v1701
          %v1741 = vadd.f32 %v1619, %v1705
          %v1742 = vadd.f32 %v1620, %v1693
          %v1743 = vadd.f32 %v1621, %v1697
          %v1744 = vadd.f32 %v1622, %v1701
          %v1745 = vadd.f32 %v1623, %v1705
          %v1746 = vadd.f32 %v1624, %v1693
          %v1747 = vadd.f32 %v1625, %v1697
          %v1748 = vadd.f32 %v1626, %v1701
          %v1749 = vadd.f32 %v1627, %v1705
          %v1750 = vadd.f32 %v1628, %v1693
          %v1751 = vadd.f32 %v1629, %v1697
          %v1752 = vadd.f32 %v1630, %v1701
          %v1753 = vadd.f32 %v1631, %v1705
          %v1754 = vadd.f32 %v1632, %v1693
          %v1755 = vadd.f32 %v1633, %v1697
          %v1756 = vadd.f32 %v1634, %v1701
          %v1757 = vadd.f32 %v1635, %v1705
          %v1758 = vadd.f32 %v1636, %v1693
          %v1759 = vadd.f32 %v1637, %v1697
          %v1760 = vadd.f32 %v1638, %v1701
          %v1761 = vadd.f32 %v1639, %v1705
          %v1762 = vadd.f32 %v1640, %v1693
          %v1763 = vadd.f32 %v1641, %v1697
          %v1764 = vadd.f32 %v1642, %v1701
          %v1765 = vadd.f32 %v1643, %v1705
          %v1766 = vadd.f32 %v1644, %v1693
          %v1767 = vadd.f32 %v1645, %v1697
          %v1768 = vadd.f32 %v1646, %v1701
          %v1769 = vadd.f32 %v1647, %v1705
          %v1770 = vadd.f32 %v1648, %v1693
          %v1771 = vadd.f32 %v1649, %v1697
          %v1772 = vadd.f32 %v1650, %v1701
          %v1773 = vadd.f32 %v1651, %v1705
          %v1774 = vadd.f32 %v1652, %v1693
          %v1775 = vadd.f32 %v1653, %v1697
          %v1776 = vadd.f32 %v1654, %v1701
          %v1777 = vadd.f32 %v1655, %v1705
          %v1778 = vadd.f32 %v1656, %v1693
          %v1779 = vadd.f32 %v1657, %v1697
          %v1780 = vadd.f32 %v1658, %v1701
          %v1781 = vadd.f32 %v1659, %v1705
          %v1782 = vadd.f32 %v1660, %v1693
          %v1783 = vadd.f32 %v1661, %v1697
          %v1784 = vadd.f32 %v1662, %v1701
          %v1785 = vadd.f32 %v1663, %v1705
          %v1786 = vadd.f32 %v1664, %v1693
          %v1787 = vadd.f32 %v1665, %v1697
          %v1788 = vadd.f32 %v1666, %v1701
          %v1789 = vadd.f32 %v1667, %v1705
          %v1790 = vadd.f32 %v1668, %v1693
          %v1791 = vadd.f32 %v1669, %v1697
          %v1792 = vadd.f32 %v1670, %v1701
          %v1793 = vadd.f32 %v1671, %v1705
          %v1794 = vadd.f32 %v1672, %v1693
          %v1795 = vadd.f32 %v1673, %v1697
          %v1796 = vadd.f32 %v1674, %v1701
          %v1797 = vadd.f32 %v1675, %v1705
          %v1798 = vadd.f32 %v1676, %v1693
          %v1799 = vadd.f32 %v1677, %v1697
          %v1800 = vadd.f32 %v1678, %v1701
          %v1801 = vadd.f32 %v1679, %v1705
          %v1802 = vadd.f32 %v1680, %v1693
          %v1803 = vadd.f32 %v1681, %v1697
          %v1804 = vadd.f32 %v1682, %v1701
          %v1805 = vadd.f32 %v1683, %v1705
          %v1806 = vadd.f32 %v1684, %v1693
          %v1807 = vadd.f32 %v1685, %v1697
          %v1808 = vadd.f32 %v1686, %v1701
          %v1809 = vadd.f32 %v1687, %v1705
          %v1810 = vpack.c.bf16 %v1714, %v1710
          %v1811 = vpack.c.bf16 %v1715, %v1711
          %v1812 = vpack.c.bf16 %v1716, %v1712
          %v1813 = vpack.c.bf16 %v1717, %v1713
          %v1814 = vpack.c.bf16 %v1722, %v1718
          %v1815 = vpack.c.bf16 %v1723, %v1719
          %v1816 = vpack.c.bf16 %v1724, %v1720
          %v1817 = vpack.c.bf16 %v1725, %v1721
          %v1818 = vpack.c.bf16 %v1730, %v1726
          %v1819 = vpack.c.bf16 %v1731, %v1727
          %v1820 = vpack.c.bf16 %v1732, %v1728
          %v1821 = vpack.c.bf16 %v1733, %v1729
          %v1822 = vpack.c.bf16 %v1738, %v1734
          %v1823 = vpack.c.bf16 %v1739, %v1735
          %v1824 = vpack.c.bf16 %v1740, %v1736
          %v1825 = vpack.c.bf16 %v1741, %v1737
          %v1826 = vpack.c.bf16 %v1746, %v1742
          %v1827 = vpack.c.bf16 %v1747, %v1743
          %v1828 = vpack.c.bf16 %v1748, %v1744
          %v1829 = vpack.c.bf16 %v1749, %v1745
          %v1830 = vpack.c.bf16 %v1754, %v1750
          %v1831 = vpack.c.bf16 %v1755, %v1751
          %v1832 = vpack.c.bf16 %v1756, %v1752
          %v1833 = vpack.c.bf16 %v1757, %v1753
          %v1834 = vpack.c.bf16 %v1762, %v1758
          %v1835 = vpack.c.bf16 %v1763, %v1759
          %v1836 = vpack.c.bf16 %v1764, %v1760
          %v1837 = vpack.c.bf16 %v1765, %v1761
          %v1838 = vpack.c.bf16 %v1770, %v1766
          %v1839 = vpack.c.bf16 %v1771, %v1767
          %v1840 = vpack.c.bf16 %v1772, %v1768
          %v1841 = vpack.c.bf16 %v1773, %v1769
          %v1842 = vpack.c.bf16 %v1778, %v1774
          %v1843 = vpack.c.bf16 %v1779, %v1775
          %v1844 = vpack.c.bf16 %v1780, %v1776
          %v1845 = vpack.c.bf16 %v1781, %v1777
          %v1846 = vpack.c.bf16 %v1786, %v1782
          %v1847 = vpack.c.bf16 %v1787, %v1783
          %v1848 = vpack.c.bf16 %v1788, %v1784
          %v1849 = vpack.c.bf16 %v1789, %v1785
          %v1850 = vpack.c.bf16 %v1794, %v1790
          %v1851 = vpack.c.bf16 %v1795, %v1791
          %v1852 = vpack.c.bf16 %v1796, %v1792
          %v1853 = vpack.c.bf16 %v1797, %v1793
          %v1854 = vpack.c.bf16 %v1802, %v1798
          %v1855 = vpack.c.bf16 %v1803, %v1799
          %v1856 = vpack.c.bf16 %v1804, %v1800
          %v1857 = vpack.c.bf16 %v1805, %v1801
          %v1858 = vpack.c.bf16 %v1806, %v1806
          %v1859 = vpack.c.bf16 %v1807, %v1807
          %v1860 = vpack.c.bf16 %v1808, %v1808
          %v1861 = vpack.c.bf16 %v1809, %v1809
          %v1914 = vunpack.c.l.b16 %v1810
          %v1915 = vunpack.c.l.b16 %v1811
          %v1916 = vunpack.c.l.b16 %v1812
          %v1917 = vunpack.c.l.b16 %v1813
          %v1918 = vunpack.c.h.b16 %v1810
          %v1919 = vunpack.c.h.b16 %v1811
          %v1920 = vunpack.c.h.b16 %v1812
          %v1921 = vunpack.c.h.b16 %v1813
          %v1922 = vunpack.c.l.b16 %v1814
          %v1923 = vunpack.c.l.b16 %v1815
          %v1924 = vunpack.c.l.b16 %v1816
          %v1925 = vunpack.c.l.b16 %v1817
          %v1926 = vunpack.c.h.b16 %v1814
          %v1927 = vunpack.c.h.b16 %v1815
          %v1928 = vunpack.c.h.b16 %v1816
          %v1929 = vunpack.c.h.b16 %v1817
          %v1930 = vunpack.c.l.b16 %v1818
          %v1931 = vunpack.c.l.b16 %v1819
          %v1932 = vunpack.c.l.b16 %v1820
          %v1933 = vunpack.c.l.b16 %v1821
          %v1934 = vunpack.c.h.b16 %v1818
          %v1935 = vunpack.c.h.b16 %v1819
          %v1936 = vunpack.c.h.b16 %v1820
          %v1937 = vunpack.c.h.b16 %v1821
          %v1938 = vunpack.c.l.b16 %v1822
          %v1939 = vunpack.c.l.b16 %v1823
          %v1940 = vunpack.c.l.b16 %v1824
          %v1941 = vunpack.c.l.b16 %v1825
          %v1942 = vunpack.c.h.b16 %v1822
          %v1943 = vunpack.c.h.b16 %v1823
          %v1944 = vunpack.c.h.b16 %v1824
          %v1945 = vunpack.c.h.b16 %v1825
          %v1946 = vunpack.c.l.b16 %v1826
          %v1947 = vunpack.c.l.b16 %v1827
          %v1948 = vunpack.c.l.b16 %v1828
          %v1949 = vunpack.c.l.b16 %v1829
          %v1950 = vunpack.c.h.b16 %v1826
          %v1951 = vunpack.c.h.b16 %v1827
          %v1952 = vunpack.c.h.b16 %v1828
          %v1953 = vunpack.c.h.b16 %v1829
          %v1954 = vunpack.c.l.b16 %v1830
          %v1955 = vunpack.c.l.b16 %v1831
          %v1956 = vunpack.c.l.b16 %v1832
          %v1957 = vunpack.c.l.b16 %v1833
          %v1958 = vunpack.c.h.b16 %v1830
          %v1959 = vunpack.c.h.b16 %v1831
          %v1960 = vunpack.c.h.b16 %v1832
          %v1961 = vunpack.c.h.b16 %v1833
          %v1962 = vunpack.c.l.b16 %v1834
          %v1963 = vunpack.c.l.b16 %v1835
          %v1964 = vunpack.c.l.b16 %v1836
          %v1965 = vunpack.c.l.b16 %v1837
          %v1966 = vunpack.c.h.b16 %v1834
          %v1967 = vunpack.c.h.b16 %v1835
          %v1968 = vunpack.c.h.b16 %v1836
          %v1969 = vunpack.c.h.b16 %v1837
          %v1970 = vunpack.c.l.b16 %v1838
          %v1971 = vunpack.c.l.b16 %v1839
          %v1972 = vunpack.c.l.b16 %v1840
          %v1973 = vunpack.c.l.b16 %v1841
          %v1974 = vunpack.c.h.b16 %v1838
          %v1975 = vunpack.c.h.b16 %v1839
          %v1976 = vunpack.c.h.b16 %v1840
          %v1977 = vunpack.c.h.b16 %v1841
          %v1978 = vunpack.c.l.b16 %v1842
          %v1979 = vunpack.c.l.b16 %v1843
          %v1980 = vunpack.c.l.b16 %v1844
          %v1981 = vunpack.c.l.b16 %v1845
          %v1982 = vunpack.c.h.b16 %v1842
          %v1983 = vunpack.c.h.b16 %v1843
          %v1984 = vunpack.c.h.b16 %v1844
          %v1985 = vunpack.c.h.b16 %v1845
          %v1986 = vunpack.c.l.b16 %v1846
          %v1987 = vunpack.c.l.b16 %v1847
          %v1988 = vunpack.c.l.b16 %v1848
          %v1989 = vunpack.c.l.b16 %v1849
          %v1990 = vunpack.c.h.b16 %v1846
          %v1991 = vunpack.c.h.b16 %v1847
          %v1992 = vunpack.c.h.b16 %v1848
          %v1993 = vunpack.c.h.b16 %v1849
          %v1994 = vunpack.c.l.b16 %v1850
          %v1995 = vunpack.c.l.b16 %v1851
          %v1996 = vunpack.c.l.b16 %v1852
          %v1997 = vunpack.c.l.b16 %v1853
          %v1998 = vunpack.c.h.b16 %v1850
          %v1999 = vunpack.c.h.b16 %v1851
          %v2000 = vunpack.c.h.b16 %v1852
          %v2001 = vunpack.c.h.b16 %v1853
          %v2002 = vunpack.c.l.b16 %v1854
          %v2003 = vunpack.c.l.b16 %v1855
          %v2004 = vunpack.c.l.b16 %v1856
          %v2005 = vunpack.c.l.b16 %v1857
          %v2006 = vunpack.c.h.b16 %v1854
          %v2007 = vunpack.c.h.b16 %v1855
          %v2008 = vunpack.c.h.b16 %v1856
          %v2009 = vunpack.c.h.b16 %v1857
          %v2010 = vunpack.c.l.b16 %v1858
          %v2011 = vunpack.c.l.b16 %v1859
          %v2012 = vunpack.c.l.b16 %v1860
          %v2013 = vunpack.c.l.b16 %v1861
          %v2014 = vpack.c.b16 %v1915, %v1914
          %v2015 = vpack.c.b16 %v1917, %v1916
          %v2016 = vpack.c.b16 %v1919, %v1918
          %v2017 = vpack.c.b16 %v1921, %v1920
          %v2018 = vpack.c.b16 %v1923, %v1922
          %v2019 = vpack.c.b16 %v1925, %v1924
          %v2020 = vpack.c.b16 %v1927, %v1926
          %v2021 = vpack.c.b16 %v1929, %v1928
          %v2022 = vpack.c.b16 %v1931, %v1930
          %v2023 = vpack.c.b16 %v1933, %v1932
          %v2024 = vpack.c.b16 %v1935, %v1934
          %v2025 = vpack.c.b16 %v1937, %v1936
          %v2026 = vpack.c.b16 %v1939, %v1938
          %v2027 = vpack.c.b16 %v1941, %v1940
          %v2028 = vpack.c.b16 %v1943, %v1942
          %v2029 = vpack.c.b16 %v1945, %v1944
          %v2030 = vpack.c.b16 %v1947, %v1946
          %v2031 = vpack.c.b16 %v1949, %v1948
          %v2032 = vpack.c.b16 %v1951, %v1950
          %v2033 = vpack.c.b16 %v1953, %v1952
          %v2034 = vpack.c.b16 %v1955, %v1954
          %v2035 = vpack.c.b16 %v1957, %v1956
          %v2036 = vpack.c.b16 %v1959, %v1958
          %v2037 = vpack.c.b16 %v1961, %v1960
          %v2038 = vpack.c.b16 %v1963, %v1962
          %v2039 = vpack.c.b16 %v1965, %v1964
          %v2040 = vpack.c.b16 %v1967, %v1966
          %v2041 = vpack.c.b16 %v1969, %v1968
          %v2042 = vpack.c.b16 %v1971, %v1970
          %v2043 = vpack.c.b16 %v1973, %v1972
          %v2044 = vpack.c.b16 %v1975, %v1974
          %v2045 = vpack.c.b16 %v1977, %v1976
          %v2046 = vpack.c.b16 %v1979, %v1978
          %v2047 = vpack.c.b16 %v1981, %v1980
          %v2048 = vpack.c.b16 %v1983, %v1982
          %v2049 = vpack.c.b16 %v1985, %v1984
          %v2050 = vpack.c.b16 %v1987, %v1986
          %v2051 = vpack.c.b16 %v1989, %v1988
          %v2052 = vpack.c.b16 %v1991, %v1990
          %v2053 = vpack.c.b16 %v1993, %v1992
          %v2054 = vpack.c.b16 %v1995, %v1994
          %v2055 = vpack.c.b16 %v1997, %v1996
          %v2056 = vpack.c.b16 %v1999, %v1998
          %v2057 = vpack.c.b16 %v2001, %v2000
          %v2058 = vpack.c.b16 %v2003, %v2002
          %v2059 = vpack.c.b16 %v2005, %v2004
          %v2060 = vpack.c.b16 %v2007, %v2006
          %v2061 = vpack.c.b16 %v2009, %v2008
          %v2062 = vpack.c.b16 %v2011, %v2010
          %v2063 = vpack.c.b16 %v2013, %v2012
          %2114 = vst [vmem:[#allocation2] sm:$0xff] %v2014
          %2115 = vst [vmem:[#allocation2 + $0x8] sm:$0xff] %v2015
          %2116 = vst [vmem:[#allocation2 + $0x10] sm:$0xff] %v2016
          %2117 = vst [vmem:[#allocation2 + $0x18] sm:$0xff] %v2017
          %2118 = vst [vmem:[#allocation2 + $0x20] sm:$0xff] %v2018
          %2119 = vst [vmem:[#allocation2 + $0x28] sm:$0xff] %v2019
          %2120 = vst [vmem:[#allocation2 + $0x30] sm:$0xff] %v2020
          %2121 = vst [vmem:[#allocation2 + $0x38] sm:$0xff] %v2021
          %2122 = vst [vmem:[#allocation2 + $0x40] sm:$0xff] %v2022
          %2123 = vst [vmem:[#allocation2 + $0x48] sm:$0xff] %v2023
          %2124 = vst [vmem:[#allocation2 + $0x50] sm:$0xff] %v2024
          %2125 = vst [vmem:[#allocation2 + $0x58] sm:$0xff] %v2025
          %2126 = vst [vmem:[#allocation2 + $0x60] sm:$0xff] %v2026
          %2127 = vst [vmem:[#allocation2 + $0x68] sm:$0xff] %v2027
          %2128 = vst [vmem:[#allocation2 + $0x70] sm:$0xff] %v2028
          %2129 = vst [vmem:[#allocation2 + $0x78] sm:$0xff] %v2029
          %2130 = vst [vmem:[#allocation2 + $0x80] sm:$0xff] %v2030
          %2131 = vst [vmem:[#allocation2 + $0x88] sm:$0xff] %v2031
          %2132 = vst [vmem:[#allocation2 + $0x90] sm:$0xff] %v2032
          %2133 = vst [vmem:[#allocation2 + $0x98] sm:$0xff] %v2033
          %2134 = vst [vmem:[#allocation2 + $0xa0] sm:$0xff] %v2034
          %2135 = vst [vmem:[#allocation2 + $0xa8] sm:$0xff] %v2035
          %2136 = vst [vmem:[#allocation2 + $0xb0] sm:$0xff] %v2036
          %2137 = vst [vmem:[#allocation2 + $0xb8] sm:$0xff] %v2037
          %2138 = vst [vmem:[#allocation2 + $0xc0] sm:$0xff] %v2038
          %2139 = vst [vmem:[#allocation2 + $0xc8] sm:$0xff] %v2039
          %2140 = vst [vmem:[#allocation2 + $0xd0] sm:$0xff] %v2040
          %2141 = vst [vmem:[#allocation2 + $0xd8] sm:$0xff] %v2041
          %2142 = vst [vmem:[#allocation2 + $0xe0] sm:$0xff] %v2042
          %2143 = vst [vmem:[#allocation2 + $0xe8] sm:$0xff] %v2043
          %2144 = vst [vmem:[#allocation2 + $0xf0] sm:$0xff] %v2044
          %2145 = vst [vmem:[#allocation2 + $0xf8] sm:$0xff] %v2045
          %2146 = vst [vmem:[#allocation2 + $0x100] sm:$0xff] %v2046
          %2147 = vst [vmem:[#allocation2 + $0x108] sm:$0xff] %v2047
          %2148 = vst [vmem:[#allocation2 + $0x110] sm:$0xff] %v2048
          %2149 = vst [vmem:[#allocation2 + $0x118] sm:$0xff] %v2049
          %2150 = vst [vmem:[#allocation2 + $0x120] sm:$0xff] %v2050
          %2151 = vst [vmem:[#allocation2 + $0x128] sm:$0xff] %v2051
          %2152 = vst [vmem:[#allocation2 + $0x130] sm:$0xff] %v2052
          %2153 = vst [vmem:[#allocation2 + $0x138] sm:$0xff] %v2053
          %2154 = vst [vmem:[#allocation2 + $0x140] sm:$0xff] %v2054
          %2155 = vst [vmem:[#allocation2 + $0x148] sm:$0xff] %v2055
          %2156 = vst [vmem:[#allocation2 + $0x150] sm:$0xff] %v2056
          %2157 = vst [vmem:[#allocation2 + $0x158] sm:$0xff] %v2057
          %2158 = vst [vmem:[#allocation2 + $0x160] sm:$0xff] %v2058
          %2159 = vst [vmem:[#allocation2 + $0x168] sm:$0xff] %v2059
          %2160 = vst [vmem:[#allocation2 + $0x170] sm:$0xff] %v2060
          %2161 = vst [vmem:[#allocation2 + $0x178] sm:$0xff] %v2061
          %2162 = vst [vmem:[#allocation2 + $0x180] sm:$0x33] %v2062
          %2163 = vst [vmem:[#allocation2 + $0x188] sm:$0x33] %v2063
          %p2164 = scmp.eq.s32.totalorder %s26, 0
          %s2165 = scalar_select %p2164, 1, 0
          %s2166 = scvt.s32.f32 %s2165
          %v2167 = vld [vmem:[#allocation13] sm:$0xf]
          %v2168 = vstv %s2166
          %v2169 = vmul.f32 %v2167, %v2168
          %v2171 = vlaneseq
          %v2172 = vshrl.u32 %v2171, 7
          %v2173 = vsub.s32 0, %v2172
          %v2174 = vrot.slane %v2169, %v2173
          %v2175 = vlaneseq
          %v2176 = vshrl.u32 %v2175, 7
          %v2177 = vsub.s32 1, %v2176
          %v2178 = vrot.slane %v2169, %v2177
          %v2179 = vlaneseq
          %v2180 = vshrl.u32 %v2179, 7
          %v2181 = vsub.s32 2, %v2180
          %v2182 = vrot.slane %v2169, %v2181
          %v2183 = vlaneseq
          %v2184 = vshrl.u32 %v2183, 7
          %v2185 = vsub.s32 3, %v2184
          %v2186 = vrot.slane %v2169, %v2185
          %2191 = vst [vmem:[%s501] sm:$0xff] %v2174
          %2192 = vst [vmem:[%s501 + $0x8] sm:$0xff] %v2178
          %2193 = vst [vmem:[%s501 + $0x10] sm:$0xff] %v2182
          %2194 = vst [vmem:[%s501 + $0x18] sm:$0xff] %v2186
          %2195 = vst [vmem:[%s501 + $0x20] sm:$0xff] %v2174
          %2196 = vst [vmem:[%s501 + $0x28] sm:$0xff] %v2178
          %2197 = vst [vmem:[%s501 + $0x30] sm:$0xff] %v2182
          %2198 = vst [vmem:[%s501 + $0x38] sm:$0xff] %v2186
          %2199 = vst [vmem:[%s501 + $0x40] sm:$0xff] %v2174
          %2200 = vst [vmem:[%s501 + $0x48] sm:$0xff] %v2178
          %2201 = vst [vmem:[%s501 + $0x50] sm:$0xff] %v2182
          %2202 = vst [vmem:[%s501 + $0x58] sm:$0xff] %v2186
          %2203 = vst [vmem:[%s501 + $0x60] sm:$0xff] %v2174
          %2204 = vst [vmem:[%s501 + $0x68] sm:$0xff] %v2178
          %2205 = vst [vmem:[%s501 + $0x70] sm:$0xff] %v2182
          %2206 = vst [vmem:[%s501 + $0x78] sm:$0xff] %v2186
          %2207 = vst [vmem:[%s501 + $0x80] sm:$0xff] %v2174
          %2208 = vst [vmem:[%s501 + $0x88] sm:$0xff] %v2178
          %2209 = vst [vmem:[%s501 + $0x90] sm:$0xff] %v2182
          %2210 = vst [vmem:[%s501 + $0x98] sm:$0xff] %v2186
          %2211 = vst [vmem:[%s501 + $0xa0] sm:$0xff] %v2174
          %2212 = vst [vmem:[%s501 + $0xa8] sm:$0xff] %v2178
          %2213 = vst [vmem:[%s501 + $0xb0] sm:$0xff] %v2182
          %2214 = vst [vmem:[%s501 + $0xb8] sm:$0xff] %v2186
          %2215 = vst [vmem:[%s501 + $0xc0] sm:$0xff] %v2174
          %2216 = vst [vmem:[%s501 + $0xc8] sm:$0xff] %v2178
          %2217 = vst [vmem:[%s501 + $0xd0] sm:$0xff] %v2182
          %2218 = vst [vmem:[%s501 + $0xd8] sm:$0xff] %v2186
          %2219 = vst [vmem:[%s501 + $0xe0] sm:$0xff] %v2174
          %2220 = vst [vmem:[%s501 + $0xe8] sm:$0xff] %v2178
          %2221 = vst [vmem:[%s501 + $0xf0] sm:$0xff] %v2182
          %2222 = vst [vmem:[%s501 + $0xf8] sm:$0xff] %v2186
          %2223 = vst [vmem:[%s501 + $0x100] sm:$0xff] %v2174
          %2224 = vst [vmem:[%s501 + $0x108] sm:$0xff] %v2178
          %2225 = vst [vmem:[%s501 + $0x110] sm:$0xff] %v2182
          %2226 = vst [vmem:[%s501 + $0x118] sm:$0xff] %v2186
          %2227 = vst [vmem:[%s501 + $0x120] sm:$0xff] %v2174
          %2228 = vst [vmem:[%s501 + $0x128] sm:$0xff] %v2178
          %2229 = vst [vmem:[%s501 + $0x130] sm:$0xff] %v2182
          %2230 = vst [vmem:[%s501 + $0x138] sm:$0xff] %v2186
          %2231 = vst [vmem:[%s501 + $0x140] sm:$0xff] %v2174
          %2232 = vst [vmem:[%s501 + $0x148] sm:$0xff] %v2178
          %2233 = vst [vmem:[%s501 + $0x150] sm:$0xff] %v2182
          %2234 = vst [vmem:[%s501 + $0x158] sm:$0xff] %v2186
          %2235 = vst [vmem:[%s501 + $0x160] sm:$0xff] %v2174
          %2236 = vst [vmem:[%s501 + $0x168] sm:$0xff] %v2178
          %2237 = vst [vmem:[%s501 + $0x170] sm:$0xff] %v2182
          %2238 = vst [vmem:[%s501 + $0x178] sm:$0xff] %v2186
          %2239 = vst [vmem:[%s501 + $0x180] sm:$0xff] %v2174
          %2240 = vst [vmem:[%s501 + $0x188] sm:$0xff] %v2178
          %2241 = vst [vmem:[%s501 + $0x190] sm:$0xff] %v2182
          %2242 = vst [vmem:[%s501 + $0x198] sm:$0xff] %v2186
          %2243 = vst [vmem:[%s501 + $0x1a0] sm:$0xff] %v2174
          %2244 = vst [vmem:[%s501 + $0x1a8] sm:$0xff] %v2178
          %2245 = vst [vmem:[%s501 + $0x1b0] sm:$0xff] %v2182
          %2246 = vst [vmem:[%s501 + $0x1b8] sm:$0xff] %v2186
          %2247 = vst [vmem:[%s501 + $0x1c0] sm:$0xff] %v2174
          %2248 = vst [vmem:[%s501 + $0x1c8] sm:$0xff] %v2178
          %2249 = vst [vmem:[%s501 + $0x1d0] sm:$0xff] %v2182
          %2250 = vst [vmem:[%s501 + $0x1d8] sm:$0xff] %v2186
          %2251 = vst [vmem:[%s501 + $0x1e0] sm:$0xff] %v2174
          %2252 = vst [vmem:[%s501 + $0x1e8] sm:$0xff] %v2178
          %2253 = vst [vmem:[%s501 + $0x1f0] sm:$0xff] %v2182
          %2254 = vst [vmem:[%s501 + $0x1f8] sm:$0xff] %v2186
          %2255 = vst [vmem:[%s501 + $0x200] sm:$0xff] %v2174
          %2256 = vst [vmem:[%s501 + $0x208] sm:$0xff] %v2178
          %2257 = vst [vmem:[%s501 + $0x210] sm:$0xff] %v2182
          %2258 = vst [vmem:[%s501 + $0x218] sm:$0xff] %v2186
          %2259 = vst [vmem:[%s501 + $0x220] sm:$0xff] %v2174
          %2260 = vst [vmem:[%s501 + $0x228] sm:$0xff] %v2178
          %2261 = vst [vmem:[%s501 + $0x230] sm:$0xff] %v2182
          %2262 = vst [vmem:[%s501 + $0x238] sm:$0xff] %v2186
          %2263 = vst [vmem:[%s501 + $0x240] sm:$0xff] %v2174
          %2264 = vst [vmem:[%s501 + $0x248] sm:$0xff] %v2178
          %2265 = vst [vmem:[%s501 + $0x250] sm:$0xff] %v2182
          %2266 = vst [vmem:[%s501 + $0x258] sm:$0xff] %v2186
          %2267 = vst [vmem:[%s501 + $0x260] sm:$0xff] %v2174
          %2268 = vst [vmem:[%s501 + $0x268] sm:$0xff] %v2178
          %2269 = vst [vmem:[%s501 + $0x270] sm:$0xff] %v2182
          %2270 = vst [vmem:[%s501 + $0x278] sm:$0xff] %v2186
          %2271 = vst [vmem:[%s501 + $0x280] sm:$0xff] %v2174
          %2272 = vst [vmem:[%s501 + $0x288] sm:$0xff] %v2178
          %2273 = vst [vmem:[%s501 + $0x290] sm:$0xff] %v2182
          %2274 = vst [vmem:[%s501 + $0x298] sm:$0xff] %v2186
          %2275 = vst [vmem:[%s501 + $0x2a0] sm:$0xff] %v2174
          %2276 = vst [vmem:[%s501 + $0x2a8] sm:$0xff] %v2178
          %2277 = vst [vmem:[%s501 + $0x2b0] sm:$0xff] %v2182
          %2278 = vst [vmem:[%s501 + $0x2b8] sm:$0xff] %v2186
          %2279 = vst [vmem:[%s501 + $0x2c0] sm:$0xff] %v2174
          %2280 = vst [vmem:[%s501 + $0x2c8] sm:$0xff] %v2178
          %2281 = vst [vmem:[%s501 + $0x2d0] sm:$0xff] %v2182
          %2282 = vst [vmem:[%s501 + $0x2d8] sm:$0xff] %v2186
          %2283 = vst [vmem:[%s501 + $0x2e0] sm:$0xff] %v2174
          %2284 = vst [vmem:[%s501 + $0x2e8] sm:$0xff] %v2178
          %2285 = vst [vmem:[%s501 + $0x2f0] sm:$0xff] %v2182
          %2286 = vst [vmem:[%s501 + $0x2f8] sm:$0xff] %v2186
          %2287 = vst [vmem:[%s501 + $0x300] sm:$0xf] %v2174
          %2288 = vst [vmem:[%s501 + $0x308] sm:$0xf] %v2178
          %2289 = vst [vmem:[%s501 + $0x310] sm:$0xf] %v2182
          %2290 = vst [vmem:[%s501 + $0x318] sm:$0xf] %v2186
        $region88: #{tpu_custom_call.1} parent=51 // pred_fallthru
          _
        %v2291 = vld [vmem:[#allocation2] sm:$0xff]
        %v2292 = vld [vmem:[#allocation2 + $0x8] sm:$0xff]
        %v2293 = vld [vmem:[#allocation2 + $0x10] sm:$0xff]
        %v2294 = vld [vmem:[#allocation2 + $0x18] sm:$0xff]
        %v2295 = vld [vmem:[#allocation2 + $0x20] sm:$0xff]
        %v2296 = vld [vmem:[#allocation2 + $0x28] sm:$0xff]
        %v2297 = vld [vmem:[#allocation2 + $0x30] sm:$0xff]
        %v2298 = vld [vmem:[#allocation2 + $0x38] sm:$0xff]
        %v2299 = vld [vmem:[#allocation2 + $0x40] sm:$0xff]
        %v2300 = vld [vmem:[#allocation2 + $0x48] sm:$0xff]
        %v2301 = vld [vmem:[#allocation2 + $0x50] sm:$0xff]
        %v2302 = vld [vmem:[#allocation2 + $0x58] sm:$0xff]
        %v2303 = vld [vmem:[#allocation2 + $0x60] sm:$0xff]
        %v2304 = vld [vmem:[#allocation2 + $0x68] sm:$0xff]
        %v2305 = vld [vmem:[#allocation2 + $0x70] sm:$0xff]
        %v2306 = vld [vmem:[#allocation2 + $0x78] sm:$0xff]
        %v2307 = vld [vmem:[#allocation2 + $0x80] sm:$0xff]
        %v2308 = vld [vmem:[#allocation2 + $0x88] sm:$0xff]
        %v2309 = vld [vmem:[#allocation2 + $0x90] sm:$0xff]
        %v2310 = vld [vmem:[#allocation2 + $0x98] sm:$0xff]
        %v2311 = vld [vmem:[#allocation2 + $0xa0] sm:$0xff]
        %v2312 = vld [vmem:[#allocation2 + $0xa8] sm:$0xff]
        %v2313 = vld [vmem:[#allocation2 + $0xb0] sm:$0xff]
        %v2314 = vld [vmem:[#allocation2 + $0xb8] sm:$0xff]
        %v2315 = vld [vmem:[#allocation2 + $0xc0] sm:$0xff]
        %v2316 = vld [vmem:[#allocation2 + $0xc8] sm:$0xff]
        %v2317 = vld [vmem:[#allocation2 + $0xd0] sm:$0xff]
        %v2318 = vld [vmem:[#allocation2 + $0xd8] sm:$0xff]
        %v2319 = vld [vmem:[#allocation2 + $0xe0] sm:$0xff]
        %v2320 = vld [vmem:[#allocation2 + $0xe8] sm:$0xff]
        %v2321 = vld [vmem:[#allocation2 + $0xf0] sm:$0xff]
        %v2322 = vld [vmem:[#allocation2 + $0xf8] sm:$0xff]
        %v2323 = vld [vmem:[#allocation2 + $0x100] sm:$0xff]
        %v2324 = vld [vmem:[#allocation2 + $0x108] sm:$0xff]
        %v2325 = vld [vmem:[#allocation2 + $0x110] sm:$0xff]
        %v2326 = vld [vmem:[#allocation2 + $0x118] sm:$0xff]
        %v2327 = vld [vmem:[#allocation2 + $0x120] sm:$0xff]
        %v2328 = vld [vmem:[#allocation2 + $0x128] sm:$0xff]
        %v2329 = vld [vmem:[#allocation2 + $0x130] sm:$0xff]
        %v2330 = vld [vmem:[#allocation2 + $0x138] sm:$0xff]
        %v2331 = vld [vmem:[#allocation2 + $0x140] sm:$0xff]
        %v2332 = vld [vmem:[#allocation2 + $0x148] sm:$0xff]
        %v2333 = vld [vmem:[#allocation2 + $0x150] sm:$0xff]
        %v2334 = vld [vmem:[#allocation2 + $0x158] sm:$0xff]
        %v2335 = vld [vmem:[#allocation2 + $0x160] sm:$0xff]
        %v2336 = vld [vmem:[#allocation2 + $0x168] sm:$0xff]
        %v2337 = vld [vmem:[#allocation2 + $0x170] sm:$0xff]
        %v2338 = vld [vmem:[#allocation2 + $0x178] sm:$0xff]
        %v2339 = vld [vmem:[#allocation2 + $0x180] sm:$0x33]
        %v2340 = vld [vmem:[#allocation2 + $0x188] sm:$0x33]
        %v2341 = vld [vmem:[%s423] sm:$0xff]
        %v2342 = vld [vmem:[%s423 + $0x8] sm:$0xff]
        %v2343 = vld [vmem:[%s423 + $0x10] sm:$0xff]
        %v2344 = vld [vmem:[%s423 + $0x18] sm:$0xff]
        %v2345 = vld [vmem:[%s423 + $0x20] sm:$0xff]
        %v2346 = vld [vmem:[%s423 + $0x28] sm:$0xff]
        %v2347 = vld [vmem:[%s423 + $0x30] sm:$0xff]
        %v2348 = vld [vmem:[%s423 + $0x38] sm:$0xff]
        %v2349 = vld [vmem:[%s423 + $0x40] sm:$0xff]
        %v2350 = vld [vmem:[%s423 + $0x48] sm:$0xff]
        %v2351 = vld [vmem:[%s423 + $0x50] sm:$0xff]
        %v2352 = vld [vmem:[%s423 + $0x58] sm:$0xff]
        %v2353 = vld [vmem:[%s423 + $0x60] sm:$0xff]
        %v2354 = vld [vmem:[%s423 + $0x68] sm:$0xff]
        %v2355 = vld [vmem:[%s423 + $0x70] sm:$0xff]
        %v2356 = vld [vmem:[%s423 + $0x78] sm:$0xff]
        %v2357 = vld [vmem:[%s423 + $0x80] sm:$0xff]
        %v2358 = vld [vmem:[%s423 + $0x88] sm:$0xff]
        %v2359 = vld [vmem:[%s423 + $0x90] sm:$0xff]
        %v2360 = vld [vmem:[%s423 + $0x98] sm:$0xff]
        %v2361 = vld [vmem:[%s423 + $0xa0] sm:$0xff]
        %v2362 = vld [vmem:[%s423 + $0xa8] sm:$0xff]
        %v2363 = vld [vmem:[%s423 + $0xb0] sm:$0xff]
        %v2364 = vld [vmem:[%s423 + $0xb8] sm:$0xff]
        %v2365 = vld [vmem:[%s423 + $0xc0] sm:$0xff]
        %v2366 = vld [vmem:[%s423 + $0xc8] sm:$0xff]
        %v2367 = vld [vmem:[%s423 + $0xd0] sm:$0xff]
        %v2368 = vld [vmem:[%s423 + $0xd8] sm:$0xff]
        %v2369 = vld [vmem:[%s423 + $0xe0] sm:$0xff]
        %v2370 = vld [vmem:[%s423 + $0xe8] sm:$0xff]
        %v2371 = vld [vmem:[%s423 + $0xf0] sm:$0xff]
        %v2372 = vld [vmem:[%s423 + $0xf8] sm:$0xff]
        %v2373 = vld [vmem:[%s423 + $0x100] sm:$0xff]
        %v2374 = vld [vmem:[%s423 + $0x108] sm:$0xff]
        %v2375 = vld [vmem:[%s423 + $0x110] sm:$0xff]
        %v2376 = vld [vmem:[%s423 + $0x118] sm:$0xff]
        %v2377 = vld [vmem:[%s423 + $0x120] sm:$0xff]
        %v2378 = vld [vmem:[%s423 + $0x128] sm:$0xff]
        %v2379 = vld [vmem:[%s423 + $0x130] sm:$0xff]
        %v2380 = vld [vmem:[%s423 + $0x138] sm:$0xff]
        %v2381 = vld [vmem:[%s423 + $0x140] sm:$0xff]
        %v2382 = vld [vmem:[%s423 + $0x148] sm:$0xff]
        %v2383 = vld [vmem:[%s423 + $0x150] sm:$0xff]
        %v2384 = vld [vmem:[%s423 + $0x158] sm:$0xff]
        %v2385 = vld [vmem:[%s423 + $0x160] sm:$0xff]
        %v2386 = vld [vmem:[%s423 + $0x168] sm:$0xff]
        %v2387 = vld [vmem:[%s423 + $0x170] sm:$0xff]
        %v2388 = vld [vmem:[%s423 + $0x178] sm:$0xff]
        %v2389 = vld [vmem:[%s423 + $0x180] sm:$0xff]
        %v2390 = vld [vmem:[%s423 + $0x188] sm:$0xff]
        %v2391 = vld [vmem:[%s423 + $0x190] sm:$0xff]
        %v2392 = vld [vmem:[%s423 + $0x198] sm:$0xff]
        %v2393 = vld [vmem:[%s423 + $0x1a0] sm:$0xff]
        %v2394 = vld [vmem:[%s423 + $0x1a8] sm:$0xff]
        %v2395 = vld [vmem:[%s423 + $0x1b0] sm:$0xff]
        %v2396 = vld [vmem:[%s423 + $0x1b8] sm:$0xff]
        %v2397 = vld [vmem:[%s423 + $0x1c0] sm:$0xff]
        %v2398 = vld [vmem:[%s423 + $0x1c8] sm:$0xff]
        %v2399 = vld [vmem:[%s423 + $0x1d0] sm:$0xff]
        %v2400 = vld [vmem:[%s423 + $0x1d8] sm:$0xff]
        %v2401 = vld [vmem:[%s423 + $0x1e0] sm:$0xff]
        %v2402 = vld [vmem:[%s423 + $0x1e8] sm:$0xff]
        %v2403 = vld [vmem:[%s423 + $0x1f0] sm:$0xff]
        %v2404 = vld [vmem:[%s423 + $0x1f8] sm:$0xff]
        %v2405 = vld [vmem:[%s423 + $0x200] sm:$0xff]
        %v2406 = vld [vmem:[%s423 + $0x208] sm:$0xff]
        %v2407 = vld [vmem:[%s423 + $0x210] sm:$0xff]
        %v2408 = vld [vmem:[%s423 + $0x218] sm:$0xff]
        %v2409 = vld [vmem:[%s423 + $0x220] sm:$0xff]
        %v2410 = vld [vmem:[%s423 + $0x228] sm:$0xff]
        %v2411 = vld [vmem:[%s423 + $0x230] sm:$0xff]
        %v2412 = vld [vmem:[%s423 + $0x238] sm:$0xff]
        %v2413 = vld [vmem:[%s423 + $0x240] sm:$0xff]
        %v2414 = vld [vmem:[%s423 + $0x248] sm:$0xff]
        %v2415 = vld [vmem:[%s423 + $0x250] sm:$0xff]
        %v2416 = vld [vmem:[%s423 + $0x258] sm:$0xff]
        %v2417 = vld [vmem:[%s423 + $0x260] sm:$0xff]
        %v2418 = vld [vmem:[%s423 + $0x268] sm:$0xff]
        %v2419 = vld [vmem:[%s423 + $0x270] sm:$0xff]
        %v2420 = vld [vmem:[%s423 + $0x278] sm:$0xff]
        %v2421 = vld [vmem:[%s423 + $0x280] sm:$0xff]
        %v2422 = vld [vmem:[%s423 + $0x288] sm:$0xff]
        %v2423 = vld [vmem:[%s423 + $0x290] sm:$0xff]
        %v2424 = vld [vmem:[%s423 + $0x298] sm:$0xff]
        %v2425 = vld [vmem:[%s423 + $0x2a0] sm:$0xff]
        %v2426 = vld [vmem:[%s423 + $0x2a8] sm:$0xff]
        %v2427 = vld [vmem:[%s423 + $0x2b0] sm:$0xff]
        %v2428 = vld [vmem:[%s423 + $0x2b8] sm:$0xff]
        %v2429 = vld [vmem:[%s423 + $0x2c0] sm:$0xff]
        %v2430 = vld [vmem:[%s423 + $0x2c8] sm:$0xff]
        %v2431 = vld [vmem:[%s423 + $0x2d0] sm:$0xff]
        %v2432 = vld [vmem:[%s423 + $0x2d8] sm:$0xff]
        %v2433 = vld [vmem:[%s423 + $0x2e0] sm:$0xff]
        %v2434 = vld [vmem:[%s423 + $0x2e8] sm:$0xff]
        %v2435 = vld [vmem:[%s423 + $0x2f0] sm:$0xff]
        %v2436 = vld [vmem:[%s423 + $0x2f8] sm:$0xff]
        %v2437 = vld [vmem:[%s423 + $0x300] sm:$0xff]
        %v2438 = vld [vmem:[%s423 + $0x308] sm:$0xff]
        %v2439 = vld [vmem:[%s423 + $0x310] sm:$0xff]
        %v2440 = vld [vmem:[%s423 + $0x318] sm:$0xff]
        %v2441 = vld [vmem:[%s423 + $0x320] sm:$0xff]
        %v2442 = vld [vmem:[%s423 + $0x328] sm:$0xff]
        %v2443 = vld [vmem:[%s423 + $0x330] sm:$0xff]
        %v2444 = vld [vmem:[%s423 + $0x338] sm:$0xff]
        %v2445 = vld [vmem:[%s423 + $0x340] sm:$0xff]
        %v2446 = vld [vmem:[%s423 + $0x348] sm:$0xff]
        %v2447 = vld [vmem:[%s423 + $0x350] sm:$0xff]
        %v2448 = vld [vmem:[%s423 + $0x358] sm:$0xff]
        %v2449 = vld [vmem:[%s423 + $0x360] sm:$0xff]
        %v2450 = vld [vmem:[%s423 + $0x368] sm:$0xff]
        %v2451 = vld [vmem:[%s423 + $0x370] sm:$0xff]
        %v2452 = vld [vmem:[%s423 + $0x378] sm:$0xff]
        %v2453 = vld [vmem:[%s423 + $0x380] sm:$0xff]
        %v2454 = vld [vmem:[%s423 + $0x388] sm:$0xff]
        %v2455 = vld [vmem:[%s423 + $0x390] sm:$0xff]
        %v2456 = vld [vmem:[%s423 + $0x398] sm:$0xff]
        %v2457 = vld [vmem:[%s423 + $0x3a0] sm:$0xff]
        %v2458 = vld [vmem:[%s423 + $0x3a8] sm:$0xff]
        %v2459 = vld [vmem:[%s423 + $0x3b0] sm:$0xff]
        %v2460 = vld [vmem:[%s423 + $0x3b8] sm:$0xff]
        %v2461 = vld [vmem:[%s423 + $0x3c0] sm:$0xff]
        %v2462 = vld [vmem:[%s423 + $0x3c8] sm:$0xff]
        %v2463 = vld [vmem:[%s423 + $0x3d0] sm:$0xff]
        %v2464 = vld [vmem:[%s423 + $0x3d8] sm:$0xff]
        %v2465 = vld [vmem:[%s423 + $0x3e0] sm:$0xff]
        %v2466 = vld [vmem:[%s423 + $0x3e8] sm:$0xff]
        %v2467 = vld [vmem:[%s423 + $0x3f0] sm:$0xff]
        %v2468 = vld [vmem:[%s423 + $0x3f8] sm:$0xff]
        %v2469 = vld [vmem:[%s423 + $0x400] sm:$0xff]
        %v2470 = vld [vmem:[%s423 + $0x408] sm:$0xff]
        %v2471 = vld [vmem:[%s423 + $0x410] sm:$0xff]
        %v2472 = vld [vmem:[%s423 + $0x418] sm:$0xff]
        %v2473 = vld [vmem:[%s423 + $0x420] sm:$0xff]
        %v2474 = vld [vmem:[%s423 + $0x428] sm:$0xff]
        %v2475 = vld [vmem:[%s423 + $0x430] sm:$0xff]
        %v2476 = vld [vmem:[%s423 + $0x438] sm:$0xff]
        %v2477 = vld [vmem:[%s423 + $0x440] sm:$0xff]
        %v2478 = vld [vmem:[%s423 + $0x448] sm:$0xff]
        %v2479 = vld [vmem:[%s423 + $0x450] sm:$0xff]
        %v2480 = vld [vmem:[%s423 + $0x458] sm:$0xff]
        %v2481 = vld [vmem:[%s423 + $0x460] sm:$0xff]
        %v2482 = vld [vmem:[%s423 + $0x468] sm:$0xff]
        %v2483 = vld [vmem:[%s423 + $0x470] sm:$0xff]
        %v2484 = vld [vmem:[%s423 + $0x478] sm:$0xff]
        %v2485 = vld [vmem:[%s423 + $0x480] sm:$0xff]
        %v2486 = vld [vmem:[%s423 + $0x488] sm:$0xff]
        %v2487 = vld [vmem:[%s423 + $0x490] sm:$0xff]
        %v2488 = vld [vmem:[%s423 + $0x498] sm:$0xff]
        %v2489 = vld [vmem:[%s423 + $0x4a0] sm:$0xff]
        %v2490 = vld [vmem:[%s423 + $0x4a8] sm:$0xff]
        %v2491 = vld [vmem:[%s423 + $0x4b0] sm:$0xff]
        %v2492 = vld [vmem:[%s423 + $0x4b8] sm:$0xff]
        %v2493 = vld [vmem:[%s423 + $0x4c0] sm:$0xff]
        %v2494 = vld [vmem:[%s423 + $0x4c8] sm:$0xff]
        %v2495 = vld [vmem:[%s423 + $0x4d0] sm:$0xff]
        %v2496 = vld [vmem:[%s423 + $0x4d8] sm:$0xff]
        %v2497 = vld [vmem:[%s423 + $0x4e0] sm:$0xff]
        %v2498 = vld [vmem:[%s423 + $0x4e8] sm:$0xff]
        %v2499 = vld [vmem:[%s423 + $0x4f0] sm:$0xff]
        %v2500 = vld [vmem:[%s423 + $0x4f8] sm:$0xff]
        %v2501 = vld [vmem:[%s423 + $0x500] sm:$0xff]
        %v2502 = vld [vmem:[%s423 + $0x508] sm:$0xff]
        %v2503 = vld [vmem:[%s423 + $0x510] sm:$0xff]
        %v2504 = vld [vmem:[%s423 + $0x518] sm:$0xff]
        %v2505 = vld [vmem:[%s423 + $0x520] sm:$0xff]
        %v2506 = vld [vmem:[%s423 + $0x528] sm:$0xff]
        %v2507 = vld [vmem:[%s423 + $0x530] sm:$0xff]
        %v2508 = vld [vmem:[%s423 + $0x538] sm:$0xff]
        %v2509 = vld [vmem:[%s423 + $0x540] sm:$0xff]
        %v2510 = vld [vmem:[%s423 + $0x548] sm:$0xff]
        %v2511 = vld [vmem:[%s423 + $0x550] sm:$0xff]
        %v2512 = vld [vmem:[%s423 + $0x558] sm:$0xff]
        %v2513 = vld [vmem:[%s423 + $0x560] sm:$0xff]
        %v2514 = vld [vmem:[%s423 + $0x568] sm:$0xff]
        %v2515 = vld [vmem:[%s423 + $0x570] sm:$0xff]
        %v2516 = vld [vmem:[%s423 + $0x578] sm:$0xff]
        %v2517 = vld [vmem:[%s423 + $0x580] sm:$0xff]
        %v2518 = vld [vmem:[%s423 + $0x588] sm:$0xff]
        %v2519 = vld [vmem:[%s423 + $0x590] sm:$0xff]
        %v2520 = vld [vmem:[%s423 + $0x598] sm:$0xff]
        %v2521 = vld [vmem:[%s423 + $0x5a0] sm:$0xff]
        %v2522 = vld [vmem:[%s423 + $0x5a8] sm:$0xff]
        %v2523 = vld [vmem:[%s423 + $0x5b0] sm:$0xff]
        %v2524 = vld [vmem:[%s423 + $0x5b8] sm:$0xff]
        %v2525 = vld [vmem:[%s423 + $0x5c0] sm:$0xff]
        %v2526 = vld [vmem:[%s423 + $0x5c8] sm:$0xff]
        %v2527 = vld [vmem:[%s423 + $0x5d0] sm:$0xff]
        %v2528 = vld [vmem:[%s423 + $0x5d8] sm:$0xff]
        %v2529 = vld [vmem:[%s423 + $0x5e0] sm:$0xff]
        %v2530 = vld [vmem:[%s423 + $0x5e8] sm:$0xff]
        %v2531 = vld [vmem:[%s423 + $0x5f0] sm:$0xff]
        %v2532 = vld [vmem:[%s423 + $0x5f8] sm:$0xff]
        %v2533 = vld [vmem:[%s423 + $0x600] sm:$0xff]
        %v2534 = vld [vmem:[%s423 + $0x608] sm:$0xff]
        %v2535 = vld [vmem:[%s423 + $0x610] sm:$0xff]
        %v2536 = vld [vmem:[%s423 + $0x618] sm:$0xff]
        %v2537 = vld [vmem:[%s423 + $0x620] sm:$0xff]
        %v2538 = vld [vmem:[%s423 + $0x628] sm:$0xff]
        %v2539 = vld [vmem:[%s423 + $0x630] sm:$0xff]
        %v2540 = vld [vmem:[%s423 + $0x638] sm:$0xff]
        %v2541 = vld [vmem:[%s423 + $0x640] sm:$0xff]
        %v2542 = vld [vmem:[%s423 + $0x648] sm:$0xff]
        %v2543 = vld [vmem:[%s423 + $0x650] sm:$0xff]
        %v2544 = vld [vmem:[%s423 + $0x658] sm:$0xff]
        %v2545 = vld [vmem:[%s423 + $0x660] sm:$0xff]
        %v2546 = vld [vmem:[%s423 + $0x668] sm:$0xff]
        %v2547 = vld [vmem:[%s423 + $0x670] sm:$0xff]
        %v2548 = vld [vmem:[%s423 + $0x678] sm:$0xff]
        %v2549 = vld [vmem:[%s423 + $0x680] sm:$0xff]
        %v2550 = vld [vmem:[%s423 + $0x688] sm:$0xff]
        %v2551 = vld [vmem:[%s423 + $0x690] sm:$0xff]
        %v2552 = vld [vmem:[%s423 + $0x698] sm:$0xff]
        %v2553 = vld [vmem:[%s423 + $0x6a0] sm:$0xff]
        %v2554 = vld [vmem:[%s423 + $0x6a8] sm:$0xff]
        %v2555 = vld [vmem:[%s423 + $0x6b0] sm:$0xff]
        %v2556 = vld [vmem:[%s423 + $0x6b8] sm:$0xff]
        %v2557 = vld [vmem:[%s423 + $0x6c0] sm:$0xff]
        %v2558 = vld [vmem:[%s423 + $0x6c8] sm:$0xff]
        %v2559 = vld [vmem:[%s423 + $0x6d0] sm:$0xff]
        %v2560 = vld [vmem:[%s423 + $0x6d8] sm:$0xff]
        %v2561 = vld [vmem:[%s423 + $0x6e0] sm:$0xff]
        %v2562 = vld [vmem:[%s423 + $0x6e8] sm:$0xff]
        %v2563 = vld [vmem:[%s423 + $0x6f0] sm:$0xff]
        %v2564 = vld [vmem:[%s423 + $0x6f8] sm:$0xff]
        %v2565 = vld [vmem:[%s423 + $0x700] sm:$0xff]
        %v2566 = vld [vmem:[%s423 + $0x708] sm:$0xff]
        %v2567 = vld [vmem:[%s423 + $0x710] sm:$0xff]
        %v2568 = vld [vmem:[%s423 + $0x718] sm:$0xff]
        %v2569 = vld [vmem:[%s423 + $0x720] sm:$0xff]
        %v2570 = vld [vmem:[%s423 + $0x728] sm:$0xff]
        %v2571 = vld [vmem:[%s423 + $0x730] sm:$0xff]
        %v2572 = vld [vmem:[%s423 + $0x738] sm:$0xff]
        %v2573 = vld [vmem:[%s423 + $0x740] sm:$0xff]
        %v2574 = vld [vmem:[%s423 + $0x748] sm:$0xff]
        %v2575 = vld [vmem:[%s423 + $0x750] sm:$0xff]
        %v2576 = vld [vmem:[%s423 + $0x758] sm:$0xff]
        %v2577 = vld [vmem:[%s423 + $0x760] sm:$0xff]
        %v2578 = vld [vmem:[%s423 + $0x768] sm:$0xff]
        %v2579 = vld [vmem:[%s423 + $0x770] sm:$0xff]
        %v2580 = vld [vmem:[%s423 + $0x778] sm:$0xff]
        %v2581 = vld [vmem:[%s423 + $0x780] sm:$0xff]
        %v2582 = vld [vmem:[%s423 + $0x788] sm:$0xff]
        %v2583 = vld [vmem:[%s423 + $0x790] sm:$0xff]
        %v2584 = vld [vmem:[%s423 + $0x798] sm:$0xff]
        %v2585 = vld [vmem:[%s423 + $0x7a0] sm:$0xff]
        %v2586 = vld [vmem:[%s423 + $0x7a8] sm:$0xff]
        %v2587 = vld [vmem:[%s423 + $0x7b0] sm:$0xff]
        %v2588 = vld [vmem:[%s423 + $0x7b8] sm:$0xff]
        %v2589 = vld [vmem:[%s423 + $0x7c0] sm:$0xff]
        %v2590 = vld [vmem:[%s423 + $0x7c8] sm:$0xff]
        %v2591 = vld [vmem:[%s423 + $0x7d0] sm:$0xff]
        %v2592 = vld [vmem:[%s423 + $0x7d8] sm:$0xff]
        %v2593 = vld [vmem:[%s423 + $0x7e0] sm:$0xff]
        %v2594 = vld [vmem:[%s423 + $0x7e8] sm:$0xff]
        %v2595 = vld [vmem:[%s423 + $0x7f0] sm:$0xff]
        %v2596 = vld [vmem:[%s423 + $0x7f8] sm:$0xff]
        %v2597 = vld [vmem:[%s432] sm:$0xff]
        %v2599 = vlaneseq
        %v2600 = vshrl.u32 %v2599, 7
        %v2601 = vsub.s32 0, %v2600
        %v2602 = vrot.slane %v2597, %v2601
        %v2603 = vlaneseq
        %v2604 = vshrl.u32 %v2603, 7
        %v2605 = vsub.s32 1, %v2604
        %v2606 = vrot.slane %v2597, %v2605
        %v2607 = vlaneseq
        %v2608 = vshrl.u32 %v2607, 7
        %v2609 = vsub.s32 2, %v2608
        %v2610 = vrot.slane %v2597, %v2609
        %v2611 = vlaneseq
        %v2612 = vshrl.u32 %v2611, 7
        %v2613 = vsub.s32 3, %v2612
        %v2614 = vrot.slane %v2597, %v2613
        %v2615 = vlaneseq
        %v2616 = vshrl.u32 %v2615, 7
        %v2617 = vsub.s32 4, %v2616
        %v2618 = vrot.slane %v2597, %v2617
        %v2619 = vlaneseq
        %v2620 = vshrl.u32 %v2619, 7
        %v2621 = vsub.s32 5, %v2620
        %v2622 = vrot.slane %v2597, %v2621
        %v2623 = vlaneseq
        %v2624 = vshrl.u32 %v2623, 7
        %v2625 = vsub.s32 6, %v2624
        %v2626 = vrot.slane %v2597, %v2625
        %v2627 = vlaneseq
        %v2628 = vshrl.u32 %v2627, 7
        %v2629 = vsub.s32 7, %v2628
        %v2630 = vrot.slane %v2597, %v2629
        %v2689 = vunpack.c.l.b16 %v2291
        %v2690 = vunpack.c.h.b16 %v2291
        %v2691 = vunpack.c.l.b16 %v2292
        %v2692 = vunpack.c.h.b16 %v2292
        %v2693 = vunpack.c.l.b16 %v2293
        %v2694 = vunpack.c.h.b16 %v2293
        %v2695 = vunpack.c.l.b16 %v2294
        %v2696 = vunpack.c.h.b16 %v2294
        %v2697 = vunpack.c.l.b16 %v2295
        %v2698 = vunpack.c.h.b16 %v2295
        %v2699 = vunpack.c.l.b16 %v2296
        %v2700 = vunpack.c.h.b16 %v2296
        %v2701 = vunpack.c.l.b16 %v2297
        %v2702 = vunpack.c.h.b16 %v2297
        %v2703 = vunpack.c.l.b16 %v2298
        %v2704 = vunpack.c.h.b16 %v2298
        %v2705 = vunpack.c.l.b16 %v2299
        %v2706 = vunpack.c.h.b16 %v2299
        %v2707 = vunpack.c.l.b16 %v2300
        %v2708 = vunpack.c.h.b16 %v2300
        %v2709 = vunpack.c.l.b16 %v2301
        %v2710 = vunpack.c.h.b16 %v2301
        %v2711 = vunpack.c.l.b16 %v2302
        %v2712 = vunpack.c.h.b16 %v2302
        %v2713 = vunpack.c.l.b16 %v2303
        %v2714 = vunpack.c.h.b16 %v2303
        %v2715 = vunpack.c.l.b16 %v2304
        %v2716 = vunpack.c.h.b16 %v2304
        %v2717 = vunpack.c.l.b16 %v2305
        %v2718 = vunpack.c.h.b16 %v2305
        %v2719 = vunpack.c.l.b16 %v2306
        %v2720 = vunpack.c.h.b16 %v2306
        %v2721 = vunpack.c.l.b16 %v2307
        %v2722 = vunpack.c.h.b16 %v2307
        %v2723 = vunpack.c.l.b16 %v2308
        %v2724 = vunpack.c.h.b16 %v2308
        %v2725 = vunpack.c.l.b16 %v2309
        %v2726 = vunpack.c.h.b16 %v2309
        %v2727 = vunpack.c.l.b16 %v2310
        %v2728 = vunpack.c.h.b16 %v2310
        %v2729 = vunpack.c.l.b16 %v2311
        %v2730 = vunpack.c.h.b16 %v2311
        %v2731 = vunpack.c.l.b16 %v2312
        %v2732 = vunpack.c.h.b16 %v2312
        %v2733 = vunpack.c.l.b16 %v2313
        %v2734 = vunpack.c.h.b16 %v2313
        %v2735 = vunpack.c.l.b16 %v2314
        %v2736 = vunpack.c.h.b16 %v2314
        %v2737 = vunpack.c.l.b16 %v2315
        %v2738 = vunpack.c.h.b16 %v2315
        %v2739 = vunpack.c.l.b16 %v2316
        %v2740 = vunpack.c.h.b16 %v2316
        %v2741 = vunpack.c.l.b16 %v2317
        %v2742 = vunpack.c.h.b16 %v2317
        %v2743 = vunpack.c.l.b16 %v2318
        %v2744 = vunpack.c.h.b16 %v2318
        %v2745 = vunpack.c.l.b16 %v2319
        %v2746 = vunpack.c.h.b16 %v2319
        %v2747 = vunpack.c.l.b16 %v2320
        %v2748 = vunpack.c.h.b16 %v2320
        %v2749 = vunpack.c.l.b16 %v2321
        %v2750 = vunpack.c.h.b16 %v2321
        %v2751 = vunpack.c.l.b16 %v2322
        %v2752 = vunpack.c.h.b16 %v2322
        %v2753 = vunpack.c.l.b16 %v2323
        %v2754 = vunpack.c.h.b16 %v2323
        %v2755 = vunpack.c.l.b16 %v2324
        %v2756 = vunpack.c.h.b16 %v2324
        %v2757 = vunpack.c.l.b16 %v2325
        %v2758 = vunpack.c.h.b16 %v2325
        %v2759 = vunpack.c.l.b16 %v2326
        %v2760 = vunpack.c.h.b16 %v2326
        %v2761 = vunpack.c.l.b16 %v2327
        %v2762 = vunpack.c.h.b16 %v2327
        %v2763 = vunpack.c.l.b16 %v2328
        %v2764 = vunpack.c.h.b16 %v2328
        %v2765 = vunpack.c.l.b16 %v2329
        %v2766 = vunpack.c.h.b16 %v2329
        %v2767 = vunpack.c.l.b16 %v2330
        %v2768 = vunpack.c.h.b16 %v2330
        %v2769 = vunpack.c.l.b16 %v2331
        %v2770 = vunpack.c.h.b16 %v2331
        %v2771 = vunpack.c.l.b16 %v2332
        %v2772 = vunpack.c.h.b16 %v2332
        %v2773 = vunpack.c.l.b16 %v2333
        %v2774 = vunpack.c.h.b16 %v2333
        %v2775 = vunpack.c.l.b16 %v2334
        %v2776 = vunpack.c.h.b16 %v2334
        %v2777 = vunpack.c.l.b16 %v2335
        %v2778 = vunpack.c.h.b16 %v2335
        %v2779 = vunpack.c.l.b16 %v2336
        %v2780 = vunpack.c.h.b16 %v2336
        %v2781 = vunpack.c.l.b16 %v2337
        %v2782 = vunpack.c.h.b16 %v2337
        %v2783 = vunpack.c.l.b16 %v2338
        %v2784 = vunpack.c.h.b16 %v2338
        %v2785 = vunpack.c.l.b16 %v2339
        %v2786 = vunpack.c.h.b16 %v2339
        %v2787 = vunpack.c.l.b16 %v2340
        %v2788 = vunpack.c.h.b16 %v2340
        %v2789 = vpack.c.b16 %v2693, %v2689
        %v2790 = vpack.c.b16 %v2694, %v2690
        %v2791 = vpack.c.b16 %v2695, %v2691
        %v2792 = vpack.c.b16 %v2696, %v2692
        %v2793 = vpack.c.b16 %v2701, %v2697
        %v2794 = vpack.c.b16 %v2702, %v2698
        %v2795 = vpack.c.b16 %v2703, %v2699
        %v2796 = vpack.c.b16 %v2704, %v2700
        %v2797 = vpack.c.b16 %v2709, %v2705
        %v2798 = vpack.c.b16 %v2710, %v2706
        %v2799 = vpack.c.b16 %v2711, %v2707
        %v2800 = vpack.c.b16 %v2712, %v2708
        %v2801 = vpack.c.b16 %v2717, %v2713
        %v2802 = vpack.c.b16 %v2718, %v2714
        %v2803 = vpack.c.b16 %v2719, %v2715
        %v2804 = vpack.c.b16 %v2720, %v2716
        %v2805 = vpack.c.b16 %v2725, %v2721
        %v2806 = vpack.c.b16 %v2726, %v2722
        %v2807 = vpack.c.b16 %v2727, %v2723
        %v2808 = vpack.c.b16 %v2728, %v2724
        %v2809 = vpack.c.b16 %v2733, %v2729
        %v2810 = vpack.c.b16 %v2734, %v2730
        %v2811 = vpack.c.b16 %v2735, %v2731
        %v2812 = vpack.c.b16 %v2736, %v2732
        %v2813 = vpack.c.b16 %v2741, %v2737
        %v2814 = vpack.c.b16 %v2742, %v2738
        %v2815 = vpack.c.b16 %v2743, %v2739
        %v2816 = vpack.c.b16 %v2744, %v2740
        %v2817 = vpack.c.b16 %v2749, %v2745
        %v2818 = vpack.c.b16 %v2750, %v2746
        %v2819 = vpack.c.b16 %v2751, %v2747
        %v2820 = vpack.c.b16 %v2752, %v2748
        %v2821 = vpack.c.b16 %v2757, %v2753
        %v2822 = vpack.c.b16 %v2758, %v2754
        %v2823 = vpack.c.b16 %v2759, %v2755
        %v2824 = vpack.c.b16 %v2760, %v2756
        %v2825 = vpack.c.b16 %v2765, %v2761
        %v2826 = vpack.c.b16 %v2766, %v2762
        %v2827 = vpack.c.b16 %v2767, %v2763
        %v2828 = vpack.c.b16 %v2768, %v2764
        %v2829 = vpack.c.b16 %v2773, %v2769
        %v2830 = vpack.c.b16 %v2774, %v2770
        %v2831 = vpack.c.b16 %v2775, %v2771
        %v2832 = vpack.c.b16 %v2776, %v2772
        %v2833 = vpack.c.b16 %v2781, %v2777
        %v2834 = vpack.c.b16 %v2782, %v2778
        %v2835 = vpack.c.b16 %v2783, %v2779
        %v2836 = vpack.c.b16 %v2784, %v2780
        %v2837 = vpack.c.b16 %v2785, %v2785
        %v2838 = vpack.c.b16 %v2786, %v2786
        %v2839 = vpack.c.b16 %v2787, %v2787
        %v2840 = vpack.c.b16 %v2788, %v2788
        %v3149 = vunpack.c.l.b16 %v2341
        %v3150 = vunpack.c.h.b16 %v2341
        %v3151 = vunpack.c.l.b16 %v2342
        %v3152 = vunpack.c.h.b16 %v2342
        %v3153 = vunpack.c.l.b16 %v2343
        %v3154 = vunpack.c.h.b16 %v2343
        %v3155 = vunpack.c.l.b16 %v2344
        %v3156 = vunpack.c.h.b16 %v2344
        %v3157 = vunpack.c.l.b16 %v2345
        %v3158 = vunpack.c.h.b16 %v2345
        %v3159 = vunpack.c.l.b16 %v2346
        %v3160 = vunpack.c.h.b16 %v2346
        %v3161 = vunpack.c.l.b16 %v2347
        %v3162 = vunpack.c.h.b16 %v2347
        %v3163 = vunpack.c.l.b16 %v2348
        %v3164 = vunpack.c.h.b16 %v2348
        %v3165 = vunpack.c.l.b16 %v2349
        %v3166 = vunpack.c.h.b16 %v2349
        %v3167 = vunpack.c.l.b16 %v2350
        %v3168 = vunpack.c.h.b16 %v2350
        %v3169 = vunpack.c.l.b16 %v2351
        %v3170 = vunpack.c.h.b16 %v2351
        %v3171 = vunpack.c.l.b16 %v2352
        %v3172 = vunpack.c.h.b16 %v2352
        %v3173 = vunpack.c.l.b16 %v2353
        %v3174 = vunpack.c.h.b16 %v2353
        %v3175 = vunpack.c.l.b16 %v2354
        %v3176 = vunpack.c.h.b16 %v2354
        %v3177 = vunpack.c.l.b16 %v2355
        %v3178 = vunpack.c.h.b16 %v2355
        %v3179 = vunpack.c.l.b16 %v2356
        %v3180 = vunpack.c.h.b16 %v2356
        %v3181 = vunpack.c.l.b16 %v2357
        %v3182 = vunpack.c.h.b16 %v2357
        %v3183 = vunpack.c.l.b16 %v2358
        %v3184 = vunpack.c.h.b16 %v2358
        %v3185 = vunpack.c.l.b16 %v2359
        %v3186 = vunpack.c.h.b16 %v2359
        %v3187 = vunpack.c.l.b16 %v2360
        %v3188 = vunpack.c.h.b16 %v2360
        %v3189 = vunpack.c.l.b16 %v2361
        %v3190 = vunpack.c.h.b16 %v2361
        %v3191 = vunpack.c.l.b16 %v2362
        %v3192 = vunpack.c.h.b16 %v2362
        %v3193 = vunpack.c.l.b16 %v2363
        %v3194 = vunpack.c.h.b16 %v2363
        %v3195 = vunpack.c.l.b16 %v2364
        %v3196 = vunpack.c.h.b16 %v2364
        %v3197 = vunpack.c.l.b16 %v2365
        %v3198 = vunpack.c.h.b16 %v2365
        %v3199 = vunpack.c.l.b16 %v2366
        %v3200 = vunpack.c.h.b16 %v2366
        %v3201 = vunpack.c.l.b16 %v2367
        %v3202 = vunpack.c.h.b16 %v2367
        %v3203 = vunpack.c.l.b16 %v2368
        %v3204 = vunpack.c.h.b16 %v2368
        %v3205 = vunpack.c.l.b16 %v2369
        %v3206 = vunpack.c.h.b16 %v2369
        %v3207 = vunpack.c.l.b16 %v2370
        %v3208 = vunpack.c.h.b16 %v2370
        %v3209 = vunpack.c.l.b16 %v2371
        %v3210 = vunpack.c.h.b16 %v2371
        %v3211 = vunpack.c.l.b16 %v2372
        %v3212 = vunpack.c.h.b16 %v2372
        %v3213 = vunpack.c.l.b16 %v2373
        %v3214 = vunpack.c.h.b16 %v2373
        %v3215 = vunpack.c.l.b16 %v2374
        %v3216 = vunpack.c.h.b16 %v2374
        %v3217 = vunpack.c.l.b16 %v2375
        %v3218 = vunpack.c.h.b16 %v2375
        %v3219 = vunpack.c.l.b16 %v2376
        %v3220 = vunpack.c.h.b16 %v2376
        %v3221 = vunpack.c.l.b16 %v2377
        %v3222 = vunpack.c.h.b16 %v2377
        %v3223 = vunpack.c.l.b16 %v2378
        %v3224 = vunpack.c.h.b16 %v2378
        %v3225 = vunpack.c.l.b16 %v2379
        %v3226 = vunpack.c.h.b16 %v2379
        %v3227 = vunpack.c.l.b16 %v2380
        %v3228 = vunpack.c.h.b16 %v2380
        %v3229 = vunpack.c.l.b16 %v2381
        %v3230 = vunpack.c.h.b16 %v2381
        %v3231 = vunpack.c.l.b16 %v2382
        %v3232 = vunpack.c.h.b16 %v2382
        %v3233 = vunpack.c.l.b16 %v2383
        %v3234 = vunpack.c.h.b16 %v2383
        %v3235 = vunpack.c.l.b16 %v2384
        %v3236 = vunpack.c.h.b16 %v2384
        %v3237 = vunpack.c.l.b16 %v2385
        %v3238 = vunpack.c.h.b16 %v2385
        %v3239 = vunpack.c.l.b16 %v2386
        %v3240 = vunpack.c.h.b16 %v2386
        %v3241 = vunpack.c.l.b16 %v2387
        %v3242 = vunpack.c.h.b16 %v2387
        %v3243 = vunpack.c.l.b16 %v2388
        %v3244 = vunpack.c.h.b16 %v2388
        %v3245 = vunpack.c.l.b16 %v2389
        %v3246 = vunpack.c.h.b16 %v2389
        %v3247 = vunpack.c.l.b16 %v2390
        %v3248 = vunpack.c.h.b16 %v2390
        %v3249 = vunpack.c.l.b16 %v2391
        %v3250 = vunpack.c.h.b16 %v2391
        %v3251 = vunpack.c.l.b16 %v2392
        %v3252 = vunpack.c.h.b16 %v2392
        %v3253 = vunpack.c.l.b16 %v2393
        %v3254 = vunpack.c.h.b16 %v2393
        %v3255 = vunpack.c.l.b16 %v2394
        %v3256 = vunpack.c.h.b16 %v2394
        %v3257 = vunpack.c.l.b16 %v2395
        %v3258 = vunpack.c.h.b16 %v2395
        %v3259 = vunpack.c.l.b16 %v2396
        %v3260 = vunpack.c.h.b16 %v2396
        %v3261 = vunpack.c.l.b16 %v2397
        %v3262 = vunpack.c.h.b16 %v2397
        %v3263 = vunpack.c.l.b16 %v2398
        %v3264 = vunpack.c.h.b16 %v2398
        %v3265 = vunpack.c.l.b16 %v2399
        %v3266 = vunpack.c.h.b16 %v2399
        %v3267 = vunpack.c.l.b16 %v2400
        %v3268 = vunpack.c.h.b16 %v2400
        %v3269 = vunpack.c.l.b16 %v2401
        %v3270 = vunpack.c.h.b16 %v2401
        %v3271 = vunpack.c.l.b16 %v2402
        %v3272 = vunpack.c.h.b16 %v2402
        %v3273 = vunpack.c.l.b16 %v2403
        %v3274 = vunpack.c.h.b16 %v2403
        %v3275 = vunpack.c.l.b16 %v2404
        %v3276 = vunpack.c.h.b16 %v2404
        %v3277 = vunpack.c.l.b16 %v2405
        %v3278 = vunpack.c.h.b16 %v2405
        %v3279 = vunpack.c.l.b16 %v2406
        %v3280 = vunpack.c.h.b16 %v2406
        %v3281 = vunpack.c.l.b16 %v2407
        %v3282 = vunpack.c.h.b16 %v2407
        %v3283 = vunpack.c.l.b16 %v2408
        %v3284 = vunpack.c.h.b16 %v2408
        %v3285 = vunpack.c.l.b16 %v2409
        %v3286 = vunpack.c.h.b16 %v2409
        %v3287 = vunpack.c.l.b16 %v2410
        %v3288 = vunpack.c.h.b16 %v2410
        %v3289 = vunpack.c.l.b16 %v2411
        %v3290 = vunpack.c.h.b16 %v2411
        %v3291 = vunpack.c.l.b16 %v2412
        %v3292 = vunpack.c.h.b16 %v2412
        %v3293 = vunpack.c.l.b16 %v2413
        %v3294 = vunpack.c.h.b16 %v2413
        %v3295 = vunpack.c.l.b16 %v2414
        %v3296 = vunpack.c.h.b16 %v2414
        %v3297 = vunpack.c.l.b16 %v2415
        %v3298 = vunpack.c.h.b16 %v2415
        %v3299 = vunpack.c.l.b16 %v2416
        %v3300 = vunpack.c.h.b16 %v2416
        %v3301 = vunpack.c.l.b16 %v2417
        %v3302 = vunpack.c.h.b16 %v2417
        %v3303 = vunpack.c.l.b16 %v2418
        %v3304 = vunpack.c.h.b16 %v2418
        %v3305 = vunpack.c.l.b16 %v2419
        %v3306 = vunpack.c.h.b16 %v2419
        %v3307 = vunpack.c.l.b16 %v2420
        %v3308 = vunpack.c.h.b16 %v2420
        %v3309 = vunpack.c.l.b16 %v2421
        %v3310 = vunpack.c.h.b16 %v2421
        %v3311 = vunpack.c.l.b16 %v2422
        %v3312 = vunpack.c.h.b16 %v2422
        %v3313 = vunpack.c.l.b16 %v2423
        %v3314 = vunpack.c.h.b16 %v2423
        %v3315 = vunpack.c.l.b16 %v2424
        %v3316 = vunpack.c.h.b16 %v2424
        %v3317 = vunpack.c.l.b16 %v2425
        %v3318 = vunpack.c.h.b16 %v2425
        %v3319 = vunpack.c.l.b16 %v2426
        %v3320 = vunpack.c.h.b16 %v2426
        %v3321 = vunpack.c.l.b16 %v2427
        %v3322 = vunpack.c.h.b16 %v2427
        %v3323 = vunpack.c.l.b16 %v2428
        %v3324 = vunpack.c.h.b16 %v2428
        %v3325 = vunpack.c.l.b16 %v2429
        %v3326 = vunpack.c.h.b16 %v2429
        %v3327 = vunpack.c.l.b16 %v2430
        %v3328 = vunpack.c.h.b16 %v2430
        %v3329 = vunpack.c.l.b16 %v2431
        %v3330 = vunpack.c.h.b16 %v2431
        %v3331 = vunpack.c.l.b16 %v2432
        %v3332 = vunpack.c.h.b16 %v2432
        %v3333 = vunpack.c.l.b16 %v2433
        %v3334 = vunpack.c.h.b16 %v2433
        %v3335 = vunpack.c.l.b16 %v2434
        %v3336 = vunpack.c.h.b16 %v2434
        %v3337 = vunpack.c.l.b16 %v2435
        %v3338 = vunpack.c.h.b16 %v2435
        %v3339 = vunpack.c.l.b16 %v2436
        %v3340 = vunpack.c.h.b16 %v2436
        %v3341 = vunpack.c.l.b16 %v2437
        %v3342 = vunpack.c.h.b16 %v2437
        %v3343 = vunpack.c.l.b16 %v2438
        %v3344 = vunpack.c.h.b16 %v2438
        %v3345 = vunpack.c.l.b16 %v2439
        %v3346 = vunpack.c.h.b16 %v2439
        %v3347 = vunpack.c.l.b16 %v2440
        %v3348 = vunpack.c.h.b16 %v2440
        %v3349 = vunpack.c.l.b16 %v2441
        %v3350 = vunpack.c.h.b16 %v2441
        %v3351 = vunpack.c.l.b16 %v2442
        %v3352 = vunpack.c.h.b16 %v2442
        %v3353 = vunpack.c.l.b16 %v2443
        %v3354 = vunpack.c.h.b16 %v2443
        %v3355 = vunpack.c.l.b16 %v2444
        %v3356 = vunpack.c.h.b16 %v2444
        %v3357 = vunpack.c.l.b16 %v2445
        %v3358 = vunpack.c.h.b16 %v2445
        %v3359 = vunpack.c.l.b16 %v2446
        %v3360 = vunpack.c.h.b16 %v2446
        %v3361 = vunpack.c.l.b16 %v2447
        %v3362 = vunpack.c.h.b16 %v2447
        %v3363 = vunpack.c.l.b16 %v2448
        %v3364 = vunpack.c.h.b16 %v2448
        %v3365 = vunpack.c.l.b16 %v2449
        %v3366 = vunpack.c.h.b16 %v2449
        %v3367 = vunpack.c.l.b16 %v2450
        %v3368 = vunpack.c.h.b16 %v2450
        %v3369 = vunpack.c.l.b16 %v2451
        %v3370 = vunpack.c.h.b16 %v2451
        %v3371 = vunpack.c.l.b16 %v2452
        %v3372 = vunpack.c.h.b16 %v2452
        %v3373 = vunpack.c.l.b16 %v2453
        %v3374 = vunpack.c.h.b16 %v2453
        %v3375 = vunpack.c.l.b16 %v2454
        %v3376 = vunpack.c.h.b16 %v2454
        %v3377 = vunpack.c.l.b16 %v2455
        %v3378 = vunpack.c.h.b16 %v2455
        %v3379 = vunpack.c.l.b16 %v2456
        %v3380 = vunpack.c.h.b16 %v2456
        %v3381 = vunpack.c.l.b16 %v2457
        %v3382 = vunpack.c.h.b16 %v2457
        %v3383 = vunpack.c.l.b16 %v2458
        %v3384 = vunpack.c.h.b16 %v2458
        %v3385 = vunpack.c.l.b16 %v2459
        %v3386 = vunpack.c.h.b16 %v2459
        %v3387 = vunpack.c.l.b16 %v2460
        %v3388 = vunpack.c.h.b16 %v2460
        %v3389 = vunpack.c.l.b16 %v2461
        %v3390 = vunpack.c.h.b16 %v2461
        %v3391 = vunpack.c.l.b16 %v2462
        %v3392 = vunpack.c.h.b16 %v2462
        %v3393 = vunpack.c.l.b16 %v2463
        %v3394 = vunpack.c.h.b16 %v2463
        %v3395 = vunpack.c.l.b16 %v2464
        %v3396 = vunpack.c.h.b16 %v2464
        %v3397 = vunpack.c.l.b16 %v2465
        %v3398 = vunpack.c.h.b16 %v2465
        %v3399 = vunpack.c.l.b16 %v2466
        %v3400 = vunpack.c.h.b16 %v2466
        %v3401 = vunpack.c.l.b16 %v2467
        %v3402 = vunpack.c.h.b16 %v2467
        %v3403 = vunpack.c.l.b16 %v2468
        %v3404 = vunpack.c.h.b16 %v2468
        %v3405 = vunpack.c.l.b16 %v2469
        %v3406 = vunpack.c.h.b16 %v2469
        %v3407 = vunpack.c.l.b16 %v2470
        %v3408 = vunpack.c.h.b16 %v2470
        %v3409 = vunpack.c.l.b16 %v2471
        %v3410 = vunpack.c.h.b16 %v2471
        %v3411 = vunpack.c.l.b16 %v2472
        %v3412 = vunpack.c.h.b16 %v2472
        %v3413 = vunpack.c.l.b16 %v2473
        %v3414 = vunpack.c.h.b16 %v2473
        %v3415 = vunpack.c.l.b16 %v2474
        %v3416 = vunpack.c.h.b16 %v2474
        %v3417 = vunpack.c.l.b16 %v2475
        %v3418 = vunpack.c.h.b16 %v2475
        %v3419 = vunpack.c.l.b16 %v2476
        %v3420 = vunpack.c.h.b16 %v2476
        %v3421 = vunpack.c.l.b16 %v2477
        %v3422 = vunpack.c.h.b16 %v2477
        %v3423 = vunpack.c.l.b16 %v2478
        %v3424 = vunpack.c.h.b16 %v2478
        %v3425 = vunpack.c.l.b16 %v2479
        %v3426 = vunpack.c.h.b16 %v2479
        %v3427 = vunpack.c.l.b16 %v2480
        %v3428 = vunpack.c.h.b16 %v2480
        %v3429 = vunpack.c.l.b16 %v2481
        %v3430 = vunpack.c.h.b16 %v2481
        %v3431 = vunpack.c.l.b16 %v2482
        %v3432 = vunpack.c.h.b16 %v2482
        %v3433 = vunpack.c.l.b16 %v2483
        %v3434 = vunpack.c.h.b16 %v2483
        %v3435 = vunpack.c.l.b16 %v2484
        %v3436 = vunpack.c.h.b16 %v2484
        %v3437 = vunpack.c.l.b16 %v2485
        %v3438 = vunpack.c.h.b16 %v2485
        %v3439 = vunpack.c.l.b16 %v2486
        %v3440 = vunpack.c.h.b16 %v2486
        %v3441 = vunpack.c.l.b16 %v2487
        %v3442 = vunpack.c.h.b16 %v2487
        %v3443 = vunpack.c.l.b16 %v2488
        %v3444 = vunpack.c.h.b16 %v2488
        %v3445 = vunpack.c.l.b16 %v2489
        %v3446 = vunpack.c.h.b16 %v2489
        %v3447 = vunpack.c.l.b16 %v2490
        %v3448 = vunpack.c.h.b16 %v2490
        %v3449 = vunpack.c.l.b16 %v2491
        %v3450 = vunpack.c.h.b16 %v2491
        %v3451 = vunpack.c.l.b16 %v2492
        %v3452 = vunpack.c.h.b16 %v2492
        %v3453 = vunpack.c.l.b16 %v2493
        %v3454 = vunpack.c.h.b16 %v2493
        %v3455 = vunpack.c.l.b16 %v2494
        %v3456 = vunpack.c.h.b16 %v2494
        %v3457 = vunpack.c.l.b16 %v2495
        %v3458 = vunpack.c.h.b16 %v2495
        %v3459 = vunpack.c.l.b16 %v2496
        %v3460 = vunpack.c.h.b16 %v2496
        %v3461 = vunpack.c.l.b16 %v2497
        %v3462 = vunpack.c.h.b16 %v2497
        %v3463 = vunpack.c.l.b16 %v2498
        %v3464 = vunpack.c.h.b16 %v2498
        %v3465 = vunpack.c.l.b16 %v2499
        %v3466 = vunpack.c.h.b16 %v2499
        %v3467 = vunpack.c.l.b16 %v2500
        %v3468 = vunpack.c.h.b16 %v2500
        %v3469 = vunpack.c.l.b16 %v2501
        %v3470 = vunpack.c.h.b16 %v2501
        %v3471 = vunpack.c.l.b16 %v2502
        %v3472 = vunpack.c.h.b16 %v2502
        %v3473 = vunpack.c.l.b16 %v2503
        %v3474 = vunpack.c.h.b16 %v2503
        %v3475 = vunpack.c.l.b16 %v2504
        %v3476 = vunpack.c.h.b16 %v2504
        %v3477 = vunpack.c.l.b16 %v2505
        %v3478 = vunpack.c.h.b16 %v2505
        %v3479 = vunpack.c.l.b16 %v2506
        %v3480 = vunpack.c.h.b16 %v2506
        %v3481 = vunpack.c.l.b16 %v2507
        %v3482 = vunpack.c.h.b16 %v2507
        %v3483 = vunpack.c.l.b16 %v2508
        %v3484 = vunpack.c.h.b16 %v2508
        %v3485 = vunpack.c.l.b16 %v2509
        %v3486 = vunpack.c.h.b16 %v2509
        %v3487 = vunpack.c.l.b16 %v2510
        %v3488 = vunpack.c.h.b16 %v2510
        %v3489 = vunpack.c.l.b16 %v2511
        %v3490 = vunpack.c.h.b16 %v2511
        %v3491 = vunpack.c.l.b16 %v2512
        %v3492 = vunpack.c.h.b16 %v2512
        %v3493 = vunpack.c.l.b16 %v2513
        %v3494 = vunpack.c.h.b16 %v2513
        %v3495 = vunpack.c.l.b16 %v2514
        %v3496 = vunpack.c.h.b16 %v2514
        %v3497 = vunpack.c.l.b16 %v2515
        %v3498 = vunpack.c.h.b16 %v2515
        %v3499 = vunpack.c.l.b16 %v2516
        %v3500 = vunpack.c.h.b16 %v2516
        %v3501 = vunpack.c.l.b16 %v2517
        %v3502 = vunpack.c.h.b16 %v2517
        %v3503 = vunpack.c.l.b16 %v2518
        %v3504 = vunpack.c.h.b16 %v2518
        %v3505 = vunpack.c.l.b16 %v2519
        %v3506 = vunpack.c.h.b16 %v2519
        %v3507 = vunpack.c.l.b16 %v2520
        %v3508 = vunpack.c.h.b16 %v2520
        %v3509 = vunpack.c.l.b16 %v2521
        %v3510 = vunpack.c.h.b16 %v2521
        %v3511 = vunpack.c.l.b16 %v2522
        %v3512 = vunpack.c.h.b16 %v2522
        %v3513 = vunpack.c.l.b16 %v2523
        %v3514 = vunpack.c.h.b16 %v2523
        %v3515 = vunpack.c.l.b16 %v2524
        %v3516 = vunpack.c.h.b16 %v2524
        %v3517 = vunpack.c.l.b16 %v2525
        %v3518 = vunpack.c.h.b16 %v2525
        %v3519 = vunpack.c.l.b16 %v2526
        %v3520 = vunpack.c.h.b16 %v2526
        %v3521 = vunpack.c.l.b16 %v2527
        %v3522 = vunpack.c.h.b16 %v2527
        %v3523 = vunpack.c.l.b16 %v2528
        %v3524 = vunpack.c.h.b16 %v2528
        %v3525 = vunpack.c.l.b16 %v2529
        %v3526 = vunpack.c.h.b16 %v2529
        %v3527 = vunpack.c.l.b16 %v2530
        %v3528 = vunpack.c.h.b16 %v2530
        %v3529 = vunpack.c.l.b16 %v2531
        %v3530 = vunpack.c.h.b16 %v2531
        %v3531 = vunpack.c.l.b16 %v2532
        %v3532 = vunpack.c.h.b16 %v2532
        %v3533 = vunpack.c.l.b16 %v2533
        %v3534 = vunpack.c.h.b16 %v2533
        %v3535 = vunpack.c.l.b16 %v2534
        %v3536 = vunpack.c.h.b16 %v2534
        %v3537 = vunpack.c.l.b16 %v2535
        %v3538 = vunpack.c.h.b16 %v2535
        %v3539 = vunpack.c.l.b16 %v2536
        %v3540 = vunpack.c.h.b16 %v2536
        %v3541 = vunpack.c.l.b16 %v2537
        %v3542 = vunpack.c.h.b16 %v2537
        %v3543 = vunpack.c.l.b16 %v2538
        %v3544 = vunpack.c.h.b16 %v2538
        %v3545 = vunpack.c.l.b16 %v2539
        %v3546 = vunpack.c.h.b16 %v2539
        %v3547 = vunpack.c.l.b16 %v2540
        %v3548 = vunpack.c.h.b16 %v2540
        %v3549 = vunpack.c.l.b16 %v2541
        %v3550 = vunpack.c.h.b16 %v2541
        %v3551 = vunpack.c.l.b16 %v2542
        %v3552 = vunpack.c.h.b16 %v2542
        %v3553 = vunpack.c.l.b16 %v2543
        %v3554 = vunpack.c.h.b16 %v2543
        %v3555 = vunpack.c.l.b16 %v2544
        %v3556 = vunpack.c.h.b16 %v2544
        %v3557 = vunpack.c.l.b16 %v2545
        %v3558 = vunpack.c.h.b16 %v2545
        %v3559 = vunpack.c.l.b16 %v2546
        %v3560 = vunpack.c.h.b16 %v2546
        %v3561 = vunpack.c.l.b16 %v2547
        %v3562 = vunpack.c.h.b16 %v2547
        %v3563 = vunpack.c.l.b16 %v2548
        %v3564 = vunpack.c.h.b16 %v2548
        %v3565 = vunpack.c.l.b16 %v2549
        %v3566 = vunpack.c.h.b16 %v2549
        %v3567 = vunpack.c.l.b16 %v2550
        %v3568 = vunpack.c.h.b16 %v2550
        %v3569 = vunpack.c.l.b16 %v2551
        %v3570 = vunpack.c.h.b16 %v2551
        %v3571 = vunpack.c.l.b16 %v2552
        %v3572 = vunpack.c.h.b16 %v2552
        %v3573 = vunpack.c.l.b16 %v2553
        %v3574 = vunpack.c.h.b16 %v2553
        %v3575 = vunpack.c.l.b16 %v2554
        %v3576 = vunpack.c.h.b16 %v2554
        %v3577 = vunpack.c.l.b16 %v2555
        %v3578 = vunpack.c.h.b16 %v2555
        %v3579 = vunpack.c.l.b16 %v2556
        %v3580 = vunpack.c.h.b16 %v2556
        %v3581 = vunpack.c.l.b16 %v2557
        %v3582 = vunpack.c.h.b16 %v2557
        %v3583 = vunpack.c.l.b16 %v2558
        %v3584 = vunpack.c.h.b16 %v2558
        %v3585 = vunpack.c.l.b16 %v2559
        %v3586 = vunpack.c.h.b16 %v2559
        %v3587 = vunpack.c.l.b16 %v2560
        %v3588 = vunpack.c.h.b16 %v2560
        %v3589 = vunpack.c.l.b16 %v2561
        %v3590 = vunpack.c.h.b16 %v2561
        %v3591 = vunpack.c.l.b16 %v2562
        %v3592 = vunpack.c.h.b16 %v2562
        %v3593 = vunpack.c.l.b16 %v2563
        %v3594 = vunpack.c.h.b16 %v2563
        %v3595 = vunpack.c.l.b16 %v2564
        %v3596 = vunpack.c.h.b16 %v2564
        %v3597 = vunpack.c.l.b16 %v2565
        %v3598 = vunpack.c.h.b16 %v2565
        %v3599 = vunpack.c.l.b16 %v2566
        %v3600 = vunpack.c.h.b16 %v2566
        %v3601 = vunpack.c.l.b16 %v2567
        %v3602 = vunpack.c.h.b16 %v2567
        %v3603 = vunpack.c.l.b16 %v2568
        %v3604 = vunpack.c.h.b16 %v2568
        %v3605 = vunpack.c.l.b16 %v2569
        %v3606 = vunpack.c.h.b16 %v2569
        %v3607 = vunpack.c.l.b16 %v2570
        %v3608 = vunpack.c.h.b16 %v2570
        %v3609 = vunpack.c.l.b16 %v2571
        %v3610 = vunpack.c.h.b16 %v2571
        %v3611 = vunpack.c.l.b16 %v2572
        %v3612 = vunpack.c.h.b16 %v2572
        %v3613 = vunpack.c.l.b16 %v2573
        %v3614 = vunpack.c.h.b16 %v2573
        %v3615 = vunpack.c.l.b16 %v2574
        %v3616 = vunpack.c.h.b16 %v2574
        %v3617 = vunpack.c.l.b16 %v2575
        %v3618 = vunpack.c.h.b16 %v2575
        %v3619 = vunpack.c.l.b16 %v2576
        %v3620 = vunpack.c.h.b16 %v2576
        %v3621 = vunpack.c.l.b16 %v2577
        %v3622 = vunpack.c.h.b16 %v2577
        %v3623 = vunpack.c.l.b16 %v2578
        %v3624 = vunpack.c.h.b16 %v2578
        %v3625 = vunpack.c.l.b16 %v2579
        %v3626 = vunpack.c.h.b16 %v2579
        %v3627 = vunpack.c.l.b16 %v2580
        %v3628 = vunpack.c.h.b16 %v2580
        %v3629 = vunpack.c.l.b16 %v2581
        %v3630 = vunpack.c.h.b16 %v2581
        %v3631 = vunpack.c.l.b16 %v2582
        %v3632 = vunpack.c.h.b16 %v2582
        %v3633 = vunpack.c.l.b16 %v2583
        %v3634 = vunpack.c.h.b16 %v2583
        %v3635 = vunpack.c.l.b16 %v2584
        %v3636 = vunpack.c.h.b16 %v2584
        %v3637 = vunpack.c.l.b16 %v2585
        %v3638 = vunpack.c.h.b16 %v2585
        %v3639 = vunpack.c.l.b16 %v2586
        %v3640 = vunpack.c.h.b16 %v2586
        %v3641 = vunpack.c.l.b16 %v2587
        %v3642 = vunpack.c.h.b16 %v2587
        %v3643 = vunpack.c.l.b16 %v2588
        %v3644 = vunpack.c.h.b16 %v2588
        %v3645 = vunpack.c.l.b16 %v2589
        %v3646 = vunpack.c.h.b16 %v2589
        %v3647 = vunpack.c.l.b16 %v2590
        %v3648 = vunpack.c.h.b16 %v2590
        %v3649 = vunpack.c.l.b16 %v2591
        %v3650 = vunpack.c.h.b16 %v2591
        %v3651 = vunpack.c.l.b16 %v2592
        %v3652 = vunpack.c.h.b16 %v2592
        %v3653 = vunpack.c.l.b16 %v2593
        %v3654 = vunpack.c.h.b16 %v2593
        %v3655 = vunpack.c.l.b16 %v2594
        %v3656 = vunpack.c.h.b16 %v2594
        %v3657 = vunpack.c.l.b16 %v2595
        %v3658 = vunpack.c.h.b16 %v2595
        %v3659 = vunpack.c.l.b16 %v2596
        %v3660 = vunpack.c.h.b16 %v2596
        %v3661 = vpack.c.b16 %v3157, %v3149
        %v3662 = vpack.c.b16 %v3158, %v3150
        %v3663 = vpack.c.b16 %v3159, %v3151
        %v3664 = vpack.c.b16 %v3160, %v3152
        %v3665 = vpack.c.b16 %v3161, %v3153
        %v3666 = vpack.c.b16 %v3162, %v3154
        %v3667 = vpack.c.b16 %v3163, %v3155
        %v3668 = vpack.c.b16 %v3164, %v3156
        %v3669 = vpack.c.b16 %v3173, %v3165
        %v3670 = vpack.c.b16 %v3174, %v3166
        %v3671 = vpack.c.b16 %v3175, %v3167
        %v3672 = vpack.c.b16 %v3176, %v3168
        %v3673 = vpack.c.b16 %v3177, %v3169
        %v3674 = vpack.c.b16 %v3178, %v3170
        %v3675 = vpack.c.b16 %v3179, %v3171
        %v3676 = vpack.c.b16 %v3180, %v3172
        %v3677 = vpack.c.b16 %v3189, %v3181
        %v3678 = vpack.c.b16 %v3190, %v3182
        %v3679 = vpack.c.b16 %v3191, %v3183
        %v3680 = vpack.c.b16 %v3192, %v3184
        %v3681 = vpack.c.b16 %v3193, %v3185
        %v3682 = vpack.c.b16 %v3194, %v3186
        %v3683 = vpack.c.b16 %v3195, %v3187
        %v3684 = vpack.c.b16 %v3196, %v3188
        %v3685 = vpack.c.b16 %v3205, %v3197
        %v3686 = vpack.c.b16 %v3206, %v3198
        %v3687 = vpack.c.b16 %v3207, %v3199
        %v3688 = vpack.c.b16 %v3208, %v3200
        %v3689 = vpack.c.b16 %v3209, %v3201
        %v3690 = vpack.c.b16 %v3210, %v3202
        %v3691 = vpack.c.b16 %v3211, %v3203
        %v3692 = vpack.c.b16 %v3212, %v3204
        %v3693 = vpack.c.b16 %v3221, %v3213
        %v3694 = vpack.c.b16 %v3222, %v3214
        %v3695 = vpack.c.b16 %v3223, %v3215
        %v3696 = vpack.c.b16 %v3224, %v3216
        %v3697 = vpack.c.b16 %v3225, %v3217
        %v3698 = vpack.c.b16 %v3226, %v3218
        %v3699 = vpack.c.b16 %v3227, %v3219
        %v3700 = vpack.c.b16 %v3228, %v3220
        %v3701 = vpack.c.b16 %v3237, %v3229
        %v3702 = vpack.c.b16 %v3238, %v3230
        %v3703 = vpack.c.b16 %v3239, %v3231
        %v3704 = vpack.c.b16 %v3240, %v3232
        %v3705 = vpack.c.b16 %v3241, %v3233
        %v3706 = vpack.c.b16 %v3242, %v3234
        %v3707 = vpack.c.b16 %v3243, %v3235
        %v3708 = vpack.c.b16 %v3244, %v3236
        %v3709 = vpack.c.b16 %v3253, %v3245
        %v3710 = vpack.c.b16 %v3254, %v3246
        %v3711 = vpack.c.b16 %v3255, %v3247
        %v3712 = vpack.c.b16 %v3256, %v3248
        %v3713 = vpack.c.b16 %v3257, %v3249
        %v3714 = vpack.c.b16 %v3258, %v3250
        %v3715 = vpack.c.b16 %v3259, %v3251
        %v3716 = vpack.c.b16 %v3260, %v3252
        %v3717 = vpack.c.b16 %v3269, %v3261
        %v3718 = vpack.c.b16 %v3270, %v3262
        %v3719 = vpack.c.b16 %v3271, %v3263
        %v3720 = vpack.c.b16 %v3272, %v3264
        %v3721 = vpack.c.b16 %v3273, %v3265
        %v3722 = vpack.c.b16 %v3274, %v3266
        %v3723 = vpack.c.b16 %v3275, %v3267
        %v3724 = vpack.c.b16 %v3276, %v3268
        %v3725 = vpack.c.b16 %v3285, %v3277
        %v3726 = vpack.c.b16 %v3286, %v3278
        %v3727 = vpack.c.b16 %v3287, %v3279
        %v3728 = vpack.c.b16 %v3288, %v3280
        %v3729 = vpack.c.b16 %v3289, %v3281
        %v3730 = vpack.c.b16 %v3290, %v3282
        %v3731 = vpack.c.b16 %v3291, %v3283
        %v3732 = vpack.c.b16 %v3292, %v3284
        %v3733 = vpack.c.b16 %v3301, %v3293
        %v3734 = vpack.c.b16 %v3302, %v3294
        %v3735 = vpack.c.b16 %v3303, %v3295
        %v3736 = vpack.c.b16 %v3304, %v3296
        %v3737 = vpack.c.b16 %v3305, %v3297
        %v3738 = vpack.c.b16 %v3306, %v3298
        %v3739 = vpack.c.b16 %v3307, %v3299
        %v3740 = vpack.c.b16 %v3308, %v3300
        %v3741 = vpack.c.b16 %v3317, %v3309
        %v3742 = vpack.c.b16 %v3318, %v3310
        %v3743 = vpack.c.b16 %v3319, %v3311
        %v3744 = vpack.c.b16 %v3320, %v3312
        %v3745 = vpack.c.b16 %v3321, %v3313
        %v3746 = vpack.c.b16 %v3322, %v3314
        %v3747 = vpack.c.b16 %v3323, %v3315
        %v3748 = vpack.c.b16 %v3324, %v3316
        %v3749 = vpack.c.b16 %v3333, %v3325
        %v3750 = vpack.c.b16 %v3334, %v3326
        %v3751 = vpack.c.b16 %v3335, %v3327
        %v3752 = vpack.c.b16 %v3336, %v3328
        %v3753 = vpack.c.b16 %v3337, %v3329
        %v3754 = vpack.c.b16 %v3338, %v3330
        %v3755 = vpack.c.b16 %v3339, %v3331
        %v3756 = vpack.c.b16 %v3340, %v3332
        %v3757 = vpack.c.b16 %v3349, %v3341
        %v3758 = vpack.c.b16 %v3350, %v3342
        %v3759 = vpack.c.b16 %v3351, %v3343
        %v3760 = vpack.c.b16 %v3352, %v3344
        %v3761 = vpack.c.b16 %v3353, %v3345
        %v3762 = vpack.c.b16 %v3354, %v3346
        %v3763 = vpack.c.b16 %v3355, %v3347
        %v3764 = vpack.c.b16 %v3356, %v3348
        %v3765 = vpack.c.b16 %v3365, %v3357
        %v3766 = vpack.c.b16 %v3366, %v3358
        %v3767 = vpack.c.b16 %v3367, %v3359
        %v3768 = vpack.c.b16 %v3368, %v3360
        %v3769 = vpack.c.b16 %v3369, %v3361
        %v3770 = vpack.c.b16 %v3370, %v3362
        %v3771 = vpack.c.b16 %v3371, %v3363
        %v3772 = vpack.c.b16 %v3372, %v3364
        %v3773 = vpack.c.b16 %v3381, %v3373
        %v3774 = vpack.c.b16 %v3382, %v3374
        %v3775 = vpack.c.b16 %v3383, %v3375
        %v3776 = vpack.c.b16 %v3384, %v3376
        %v3777 = vpack.c.b16 %v3385, %v3377
        %v3778 = vpack.c.b16 %v3386, %v3378
        %v3779 = vpack.c.b16 %v3387, %v3379
        %v3780 = vpack.c.b16 %v3388, %v3380
        %v3781 = vpack.c.b16 %v3397, %v3389
        %v3782 = vpack.c.b16 %v3398, %v3390
        %v3783 = vpack.c.b16 %v3399, %v3391
        %v3784 = vpack.c.b16 %v3400, %v3392
        %v3785 = vpack.c.b16 %v3401, %v3393
        %v3786 = vpack.c.b16 %v3402, %v3394
        %v3787 = vpack.c.b16 %v3403, %v3395
        %v3788 = vpack.c.b16 %v3404, %v3396
        %v3789 = vpack.c.b16 %v3413, %v3405
        %v3790 = vpack.c.b16 %v3414, %v3406
        %v3791 = vpack.c.b16 %v3415, %v3407
        %v3792 = vpack.c.b16 %v3416, %v3408
        %v3793 = vpack.c.b16 %v3417, %v3409
        %v3794 = vpack.c.b16 %v3418, %v3410
        %v3795 = vpack.c.b16 %v3419, %v3411
        %v3796 = vpack.c.b16 %v3420, %v3412
        %v3797 = vpack.c.b16 %v3429, %v3421
        %v3798 = vpack.c.b16 %v3430, %v3422
        %v3799 = vpack.c.b16 %v3431, %v3423
        %v3800 = vpack.c.b16 %v3432, %v3424
        %v3801 = vpack.c.b16 %v3433, %v3425
        %v3802 = vpack.c.b16 %v3434, %v3426
        %v3803 = vpack.c.b16 %v3435, %v3427
        %v3804 = vpack.c.b16 %v3436, %v3428
        %v3805 = vpack.c.b16 %v3445, %v3437
        %v3806 = vpack.c.b16 %v3446, %v3438
        %v3807 = vpack.c.b16 %v3447, %v3439
        %v3808 = vpack.c.b16 %v3448, %v3440
        %v3809 = vpack.c.b16 %v3449, %v3441
        %v3810 = vpack.c.b16 %v3450, %v3442
        %v3811 = vpack.c.b16 %v3451, %v3443
        %v3812 = vpack.c.b16 %v3452, %v3444
        %v3813 = vpack.c.b16 %v3461, %v3453
        %v3814 = vpack.c.b16 %v3462, %v3454
        %v3815 = vpack.c.b16 %v3463, %v3455
        %v3816 = vpack.c.b16 %v3464, %v3456
        %v3817 = vpack.c.b16 %v3465, %v3457
        %v3818 = vpack.c.b16 %v3466, %v3458
        %v3819 = vpack.c.b16 %v3467, %v3459
        %v3820 = vpack.c.b16 %v3468, %v3460
        %v3821 = vpack.c.b16 %v3477, %v3469
        %v3822 = vpack.c.b16 %v3478, %v3470
        %v3823 = vpack.c.b16 %v3479, %v3471
        %v3824 = vpack.c.b16 %v3480, %v3472
        %v3825 = vpack.c.b16 %v3481, %v3473
        %v3826 = vpack.c.b16 %v3482, %v3474
        %v3827 = vpack.c.b16 %v3483, %v3475
        %v3828 = vpack.c.b16 %v3484, %v3476
        %v3829 = vpack.c.b16 %v3493, %v3485
        %v3830 = vpack.c.b16 %v3494, %v3486
        %v3831 = vpack.c.b16 %v3495, %v3487
        %v3832 = vpack.c.b16 %v3496, %v3488
        %v3833 = vpack.c.b16 %v3497, %v3489
        %v3834 = vpack.c.b16 %v3498, %v3490
        %v3835 = vpack.c.b16 %v3499, %v3491
        %v3836 = vpack.c.b16 %v3500, %v3492
        %v3837 = vpack.c.b16 %v3509, %v3501
        %v3838 = vpack.c.b16 %v3510, %v3502
        %v3839 = vpack.c.b16 %v3511, %v3503
        %v3840 = vpack.c.b16 %v3512, %v3504
        %v3841 = vpack.c.b16 %v3513, %v3505
        %v3842 = vpack.c.b16 %v3514, %v3506
        %v3843 = vpack.c.b16 %v3515, %v3507
        %v3844 = vpack.c.b16 %v3516, %v3508
        %v3845 = vpack.c.b16 %v3525, %v3517
        %v3846 = vpack.c.b16 %v3526, %v3518
        %v3847 = vpack.c.b16 %v3527, %v3519
        %v3848 = vpack.c.b16 %v3528, %v3520
        %v3849 = vpack.c.b16 %v3529, %v3521
        %v3850 = vpack.c.b16 %v3530, %v3522
        %v3851 = vpack.c.b16 %v3531, %v3523
        %v3852 = vpack.c.b16 %v3532, %v3524
        %v3853 = vpack.c.b16 %v3541, %v3533
        %v3854 = vpack.c.b16 %v3542, %v3534
        %v3855 = vpack.c.b16 %v3543, %v3535
        %v3856 = vpack.c.b16 %v3544, %v3536
        %v3857 = vpack.c.b16 %v3545, %v3537
        %v3858 = vpack.c.b16 %v3546, %v3538
        %v3859 = vpack.c.b16 %v3547, %v3539
        %v3860 = vpack.c.b16 %v3548, %v3540
        %v3861 = vpack.c.b16 %v3557, %v3549
        %v3862 = vpack.c.b16 %v3558, %v3550
        %v3863 = vpack.c.b16 %v3559, %v3551
        %v3864 = vpack.c.b16 %v3560, %v3552
        %v3865 = vpack.c.b16 %v3561, %v3553
        %v3866 = vpack.c.b16 %v3562, %v3554
        %v3867 = vpack.c.b16 %v3563, %v3555
        %v3868 = vpack.c.b16 %v3564, %v3556
        %v3869 = vpack.c.b16 %v3573, %v3565
        %v3870 = vpack.c.b16 %v3574, %v3566
        %v3871 = vpack.c.b16 %v3575, %v3567
        %v3872 = vpack.c.b16 %v3576, %v3568
        %v3873 = vpack.c.b16 %v3577, %v3569
        %v3874 = vpack.c.b16 %v3578, %v3570
        %v3875 = vpack.c.b16 %v3579, %v3571
        %v3876 = vpack.c.b16 %v3580, %v3572
        %v3877 = vpack.c.b16 %v3589, %v3581
        %v3878 = vpack.c.b16 %v3590, %v3582
        %v3879 = vpack.c.b16 %v3591, %v3583
        %v3880 = vpack.c.b16 %v3592, %v3584
        %v3881 = vpack.c.b16 %v3593, %v3585
        %v3882 = vpack.c.b16 %v3594, %v3586
        %v3883 = vpack.c.b16 %v3595, %v3587
        %v3884 = vpack.c.b16 %v3596, %v3588
        %v3885 = vpack.c.b16 %v3605, %v3597
        %v3886 = vpack.c.b16 %v3606, %v3598
        %v3887 = vpack.c.b16 %v3607, %v3599
        %v3888 = vpack.c.b16 %v3608, %v3600
        %v3889 = vpack.c.b16 %v3609, %v3601
        %v3890 = vpack.c.b16 %v3610, %v3602
        %v3891 = vpack.c.b16 %v3611, %v3603
        %v3892 = vpack.c.b16 %v3612, %v3604
        %v3893 = vpack.c.b16 %v3621, %v3613
        %v3894 = vpack.c.b16 %v3622, %v3614
        %v3895 = vpack.c.b16 %v3623, %v3615
        %v3896 = vpack.c.b16 %v3624, %v3616
        %v3897 = vpack.c.b16 %v3625, %v3617
        %v3898 = vpack.c.b16 %v3626, %v3618
        %v3899 = vpack.c.b16 %v3627, %v3619
        %v3900 = vpack.c.b16 %v3628, %v3620
        %v3901 = vpack.c.b16 %v3637, %v3629
        %v3902 = vpack.c.b16 %v3638, %v3630
        %v3903 = vpack.c.b16 %v3639, %v3631
        %v3904 = vpack.c.b16 %v3640, %v3632
        %v3905 = vpack.c.b16 %v3641, %v3633
        %v3906 = vpack.c.b16 %v3642, %v3634
        %v3907 = vpack.c.b16 %v3643, %v3635
        %v3908 = vpack.c.b16 %v3644, %v3636
        %v3909 = vpack.c.b16 %v3653, %v3645
        %v3910 = vpack.c.b16 %v3654, %v3646
        %v3911 = vpack.c.b16 %v3655, %v3647
        %v3912 = vpack.c.b16 %v3656, %v3648
        %v3913 = vpack.c.b16 %v3657, %v3649
        %v3914 = vpack.c.b16 %v3658, %v3650
        %v3915 = vpack.c.b16 %v3659, %v3651
        %v3916 = vpack.c.b16 %v3660, %v3652
        %4173 = vmatprep.subr.bf16.mxu0 %v3662
        %4174 = vmatpush1.bf16.msra.mxu0 %v3661
        %4175 = vmatprep.subr.bf16.mxu0 %v3670
        %4176 = vmatpush1.bf16.msra.mxu0 %v3669
        %4177 = vmatprep.subr.bf16.mxu0 %v3678
        %4178 = vmatpush1.bf16.msra.mxu0 %v3677
        %4179 = vmatprep.subr.bf16.mxu0 %v3686
        %4180 = vmatpush1.bf16.msra.mxu0 %v3685
        %4181 = vmatprep.subr.bf16.mxu0 %v3694
        %4182 = vmatpush1.bf16.msra.mxu0 %v3693
        %4183 = vmatprep.subr.bf16.mxu0 %v3702
        %4184 = vmatpush1.bf16.msra.mxu0 %v3701
        %4185 = vmatprep.subr.bf16.mxu0 %v3710
        %4186 = vmatpush1.bf16.msra.mxu0 %v3709
        %4187 = vmatprep.subr.bf16.mxu0 %v3718
        %4188 = vmatpush1.bf16.msra.mxu0 %v3717
        %4189 = vmatprep.subr.bf16.mxu0 %v3726
        %4190 = vmatpush1.bf16.msra.mxu0 %v3725
        %4191 = vmatprep.subr.bf16.mxu0 %v3734
        %4192 = vmatpush1.bf16.msra.mxu0 %v3733
        %4193 = vmatprep.subr.bf16.mxu0 %v3742
        %4194 = vmatpush1.bf16.msra.mxu0 %v3741
        %4195 = vmatprep.subr.bf16.mxu0 %v3750
        %4196 = vmatpush1.bf16.msra.mxu0 %v3749
        %4197 = vmatprep.subr.bf16.mxu0 %v3758
        %4198 = vmatpush1.bf16.msra.mxu0 %v3757
        %4199 = vmatprep.subr.bf16.mxu0 %v3766
        %4200 = vmatpush1.bf16.msra.mxu0 %v3765
        %4201 = vmatprep.subr.bf16.mxu0 %v3774
        %4202 = vmatpush1.bf16.msra.mxu0 %v3773
        %4203 = vmatprep.subr.bf16.mxu0 %v3782
        %4204 = vmatpush1.bf16.msra.mxu0 %v3781
        %4205 = vmatprep.mubr.bf16.mxu0 %v2790
        %4206 = vmatmul.mubr.bf16.gmra.mrb[0].mxu0 %v2789
        %v4207 = vpop.f32.mrb[0].mxu0
        %v4208 = vadd.f32 %v2602, %v4207
        %v4209 = vpop.f32.mrb[0].mxu0
        %v4210 = vadd.f32 %v2606, %v4209
        %v4211 = vpop.f32.mrb[0].mxu0
        %v4212 = vadd.f32 %v2602, %v4211
        %v4213 = vpop.f32.mrb[0].mxu0
        %v4214 = vadd.f32 %v2606, %v4213
        %4215 = vmatprep.mubr.bf16.mxu0 %v2794
        %4216 = vmatmul.mubr.bf16.gmra.mrb[0].mxu0 %v2793
        %v4217 = vpop.f32.mrb[0].mxu0
        %v4218 = vadd.f32 %v2602, %v4217
        %v4219 = vpop.f32.mrb[0].mxu0
        %v4220 = vadd.f32 %v2606, %v4219
        %v4221 = vpop.f32.mrb[0].mxu0
        %v4222 = vadd.f32 %v2602, %v4221
        %v4223 = vpop.f32.mrb[0].mxu0
        %v4224 = vadd.f32 %v2606, %v4223
        %4225 = vmatprep.mubr.bf16.mxu0 %v2798
        %4226 = vmatmul.mubr.bf16.gmra.mrb[0].mxu0 %v2797
        %v4227 = vpop.f32.mrb[0].mxu0
        %v4228 = vadd.f32 %v2602, %v4227
        %v4229 = vpop.f32.mrb[0].mxu0
        %v4230 = vadd.f32 %v2606, %v4229
        %v4231 = vpop.f32.mrb[0].mxu0
        %v4232 = vadd.f32 %v2602, %v4231
        %v4233 = vpop.f32.mrb[0].mxu0
        %v4234 = vadd.f32 %v2606, %v4233
        %4235 = vmatprep.mubr.bf16.mxu0 %v2802
        %4236 = vmatmul.mubr.bf16.gmra.mrb[0].mxu0 %v2801
        %v4237 = vpop.f32.mrb[0].mxu0
        %v4238 = vadd.f32 %v2602, %v4237
        %v4239 = vpop.f32.mrb[0].mxu0
        %v4240 = vadd.f32 %v2606, %v4239
        %v4241 = vpop.f32.mrb[0].mxu0
        %v4242 = vadd.f32 %v2602, %v4241
        %v4243 = vpop.f32.mrb[0].mxu0
        %v4244 = vadd.f32 %v2606, %v4243
        %4245 = vmatprep.mubr.bf16.mxu0 %v2806
        %4246 = vmatmul.mubr.bf16.gmra.mrb[0].mxu0 %v2805
        %v4247 = vpop.f32.mrb[0].mxu0
        %v4248 = vadd.f32 %v2602, %v4247
        %v4249 = vpop.f32.mrb[0].mxu0
        %v4250 = vadd.f32 %v2606, %v4249
        %v4251 = vpop.f32.mrb[0].mxu0
        %v4252 = vadd.f32 %v2602, %v4251
        %v4253 = vpop.f32.mrb[0].mxu0
        %v4254 = vadd.f32 %v2606, %v4253
        %4255 = vmatprep.mubr.bf16.mxu0 %v2810
        %4256 = vmatmul.mubr.bf16.gmra.mrb[0].mxu0 %v2809
        %v4257 = vpop.f32.mrb[0].mxu0
        %v4258 = vadd.f32 %v2602, %v4257
        %v4259 = vpop.f32.mrb[0].mxu0
        %v4260 = vadd.f32 %v2606, %v4259
        %v4261 = vpop.f32.mrb[0].mxu0
        %v4262 = vadd.f32 %v2602, %v4261
        %v4263 = vpop.f32.mrb[0].mxu0
        %v4264 = vadd.f32 %v2606, %v4263
        %4265 = vmatprep.mubr.bf16.mxu0 %v2814
        %4266 = vmatmul.mubr.bf16.gmra.mrb[0].mxu0 %v2813
        %v4267 = vpop.f32.mrb[0].mxu0
        %v4268 = vadd.f32 %v2602, %v4267
        %v4269 = vpop.f32.mrb[0].mxu0
        %v4270 = vadd.f32 %v2606, %v4269
        %v4271 = vpop.f32.mrb[0].mxu0
        %v4272 = vadd.f32 %v2602, %v4271
        %v4273 = vpop.f32.mrb[0].mxu0
        %v4274 = vadd.f32 %v2606, %v4273
        %4275 = vmatprep.mubr.bf16.mxu0 %v2818
        %4276 = vmatmul.mubr.bf16.gmra.mrb[0].mxu0 %v2817
        %v4277 = vpop.f32.mrb[0].mxu0
        %v4278 = vadd.f32 %v2602, %v4277
        %v4279 = vpop.f32.mrb[0].mxu0
        %v4280 = vadd.f32 %v2606, %v4279
        %v4281 = vpop.f32.mrb[0].mxu0
        %v4282 = vadd.f32 %v2602, %v4281
        %v4283 = vpop.f32.mrb[0].mxu0
        %v4284 = vadd.f32 %v2606, %v4283
        %4285 = vmatprep.mubr.bf16.mxu0 %v2822
        %4286 = vmatmul.mubr.bf16.gmra.mrb[0].mxu0 %v2821
        %v4287 = vpop.f32.mrb[0].mxu0
        %v4288 = vadd.f32 %v2602, %v4287
        %v4289 = vpop.f32.mrb[0].mxu0
        %v4290 = vadd.f32 %v2606, %v4289
        %v4291 = vpop.f32.mrb[0].mxu0
        %v4292 = vadd.f32 %v2602, %v4291
        %v4293 = vpop.f32.mrb[0].mxu0
        %v4294 = vadd.f32 %v2606, %v4293
        %4295 = vmatprep.mubr.bf16.mxu0 %v2826
        %4296 = vmatmul.mubr.bf16.gmra.mrb[0].mxu0 %v2825
        %v4297 = vpop.f32.mrb[0].mxu0
        %v4298 = vadd.f32 %v2602, %v4297
        %v4299 = vpop.f32.mrb[0].mxu0
        %v4300 = vadd.f32 %v2606, %v4299
        %v4301 = vpop.f32.mrb[0].mxu0
        %v4302 = vadd.f32 %v2602, %v4301
        %v4303 = vpop.f32.mrb[0].mxu0
        %v4304 = vadd.f32 %v2606, %v4303
        %4305 = vmatprep.mubr.bf16.mxu0 %v2830
        %4306 = vmatmul.mubr.bf16.gmra.mrb[0].mxu0 %v2829
        %v4307 = vpop.f32.mrb[0].mxu0
        %v4308 = vadd.f32 %v2602, %v4307
        %v4309 = vpop.f32.mrb[0].mxu0
        %v4310 = vadd.f32 %v2606, %v4309
        %v4311 = vpop.f32.mrb[0].mxu0
        %v4312 = vadd.f32 %v2602, %v4311
        %v4313 = vpop.f32.mrb[0].mxu0
        %v4314 = vadd.f32 %v2606, %v4313
        %4315 = vmatprep.mubr.bf16.mxu0 %v2834
        %4316 = vmatmul.mubr.bf16.gmra.mrb[0].mxu0 %v2833
        %v4317 = vpop.f32.mrb[0].mxu0
        %v4318 = vadd.f32 %v2602, %v4317
        %v4319 = vpop.f32.mrb[0].mxu0
        %v4320 = vadd.f32 %v2606, %v4319
        %v4321 = vpop.f32.mrb[0].mxu0
        %v4322 = vadd.f32 %v2602, %v4321
        %v4323 = vpop.f32.mrb[0].mxu0
        %v4324 = vadd.f32 %v2606, %v4323
        %4325 = vmatprep.mubr.bf16.mxu0 %v2838
        %4326 = vmatmul.mubr.bf16.gmra.mrb[0].mxu0 %v2837
        %v4327 = vpop.f32.mrb[0].mxu0
        %v4328 = vadd.f32 %v2602, %v4327
        %v4329 = vpop.f32.mrb[0].mxu0
        %v4330 = vadd.f32 %v2606, %v4329
        %v4331 = vpop.f32.mrb[0].mxu0
        %v4332 = vpop.f32.mrb[0].mxu0
        %4333 = vdwg.mxu0
        %4334 = vmatprep.subr.bf16.mxu0 %v3790
        %4335 = vmatpush1.bf16.msra.mxu0 %v3789
        %4336 = vmatprep.subr.bf16.mxu0 %v3798
        %4337 = vmatpush1.bf16.msra.mxu0 %v3797
        %4338 = vmatprep.subr.bf16.mxu0 %v3806
        %4339 = vmatpush1.bf16.msra.mxu0 %v3805
        %4340 = vmatprep.subr.bf16.mxu0 %v3814
        %4341 = vmatpush1.bf16.msra.mxu0 %v3813
        %4342 = vmatprep.subr.bf16.mxu0 %v3822
        %4343 = vmatpush1.bf16.msra.mxu0 %v3821
        %4344 = vmatprep.subr.bf16.mxu0 %v3830
        %4345 = vmatpush1.bf16.msra.mxu0 %v3829
        %4346 = vmatprep.subr.bf16.mxu0 %v3838
        %4347 = vmatpush1.bf16.msra.mxu0 %v3837
        %4348 = vmatprep.subr.bf16.mxu0 %v3846
        %4349 = vmatpush1.bf16.msra.mxu0 %v3845
        %4350 = vmatprep.subr.bf16.mxu0 %v3854
        %4351 = vmatpush1.bf16.msra.mxu0 %v3853
        %4352 = vmatprep.subr.bf16.mxu0 %v3862
        %4353 = vmatpush1.bf16.msra.mxu0 %v3861
        %4354 = vmatprep.subr.bf16.mxu0 %v3870
        %4355 = vmatpush1.bf16.msra.mxu0 %v3869
        %4356 = vmatprep.subr.bf16.mxu0 %v3878
        %4357 = vmatpush1.bf16.msra.mxu0 %v3877
        %4358 = vmatprep.subr.bf16.mxu0 %v3886
        %4359 = vmatpush1.bf16.msra.mxu0 %v3885
        %4360 = vmatprep.subr.bf16.mxu0 %v3894
        %4361 = vmatpush1.bf16.msra.mxu0 %v3893
        %4362 = vmatprep.subr.bf16.mxu0 %v3902
        %4363 = vmatpush1.bf16.msra.mxu0 %v3901
        %4364 = vmatprep.subr.bf16.mxu0 %v3910
        %4365 = vmatpush1.bf16.msra.mxu0 %v3909
        %4366 = vmatprep.mubr.bf16.mxu0 %v2792
        %4367 = vmatmul.mubr.bf16.gmra.mrb[0].mxu0 %v2791
        %v4368 = vpop.f32.mrb[0].mxu0
        %v4369 = vadd.f32 %v4208, %v4368
        %v4370 = vpop.f32.mrb[0].mxu0
        %v4371 = vadd.f32 %v4210, %v4370
        %v4372 = vpop.f32.mrb[0].mxu0
        %v4373 = vadd.f32 %v4212, %v4372
        %v4374 = vpop.f32.mrb[0].mxu0
        %v4375 = vadd.f32 %v4214, %v4374
        %4376 = vmatprep.mubr.bf16.mxu0 %v2796
        %4377 = vmatmul.mubr.bf16.gmra.mrb[0].mxu0 %v2795
        %v4378 = vpop.f32.mrb[0].mxu0
        %v4379 = vadd.f32 %v4218, %v4378
        %v4380 = vpop.f32.mrb[0].mxu0
        %v4381 = vadd.f32 %v4220, %v4380
        %v4382 = vpop.f32.mrb[0].mxu0
        %v4383 = vadd.f32 %v4222, %v4382
        %v4384 = vpop.f32.mrb[0].mxu0
        %v4385 = vadd.f32 %v4224, %v4384
        %4386 = vmatprep.mubr.bf16.mxu0 %v2800
        %4387 = vmatmul.mubr.bf16.gmra.mrb[0].mxu0 %v2799
        %v4388 = vpop.f32.mrb[0].mxu0
        %v4389 = vadd.f32 %v4228, %v4388
        %v4390 = vpop.f32.mrb[0].mxu0
        %v4391 = vadd.f32 %v4230, %v4390
        %v4392 = vpop.f32.mrb[0].mxu0
        %v4393 = vadd.f32 %v4232, %v4392
        %v4394 = vpop.f32.mrb[0].mxu0
        %v4395 = vadd.f32 %v4234, %v4394
        %4396 = vmatprep.mubr.bf16.mxu0 %v2804
        %4397 = vmatmul.mubr.bf16.gmra.mrb[0].mxu0 %v2803
        %v4398 = vpop.f32.mrb[0].mxu0
        %v4399 = vadd.f32 %v4238, %v4398
        %v4400 = vpop.f32.mrb[0].mxu0
        %v4401 = vadd.f32 %v4240, %v4400
        %v4402 = vpop.f32.mrb[0].mxu0
        %v4403 = vadd.f32 %v4242, %v4402
        %v4404 = vpop.f32.mrb[0].mxu0
        %v4405 = vadd.f32 %v4244, %v4404
        %4406 = vmatprep.mubr.bf16.mxu0 %v2808
        %4407 = vmatmul.mubr.bf16.gmra.mrb[0].mxu0 %v2807
        %v4408 = vpop.f32.mrb[0].mxu0
        %v4409 = vadd.f32 %v4248, %v4408
        %v4410 = vpop.f32.mrb[0].mxu0
        %v4411 = vadd.f32 %v4250, %v4410
        %v4412 = vpop.f32.mrb[0].mxu0
        %v4413 = vadd.f32 %v4252, %v4412
        %v4414 = vpop.f32.mrb[0].mxu0
        %v4415 = vadd.f32 %v4254, %v4414
        %4416 = vmatprep.mubr.bf16.mxu0 %v2812
        %4417 = vmatmul.mubr.bf16.gmra.mrb[0].mxu0 %v2811
        %v4418 = vpop.f32.mrb[0].mxu0
        %v4419 = vadd.f32 %v4258, %v4418
        %v4420 = vpop.f32.mrb[0].mxu0
        %v4421 = vadd.f32 %v4260, %v4420
        %v4422 = vpop.f32.mrb[0].mxu0
        %v4423 = vadd.f32 %v4262, %v4422
        %v4424 = vpop.f32.mrb[0].mxu0
        %v4425 = vadd.f32 %v4264, %v4424
        %4426 = vmatprep.mubr.bf16.mxu0 %v2816
        %4427 = vmatmul.mubr.bf16.gmra.mrb[0].mxu0 %v2815
        %v4428 = vpop.f32.mrb[0].mxu0
        %v4429 = vadd.f32 %v4268, %v4428
        %v4430 = vpop.f32.mrb[0].mxu0
        %v4431 = vadd.f32 %v4270, %v4430
        %v4432 = vpop.f32.mrb[0].mxu0
        %v4433 = vadd.f32 %v4272, %v4432
        %v4434 = vpop.f32.mrb[0].mxu0
        %v4435 = vadd.f32 %v4274, %v4434
        %4436 = vmatprep.mubr.bf16.mxu0 %v2820
        %4437 = vmatmul.mubr.bf16.gmra.mrb[0].mxu0 %v2819
        %v4438 = vpop.f32.mrb[0].mxu0
        %v4439 = vadd.f32 %v4278, %v4438
        %v4440 = vpop.f32.mrb[0].mxu0
        %v4441 = vadd.f32 %v4280, %v4440
        %v4442 = vpop.f32.mrb[0].mxu0
        %v4443 = vadd.f32 %v4282, %v4442
        %v4444 = vpop.f32.mrb[0].mxu0
        %v4445 = vadd.f32 %v4284, %v4444
        %4446 = vmatprep.mubr.bf16.mxu0 %v2824
        %4447 = vmatmul.mubr.bf16.gmra.mrb[0].mxu0 %v2823
        %v4448 = vpop.f32.mrb[0].mxu0
        %v4449 = vadd.f32 %v4288, %v4448
        %v4450 = vpop.f32.mrb[0].mxu0
        %v4451 = vadd.f32 %v4290, %v4450
        %v4452 = vpop.f32.mrb[0].mxu0
        %v4453 = vadd.f32 %v4292, %v4452
        %v4454 = vpop.f32.mrb[0].mxu0
        %v4455 = vadd.f32 %v4294, %v4454
        %4456 = vmatprep.mubr.bf16.mxu0 %v2828
        %4457 = vmatmul.mubr.bf16.gmra.mrb[0].mxu0 %v2827
        %v4458 = vpop.f32.mrb[0].mxu0
        %v4459 = vadd.f32 %v4298, %v4458
        %v4460 = vpop.f32.mrb[0].mxu0
        %v4461 = vadd.f32 %v4300, %v4460
        %v4462 = vpop.f32.mrb[0].mxu0
        %v4463 = vadd.f32 %v4302, %v4462
        %v4464 = vpop.f32.mrb[0].mxu0
        %v4465 = vadd.f32 %v4304, %v4464
        %4466 = vmatprep.mubr.bf16.mxu0 %v2832
        %4467 = vmatmul.mubr.bf16.gmra.mrb[0].mxu0 %v2831
        %v4468 = vpop.f32.mrb[0].mxu0
        %v4469 = vadd.f32 %v4308, %v4468
        %v4470 = vpop.f32.mrb[0].mxu0
        %v4471 = vadd.f32 %v4310, %v4470
        %v4472 = vpop.f32.mrb[0].mxu0
        %v4473 = vadd.f32 %v4312, %v4472
        %v4474 = vpop.f32.mrb[0].mxu0
        %v4475 = vadd.f32 %v4314, %v4474
        %4476 = vmatprep.mubr.bf16.mxu0 %v2836
        %4477 = vmatmul.mubr.bf16.gmra.mrb[0].mxu0 %v2835
        %v4478 = vpop.f32.mrb[0].mxu0
        %v4479 = vadd.f32 %v4318, %v4478
        %v4480 = vpop.f32.mrb[0].mxu0
        %v4481 = vadd.f32 %v4320, %v4480
        %v4482 = vpop.f32.mrb[0].mxu0
        %v4483 = vadd.f32 %v4322, %v4482
        %v4484 = vpop.f32.mrb[0].mxu0
        %v4485 = vadd.f32 %v4324, %v4484
        %4486 = vmatprep.mubr.bf16.mxu0 %v2840
        %4487 = vmatmul.mubr.bf16.gmra.mrb[0].mxu0 %v2839
        %v4488 = vpop.f32.mrb[0].mxu0
        %v4489 = vadd.f32 %v4328, %v4488
        %v4490 = vpop.f32.mrb[0].mxu0
        %v4491 = vadd.f32 %v4330, %v4490
        %v4492 = vpop.f32.mrb[0].mxu0
        %v4493 = vpop.f32.mrb[0].mxu0
        %4494 = vdwg.mxu0
        %4495 = vmatprep.subr.bf16.mxu0 %v3664
        %4496 = vmatpush1.bf16.msra.mxu0 %v3663
        %4497 = vmatprep.subr.bf16.mxu0 %v3672
        %4498 = vmatpush1.bf16.msra.mxu0 %v3671
        %4499 = vmatprep.subr.bf16.mxu0 %v3680
        %4500 = vmatpush1.bf16.msra.mxu0 %v3679
        %4501 = vmatprep.subr.bf16.mxu0 %v3688
        %4502 = vmatpush1.bf16.msra.mxu0 %v3687
        %4503 = vmatprep.subr.bf16.mxu0 %v3696
        %4504 = vmatpush1.bf16.msra.mxu0 %v3695
        %4505 = vmatprep.subr.bf16.mxu0 %v3704
        %4506 = vmatpush1.bf16.msra.mxu0 %v3703
        %4507 = vmatprep.subr.bf16.mxu0 %v3712
        %4508 = vmatpush1.bf16.msra.mxu0 %v3711
        %4509 = vmatprep.subr.bf16.mxu0 %v3720
        %4510 = vmatpush1.bf16.msra.mxu0 %v3719
        %4511 = vmatprep.subr.bf16.mxu0 %v3728
        %4512 = vmatpush1.bf16.msra.mxu0 %v3727
        %4513 = vmatprep.subr.bf16.mxu0 %v3736
        %4514 = vmatpush1.bf16.msra.mxu0 %v3735
        %4515 = vmatprep.subr.bf16.mxu0 %v3744
        %4516 = vmatpush1.bf16.msra.mxu0 %v3743
        %4517 = vmatprep.subr.bf16.mxu0 %v3752
        %4518 = vmatpush1.bf16.msra.mxu0 %v3751
        %4519 = vmatprep.subr.bf16.mxu0 %v3760
        %4520 = vmatpush1.bf16.msra.mxu0 %v3759
        %4521 = vmatprep.subr.bf16.mxu0 %v3768
        %4522 = vmatpush1.bf16.msra.mxu0 %v3767
        %4523 = vmatprep.subr.bf16.mxu0 %v3776
        %4524 = vmatpush1.bf16.msra.mxu0 %v3775
        %4525 = vmatprep.subr.bf16.mxu0 %v3784
        %4526 = vmatpush1.bf16.msra.mxu0 %v3783
        %4527 = vmatprep.mubr.bf16.mxu0 %v2790
        %4528 = vmatmul.mubr.bf16.gmra.mrb[0].mxu0 %v2789
        %v4529 = vpop.f32.mrb[0].mxu0
        %v4530 = vadd.f32 %v2610, %v4529
        %v4531 = vpop.f32.mrb[0].mxu0
        %v4532 = vadd.f32 %v2614, %v4531
        %v4533 = vpop.f32.mrb[0].mxu0
        %v4534 = vadd.f32 %v2610, %v4533
        %v4535 = vpop.f32.mrb[0].mxu0
        %v4536 = vadd.f32 %v2614, %v4535
        %4537 = vmatprep.mubr.bf16.mxu0 %v2794
        %4538 = vmatmul.mubr.bf16.gmra.mrb[0].mxu0 %v2793
        %v4539 = vpop.f32.mrb[0].mxu0
        %v4540 = vadd.f32 %v2610, %v4539
        %v4541 = vpop.f32.mrb[0].mxu0
        %v4542 = vadd.f32 %v2614, %v4541
        %v4543 = vpop.f32.mrb[0].mxu0
        %v4544 = vadd.f32 %v2610, %v4543
        %v4545 = vpop.f32.mrb[0].mxu0
        %v4546 = vadd.f32 %v2614, %v4545
        %4547 = vmatprep.mubr.bf16.mxu0 %v2798
        %4548 = vmatmul.mubr.bf16.gmra.mrb[0].mxu0 %v2797
        %v4549 = vpop.f32.mrb[0].mxu0
        %v4550 = vadd.f32 %v2610, %v4549
        %v4551 = vpop.f32.mrb[0].mxu0
        %v4552 = vadd.f32 %v2614, %v4551
        %v4553 = vpop.f32.mrb[0].mxu0
        %v4554 = vadd.f32 %v2610, %v4553
        %v4555 = vpop.f32.mrb[0].mxu0
        %v4556 = vadd.f32 %v2614, %v4555
        %4557 = vmatprep.mubr.bf16.mxu0 %v2802
        %4558 = vmatmul.mubr.bf16.gmra.mrb[0].mxu0 %v2801
        %v4559 = vpop.f32.mrb[0].mxu0
        %v4560 = vadd.f32 %v2610, %v4559
        %v4561 = vpop.f32.mrb[0].mxu0
        %v4562 = vadd.f32 %v2614, %v4561
        %v4563 = vpop.f32.mrb[0].mxu0
        %v4564 = vadd.f32 %v2610, %v4563
        %v4565 = vpop.f32.mrb[0].mxu0
        %v4566 = vadd.f32 %v2614, %v4565
        %4567 = vmatprep.mubr.bf16.mxu0 %v2806
        %4568 = vmatmul.mubr.bf16.gmra.mrb[0].mxu0 %v2805
        %v4569 = vpop.f32.mrb[0].mxu0
        %v4570 = vadd.f32 %v2610, %v4569
        %v4571 = vpop.f32.mrb[0].mxu0
        %v4572 = vadd.f32 %v2614, %v4571
        %v4573 = vpop.f32.mrb[0].mxu0
        %v4574 = vadd.f32 %v2610, %v4573
        %v4575 = vpop.f32.mrb[0].mxu0
        %v4576 = vadd.f32 %v2614, %v4575
        %4577 = vmatprep.mubr.bf16.mxu0 %v2810
        %4578 = vmatmul.mubr.bf16.gmra.mrb[0].mxu0 %v2809
        %v4579 = vpop.f32.mrb[0].mxu0
        %v4580 = vadd.f32 %v2610, %v4579
        %v4581 = vpop.f32.mrb[0].mxu0
        %v4582 = vadd.f32 %v2614, %v4581
        %v4583 = vpop.f32.mrb[0].mxu0
        %v4584 = vadd.f32 %v2610, %v4583
        %v4585 = vpop.f32.mrb[0].mxu0
        %v4586 = vadd.f32 %v2614, %v4585
        %4587 = vmatprep.mubr.bf16.mxu0 %v2814
        %4588 = vmatmul.mubr.bf16.gmra.mrb[0].mxu0 %v2813
        %v4589 = vpop.f32.mrb[0].mxu0
        %v4590 = vadd.f32 %v2610, %v4589
        %v4591 = vpop.f32.mrb[0].mxu0
        %v4592 = vadd.f32 %v2614, %v4591
        %v4593 = vpop.f32.mrb[0].mxu0
        %v4594 = vadd.f32 %v2610, %v4593
        %v4595 = vpop.f32.mrb[0].mxu0
        %v4596 = vadd.f32 %v2614, %v4595
        %4597 = vmatprep.mubr.bf16.mxu0 %v2818
        %4598 = vmatmul.mubr.bf16.gmra.mrb[0].mxu0 %v2817
        %v4599 = vpop.f32.mrb[0].mxu0
        %v4600 = vadd.f32 %v2610, %v4599
        %v4601 = vpop.f32.mrb[0].mxu0
        %v4602 = vadd.f32 %v2614, %v4601
        %v4603 = vpop.f32.mrb[0].mxu0
        %v4604 = vadd.f32 %v2610, %v4603
        %v4605 = vpop.f32.mrb[0].mxu0
        %v4606 = vadd.f32 %v2614, %v4605
        %4607 = vmatprep.mubr.bf16.mxu0 %v2822
        %4608 = vmatmul.mubr.bf16.gmra.mrb[0].mxu0 %v2821
        %v4609 = vpop.f32.mrb[0].mxu0
        %v4610 = vadd.f32 %v2610, %v4609
        %v4611 = vpop.f32.mrb[0].mxu0
        %v4612 = vadd.f32 %v2614, %v4611
        %v4613 = vpop.f32.mrb[0].mxu0
        %v4614 = vadd.f32 %v2610, %v4613
        %v4615 = vpop.f32.mrb[0].mxu0
        %v4616 = vadd.f32 %v2614, %v4615
        %4617 = vmatprep.mubr.bf16.mxu0 %v2826
        %4618 = vmatmul.mubr.bf16.gmra.mrb[0].mxu0 %v2825
        %v4619 = vpop.f32.mrb[0].mxu0
        %v4620 = vadd.f32 %v2610, %v4619
        %v4621 = vpop.f32.mrb[0].mxu0
        %v4622 = vadd.f32 %v2614, %v4621
        %v4623 = vpop.f32.mrb[0].mxu0
        %v4624 = vadd.f32 %v2610, %v4623
        %v4625 = vpop.f32.mrb[0].mxu0
        %v4626 = vadd.f32 %v2614, %v4625
        %4627 = vmatprep.mubr.bf16.mxu0 %v2830
        %4628 = vmatmul.mubr.bf16.gmra.mrb[0].mxu0 %v2829
        %v4629 = vpop.f32.mrb[0].mxu0
        %v4630 = vadd.f32 %v2610, %v4629
        %v4631 = vpop.f32.mrb[0].mxu0
        %v4632 = vadd.f32 %v2614, %v4631
        %v4633 = vpop.f32.mrb[0].mxu0
        %v4634 = vadd.f32 %v2610, %v4633
        %v4635 = vpop.f32.mrb[0].mxu0
        %v4636 = vadd.f32 %v2614, %v4635
        %4637 = vmatprep.mubr.bf16.mxu0 %v2834
        %4638 = vmatmul.mubr.bf16.gmra.mrb[0].mxu0 %v2833
        %v4639 = vpop.f32.mrb[0].mxu0
        %v4640 = vadd.f32 %v2610, %v4639
        %v4641 = vpop.f32.mrb[0].mxu0
        %v4642 = vadd.f32 %v2614, %v4641
        %v4643 = vpop.f32.mrb[0].mxu0
        %v4644 = vadd.f32 %v2610, %v4643
        %v4645 = vpop.f32.mrb[0].mxu0
        %v4646 = vadd.f32 %v2614, %v4645
        %4647 = vmatprep.mubr.bf16.mxu0 %v2838
        %4648 = vmatmul.mubr.bf16.gmra.mrb[0].mxu0 %v2837
        %v4649 = vpop.f32.mrb[0].mxu0
        %v4650 = vadd.f32 %v2610, %v4649
        %v4651 = vpop.f32.mrb[0].mxu0
        %v4652 = vadd.f32 %v2614, %v4651
        %v4653 = vpop.f32.mrb[0].mxu0
        %v4654 = vpop.f32.mrb[0].mxu0
        %4655 = vdwg.mxu0
        %4656 = vmatprep.subr.bf16.mxu0 %v3792
        %4657 = vmatpush1.bf16.msra.mxu0 %v3791
        %4658 = vmatprep.subr.bf16.mxu0 %v3800
        %4659 = vmatpush1.bf16.msra.mxu0 %v3799
        %4660 = vmatprep.subr.bf16.mxu0 %v3808
        %4661 = vmatpush1.bf16.msra.mxu0 %v3807
        %4662 = vmatprep.subr.bf16.mxu0 %v3816
        %4663 = vmatpush1.bf16.msra.mxu0 %v3815
        %4664 = vmatprep.subr.bf16.mxu0 %v3824
        %4665 = vmatpush1.bf16.msra.mxu0 %v3823
        %4666 = vmatprep.subr.bf16.mxu0 %v3832
        %4667 = vmatpush1.bf16.msra.mxu0 %v3831
        %4668 = vmatprep.subr.bf16.mxu0 %v3840
        %4669 = vmatpush1.bf16.msra.mxu0 %v3839
        %4670 = vmatprep.subr.bf16.mxu0 %v3848
        %4671 = vmatpush1.bf16.msra.mxu0 %v3847
        %4672 = vmatprep.subr.bf16.mxu0 %v3856
        %4673 = vmatpush1.bf16.msra.mxu0 %v3855
        %4674 = vmatprep.subr.bf16.mxu0 %v3864
        %4675 = vmatpush1.bf16.msra.mxu0 %v3863
        %4676 = vmatprep.subr.bf16.mxu0 %v3872
        %4677 = vmatpush1.bf16.msra.mxu0 %v3871
        %4678 = vmatprep.subr.bf16.mxu0 %v3880
        %4679 = vmatpush1.bf16.msra.mxu0 %v3879
        %4680 = vmatprep.subr.bf16.mxu0 %v3888
        %4681 = vmatpush1.bf16.msra.mxu0 %v3887
        %4682 = vmatprep.subr.bf16.mxu0 %v3896
        %4683 = vmatpush1.bf16.msra.mxu0 %v3895
        %4684 = vmatprep.subr.bf16.mxu0 %v3904
        %4685 = vmatpush1.bf16.msra.mxu0 %v3903
        %4686 = vmatprep.subr.bf16.mxu0 %v3912
        %4687 = vmatpush1.bf16.msra.mxu0 %v3911
        %4688 = vmatprep.mubr.bf16.mxu0 %v2792
        %4689 = vmatmul.mubr.bf16.gmra.mrb[0].mxu0 %v2791
        %v4690 = vpop.f32.mrb[0].mxu0
        %v4691 = vadd.f32 %v4530, %v4690
        %v4692 = vpop.f32.mrb[0].mxu0
        %v4693 = vadd.f32 %v4532, %v4692
        %v4694 = vpop.f32.mrb[0].mxu0
        %v4695 = vadd.f32 %v4534, %v4694
        %v4696 = vpop.f32.mrb[0].mxu0
        %v4697 = vadd.f32 %v4536, %v4696
        %4698 = vmatprep.mubr.bf16.mxu0 %v2796
        %4699 = vmatmul.mubr.bf16.gmra.mrb[0].mxu0 %v2795
        %v4700 = vpop.f32.mrb[0].mxu0
        %v4701 = vadd.f32 %v4540, %v4700
        %v4702 = vpop.f32.mrb[0].mxu0
        %v4703 = vadd.f32 %v4542, %v4702
        %v4704 = vpop.f32.mrb[0].mxu0
        %v4705 = vadd.f32 %v4544, %v4704
        %v4706 = vpop.f32.mrb[0].mxu0
        %v4707 = vadd.f32 %v4546, %v4706
        %4708 = vmatprep.mubr.bf16.mxu0 %v2800
        %4709 = vmatmul.mubr.bf16.gmra.mrb[0].mxu0 %v2799
        %v4710 = vpop.f32.mrb[0].mxu0
        %v4711 = vadd.f32 %v4550, %v4710
        %v4712 = vpop.f32.mrb[0].mxu0
        %v4713 = vadd.f32 %v4552, %v4712
        %v4714 = vpop.f32.mrb[0].mxu0
        %v4715 = vadd.f32 %v4554, %v4714
        %v4716 = vpop.f32.mrb[0].mxu0
        %v4717 = vadd.f32 %v4556, %v4716
        %4718 = vmatprep.mubr.bf16.mxu0 %v2804
        %4719 = vmatmul.mubr.bf16.gmra.mrb[0].mxu0 %v2803
        %v4720 = vpop.f32.mrb[0].mxu0
        %v4721 = vadd.f32 %v4560, %v4720
        %v4722 = vpop.f32.mrb[0].mxu0
        %v4723 = vadd.f32 %v4562, %v4722
        %v4724 = vpop.f32.mrb[0].mxu0
        %v4725 = vadd.f32 %v4564, %v4724
        %v4726 = vpop.f32.mrb[0].mxu0
        %v4727 = vadd.f32 %v4566, %v4726
        %4728 = vmatprep.mubr.bf16.mxu0 %v2808
        %4729 = vmatmul.mubr.bf16.gmra.mrb[0].mxu0 %v2807
        %v4730 = vpop.f32.mrb[0].mxu0
        %v4731 = vadd.f32 %v4570, %v4730
        %v4732 = vpop.f32.mrb[0].mxu0
        %v4733 = vadd.f32 %v4572, %v4732
        %v4734 = vpop.f32.mrb[0].mxu0
        %v4735 = vadd.f32 %v4574, %v4734
        %v4736 = vpop.f32.mrb[0].mxu0
        %v4737 = vadd.f32 %v4576, %v4736
        %4738 = vmatprep.mubr.bf16.mxu0 %v2812
        %4739 = vmatmul.mubr.bf16.gmra.mrb[0].mxu0 %v2811
        %v4740 = vpop.f32.mrb[0].mxu0
        %v4741 = vadd.f32 %v4580, %v4740
        %v4742 = vpop.f32.mrb[0].mxu0
        %v4743 = vadd.f32 %v4582, %v4742
        %v4744 = vpop.f32.mrb[0].mxu0
        %v4745 = vadd.f32 %v4584, %v4744
        %v4746 = vpop.f32.mrb[0].mxu0
        %v4747 = vadd.f32 %v4586, %v4746
        %4748 = vmatprep.mubr.bf16.mxu0 %v2816
        %4749 = vmatmul.mubr.bf16.gmra.mrb[0].mxu0 %v2815
        %v4750 = vpop.f32.mrb[0].mxu0
        %v4751 = vadd.f32 %v4590, %v4750
        %v4752 = vpop.f32.mrb[0].mxu0
        %v4753 = vadd.f32 %v4592, %v4752
        %v4754 = vpop.f32.mrb[0].mxu0
        %v4755 = vadd.f32 %v4594, %v4754
        %v4756 = vpop.f32.mrb[0].mxu0
        %v4757 = vadd.f32 %v4596, %v4756
        %4758 = vmatprep.mubr.bf16.mxu0 %v2820
        %4759 = vmatmul.mubr.bf16.gmra.mrb[0].mxu0 %v2819
        %v4760 = vpop.f32.mrb[0].mxu0
        %v4761 = vadd.f32 %v4600, %v4760
        %v4762 = vpop.f32.mrb[0].mxu0
        %v4763 = vadd.f32 %v4602, %v4762
        %v4764 = vpop.f32.mrb[0].mxu0
        %v4765 = vadd.f32 %v4604, %v4764
        %v4766 = vpop.f32.mrb[0].mxu0
        %v4767 = vadd.f32 %v4606, %v4766
        %4768 = vmatprep.mubr.bf16.mxu0 %v2824
        %4769 = vmatmul.mubr.bf16.gmra.mrb[0].mxu0 %v2823
        %v4770 = vpop.f32.mrb[0].mxu0
        %v4771 = vadd.f32 %v4610, %v4770
        %v4772 = vpop.f32.mrb[0].mxu0
        %v4773 = vadd.f32 %v4612, %v4772
        %v4774 = vpop.f32.mrb[0].mxu0
        %v4775 = vadd.f32 %v4614, %v4774
        %v4776 = vpop.f32.mrb[0].mxu0
        %v4777 = vadd.f32 %v4616, %v4776
        %4778 = vmatprep.mubr.bf16.mxu0 %v2828
        %4779 = vmatmul.mubr.bf16.gmra.mrb[0].mxu0 %v2827
        %v4780 = vpop.f32.mrb[0].mxu0
        %v4781 = vadd.f32 %v4620, %v4780
        %v4782 = vpop.f32.mrb[0].mxu0
        %v4783 = vadd.f32 %v4622, %v4782
        %v4784 = vpop.f32.mrb[0].mxu0
        %v4785 = vadd.f32 %v4624, %v4784
        %v4786 = vpop.f32.mrb[0].mxu0
        %v4787 = vadd.f32 %v4626, %v4786
        %4788 = vmatprep.mubr.bf16.mxu0 %v2832
        %4789 = vmatmul.mubr.bf16.gmra.mrb[0].mxu0 %v2831
        %v4790 = vpop.f32.mrb[0].mxu0
        %v4791 = vadd.f32 %v4630, %v4790
        %v4792 = vpop.f32.mrb[0].mxu0
        %v4793 = vadd.f32 %v4632, %v4792
        %v4794 = vpop.f32.mrb[0].mxu0
        %v4795 = vadd.f32 %v4634, %v4794
        %v4796 = vpop.f32.mrb[0].mxu0
        %v4797 = vadd.f32 %v4636, %v4796
        %4798 = vmatprep.mubr.bf16.mxu0 %v2836
        %4799 = vmatmul.mubr.bf16.gmra.mrb[0].mxu0 %v2835
        %v4800 = vpop.f32.mrb[0].mxu0
        %v4801 = vadd.f32 %v4640, %v4800
        %v4802 = vpop.f32.mrb[0].mxu0
        %v4803 = vadd.f32 %v4642, %v4802
        %v4804 = vpop.f32.mrb[0].mxu0
        %v4805 = vadd.f32 %v4644, %v4804
        %v4806 = vpop.f32.mrb[0].mxu0
        %v4807 = vadd.f32 %v4646, %v4806
        %4808 = vmatprep.mubr.bf16.mxu0 %v2840
        %4809 = vmatmul.mubr.bf16.gmra.mrb[0].mxu0 %v2839
        %v4810 = vpop.f32.mrb[0].mxu0
        %v4811 = vadd.f32 %v4650, %v4810
        %v4812 = vpop.f32.mrb[0].mxu0
        %v4813 = vadd.f32 %v4652, %v4812
        %v4814 = vpop.f32.mrb[0].mxu0
        %v4815 = vpop.f32.mrb[0].mxu0
        %4816 = vdwg.mxu0
        %4817 = vmatprep.subr.bf16.mxu0 %v3666
        %4818 = vmatpush1.bf16.msra.mxu0 %v3665
        %4819 = vmatprep.subr.bf16.mxu0 %v3674
        %4820 = vmatpush1.bf16.msra.mxu0 %v3673
        %4821 = vmatprep.subr.bf16.mxu0 %v3682
        %4822 = vmatpush1.bf16.msra.mxu0 %v3681
        %4823 = vmatprep.subr.bf16.mxu0 %v3690
        %4824 = vmatpush1.bf16.msra.mxu0 %v3689
        %4825 = vmatprep.subr.bf16.mxu0 %v3698
        %4826 = vmatpush1.bf16.msra.mxu0 %v3697
        %4827 = vmatprep.subr.bf16.mxu0 %v3706
        %4828 = vmatpush1.bf16.msra.mxu0 %v3705
        %4829 = vmatprep.subr.bf16.mxu0 %v3714
        %4830 = vmatpush1.bf16.msra.mxu0 %v3713
        %4831 = vmatprep.subr.bf16.mxu0 %v3722
        %4832 = vmatpush1.bf16.msra.mxu0 %v3721
        %4833 = vmatprep.subr.bf16.mxu0 %v3730
        %4834 = vmatpush1.bf16.msra.mxu0 %v3729
        %4835 = vmatprep.subr.bf16.mxu0 %v3738
        %4836 = vmatpush1.bf16.msra.mxu0 %v3737
        %4837 = vmatprep.subr.bf16.mxu0 %v3746
        %4838 = vmatpush1.bf16.msra.mxu0 %v3745
        %4839 = vmatprep.subr.bf16.mxu0 %v3754
        %4840 = vmatpush1.bf16.msra.mxu0 %v3753
        %4841 = vmatprep.subr.bf16.mxu0 %v3762
        %4842 = vmatpush1.bf16.msra.mxu0 %v3761
        %4843 = vmatprep.subr.bf16.mxu0 %v3770
        %4844 = vmatpush1.bf16.msra.mxu0 %v3769
        %4845 = vmatprep.subr.bf16.mxu0 %v3778
        %4846 = vmatpush1.bf16.msra.mxu0 %v3777
        %4847 = vmatprep.subr.bf16.mxu0 %v3786
        %4848 = vmatpush1.bf16.msra.mxu0 %v3785
        %4849 = vmatprep.mubr.bf16.mxu0 %v2790
        %4850 = vmatmul.mubr.bf16.gmra.mrb[0].mxu0 %v2789
        %v4851 = vpop.f32.mrb[0].mxu0
        %v4852 = vadd.f32 %v2618, %v4851
        %v4853 = vpop.f32.mrb[0].mxu0
        %v4854 = vadd.f32 %v2622, %v4853
        %v4855 = vpop.f32.mrb[0].mxu0
        %v4856 = vadd.f32 %v2618, %v4855
        %v4857 = vpop.f32.mrb[0].mxu0
        %v4858 = vadd.f32 %v2622, %v4857
        %4859 = vmatprep.mubr.bf16.mxu0 %v2794
        %4860 = vmatmul.mubr.bf16.gmra.mrb[0].mxu0 %v2793
        %v4861 = vpop.f32.mrb[0].mxu0
        %v4862 = vadd.f32 %v2618, %v4861
        %v4863 = vpop.f32.mrb[0].mxu0
        %v4864 = vadd.f32 %v2622, %v4863
        %v4865 = vpop.f32.mrb[0].mxu0
        %v4866 = vadd.f32 %v2618, %v4865
        %v4867 = vpop.f32.mrb[0].mxu0
        %v4868 = vadd.f32 %v2622, %v4867
        %4869 = vmatprep.mubr.bf16.mxu0 %v2798
        %4870 = vmatmul.mubr.bf16.gmra.mrb[0].mxu0 %v2797
        %v4871 = vpop.f32.mrb[0].mxu0
        %v4872 = vadd.f32 %v2618, %v4871
        %v4873 = vpop.f32.mrb[0].mxu0
        %v4874 = vadd.f32 %v2622, %v4873
        %v4875 = vpop.f32.mrb[0].mxu0
        %v4876 = vadd.f32 %v2618, %v4875
        %v4877 = vpop.f32.mrb[0].mxu0
        %v4878 = vadd.f32 %v2622, %v4877
        %4879 = vmatprep.mubr.bf16.mxu0 %v2802
        %4880 = vmatmul.mubr.bf16.gmra.mrb[0].mxu0 %v2801
        %v4881 = vpop.f32.mrb[0].mxu0
        %v4882 = vadd.f32 %v2618, %v4881
        %v4883 = vpop.f32.mrb[0].mxu0
        %v4884 = vadd.f32 %v2622, %v4883
        %v4885 = vpop.f32.mrb[0].mxu0
        %v4886 = vadd.f32 %v2618, %v4885
        %v4887 = vpop.f32.mrb[0].mxu0
        %v4888 = vadd.f32 %v2622, %v4887
        %4889 = vmatprep.mubr.bf16.mxu0 %v2806
        %4890 = vmatmul.mubr.bf16.gmra.mrb[0].mxu0 %v2805
        %v4891 = vpop.f32.mrb[0].mxu0
        %v4892 = vadd.f32 %v2618, %v4891
        %v4893 = vpop.f32.mrb[0].mxu0
        %v4894 = vadd.f32 %v2622, %v4893
        %v4895 = vpop.f32.mrb[0].mxu0
        %v4896 = vadd.f32 %v2618, %v4895
        %v4897 = vpop.f32.mrb[0].mxu0
        %v4898 = vadd.f32 %v2622, %v4897
        %4899 = vmatprep.mubr.bf16.mxu0 %v2810
        %4900 = vmatmul.mubr.bf16.gmra.mrb[0].mxu0 %v2809
        %v4901 = vpop.f32.mrb[0].mxu0
        %v4902 = vadd.f32 %v2618, %v4901
        %v4903 = vpop.f32.mrb[0].mxu0
        %v4904 = vadd.f32 %v2622, %v4903
        %v4905 = vpop.f32.mrb[0].mxu0
        %v4906 = vadd.f32 %v2618, %v4905
        %v4907 = vpop.f32.mrb[0].mxu0
        %v4908 = vadd.f32 %v2622, %v4907
        %4909 = vmatprep.mubr.bf16.mxu0 %v2814
        %4910 = vmatmul.mubr.bf16.gmra.mrb[0].mxu0 %v2813
        %v4911 = vpop.f32.mrb[0].mxu0
        %v4912 = vadd.f32 %v2618, %v4911
        %v4913 = vpop.f32.mrb[0].mxu0
        %v4914 = vadd.f32 %v2622, %v4913
        %v4915 = vpop.f32.mrb[0].mxu0
        %v4916 = vadd.f32 %v2618, %v4915
        %v4917 = vpop.f32.mrb[0].mxu0
        %v4918 = vadd.f32 %v2622, %v4917
        %4919 = vmatprep.mubr.bf16.mxu0 %v2818
        %4920 = vmatmul.mubr.bf16.gmra.mrb[0].mxu0 %v2817
        %v4921 = vpop.f32.mrb[0].mxu0
        %v4922 = vadd.f32 %v2618, %v4921
        %v4923 = vpop.f32.mrb[0].mxu0
        %v4924 = vadd.f32 %v2622, %v4923
        %v4925 = vpop.f32.mrb[0].mxu0
        %v4926 = vadd.f32 %v2618, %v4925
        %v4927 = vpop.f32.mrb[0].mxu0
        %v4928 = vadd.f32 %v2622, %v4927
        %4929 = vmatprep.mubr.bf16.mxu0 %v2822
        %4930 = vmatmul.mubr.bf16.gmra.mrb[0].mxu0 %v2821
        %v4931 = vpop.f32.mrb[0].mxu0
        %v4932 = vadd.f32 %v2618, %v4931
        %v4933 = vpop.f32.mrb[0].mxu0
        %v4934 = vadd.f32 %v2622, %v4933
        %v4935 = vpop.f32.mrb[0].mxu0
        %v4936 = vadd.f32 %v2618, %v4935
        %v4937 = vpop.f32.mrb[0].mxu0
        %v4938 = vadd.f32 %v2622, %v4937
        %4939 = vmatprep.mubr.bf16.mxu0 %v2826
        %4940 = vmatmul.mubr.bf16.gmra.mrb[0].mxu0 %v2825
        %v4941 = vpop.f32.mrb[0].mxu0
        %v4942 = vadd.f32 %v2618, %v4941
        %v4943 = vpop.f32.mrb[0].mxu0
        %v4944 = vadd.f32 %v2622, %v4943
        %v4945 = vpop.f32.mrb[0].mxu0
        %v4946 = vadd.f32 %v2618, %v4945
        %v4947 = vpop.f32.mrb[0].mxu0
        %v4948 = vadd.f32 %v2622, %v4947
        %4949 = vmatprep.mubr.bf16.mxu0 %v2830
        %4950 = vmatmul.mubr.bf16.gmra.mrb[0].mxu0 %v2829
        %v4951 = vpop.f32.mrb[0].mxu0
        %v4952 = vadd.f32 %v2618, %v4951
        %v4953 = vpop.f32.mrb[0].mxu0
        %v4954 = vadd.f32 %v2622, %v4953
        %v4955 = vpop.f32.mrb[0].mxu0
        %v4956 = vadd.f32 %v2618, %v4955
        %v4957 = vpop.f32.mrb[0].mxu0
        %v4958 = vadd.f32 %v2622, %v4957
        %4959 = vmatprep.mubr.bf16.mxu0 %v2834
        %4960 = vmatmul.mubr.bf16.gmra.mrb[0].mxu0 %v2833
        %v4961 = vpop.f32.mrb[0].mxu0
        %v4962 = vadd.f32 %v2618, %v4961
        %v4963 = vpop.f32.mrb[0].mxu0
        %v4964 = vadd.f32 %v2622, %v4963
        %v4965 = vpop.f32.mrb[0].mxu0
        %v4966 = vadd.f32 %v2618, %v4965
        %v4967 = vpop.f32.mrb[0].mxu0
        %v4968 = vadd.f32 %v2622, %v4967
        %4969 = vmatprep.mubr.bf16.mxu0 %v2838
        %4970 = vmatmul.mubr.bf16.gmra.mrb[0].mxu0 %v2837
        %v4971 = vpop.f32.mrb[0].mxu0
        %v4972 = vadd.f32 %v2618, %v4971
        %v4973 = vpop.f32.mrb[0].mxu0
        %v4974 = vadd.f32 %v2622, %v4973
        %v4975 = vpop.f32.mrb[0].mxu0
        %v4976 = vpop.f32.mrb[0].mxu0
        %4977 = vdwg.mxu0
        %4978 = vmatprep.subr.bf16.mxu0 %v3794
        %4979 = vmatpush1.bf16.msra.mxu0 %v3793
        %4980 = vmatprep.subr.bf16.mxu0 %v3802
        %4981 = vmatpush1.bf16.msra.mxu0 %v3801
        %4982 = vmatprep.subr.bf16.mxu0 %v3810
        %4983 = vmatpush1.bf16.msra.mxu0 %v3809
        %4984 = vmatprep.subr.bf16.mxu0 %v3818
        %4985 = vmatpush1.bf16.msra.mxu0 %v3817
        %4986 = vmatprep.subr.bf16.mxu0 %v3826
        %4987 = vmatpush1.bf16.msra.mxu0 %v3825
        %4988 = vmatprep.subr.bf16.mxu0 %v3834
        %4989 = vmatpush1.bf16.msra.mxu0 %v3833
        %4990 = vmatprep.subr.bf16.mxu0 %v3842
        %4991 = vmatpush1.bf16.msra.mxu0 %v3841
        %4992 = vmatprep.subr.bf16.mxu0 %v3850
        %4993 = vmatpush1.bf16.msra.mxu0 %v3849
        %4994 = vmatprep.subr.bf16.mxu0 %v3858
        %4995 = vmatpush1.bf16.msra.mxu0 %v3857
        %4996 = vmatprep.subr.bf16.mxu0 %v3866
        %4997 = vmatpush1.bf16.msra.mxu0 %v3865
        %4998 = vmatprep.subr.bf16.mxu0 %v3874
        %4999 = vmatpush1.bf16.msra.mxu0 %v3873
        %5000 = vmatprep.subr.bf16.mxu0 %v3882
        %5001 = vmatpush1.bf16.msra.mxu0 %v3881
        %5002 = vmatprep.subr.bf16.mxu0 %v3890
        %5003 = vmatpush1.bf16.msra.mxu0 %v3889
        %5004 = vmatprep.subr.bf16.mxu0 %v3898
        %5005 = vmatpush1.bf16.msra.mxu0 %v3897
        %5006 = vmatprep.subr.bf16.mxu0 %v3906
        %5007 = vmatpush1.bf16.msra.mxu0 %v3905
        %5008 = vmatprep.subr.bf16.mxu0 %v3914
        %5009 = vmatpush1.bf16.msra.mxu0 %v3913
        %5010 = vmatprep.mubr.bf16.mxu0 %v2792
        %5011 = vmatmul.mubr.bf16.gmra.mrb[0].mxu0 %v2791
        %v5012 = vpop.f32.mrb[0].mxu0
        %v5013 = vadd.f32 %v4852, %v5012
        %v5014 = vpop.f32.mrb[0].mxu0
        %v5015 = vadd.f32 %v4854, %v5014
        %v5016 = vpop.f32.mrb[0].mxu0
        %v5017 = vadd.f32 %v4856, %v5016
        %v5018 = vpop.f32.mrb[0].mxu0
        %v5019 = vadd.f32 %v4858, %v5018
        %5020 = vmatprep.mubr.bf16.mxu0 %v2796
        %5021 = vmatmul.mubr.bf16.gmra.mrb[0].mxu0 %v2795
        %v5022 = vpop.f32.mrb[0].mxu0
        %v5023 = vadd.f32 %v4862, %v5022
        %v5024 = vpop.f32.mrb[0].mxu0
        %v5025 = vadd.f32 %v4864, %v5024
        %v5026 = vpop.f32.mrb[0].mxu0
        %v5027 = vadd.f32 %v4866, %v5026
        %v5028 = vpop.f32.mrb[0].mxu0
        %v5029 = vadd.f32 %v4868, %v5028
        %5030 = vmatprep.mubr.bf16.mxu0 %v2800
        %5031 = vmatmul.mubr.bf16.gmra.mrb[0].mxu0 %v2799
        %v5032 = vpop.f32.mrb[0].mxu0
        %v5033 = vadd.f32 %v4872, %v5032
        %v5034 = vpop.f32.mrb[0].mxu0
        %v5035 = vadd.f32 %v4874, %v5034
        %v5036 = vpop.f32.mrb[0].mxu0
        %v5037 = vadd.f32 %v4876, %v5036
        %v5038 = vpop.f32.mrb[0].mxu0
        %v5039 = vadd.f32 %v4878, %v5038
        %5040 = vmatprep.mubr.bf16.mxu0 %v2804
        %5041 = vmatmul.mubr.bf16.gmra.mrb[0].mxu0 %v2803
        %v5042 = vpop.f32.mrb[0].mxu0
        %v5043 = vadd.f32 %v4882, %v5042
        %v5044 = vpop.f32.mrb[0].mxu0
        %v5045 = vadd.f32 %v4884, %v5044
        %v5046 = vpop.f32.mrb[0].mxu0
        %v5047 = vadd.f32 %v4886, %v5046
        %v5048 = vpop.f32.mrb[0].mxu0
        %v5049 = vadd.f32 %v4888, %v5048
        %5050 = vmatprep.mubr.bf16.mxu0 %v2808
        %5051 = vmatmul.mubr.bf16.gmra.mrb[0].mxu0 %v2807
        %v5052 = vpop.f32.mrb[0].mxu0
        %v5053 = vadd.f32 %v4892, %v5052
        %v5054 = vpop.f32.mrb[0].mxu0
        %v5055 = vadd.f32 %v4894, %v5054
        %v5056 = vpop.f32.mrb[0].mxu0
        %v5057 = vadd.f32 %v4896, %v5056
        %v5058 = vpop.f32.mrb[0].mxu0
        %v5059 = vadd.f32 %v4898, %v5058
        %5060 = vmatprep.mubr.bf16.mxu0 %v2812
        %5061 = vmatmul.mubr.bf16.gmra.mrb[0].mxu0 %v2811
        %v5062 = vpop.f32.mrb[0].mxu0
        %v5063 = vadd.f32 %v4902, %v5062
        %v5064 = vpop.f32.mrb[0].mxu0
        %v5065 = vadd.f32 %v4904, %v5064
        %v5066 = vpop.f32.mrb[0].mxu0
        %v5067 = vadd.f32 %v4906, %v5066
        %v5068 = vpop.f32.mrb[0].mxu0
        %v5069 = vadd.f32 %v4908, %v5068
        %5070 = vmatprep.mubr.bf16.mxu0 %v2816
        %5071 = vmatmul.mubr.bf16.gmra.mrb[0].mxu0 %v2815
        %v5072 = vpop.f32.mrb[0].mxu0
        %v5073 = vadd.f32 %v4912, %v5072
        %v5074 = vpop.f32.mrb[0].mxu0
        %v5075 = vadd.f32 %v4914, %v5074
        %v5076 = vpop.f32.mrb[0].mxu0
        %v5077 = vadd.f32 %v4916, %v5076
        %v5078 = vpop.f32.mrb[0].mxu0
        %v5079 = vadd.f32 %v4918, %v5078
        %5080 = vmatprep.mubr.bf16.mxu0 %v2820
        %5081 = vmatmul.mubr.bf16.gmra.mrb[0].mxu0 %v2819
        %v5082 = vpop.f32.mrb[0].mxu0
        %v5083 = vadd.f32 %v4922, %v5082
        %v5084 = vpop.f32.mrb[0].mxu0
        %v5085 = vadd.f32 %v4924, %v5084
        %v5086 = vpop.f32.mrb[0].mxu0
        %v5087 = vadd.f32 %v4926, %v5086
        %v5088 = vpop.f32.mrb[0].mxu0
        %v5089 = vadd.f32 %v4928, %v5088
        %5090 = vmatprep.mubr.bf16.mxu0 %v2824
        %5091 = vmatmul.mubr.bf16.gmra.mrb[0].mxu0 %v2823
        %v5092 = vpop.f32.mrb[0].mxu0
        %v5093 = vadd.f32 %v4932, %v5092
        %v5094 = vpop.f32.mrb[0].mxu0
        %v5095 = vadd.f32 %v4934, %v5094
        %v5096 = vpop.f32.mrb[0].mxu0
        %v5097 = vadd.f32 %v4936, %v5096
        %v5098 = vpop.f32.mrb[0].mxu0
        %v5099 = vadd.f32 %v4938, %v5098
        %5100 = vmatprep.mubr.bf16.mxu0 %v2828
        %5101 = vmatmul.mubr.bf16.gmra.mrb[0].mxu0 %v2827
        %v5102 = vpop.f32.mrb[0].mxu0
        %v5103 = vadd.f32 %v4942, %v5102
        %v5104 = vpop.f32.mrb[0].mxu0
        %v5105 = vadd.f32 %v4944, %v5104
        %v5106 = vpop.f32.mrb[0].mxu0
        %v5107 = vadd.f32 %v4946, %v5106
        %v5108 = vpop.f32.mrb[0].mxu0
        %v5109 = vadd.f32 %v4948, %v5108
        %5110 = vmatprep.mubr.bf16.mxu0 %v2832
        %5111 = vmatmul.mubr.bf16.gmra.mrb[0].mxu0 %v2831
        %v5112 = vpop.f32.mrb[0].mxu0
        %v5113 = vadd.f32 %v4952, %v5112
        %v5114 = vpop.f32.mrb[0].mxu0
        %v5115 = vadd.f32 %v4954, %v5114
        %v5116 = vpop.f32.mrb[0].mxu0
        %v5117 = vadd.f32 %v4956, %v5116
        %v5118 = vpop.f32.mrb[0].mxu0
        %v5119 = vadd.f32 %v4958, %v5118
        %5120 = vmatprep.mubr.bf16.mxu0 %v2836
        %5121 = vmatmul.mubr.bf16.gmra.mrb[0].mxu0 %v2835
        %v5122 = vpop.f32.mrb[0].mxu0
        %v5123 = vadd.f32 %v4962, %v5122
        %v5124 = vpop.f32.mrb[0].mxu0
        %v5125 = vadd.f32 %v4964, %v5124
        %v5126 = vpop.f32.mrb[0].mxu0
        %v5127 = vadd.f32 %v4966, %v5126
        %v5128 = vpop.f32.mrb[0].mxu0
        %v5129 = vadd.f32 %v4968, %v5128
        %5130 = vmatprep.mubr.bf16.mxu0 %v2840
        %5131 = vmatmul.mubr.bf16.gmra.mrb[0].mxu0 %v2839
        %v5132 = vpop.f32.mrb[0].mxu0
        %v5133 = vadd.f32 %v4972, %v5132
        %v5134 = vpop.f32.mrb[0].mxu0
        %v5135 = vadd.f32 %v4974, %v5134
        %v5136 = vpop.f32.mrb[0].mxu0
        %v5137 = vpop.f32.mrb[0].mxu0
        %5138 = vdwg.mxu0
        %5139 = vmatprep.subr.bf16.mxu0 %v3668
        %5140 = vmatpush1.bf16.msra.mxu0 %v3667
        %5141 = vmatprep.subr.bf16.mxu0 %v3676
        %5142 = vmatpush1.bf16.msra.mxu0 %v3675
        %5143 = vmatprep.subr.bf16.mxu0 %v3684
        %5144 = vmatpush1.bf16.msra.mxu0 %v3683
        %5145 = vmatprep.subr.bf16.mxu0 %v3692
        %5146 = vmatpush1.bf16.msra.mxu0 %v3691
        %5147 = vmatprep.subr.bf16.mxu0 %v3700
        %5148 = vmatpush1.bf16.msra.mxu0 %v3699
        %5149 = vmatprep.subr.bf16.mxu0 %v3708
        %5150 = vmatpush1.bf16.msra.mxu0 %v3707
        %5151 = vmatprep.subr.bf16.mxu0 %v3716
        %5152 = vmatpush1.bf16.msra.mxu0 %v3715
        %5153 = vmatprep.subr.bf16.mxu0 %v3724
        %5154 = vmatpush1.bf16.msra.mxu0 %v3723
        %5155 = vmatprep.subr.bf16.mxu0 %v3732
        %5156 = vmatpush1.bf16.msra.mxu0 %v3731
        %5157 = vmatprep.subr.bf16.mxu0 %v3740
        %5158 = vmatpush1.bf16.msra.mxu0 %v3739
        %5159 = vmatprep.subr.bf16.mxu0 %v3748
        %5160 = vmatpush1.bf16.msra.mxu0 %v3747
        %5161 = vmatprep.subr.bf16.mxu0 %v3756
        %5162 = vmatpush1.bf16.msra.mxu0 %v3755
        %5163 = vmatprep.subr.bf16.mxu0 %v3764
        %5164 = vmatpush1.bf16.msra.mxu0 %v3763
        %5165 = vmatprep.subr.bf16.mxu0 %v3772
        %5166 = vmatpush1.bf16.msra.mxu0 %v3771
        %5167 = vmatprep.subr.bf16.mxu0 %v3780
        %5168 = vmatpush1.bf16.msra.mxu0 %v3779
        %5169 = vmatprep.subr.bf16.mxu0 %v3788
        %5170 = vmatpush1.bf16.msra.mxu0 %v3787
        %5171 = vmatprep.mubr.bf16.mxu0 %v2790
        %5172 = vmatmul.mubr.bf16.gmra.mrb[0].mxu0 %v2789
        %v5173 = vpop.f32.mrb[0].mxu0
        %v5174 = vadd.f32 %v2626, %v5173
        %v5175 = vpop.f32.mrb[0].mxu0
        %v5176 = vadd.f32 %v2630, %v5175
        %v5177 = vpop.f32.mrb[0].mxu0
        %v5178 = vadd.f32 %v2626, %v5177
        %v5179 = vpop.f32.mrb[0].mxu0
        %v5180 = vadd.f32 %v2630, %v5179
        %5181 = vmatprep.mubr.bf16.mxu0 %v2794
        %5182 = vmatmul.mubr.bf16.gmra.mrb[0].mxu0 %v2793
        %v5183 = vpop.f32.mrb[0].mxu0
        %v5184 = vadd.f32 %v2626, %v5183
        %v5185 = vpop.f32.mrb[0].mxu0
        %v5186 = vadd.f32 %v2630, %v5185
        %v5187 = vpop.f32.mrb[0].mxu0
        %v5188 = vadd.f32 %v2626, %v5187
        %v5189 = vpop.f32.mrb[0].mxu0
        %v5190 = vadd.f32 %v2630, %v5189
        %5191 = vmatprep.mubr.bf16.mxu0 %v2798
        %5192 = vmatmul.mubr.bf16.gmra.mrb[0].mxu0 %v2797
        %v5193 = vpop.f32.mrb[0].mxu0
        %v5194 = vadd.f32 %v2626, %v5193
        %v5195 = vpop.f32.mrb[0].mxu0
        %v5196 = vadd.f32 %v2630, %v5195
        %v5197 = vpop.f32.mrb[0].mxu0
        %v5198 = vadd.f32 %v2626, %v5197
        %v5199 = vpop.f32.mrb[0].mxu0
        %v5200 = vadd.f32 %v2630, %v5199
        %5201 = vmatprep.mubr.bf16.mxu0 %v2802
        %5202 = vmatmul.mubr.bf16.gmra.mrb[0].mxu0 %v2801
        %v5203 = vpop.f32.mrb[0].mxu0
        %v5204 = vadd.f32 %v2626, %v5203
        %v5205 = vpop.f32.mrb[0].mxu0
        %v5206 = vadd.f32 %v2630, %v5205
        %v5207 = vpop.f32.mrb[0].mxu0
        %v5208 = vadd.f32 %v2626, %v5207
        %v5209 = vpop.f32.mrb[0].mxu0
        %v5210 = vadd.f32 %v2630, %v5209
        %5211 = vmatprep.mubr.bf16.mxu0 %v2806
        %5212 = vmatmul.mubr.bf16.gmra.mrb[0].mxu0 %v2805
        %v5213 = vpop.f32.mrb[0].mxu0
        %v5214 = vadd.f32 %v2626, %v5213
        %v5215 = vpop.f32.mrb[0].mxu0
        %v5216 = vadd.f32 %v2630, %v5215
        %v5217 = vpop.f32.mrb[0].mxu0
        %v5218 = vadd.f32 %v2626, %v5217
        %v5219 = vpop.f32.mrb[0].mxu0
        %v5220 = vadd.f32 %v2630, %v5219
        %5221 = vmatprep.mubr.bf16.mxu0 %v2810
        %5222 = vmatmul.mubr.bf16.gmra.mrb[0].mxu0 %v2809
        %v5223 = vpop.f32.mrb[0].mxu0
        %v5224 = vadd.f32 %v2626, %v5223
        %v5225 = vpop.f32.mrb[0].mxu0
        %v5226 = vadd.f32 %v2630, %v5225
        %v5227 = vpop.f32.mrb[0].mxu0
        %v5228 = vadd.f32 %v2626, %v5227
        %v5229 = vpop.f32.mrb[0].mxu0
        %v5230 = vadd.f32 %v2630, %v5229
        %5231 = vmatprep.mubr.bf16.mxu0 %v2814
        %5232 = vmatmul.mubr.bf16.gmra.mrb[0].mxu0 %v2813
        %v5233 = vpop.f32.mrb[0].mxu0
        %v5234 = vadd.f32 %v2626, %v5233
        %v5235 = vpop.f32.mrb[0].mxu0
        %v5236 = vadd.f32 %v2630, %v5235
        %v5237 = vpop.f32.mrb[0].mxu0
        %v5238 = vadd.f32 %v2626, %v5237
        %v5239 = vpop.f32.mrb[0].mxu0
        %v5240 = vadd.f32 %v2630, %v5239
        %5241 = vmatprep.mubr.bf16.mxu0 %v2818
        %5242 = vmatmul.mubr.bf16.gmra.mrb[0].mxu0 %v2817
        %v5243 = vpop.f32.mrb[0].mxu0
        %v5244 = vadd.f32 %v2626, %v5243
        %v5245 = vpop.f32.mrb[0].mxu0
        %v5246 = vadd.f32 %v2630, %v5245
        %v5247 = vpop.f32.mrb[0].mxu0
        %v5248 = vadd.f32 %v2626, %v5247
        %v5249 = vpop.f32.mrb[0].mxu0
        %v5250 = vadd.f32 %v2630, %v5249
        %5251 = vmatprep.mubr.bf16.mxu0 %v2822
        %5252 = vmatmul.mubr.bf16.gmra.mrb[0].mxu0 %v2821
        %v5253 = vpop.f32.mrb[0].mxu0
        %v5254 = vadd.f32 %v2626, %v5253
        %v5255 = vpop.f32.mrb[0].mxu0
        %v5256 = vadd.f32 %v2630, %v5255
        %v5257 = vpop.f32.mrb[0].mxu0
        %v5258 = vadd.f32 %v2626, %v5257
        %v5259 = vpop.f32.mrb[0].mxu0
        %v5260 = vadd.f32 %v2630, %v5259
        %5261 = vmatprep.mubr.bf16.mxu0 %v2826
        %5262 = vmatmul.mubr.bf16.gmra.mrb[0].mxu0 %v2825
        %v5263 = vpop.f32.mrb[0].mxu0
        %v5264 = vadd.f32 %v2626, %v5263
        %v5265 = vpop.f32.mrb[0].mxu0
        %v5266 = vadd.f32 %v2630, %v5265
        %v5267 = vpop.f32.mrb[0].mxu0
        %v5268 = vadd.f32 %v2626, %v5267
        %v5269 = vpop.f32.mrb[0].mxu0
        %v5270 = vadd.f32 %v2630, %v5269
        %5271 = vmatprep.mubr.bf16.mxu0 %v2830
        %5272 = vmatmul.mubr.bf16.gmra.mrb[0].mxu0 %v2829
        %v5273 = vpop.f32.mrb[0].mxu0
        %v5274 = vadd.f32 %v2626, %v5273
        %v5275 = vpop.f32.mrb[0].mxu0
        %v5276 = vadd.f32 %v2630, %v5275
        %v5277 = vpop.f32.mrb[0].mxu0
        %v5278 = vadd.f32 %v2626, %v5277
        %v5279 = vpop.f32.mrb[0].mxu0
        %v5280 = vadd.f32 %v2630, %v5279
        %5281 = vmatprep.mubr.bf16.mxu0 %v2834
        %5282 = vmatmul.mubr.bf16.gmra.mrb[0].mxu0 %v2833
        %v5283 = vpop.f32.mrb[0].mxu0
        %v5284 = vadd.f32 %v2626, %v5283
        %v5285 = vpop.f32.mrb[0].mxu0
        %v5286 = vadd.f32 %v2630, %v5285
        %v5287 = vpop.f32.mrb[0].mxu0
        %v5288 = vadd.f32 %v2626, %v5287
        %v5289 = vpop.f32.mrb[0].mxu0
        %v5290 = vadd.f32 %v2630, %v5289
        %5291 = vmatprep.mubr.bf16.mxu0 %v2838
        %5292 = vmatmul.mubr.bf16.gmra.mrb[0].mxu0 %v2837
        %v5293 = vpop.f32.mrb[0].mxu0
        %v5294 = vadd.f32 %v2626, %v5293
        %v5295 = vpop.f32.mrb[0].mxu0
        %v5296 = vadd.f32 %v2630, %v5295
        %v5297 = vpop.f32.mrb[0].mxu0
        %v5298 = vpop.f32.mrb[0].mxu0
        %5299 = vdwg.mxu0
        %5300 = vmatprep.subr.bf16.mxu0 %v3796
        %5301 = vmatpush1.bf16.msra.mxu0 %v3795
        %5302 = vmatprep.subr.bf16.mxu0 %v3804
        %5303 = vmatpush1.bf16.msra.mxu0 %v3803
        %5304 = vmatprep.subr.bf16.mxu0 %v3812
        %5305 = vmatpush1.bf16.msra.mxu0 %v3811
        %5306 = vmatprep.subr.bf16.mxu0 %v3820
        %5307 = vmatpush1.bf16.msra.mxu0 %v3819
        %5308 = vmatprep.subr.bf16.mxu0 %v3828
        %5309 = vmatpush1.bf16.msra.mxu0 %v3827
        %5310 = vmatprep.subr.bf16.mxu0 %v3836
        %5311 = vmatpush1.bf16.msra.mxu0 %v3835
        %5312 = vmatprep.subr.bf16.mxu0 %v3844
        %5313 = vmatpush1.bf16.msra.mxu0 %v3843
        %5314 = vmatprep.subr.bf16.mxu0 %v3852
        %5315 = vmatpush1.bf16.msra.mxu0 %v3851
        %5316 = vmatprep.subr.bf16.mxu0 %v3860
        %5317 = vmatpush1.bf16.msra.mxu0 %v3859
        %5318 = vmatprep.subr.bf16.mxu0 %v3868
        %5319 = vmatpush1.bf16.msra.mxu0 %v3867
        %5320 = vmatprep.subr.bf16.mxu0 %v3876
        %5321 = vmatpush1.bf16.msra.mxu0 %v3875
        %5322 = vmatprep.subr.bf16.mxu0 %v3884
        %5323 = vmatpush1.bf16.msra.mxu0 %v3883
        %5324 = vmatprep.subr.bf16.mxu0 %v3892
        %5325 = vmatpush1.bf16.msra.mxu0 %v3891
        %5326 = vmatprep.subr.bf16.mxu0 %v3900
        %5327 = vmatpush1.bf16.msra.mxu0 %v3899
        %5328 = vmatprep.subr.bf16.mxu0 %v3908
        %5329 = vmatpush1.bf16.msra.mxu0 %v3907
        %5330 = vmatprep.subr.bf16.mxu0 %v3916
        %5331 = vmatpush1.bf16.msra.mxu0 %v3915
        %5332 = vmatprep.mubr.bf16.mxu0 %v2792
        %5333 = vmatmul.mubr.bf16.gmra.mrb[0].mxu0 %v2791
        %v5334 = vpop.f32.mrb[0].mxu0
        %v5335 = vadd.f32 %v5174, %v5334
        %v5336 = vpop.f32.mrb[0].mxu0
        %v5337 = vadd.f32 %v5176, %v5336
        %v5338 = vpop.f32.mrb[0].mxu0
        %v5339 = vadd.f32 %v5178, %v5338
        %v5340 = vpop.f32.mrb[0].mxu0
        %v5341 = vadd.f32 %v5180, %v5340
        %5342 = vmatprep.mubr.bf16.mxu0 %v2796
        %5343 = vmatmul.mubr.bf16.gmra.mrb[0].mxu0 %v2795
        %v5344 = vpop.f32.mrb[0].mxu0
        %v5345 = vadd.f32 %v5184, %v5344
        %v5346 = vpop.f32.mrb[0].mxu0
        %v5347 = vadd.f32 %v5186, %v5346
        %v5348 = vpop.f32.mrb[0].mxu0
        %v5349 = vadd.f32 %v5188, %v5348
        %v5350 = vpop.f32.mrb[0].mxu0
        %v5351 = vadd.f32 %v5190, %v5350
        %5352 = vmatprep.mubr.bf16.mxu0 %v2800
        %5353 = vmatmul.mubr.bf16.gmra.mrb[0].mxu0 %v2799
        %v5354 = vpop.f32.mrb[0].mxu0
        %v5355 = vadd.f32 %v5194, %v5354
        %v5356 = vpop.f32.mrb[0].mxu0
        %v5357 = vadd.f32 %v5196, %v5356
        %v5358 = vpop.f32.mrb[0].mxu0
        %v5359 = vadd.f32 %v5198, %v5358
        %v5360 = vpop.f32.mrb[0].mxu0
        %v5361 = vadd.f32 %v5200, %v5360
        %5362 = vmatprep.mubr.bf16.mxu0 %v2804
        %5363 = vmatmul.mubr.bf16.gmra.mrb[0].mxu0 %v2803
        %v5364 = vpop.f32.mrb[0].mxu0
        %v5365 = vadd.f32 %v5204, %v5364
        %v5366 = vpop.f32.mrb[0].mxu0
        %v5367 = vadd.f32 %v5206, %v5366
        %v5368 = vpop.f32.mrb[0].mxu0
        %v5369 = vadd.f32 %v5208, %v5368
        %v5370 = vpop.f32.mrb[0].mxu0
        %v5371 = vadd.f32 %v5210, %v5370
        %5372 = vmatprep.mubr.bf16.mxu0 %v2808
        %5373 = vmatmul.mubr.bf16.gmra.mrb[0].mxu0 %v2807
        %v5374 = vpop.f32.mrb[0].mxu0
        %v5375 = vadd.f32 %v5214, %v5374
        %v5376 = vpop.f32.mrb[0].mxu0
        %v5377 = vadd.f32 %v5216, %v5376
        %v5378 = vpop.f32.mrb[0].mxu0
        %v5379 = vadd.f32 %v5218, %v5378
        %v5380 = vpop.f32.mrb[0].mxu0
        %v5381 = vadd.f32 %v5220, %v5380
        %5382 = vmatprep.mubr.bf16.mxu0 %v2812
        %5383 = vmatmul.mubr.bf16.gmra.mrb[0].mxu0 %v2811
        %v5384 = vpop.f32.mrb[0].mxu0
        %v5385 = vadd.f32 %v5224, %v5384
        %v5386 = vpop.f32.mrb[0].mxu0
        %v5387 = vadd.f32 %v5226, %v5386
        %v5388 = vpop.f32.mrb[0].mxu0
        %v5389 = vadd.f32 %v5228, %v5388
        %v5390 = vpop.f32.mrb[0].mxu0
        %v5391 = vadd.f32 %v5230, %v5390
        %5392 = vmatprep.mubr.bf16.mxu0 %v2816
        %5393 = vmatmul.mubr.bf16.gmra.mrb[0].mxu0 %v2815
        %v5394 = vpop.f32.mrb[0].mxu0
        %v5395 = vadd.f32 %v5234, %v5394
        %v5396 = vpop.f32.mrb[0].mxu0
        %v5397 = vadd.f32 %v5236, %v5396
        %v5398 = vpop.f32.mrb[0].mxu0
        %v5399 = vadd.f32 %v5238, %v5398
        %v5400 = vpop.f32.mrb[0].mxu0
        %v5401 = vadd.f32 %v5240, %v5400
        %5402 = vmatprep.mubr.bf16.mxu0 %v2820
        %5403 = vmatmul.mubr.bf16.gmra.mrb[0].mxu0 %v2819
        %v5404 = vpop.f32.mrb[0].mxu0
        %v5405 = vadd.f32 %v5244, %v5404
        %v5406 = vpop.f32.mrb[0].mxu0
        %v5407 = vadd.f32 %v5246, %v5406
        %v5408 = vpop.f32.mrb[0].mxu0
        %v5409 = vadd.f32 %v5248, %v5408
        %v5410 = vpop.f32.mrb[0].mxu0
        %v5411 = vadd.f32 %v5250, %v5410
        %5412 = vmatprep.mubr.bf16.mxu0 %v2824
        %5413 = vmatmul.mubr.bf16.gmra.mrb[0].mxu0 %v2823
        %v5414 = vpop.f32.mrb[0].mxu0
        %v5415 = vadd.f32 %v5254, %v5414
        %v5416 = vpop.f32.mrb[0].mxu0
        %v5417 = vadd.f32 %v5256, %v5416
        %v5418 = vpop.f32.mrb[0].mxu0
        %v5419 = vadd.f32 %v5258, %v5418
        %v5420 = vpop.f32.mrb[0].mxu0
        %v5421 = vadd.f32 %v5260, %v5420
        %5422 = vmatprep.mubr.bf16.mxu0 %v2828
        %5423 = vmatmul.mubr.bf16.gmra.mrb[0].mxu0 %v2827
        %v5424 = vpop.f32.mrb[0].mxu0
        %v5425 = vadd.f32 %v5264, %v5424
        %v5426 = vpop.f32.mrb[0].mxu0
        %v5427 = vadd.f32 %v5266, %v5426
        %v5428 = vpop.f32.mrb[0].mxu0
        %v5429 = vadd.f32 %v5268, %v5428
        %v5430 = vpop.f32.mrb[0].mxu0
        %v5431 = vadd.f32 %v5270, %v5430
        %5432 = vmatprep.mubr.bf16.mxu0 %v2832
        %5433 = vmatmul.mubr.bf16.gmra.mrb[0].mxu0 %v2831
        %v5434 = vpop.f32.mrb[0].mxu0
        %v5435 = vadd.f32 %v5274, %v5434
        %v5436 = vpop.f32.mrb[0].mxu0
        %v5437 = vadd.f32 %v5276, %v5436
        %v5438 = vpop.f32.mrb[0].mxu0
        %v5439 = vadd.f32 %v5278, %v5438
        %v5440 = vpop.f32.mrb[0].mxu0
        %v5441 = vadd.f32 %v5280, %v5440
        %5442 = vmatprep.mubr.bf16.mxu0 %v2836
        %5443 = vmatmul.mubr.bf16.gmra.mrb[0].mxu0 %v2835
        %v5444 = vpop.f32.mrb[0].mxu0
        %v5445 = vadd.f32 %v5284, %v5444
        %v5446 = vpop.f32.mrb[0].mxu0
        %v5447 = vadd.f32 %v5286, %v5446
        %v5448 = vpop.f32.mrb[0].mxu0
        %v5449 = vadd.f32 %v5288, %v5448
        %v5450 = vpop.f32.mrb[0].mxu0
        %v5451 = vadd.f32 %v5290, %v5450
        %5452 = vmatprep.mubr.bf16.mxu0 %v2840
        %5453 = vmatmul.mubr.bf16.gmra.mrb[0].mxu0 %v2839
        %v5454 = vpop.f32.mrb[0].mxu0
        %v5455 = vadd.f32 %v5294, %v5454
        %v5456 = vpop.f32.mrb[0].mxu0
        %v5457 = vadd.f32 %v5296, %v5456
        %v5458 = vpop.f32.mrb[0].mxu0
        %v5459 = vpop.f32.mrb[0].mxu0
        %5460 = vdwg.mxu0
        %v5461 = vmul.f32 %v4369, 0.5
        %v5462 = vmul.f32 %v4371, 0.5
        %v5463 = vmul.f32 %v4691, 0.5
        %v5464 = vmul.f32 %v4693, 0.5
        %v5465 = vmul.f32 %v5013, 0.5
        %v5466 = vmul.f32 %v5015, 0.5
        %v5467 = vmul.f32 %v5335, 0.5
        %v5468 = vmul.f32 %v5337, 0.5
        %v5469 = vmul.f32 %v4373, 0.5
        %v5470 = vmul.f32 %v4375, 0.5
        %v5471 = vmul.f32 %v4695, 0.5
        %v5472 = vmul.f32 %v4697, 0.5
        %v5473 = vmul.f32 %v5017, 0.5
        %v5474 = vmul.f32 %v5019, 0.5
        %v5475 = vmul.f32 %v5339, 0.5
        %v5476 = vmul.f32 %v5341, 0.5
        %v5477 = vmul.f32 %v4379, 0.5
        %v5478 = vmul.f32 %v4381, 0.5
        %v5479 = vmul.f32 %v4701, 0.5
        %v5480 = vmul.f32 %v4703, 0.5
        %v5481 = vmul.f32 %v5023, 0.5
        %v5482 = vmul.f32 %v5025, 0.5
        %v5483 = vmul.f32 %v5345, 0.5
        %v5484 = vmul.f32 %v5347, 0.5
        %v5485 = vmul.f32 %v4383, 0.5
        %v5486 = vmul.f32 %v4385, 0.5
        %v5487 = vmul.f32 %v4705, 0.5
        %v5488 = vmul.f32 %v4707, 0.5
        %v5489 = vmul.f32 %v5027, 0.5
        %v5490 = vmul.f32 %v5029, 0.5
        %v5491 = vmul.f32 %v5349, 0.5
        %v5492 = vmul.f32 %v5351, 0.5
        %v5493 = vmul.f32 %v4389, 0.5
        %v5494 = vmul.f32 %v4391, 0.5
        %v5495 = vmul.f32 %v4711, 0.5
        %v5496 = vmul.f32 %v4713, 0.5
        %v5497 = vmul.f32 %v5033, 0.5
        %v5498 = vmul.f32 %v5035, 0.5
        %v5499 = vmul.f32 %v5355, 0.5
        %v5500 = vmul.f32 %v5357, 0.5
        %v5501 = vmul.f32 %v4393, 0.5
        %v5502 = vmul.f32 %v4395, 0.5
        %v5503 = vmul.f32 %v4715, 0.5
        %v5504 = vmul.f32 %v4717, 0.5
        %v5505 = vmul.f32 %v5037, 0.5
        %v5506 = vmul.f32 %v5039, 0.5
        %v5507 = vmul.f32 %v5359, 0.5
        %v5508 = vmul.f32 %v5361, 0.5
        %v5509 = vmul.f32 %v4399, 0.5
        %v5510 = vmul.f32 %v4401, 0.5
        %v5511 = vmul.f32 %v4721, 0.5
        %v5512 = vmul.f32 %v4723, 0.5
        %v5513 = vmul.f32 %v5043, 0.5
        %v5514 = vmul.f32 %v5045, 0.5
        %v5515 = vmul.f32 %v5365, 0.5
        %v5516 = vmul.f32 %v5367, 0.5
        %v5517 = vmul.f32 %v4403, 0.5
        %v5518 = vmul.f32 %v4405, 0.5
        %v5519 = vmul.f32 %v4725, 0.5
        %v5520 = vmul.f32 %v4727, 0.5
        %v5521 = vmul.f32 %v5047, 0.5
        %v5522 = vmul.f32 %v5049, 0.5
        %v5523 = vmul.f32 %v5369, 0.5
        %v5524 = vmul.f32 %v5371, 0.5
        %v5525 = vmul.f32 %v4409, 0.5
        %v5526 = vmul.f32 %v4411, 0.5
        %v5527 = vmul.f32 %v4731, 0.5
        %v5528 = vmul.f32 %v4733, 0.5
        %v5529 = vmul.f32 %v5053, 0.5
        %v5530 = vmul.f32 %v5055, 0.5
        %v5531 = vmul.f32 %v5375, 0.5
        %v5532 = vmul.f32 %v5377, 0.5
        %v5533 = vmul.f32 %v4413, 0.5
        %v5534 = vmul.f32 %v4415, 0.5
        %v5535 = vmul.f32 %v4735, 0.5
        %v5536 = vmul.f32 %v4737, 0.5
        %v5537 = vmul.f32 %v5057, 0.5
        %v5538 = vmul.f32 %v5059, 0.5
        %v5539 = vmul.f32 %v5379, 0.5
        %v5540 = vmul.f32 %v5381, 0.5
        %v5541 = vmul.f32 %v4419, 0.5
        %v5542 = vmul.f32 %v4421, 0.5
        %v5543 = vmul.f32 %v4741, 0.5
        %v5544 = vmul.f32 %v4743, 0.5
        %v5545 = vmul.f32 %v5063, 0.5
        %v5546 = vmul.f32 %v5065, 0.5
        %v5547 = vmul.f32 %v5385, 0.5
        %v5548 = vmul.f32 %v5387, 0.5
        %v5549 = vmul.f32 %v4423, 0.5
        %v5550 = vmul.f32 %v4425, 0.5
        %v5551 = vmul.f32 %v4745, 0.5
        %v5552 = vmul.f32 %v4747, 0.5
        %v5553 = vmul.f32 %v5067, 0.5
        %v5554 = vmul.f32 %v5069, 0.5
        %v5555 = vmul.f32 %v5389, 0.5
        %v5556 = vmul.f32 %v5391, 0.5
        %v5557 = vmul.f32 %v4429, 0.5
        %v5558 = vmul.f32 %v4431, 0.5
        %v5559 = vmul.f32 %v4751, 0.5
        %v5560 = vmul.f32 %v4753, 0.5
        %v5561 = vmul.f32 %v5073, 0.5
        %v5562 = vmul.f32 %v5075, 0.5
        %v5563 = vmul.f32 %v5395, 0.5
        %v5564 = vmul.f32 %v5397, 0.5
        %v5565 = vmul.f32 %v4433, 0.5
        %v5566 = vmul.f32 %v4435, 0.5
        %v5567 = vmul.f32 %v4755, 0.5
        %v5568 = vmul.f32 %v4757, 0.5
        %v5569 = vmul.f32 %v5077, 0.5
        %v5570 = vmul.f32 %v5079, 0.5
        %v5571 = vmul.f32 %v5399, 0.5
        %v5572 = vmul.f32 %v5401, 0.5
        %v5573 = vmul.f32 %v4439, 0.5
        %v5574 = vmul.f32 %v4441, 0.5
        %v5575 = vmul.f32 %v4761, 0.5
        %v5576 = vmul.f32 %v4763, 0.5
        %v5577 = vmul.f32 %v5083, 0.5
        %v5578 = vmul.f32 %v5085, 0.5
        %v5579 = vmul.f32 %v5405, 0.5
        %v5580 = vmul.f32 %v5407, 0.5
        %v5581 = vmul.f32 %v4443, 0.5
        %v5582 = vmul.f32 %v4445, 0.5
        %v5583 = vmul.f32 %v4765, 0.5
        %v5584 = vmul.f32 %v4767, 0.5
        %v5585 = vmul.f32 %v5087, 0.5
        %v5586 = vmul.f32 %v5089, 0.5
        %v5587 = vmul.f32 %v5409, 0.5
        %v5588 = vmul.f32 %v5411, 0.5
        %v5589 = vmul.f32 %v4449, 0.5
        %v5590 = vmul.f32 %v4451, 0.5
        %v5591 = vmul.f32 %v4771, 0.5
        %v5592 = vmul.f32 %v4773, 0.5
        %v5593 = vmul.f32 %v5093, 0.5
        %v5594 = vmul.f32 %v5095, 0.5
        %v5595 = vmul.f32 %v5415, 0.5
        %v5596 = vmul.f32 %v5417, 0.5
        %v5597 = vmul.f32 %v4453, 0.5
        %v5598 = vmul.f32 %v4455, 0.5
        %v5599 = vmul.f32 %v4775, 0.5
        %v5600 = vmul.f32 %v4777, 0.5
        %v5601 = vmul.f32 %v5097, 0.5
        %v5602 = vmul.f32 %v5099, 0.5
        %v5603 = vmul.f32 %v5419, 0.5
        %v5604 = vmul.f32 %v5421, 0.5
        %v5605 = vmul.f32 %v4459, 0.5
        %v5606 = vmul.f32 %v4461, 0.5
        %v5607 = vmul.f32 %v4781, 0.5
        %v5608 = vmul.f32 %v4783, 0.5
        %v5609 = vmul.f32 %v5103, 0.5
        %v5610 = vmul.f32 %v5105, 0.5
        %v5611 = vmul.f32 %v5425, 0.5
        %v5612 = vmul.f32 %v5427, 0.5
        %v5613 = vmul.f32 %v4463, 0.5
        %v5614 = vmul.f32 %v4465, 0.5
        %v5615 = vmul.f32 %v4785, 0.5
        %v5616 = vmul.f32 %v4787, 0.5
        %v5617 = vmul.f32 %v5107, 0.5
        %v5618 = vmul.f32 %v5109, 0.5
        %v5619 = vmul.f32 %v5429, 0.5
        %v5620 = vmul.f32 %v5431, 0.5
        %v5621 = vmul.f32 %v4469, 0.5
        %v5622 = vmul.f32 %v4471, 0.5
        %v5623 = vmul.f32 %v4791, 0.5
        %v5624 = vmul.f32 %v4793, 0.5
        %v5625 = vmul.f32 %v5113, 0.5
        %v5626 = vmul.f32 %v5115, 0.5
        %v5627 = vmul.f32 %v5435, 0.5
        %v5628 = vmul.f32 %v5437, 0.5
        %v5629 = vmul.f32 %v4473, 0.5
        %v5630 = vmul.f32 %v4475, 0.5
        %v5631 = vmul.f32 %v4795, 0.5
        %v5632 = vmul.f32 %v4797, 0.5
        %v5633 = vmul.f32 %v5117, 0.5
        %v5634 = vmul.f32 %v5119, 0.5
        %v5635 = vmul.f32 %v5439, 0.5
        %v5636 = vmul.f32 %v5441, 0.5
        %v5637 = vmul.f32 %v4479, 0.5
        %v5638 = vmul.f32 %v4481, 0.5
        %v5639 = vmul.f32 %v4801, 0.5
        %v5640 = vmul.f32 %v4803, 0.5
        %v5641 = vmul.f32 %v5123, 0.5
        %v5642 = vmul.f32 %v5125, 0.5
        %v5643 = vmul.f32 %v5445, 0.5
        %v5644 = vmul.f32 %v5447, 0.5
        %v5645 = vmul.f32 %v4483, 0.5
        %v5646 = vmul.f32 %v4485, 0.5
        %v5647 = vmul.f32 %v4805, 0.5
        %v5648 = vmul.f32 %v4807, 0.5
        %v5649 = vmul.f32 %v5127, 0.5
        %v5650 = vmul.f32 %v5129, 0.5
        %v5651 = vmul.f32 %v5449, 0.5
        %v5652 = vmul.f32 %v5451, 0.5
        %v5653 = vmul.f32 %v4489, 0.5
        %v5654 = vmul.f32 %v4491, 0.5
        %v5655 = vmul.f32 %v4811, 0.5
        %v5656 = vmul.f32 %v4813, 0.5
        %v5657 = vmul.f32 %v5133, 0.5
        %v5658 = vmul.f32 %v5135, 0.5
        %v5659 = vmul.f32 %v5455, 0.5
        %v5660 = vmul.f32 %v5457, 0.5
        %v5661 = vmul.f32 %v4369, 0.70710677
        %v5662 = vmul.f32 %v4371, 0.70710677
        %v5663 = vmul.f32 %v4691, 0.70710677
        %v5664 = vmul.f32 %v4693, 0.70710677
        %v5665 = vmul.f32 %v5013, 0.70710677
        %v5666 = vmul.f32 %v5015, 0.70710677
        %v5667 = vmul.f32 %v5335, 0.70710677
        %v5668 = vmul.f32 %v5337, 0.70710677
        %v5669 = vmul.f32 %v4373, 0.70710677
        %v5670 = vmul.f32 %v4375, 0.70710677
        %v5671 = vmul.f32 %v4695, 0.70710677
        %v5672 = vmul.f32 %v4697, 0.70710677
        %v5673 = vmul.f32 %v5017, 0.70710677
        %v5674 = vmul.f32 %v5019, 0.70710677
        %v5675 = vmul.f32 %v5339, 0.70710677
        %v5676 = vmul.f32 %v5341, 0.70710677
        %v5677 = vmul.f32 %v4379, 0.70710677
        %v5678 = vmul.f32 %v4381, 0.70710677
        %v5679 = vmul.f32 %v4701, 0.70710677
        %v5680 = vmul.f32 %v4703, 0.70710677
        %v5681 = vmul.f32 %v5023, 0.70710677
        %v5682 = vmul.f32 %v5025, 0.70710677
        %v5683 = vmul.f32 %v5345, 0.70710677
        %v5684 = vmul.f32 %v5347, 0.70710677
        %v5685 = vmul.f32 %v4383, 0.70710677
        %v5686 = vmul.f32 %v4385, 0.70710677
        %v5687 = vmul.f32 %v4705, 0.70710677
        %v5688 = vmul.f32 %v4707, 0.70710677
        %v5689 = vmul.f32 %v5027, 0.70710677
        %v5690 = vmul.f32 %v5029, 0.70710677
        %v5691 = vmul.f32 %v5349, 0.70710677
        %v5692 = vmul.f32 %v5351, 0.70710677
        %v5693 = vmul.f32 %v4389, 0.70710677
        %v5694 = vmul.f32 %v4391, 0.70710677
        %v5695 = vmul.f32 %v4711, 0.70710677
        %v5696 = vmul.f32 %v4713, 0.70710677
        %v5697 = vmul.f32 %v5033, 0.70710677
        %v5698 = vmul.f32 %v5035, 0.70710677
        %v5699 = vmul.f32 %v5355, 0.70710677
        %v5700 = vmul.f32 %v5357, 0.70710677
        %v5701 = vmul.f32 %v4393, 0.70710677
        %v5702 = vmul.f32 %v4395, 0.70710677
        %v5703 = vmul.f32 %v4715, 0.70710677
        %v5704 = vmul.f32 %v4717, 0.70710677
        %v5705 = vmul.f32 %v5037, 0.70710677
        %v5706 = vmul.f32 %v5039, 0.70710677
        %v5707 = vmul.f32 %v5359, 0.70710677
        %v5708 = vmul.f32 %v5361, 0.70710677
        %v5709 = vmul.f32 %v4399, 0.70710677
        %v5710 = vmul.f32 %v4401, 0.70710677
        %v5711 = vmul.f32 %v4721, 0.70710677
        %v5712 = vmul.f32 %v4723, 0.70710677
        %v5713 = vmul.f32 %v5043, 0.70710677
        %v5714 = vmul.f32 %v5045, 0.70710677
        %v5715 = vmul.f32 %v5365, 0.70710677
        %v5716 = vmul.f32 %v5367, 0.70710677
        %v5717 = vmul.f32 %v4403, 0.70710677
        %v5718 = vmul.f32 %v4405, 0.70710677
        %v5719 = vmul.f32 %v4725, 0.70710677
        %v5720 = vmul.f32 %v4727, 0.70710677
        %v5721 = vmul.f32 %v5047, 0.70710677
        %v5722 = vmul.f32 %v5049, 0.70710677
        %v5723 = vmul.f32 %v5369, 0.70710677
        %v5724 = vmul.f32 %v5371, 0.70710677
        %v5725 = vmul.f32 %v4409, 0.70710677
        %v5726 = vmul.f32 %v4411, 0.70710677
        %v5727 = vmul.f32 %v4731, 0.70710677
        %v5728 = vmul.f32 %v4733, 0.70710677
        %v5729 = vmul.f32 %v5053, 0.70710677
        %v5730 = vmul.f32 %v5055, 0.70710677
        %v5731 = vmul.f32 %v5375, 0.70710677
        %v5732 = vmul.f32 %v5377, 0.70710677
        %v5733 = vmul.f32 %v4413, 0.70710677
        %v5734 = vmul.f32 %v4415, 0.70710677
        %v5735 = vmul.f32 %v4735, 0.70710677
        %v5736 = vmul.f32 %v4737, 0.70710677
        %v5737 = vmul.f32 %v5057, 0.70710677
        %v5738 = vmul.f32 %v5059, 0.70710677
        %v5739 = vmul.f32 %v5379, 0.70710677
        %v5740 = vmul.f32 %v5381, 0.70710677
        %v5741 = vmul.f32 %v4419, 0.70710677
        %v5742 = vmul.f32 %v4421, 0.70710677
        %v5743 = vmul.f32 %v4741, 0.70710677
        %v5744 = vmul.f32 %v4743, 0.70710677
        %v5745 = vmul.f32 %v5063, 0.70710677
        %v5746 = vmul.f32 %v5065, 0.70710677
        %v5747 = vmul.f32 %v5385, 0.70710677
        %v5748 = vmul.f32 %v5387, 0.70710677
        %v5749 = vmul.f32 %v4423, 0.70710677
        %v5750 = vmul.f32 %v4425, 0.70710677
        %v5751 = vmul.f32 %v4745, 0.70710677
        %v5752 = vmul.f32 %v4747, 0.70710677
        %v5753 = vmul.f32 %v5067, 0.70710677
        %v5754 = vmul.f32 %v5069, 0.70710677
        %v5755 = vmul.f32 %v5389, 0.70710677
        %v5756 = vmul.f32 %v5391, 0.70710677
        %v5757 = vmul.f32 %v4429, 0.70710677
        %v5758 = vmul.f32 %v4431, 0.70710677
        %v5759 = vmul.f32 %v4751, 0.70710677
        %v5760 = vmul.f32 %v4753, 0.70710677
        %v5761 = vmul.f32 %v5073, 0.70710677
        %v5762 = vmul.f32 %v5075, 0.70710677
        %v5763 = vmul.f32 %v5395, 0.70710677
        %v5764 = vmul.f32 %v5397, 0.70710677
        %v5765 = vmul.f32 %v4433, 0.70710677
        %v5766 = vmul.f32 %v4435, 0.70710677
        %v5767 = vmul.f32 %v4755, 0.70710677
        %v5768 = vmul.f32 %v4757, 0.70710677
        %v5769 = vmul.f32 %v5077, 0.70710677
        %v5770 = vmul.f32 %v5079, 0.70710677
        %v5771 = vmul.f32 %v5399, 0.70710677
        %v5772 = vmul.f32 %v5401, 0.70710677
        %v5773 = vmul.f32 %v4439, 0.70710677
        %v5774 = vmul.f32 %v4441, 0.70710677
        %v5775 = vmul.f32 %v4761, 0.70710677
        %v5776 = vmul.f32 %v4763, 0.70710677
        %v5777 = vmul.f32 %v5083, 0.70710677
        %v5778 = vmul.f32 %v5085, 0.70710677
        %v5779 = vmul.f32 %v5405, 0.70710677
        %v5780 = vmul.f32 %v5407, 0.70710677
        %v5781 = vmul.f32 %v4443, 0.70710677
        %v5782 = vmul.f32 %v4445, 0.70710677
        %v5783 = vmul.f32 %v4765, 0.70710677
        %v5784 = vmul.f32 %v4767, 0.70710677
        %v5785 = vmul.f32 %v5087, 0.70710677
        %v5786 = vmul.f32 %v5089, 0.70710677
        %v5787 = vmul.f32 %v5409, 0.70710677
        %v5788 = vmul.f32 %v5411, 0.70710677
        %v5789 = vmul.f32 %v4449, 0.70710677
        %v5790 = vmul.f32 %v4451, 0.70710677
        %v5791 = vmul.f32 %v4771, 0.70710677
        %v5792 = vmul.f32 %v4773, 0.70710677
        %v5793 = vmul.f32 %v5093, 0.70710677
        %v5794 = vmul.f32 %v5095, 0.70710677
        %v5795 = vmul.f32 %v5415, 0.70710677
        %v5796 = vmul.f32 %v5417, 0.70710677
        %v5797 = vmul.f32 %v4453, 0.70710677
        %v5798 = vmul.f32 %v4455, 0.70710677
        %v5799 = vmul.f32 %v4775, 0.70710677
        %v5800 = vmul.f32 %v4777, 0.70710677
        %v5801 = vmul.f32 %v5097, 0.70710677
        %v5802 = vmul.f32 %v5099, 0.70710677
        %v5803 = vmul.f32 %v5419, 0.70710677
        %v5804 = vmul.f32 %v5421, 0.70710677
        %v5805 = vmul.f32 %v4459, 0.70710677
        %v5806 = vmul.f32 %v4461, 0.70710677
        %v5807 = vmul.f32 %v4781, 0.70710677
        %v5808 = vmul.f32 %v4783, 0.70710677
        %v5809 = vmul.f32 %v5103, 0.70710677
        %v5810 = vmul.f32 %v5105, 0.70710677
        %v5811 = vmul.f32 %v5425, 0.70710677
        %v5812 = vmul.f32 %v5427, 0.70710677
        %v5813 = vmul.f32 %v4463, 0.70710677
        %v5814 = vmul.f32 %v4465, 0.70710677
        %v5815 = vmul.f32 %v4785, 0.70710677
        %v5816 = vmul.f32 %v4787, 0.70710677
        %v5817 = vmul.f32 %v5107, 0.70710677
        %v5818 = vmul.f32 %v5109, 0.70710677
        %v5819 = vmul.f32 %v5429, 0.70710677
        %v5820 = vmul.f32 %v5431, 0.70710677
        %v5821 = vmul.f32 %v4469, 0.70710677
        %v5822 = vmul.f32 %v4471, 0.70710677
        %v5823 = vmul.f32 %v4791, 0.70710677
        %v5824 = vmul.f32 %v4793, 0.70710677
        %v5825 = vmul.f32 %v5113, 0.70710677
        %v5826 = vmul.f32 %v5115, 0.70710677
        %v5827 = vmul.f32 %v5435, 0.70710677
        %v5828 = vmul.f32 %v5437, 0.70710677
        %v5829 = vmul.f32 %v4473, 0.70710677
        %v5830 = vmul.f32 %v4475, 0.70710677
        %v5831 = vmul.f32 %v4795, 0.70710677
        %v5832 = vmul.f32 %v4797, 0.70710677
        %v5833 = vmul.f32 %v5117, 0.70710677
        %v5834 = vmul.f32 %v5119, 0.70710677
        %v5835 = vmul.f32 %v5439, 0.70710677
        %v5836 = vmul.f32 %v5441, 0.70710677
        %v5837 = vmul.f32 %v4479, 0.70710677
        %v5838 = vmul.f32 %v4481, 0.70710677
        %v5839 = vmul.f32 %v4801, 0.70710677
        %v5840 = vmul.f32 %v4803, 0.70710677
        %v5841 = vmul.f32 %v5123, 0.70710677
        %v5842 = vmul.f32 %v5125, 0.70710677
        %v5843 = vmul.f32 %v5445, 0.70710677
        %v5844 = vmul.f32 %v5447, 0.70710677
        %v5845 = vmul.f32 %v4483, 0.70710677
        %v5846 = vmul.f32 %v4485, 0.70710677
        %v5847 = vmul.f32 %v4805, 0.70710677
        %v5848 = vmul.f32 %v4807, 0.70710677
        %v5849 = vmul.f32 %v5127, 0.70710677
        %v5850 = vmul.f32 %v5129, 0.70710677
        %v5851 = vmul.f32 %v5449, 0.70710677
        %v5852 = vmul.f32 %v5451, 0.70710677
        %v5853 = vmul.f32 %v4489, 0.70710677
        %v5854 = vmul.f32 %v4491, 0.70710677
        %v5855 = vmul.f32 %v4811, 0.70710677
        %v5856 = vmul.f32 %v4813, 0.70710677
        %v5857 = vmul.f32 %v5133, 0.70710677
        %v5858 = vmul.f32 %v5135, 0.70710677
        %v5859 = vmul.f32 %v5455, 0.70710677
        %v5860 = vmul.f32 %v5457, 0.70710677
        %v5861 = verf.f32.pop %v5661
        %v5862 = verf.f32.pop %v5662
        %v5863 = verf.f32.pop %v5663
        %v5864 = verf.f32.pop %v5664
        %v5865 = verf.f32.pop %v5665
        %v5866 = verf.f32.pop %v5666
        %v5867 = verf.f32.pop %v5667
        %v5868 = verf.f32.pop %v5668
        %v5869 = verf.f32.pop %v5669
        %v5870 = verf.f32.pop %v5670
        %v5871 = verf.f32.pop %v5671
        %v5872 = verf.f32.pop %v5672
        %v5873 = verf.f32.pop %v5673
        %v5874 = verf.f32.pop %v5674
        %v5875 = verf.f32.pop %v5675
        %v5876 = verf.f32.pop %v5676
        %v5877 = verf.f32.pop %v5677
        %v5878 = verf.f32.pop %v5678
        %v5879 = verf.f32.pop %v5679
        %v5880 = verf.f32.pop %v5680
        %v5881 = verf.f32.pop %v5681
        %v5882 = verf.f32.pop %v5682
        %v5883 = verf.f32.pop %v5683
        %v5884 = verf.f32.pop %v5684
        %v5885 = verf.f32.pop %v5685
        %v5886 = verf.f32.pop %v5686
        %v5887 = verf.f32.pop %v5687
        %v5888 = verf.f32.pop %v5688
        %v5889 = verf.f32.pop %v5689
        %v5890 = verf.f32.pop %v5690
        %v5891 = verf.f32.pop %v5691
        %v5892 = verf.f32.pop %v5692
        %v5893 = verf.f32.pop %v5693
        %v5894 = verf.f32.pop %v5694
        %v5895 = verf.f32.pop %v5695
        %v5896 = verf.f32.pop %v5696
        %v5897 = verf.f32.pop %v5697
        %v5898 = verf.f32.pop %v5698
        %v5899 = verf.f32.pop %v5699
        %v5900 = verf.f32.pop %v5700
        %v5901 = verf.f32.pop %v5701
        %v5902 = verf.f32.pop %v5702
        %v5903 = verf.f32.pop %v5703
        %v5904 = verf.f32.pop %v5704
        %v5905 = verf.f32.pop %v5705
        %v5906 = verf.f32.pop %v5706
        %v5907 = verf.f32.pop %v5707
        %v5908 = verf.f32.pop %v5708
        %v5909 = verf.f32.pop %v5709
        %v5910 = verf.f32.pop %v5710
        %v5911 = verf.f32.pop %v5711
        %v5912 = verf.f32.pop %v5712
        %v5913 = verf.f32.pop %v5713
        %v5914 = verf.f32.pop %v5714
        %v5915 = verf.f32.pop %v5715
        %v5916 = verf.f32.pop %v5716
        %v5917 = verf.f32.pop %v5717
        %v5918 = verf.f32.pop %v5718
        %v5919 = verf.f32.pop %v5719
        %v5920 = verf.f32.pop %v5720
        %v5921 = verf.f32.pop %v5721
        %v5922 = verf.f32.pop %v5722
        %v5923 = verf.f32.pop %v5723
        %v5924 = verf.f32.pop %v5724
        %v5925 = verf.f32.pop %v5725
        %v5926 = verf.f32.pop %v5726
        %v5927 = verf.f32.pop %v5727
        %v5928 = verf.f32.pop %v5728
        %v5929 = verf.f32.pop %v5729
        %v5930 = verf.f32.pop %v5730
        %v5931 = verf.f32.pop %v5731
        %v5932 = verf.f32.pop %v5732
        %v5933 = verf.f32.pop %v5733
        %v5934 = verf.f32.pop %v5734
        %v5935 = verf.f32.pop %v5735
        %v5936 = verf.f32.pop %v5736
        %v5937 = verf.f32.pop %v5737
        %v5938 = verf.f32.pop %v5738
        %v5939 = verf.f32.pop %v5739
        %v5940 = verf.f32.pop %v5740
        %v5941 = verf.f32.pop %v5741
        %v5942 = verf.f32.pop %v5742
        %v5943 = verf.f32.pop %v5743
        %v5944 = verf.f32.pop %v5744
        %v5945 = verf.f32.pop %v5745
        %v5946 = verf.f32.pop %v5746
        %v5947 = verf.f32.pop %v5747
        %v5948 = verf.f32.pop %v5748
        %v5949 = verf.f32.pop %v5749
        %v5950 = verf.f32.pop %v5750
        %v5951 = verf.f32.pop %v5751
        %v5952 = verf.f32.pop %v5752
        %v5953 = verf.f32.pop %v5753
        %v5954 = verf.f32.pop %v5754
        %v5955 = verf.f32.pop %v5755
        %v5956 = verf.f32.pop %v5756
        %v5957 = verf.f32.pop %v5757
        %v5958 = verf.f32.pop %v5758
        %v5959 = verf.f32.pop %v5759
        %v5960 = verf.f32.pop %v5760
        %v5961 = verf.f32.pop %v5761
        %v5962 = verf.f32.pop %v5762
        %v5963 = verf.f32.pop %v5763
        %v5964 = verf.f32.pop %v5764
        %v5965 = verf.f32.pop %v5765
        %v5966 = verf.f32.pop %v5766
        %v5967 = verf.f32.pop %v5767
        %v5968 = verf.f32.pop %v5768
        %v5969 = verf.f32.pop %v5769
        %v5970 = verf.f32.pop %v5770
        %v5971 = verf.f32.pop %v5771
        %v5972 = verf.f32.pop %v5772
        %v5973 = verf.f32.pop %v5773
        %v5974 = verf.f32.pop %v5774
        %v5975 = verf.f32.pop %v5775
        %v5976 = verf.f32.pop %v5776
        %v5977 = verf.f32.pop %v5777
        %v5978 = verf.f32.pop %v5778
        %v5979 = verf.f32.pop %v5779
        %v5980 = verf.f32.pop %v5780
        %v5981 = verf.f32.pop %v5781
        %v5982 = verf.f32.pop %v5782
        %v5983 = verf.f32.pop %v5783
        %v5984 = verf.f32.pop %v5784
        %v5985 = verf.f32.pop %v5785
        %v5986 = verf.f32.pop %v5786
        %v5987 = verf.f32.pop %v5787
        %v5988 = verf.f32.pop %v5788
        %v5989 = verf.f32.pop %v5789
        %v5990 = verf.f32.pop %v5790
        %v5991 = verf.f32.pop %v5791
        %v5992 = verf.f32.pop %v5792
        %v5993 = verf.f32.pop %v5793
        %v5994 = verf.f32.pop %v5794
        %v5995 = verf.f32.pop %v5795
        %v5996 = verf.f32.pop %v5796
        %v5997 = verf.f32.pop %v5797
        %v5998 = verf.f32.pop %v5798
        %v5999 = verf.f32.pop %v5799
        %v6000 = verf.f32.pop %v5800
        %v6001 = verf.f32.pop %v5801
        %v6002 = verf.f32.pop %v5802
        %v6003 = verf.f32.pop %v5803
        %v6004 = verf.f32.pop %v5804
        %v6005 = verf.f32.pop %v5805
        %v6006 = verf.f32.pop %v5806
        %v6007 = verf.f32.pop %v5807
        %v6008 = verf.f32.pop %v5808
        %v6009 = verf.f32.pop %v5809
        %v6010 = verf.f32.pop %v5810
        %v6011 = verf.f32.pop %v5811
        %v6012 = verf.f32.pop %v5812
        %v6013 = verf.f32.pop %v5813
        %v6014 = verf.f32.pop %v5814
        %v6015 = verf.f32.pop %v5815
        %v6016 = verf.f32.pop %v5816
        %v6017 = verf.f32.pop %v5817
        %v6018 = verf.f32.pop %v5818
        %v6019 = verf.f32.pop %v5819
        %v6020 = verf.f32.pop %v5820
        %v6021 = verf.f32.pop %v5821
        %v6022 = verf.f32.pop %v5822
        %v6023 = verf.f32.pop %v5823
        %v6024 = verf.f32.pop %v5824
        %v6025 = verf.f32.pop %v5825
        %v6026 = verf.f32.pop %v5826
        %v6027 = verf.f32.pop %v5827
        %v6028 = verf.f32.pop %v5828
        %v6029 = verf.f32.pop %v5829
        %v6030 = verf.f32.pop %v5830
        %v6031 = verf.f32.pop %v5831
        %v6032 = verf.f32.pop %v5832
        %v6033 = verf.f32.pop %v5833
        %v6034 = verf.f32.pop %v5834
        %v6035 = verf.f32.pop %v5835
        %v6036 = verf.f32.pop %v5836
        %v6037 = verf.f32.pop %v5837
        %v6038 = verf.f32.pop %v5838
        %v6039 = verf.f32.pop %v5839
        %v6040 = verf.f32.pop %v5840
        %v6041 = verf.f32.pop %v5841
        %v6042 = verf.f32.pop %v5842
        %v6043 = verf.f32.pop %v5843
        %v6044 = verf.f32.pop %v5844
        %v6045 = verf.f32.pop %v5845
        %v6046 = verf.f32.pop %v5846
        %v6047 = verf.f32.pop %v5847
        %v6048 = verf.f32.pop %v5848
        %v6049 = verf.f32.pop %v5849
        %v6050 = verf.f32.pop %v5850
        %v6051 = verf.f32.pop %v5851
        %v6052 = verf.f32.pop %v5852
        %v6053 = verf.f32.pop %v5853
        %v6054 = verf.f32.pop %v5854
        %v6055 = verf.f32.pop %v5855
        %v6056 = verf.f32.pop %v5856
        %v6057 = verf.f32.pop %v5857
        %v6058 = verf.f32.pop %v5858
        %v6059 = verf.f32.pop %v5859
        %v6060 = verf.f32.pop %v5860
        %v6061 = vadd.f32 %v5861, 1.0
        %v6062 = vadd.f32 %v5862, 1.0
        %v6063 = vadd.f32 %v5863, 1.0
        %v6064 = vadd.f32 %v5864, 1.0
        %v6065 = vadd.f32 %v5865, 1.0
        %v6066 = vadd.f32 %v5866, 1.0
        %v6067 = vadd.f32 %v5867, 1.0
        %v6068 = vadd.f32 %v5868, 1.0
        %v6069 = vadd.f32 %v5869, 1.0
        %v6070 = vadd.f32 %v5870, 1.0
        %v6071 = vadd.f32 %v5871, 1.0
        %v6072 = vadd.f32 %v5872, 1.0
        %v6073 = vadd.f32 %v5873, 1.0
        %v6074 = vadd.f32 %v5874, 1.0
        %v6075 = vadd.f32 %v5875, 1.0
        %v6076 = vadd.f32 %v5876, 1.0
        %v6077 = vadd.f32 %v5877, 1.0
        %v6078 = vadd.f32 %v5878, 1.0
        %v6079 = vadd.f32 %v5879, 1.0
        %v6080 = vadd.f32 %v5880, 1.0
        %v6081 = vadd.f32 %v5881, 1.0
        %v6082 = vadd.f32 %v5882, 1.0
        %v6083 = vadd.f32 %v5883, 1.0
        %v6084 = vadd.f32 %v5884, 1.0
        %v6085 = vadd.f32 %v5885, 1.0
        %v6086 = vadd.f32 %v5886, 1.0
        %v6087 = vadd.f32 %v5887, 1.0
        %v6088 = vadd.f32 %v5888, 1.0
        %v6089 = vadd.f32 %v5889, 1.0
        %v6090 = vadd.f32 %v5890, 1.0
        %v6091 = vadd.f32 %v5891, 1.0
        %v6092 = vadd.f32 %v5892, 1.0
        %v6093 = vadd.f32 %v5893, 1.0
        %v6094 = vadd.f32 %v5894, 1.0
        %v6095 = vadd.f32 %v5895, 1.0
        %v6096 = vadd.f32 %v5896, 1.0
        %v6097 = vadd.f32 %v5897, 1.0
        %v6098 = vadd.f32 %v5898, 1.0
        %v6099 = vadd.f32 %v5899, 1.0
        %v6100 = vadd.f32 %v5900, 1.0
        %v6101 = vadd.f32 %v5901, 1.0
        %v6102 = vadd.f32 %v5902, 1.0
        %v6103 = vadd.f32 %v5903, 1.0
        %v6104 = vadd.f32 %v5904, 1.0
        %v6105 = vadd.f32 %v5905, 1.0
        %v6106 = vadd.f32 %v5906, 1.0
        %v6107 = vadd.f32 %v5907, 1.0
        %v6108 = vadd.f32 %v5908, 1.0
        %v6109 = vadd.f32 %v5909, 1.0
        %v6110 = vadd.f32 %v5910, 1.0
        %v6111 = vadd.f32 %v5911, 1.0
        %v6112 = vadd.f32 %v5912, 1.0
        %v6113 = vadd.f32 %v5913, 1.0
        %v6114 = vadd.f32 %v5914, 1.0
        %v6115 = vadd.f32 %v5915, 1.0
        %v6116 = vadd.f32 %v5916, 1.0
        %v6117 = vadd.f32 %v5917, 1.0
        %v6118 = vadd.f32 %v5918, 1.0
        %v6119 = vadd.f32 %v5919, 1.0
        %v6120 = vadd.f32 %v5920, 1.0
        %v6121 = vadd.f32 %v5921, 1.0
        %v6122 = vadd.f32 %v5922, 1.0
        %v6123 = vadd.f32 %v5923, 1.0
        %v6124 = vadd.f32 %v5924, 1.0
        %v6125 = vadd.f32 %v5925, 1.0
        %v6126 = vadd.f32 %v5926, 1.0
        %v6127 = vadd.f32 %v5927, 1.0
        %v6128 = vadd.f32 %v5928, 1.0
        %v6129 = vadd.f32 %v5929, 1.0
        %v6130 = vadd.f32 %v5930, 1.0
        %v6131 = vadd.f32 %v5931, 1.0
        %v6132 = vadd.f32 %v5932, 1.0
        %v6133 = vadd.f32 %v5933, 1.0
        %v6134 = vadd.f32 %v5934, 1.0
        %v6135 = vadd.f32 %v5935, 1.0
        %v6136 = vadd.f32 %v5936, 1.0
        %v6137 = vadd.f32 %v5937, 1.0
        %v6138 = vadd.f32 %v5938, 1.0
        %v6139 = vadd.f32 %v5939, 1.0
        %v6140 = vadd.f32 %v5940, 1.0
        %v6141 = vadd.f32 %v5941, 1.0
        %v6142 = vadd.f32 %v5942, 1.0
        %v6143 = vadd.f32 %v5943, 1.0
        %v6144 = vadd.f32 %v5944, 1.0
        %v6145 = vadd.f32 %v5945, 1.0
        %v6146 = vadd.f32 %v5946, 1.0
        %v6147 = vadd.f32 %v5947, 1.0
        %v6148 = vadd.f32 %v5948, 1.0
        %v6149 = vadd.f32 %v5949, 1.0
        %v6150 = vadd.f32 %v5950, 1.0
        %v6151 = vadd.f32 %v5951, 1.0
        %v6152 = vadd.f32 %v5952, 1.0
        %v6153 = vadd.f32 %v5953, 1.0
        %v6154 = vadd.f32 %v5954, 1.0
        %v6155 = vadd.f32 %v5955, 1.0
        %v6156 = vadd.f32 %v5956, 1.0
        %v6157 = vadd.f32 %v5957, 1.0
        %v6158 = vadd.f32 %v5958, 1.0
        %v6159 = vadd.f32 %v5959, 1.0
        %v6160 = vadd.f32 %v5960, 1.0
        %v6161 = vadd.f32 %v5961, 1.0
        %v6162 = vadd.f32 %v5962, 1.0
        %v6163 = vadd.f32 %v5963, 1.0
        %v6164 = vadd.f32 %v5964, 1.0
        %v6165 = vadd.f32 %v5965, 1.0
        %v6166 = vadd.f32 %v5966, 1.0
        %v6167 = vadd.f32 %v5967, 1.0
        %v6168 = vadd.f32 %v5968, 1.0
        %v6169 = vadd.f32 %v5969, 1.0
        %v6170 = vadd.f32 %v5970, 1.0
        %v6171 = vadd.f32 %v5971, 1.0
        %v6172 = vadd.f32 %v5972, 1.0
        %v6173 = vadd.f32 %v5973, 1.0
        %v6174 = vadd.f32 %v5974, 1.0
        %v6175 = vadd.f32 %v5975, 1.0
        %v6176 = vadd.f32 %v5976, 1.0
        %v6177 = vadd.f32 %v5977, 1.0
        %v6178 = vadd.f32 %v5978, 1.0
        %v6179 = vadd.f32 %v5979, 1.0
        %v6180 = vadd.f32 %v5980, 1.0
        %v6181 = vadd.f32 %v5981, 1.0
        %v6182 = vadd.f32 %v5982, 1.0
        %v6183 = vadd.f32 %v5983, 1.0
        %v6184 = vadd.f32 %v5984, 1.0
        %v6185 = vadd.f32 %v5985, 1.0
        %v6186 = vadd.f32 %v5986, 1.0
        %v6187 = vadd.f32 %v5987, 1.0
        %v6188 = vadd.f32 %v5988, 1.0
        %v6189 = vadd.f32 %v5989, 1.0
        %v6190 = vadd.f32 %v5990, 1.0
        %v6191 = vadd.f32 %v5991, 1.0
        %v6192 = vadd.f32 %v5992, 1.0
        %v6193 = vadd.f32 %v5993, 1.0
        %v6194 = vadd.f32 %v5994, 1.0
        %v6195 = vadd.f32 %v5995, 1.0
        %v6196 = vadd.f32 %v5996, 1.0
        %v6197 = vadd.f32 %v5997, 1.0
        %v6198 = vadd.f32 %v5998, 1.0
        %v6199 = vadd.f32 %v5999, 1.0
        %v6200 = vadd.f32 %v6000, 1.0
        %v6201 = vadd.f32 %v6001, 1.0
        %v6202 = vadd.f32 %v6002, 1.0
        %v6203 = vadd.f32 %v6003, 1.0
        %v6204 = vadd.f32 %v6004, 1.0
        %v6205 = vadd.f32 %v6005, 1.0
        %v6206 = vadd.f32 %v6006, 1.0
        %v6207 = vadd.f32 %v6007, 1.0
        %v6208 = vadd.f32 %v6008, 1.0
        %v6209 = vadd.f32 %v6009, 1.0
        %v6210 = vadd.f32 %v6010, 1.0
        %v6211 = vadd.f32 %v6011, 1.0
        %v6212 = vadd.f32 %v6012, 1.0
        %v6213 = vadd.f32 %v6013, 1.0
        %v6214 = vadd.f32 %v6014, 1.0
        %v6215 = vadd.f32 %v6015, 1.0
        %v6216 = vadd.f32 %v6016, 1.0
        %v6217 = vadd.f32 %v6017, 1.0
        %v6218 = vadd.f32 %v6018, 1.0
        %v6219 = vadd.f32 %v6019, 1.0
        %v6220 = vadd.f32 %v6020, 1.0
        %v6221 = vadd.f32 %v6021, 1.0
        %v6222 = vadd.f32 %v6022, 1.0
        %v6223 = vadd.f32 %v6023, 1.0
        %v6224 = vadd.f32 %v6024, 1.0
        %v6225 = vadd.f32 %v6025, 1.0
        %v6226 = vadd.f32 %v6026, 1.0
        %v6227 = vadd.f32 %v6027, 1.0
        %v6228 = vadd.f32 %v6028, 1.0
        %v6229 = vadd.f32 %v6029, 1.0
        %v6230 = vadd.f32 %v6030, 1.0
        %v6231 = vadd.f32 %v6031, 1.0
        %v6232 = vadd.f32 %v6032, 1.0
        %v6233 = vadd.f32 %v6033, 1.0
        %v6234 = vadd.f32 %v6034, 1.0
        %v6235 = vadd.f32 %v6035, 1.0
        %v6236 = vadd.f32 %v6036, 1.0
        %v6237 = vadd.f32 %v6037, 1.0
        %v6238 = vadd.f32 %v6038, 1.0
        %v6239 = vadd.f32 %v6039, 1.0
        %v6240 = vadd.f32 %v6040, 1.0
        %v6241 = vadd.f32 %v6041, 1.0
        %v6242 = vadd.f32 %v6042, 1.0
        %v6243 = vadd.f32 %v6043, 1.0
        %v6244 = vadd.f32 %v6044, 1.0
        %v6245 = vadd.f32 %v6045, 1.0
        %v6246 = vadd.f32 %v6046, 1.0
        %v6247 = vadd.f32 %v6047, 1.0
        %v6248 = vadd.f32 %v6048, 1.0
        %v6249 = vadd.f32 %v6049, 1.0
        %v6250 = vadd.f32 %v6050, 1.0
        %v6251 = vadd.f32 %v6051, 1.0
        %v6252 = vadd.f32 %v6052, 1.0
        %v6253 = vadd.f32 %v6053, 1.0
        %v6254 = vadd.f32 %v6054, 1.0
        %v6255 = vadd.f32 %v6055, 1.0
        %v6256 = vadd.f32 %v6056, 1.0
        %v6257 = vadd.f32 %v6057, 1.0
        %v6258 = vadd.f32 %v6058, 1.0
        %v6259 = vadd.f32 %v6059, 1.0
        %v6260 = vadd.f32 %v6060, 1.0
        %v6261 = vmul.f32 %v5461, %v6061
        %v6262 = vmul.f32 %v5462, %v6062
        %v6263 = vmul.f32 %v5463, %v6063
        %v6264 = vmul.f32 %v5464, %v6064
        %v6265 = vmul.f32 %v5465, %v6065
        %v6266 = vmul.f32 %v5466, %v6066
        %v6267 = vmul.f32 %v5467, %v6067
        %v6268 = vmul.f32 %v5468, %v6068
        %v6269 = vmul.f32 %v5469, %v6069
        %v6270 = vmul.f32 %v5470, %v6070
        %v6271 = vmul.f32 %v5471, %v6071
        %v6272 = vmul.f32 %v5472, %v6072
        %v6273 = vmul.f32 %v5473, %v6073
        %v6274 = vmul.f32 %v5474, %v6074
        %v6275 = vmul.f32 %v5475, %v6075
        %v6276 = vmul.f32 %v5476, %v6076
        %v6277 = vmul.f32 %v5477, %v6077
        %v6278 = vmul.f32 %v5478, %v6078
        %v6279 = vmul.f32 %v5479, %v6079
        %v6280 = vmul.f32 %v5480, %v6080
        %v6281 = vmul.f32 %v5481, %v6081
        %v6282 = vmul.f32 %v5482, %v6082
        %v6283 = vmul.f32 %v5483, %v6083
        %v6284 = vmul.f32 %v5484, %v6084
        %v6285 = vmul.f32 %v5485, %v6085
        %v6286 = vmul.f32 %v5486, %v6086
        %v6287 = vmul.f32 %v5487, %v6087
        %v6288 = vmul.f32 %v5488, %v6088
        %v6289 = vmul.f32 %v5489, %v6089
        %v6290 = vmul.f32 %v5490, %v6090
        %v6291 = vmul.f32 %v5491, %v6091
        %v6292 = vmul.f32 %v5492, %v6092
        %v6293 = vmul.f32 %v5493, %v6093
        %v6294 = vmul.f32 %v5494, %v6094
        %v6295 = vmul.f32 %v5495, %v6095
        %v6296 = vmul.f32 %v5496, %v6096
        %v6297 = vmul.f32 %v5497, %v6097
        %v6298 = vmul.f32 %v5498, %v6098
        %v6299 = vmul.f32 %v5499, %v6099
        %v6300 = vmul.f32 %v5500, %v6100
        %v6301 = vmul.f32 %v5501, %v6101
        %v6302 = vmul.f32 %v5502, %v6102
        %v6303 = vmul.f32 %v5503, %v6103
        %v6304 = vmul.f32 %v5504, %v6104
        %v6305 = vmul.f32 %v5505, %v6105
        %v6306 = vmul.f32 %v5506, %v6106
        %v6307 = vmul.f32 %v5507, %v6107
        %v6308 = vmul.f32 %v5508, %v6108
        %v6309 = vmul.f32 %v5509, %v6109
        %v6310 = vmul.f32 %v5510, %v6110
        %v6311 = vmul.f32 %v5511, %v6111
        %v6312 = vmul.f32 %v5512, %v6112
        %v6313 = vmul.f32 %v5513, %v6113
        %v6314 = vmul.f32 %v5514, %v6114
        %v6315 = vmul.f32 %v5515, %v6115
        %v6316 = vmul.f32 %v5516, %v6116
        %v6317 = vmul.f32 %v5517, %v6117
        %v6318 = vmul.f32 %v5518, %v6118
        %v6319 = vmul.f32 %v5519, %v6119
        %v6320 = vmul.f32 %v5520, %v6120
        %v6321 = vmul.f32 %v5521, %v6121
        %v6322 = vmul.f32 %v5522, %v6122
        %v6323 = vmul.f32 %v5523, %v6123
        %v6324 = vmul.f32 %v5524, %v6124
        %v6325 = vmul.f32 %v5525, %v6125
        %v6326 = vmul.f32 %v5526, %v6126
        %v6327 = vmul.f32 %v5527, %v6127
        %v6328 = vmul.f32 %v5528, %v6128
        %v6329 = vmul.f32 %v5529, %v6129
        %v6330 = vmul.f32 %v5530, %v6130
        %v6331 = vmul.f32 %v5531, %v6131
        %v6332 = vmul.f32 %v5532, %v6132
        %v6333 = vmul.f32 %v5533, %v6133
        %v6334 = vmul.f32 %v5534, %v6134
        %v6335 = vmul.f32 %v5535, %v6135
        %v6336 = vmul.f32 %v5536, %v6136
        %v6337 = vmul.f32 %v5537, %v6137
        %v6338 = vmul.f32 %v5538, %v6138
        %v6339 = vmul.f32 %v5539, %v6139
        %v6340 = vmul.f32 %v5540, %v6140
        %v6341 = vmul.f32 %v5541, %v6141
        %v6342 = vmul.f32 %v5542, %v6142
        %v6343 = vmul.f32 %v5543, %v6143
        %v6344 = vmul.f32 %v5544, %v6144
        %v6345 = vmul.f32 %v5545, %v6145
        %v6346 = vmul.f32 %v5546, %v6146
        %v6347 = vmul.f32 %v5547, %v6147
        %v6348 = vmul.f32 %v5548, %v6148
        %v6349 = vmul.f32 %v5549, %v6149
        %v6350 = vmul.f32 %v5550, %v6150
        %v6351 = vmul.f32 %v5551, %v6151
        %v6352 = vmul.f32 %v5552, %v6152
        %v6353 = vmul.f32 %v5553, %v6153
        %v6354 = vmul.f32 %v5554, %v6154
        %v6355 = vmul.f32 %v5555, %v6155
        %v6356 = vmul.f32 %v5556, %v6156
        %v6357 = vmul.f32 %v5557, %v6157
        %v6358 = vmul.f32 %v5558, %v6158
        %v6359 = vmul.f32 %v5559, %v6159
        %v6360 = vmul.f32 %v5560, %v6160
        %v6361 = vmul.f32 %v5561, %v6161
        %v6362 = vmul.f32 %v5562, %v6162
        %v6363 = vmul.f32 %v5563, %v6163
        %v6364 = vmul.f32 %v5564, %v6164
        %v6365 = vmul.f32 %v5565, %v6165
        %v6366 = vmul.f32 %v5566, %v6166
        %v6367 = vmul.f32 %v5567, %v6167
        %v6368 = vmul.f32 %v5568, %v6168
        %v6369 = vmul.f32 %v5569, %v6169
        %v6370 = vmul.f32 %v5570, %v6170
        %v6371 = vmul.f32 %v5571, %v6171
        %v6372 = vmul.f32 %v5572, %v6172
        %v6373 = vmul.f32 %v5573, %v6173
        %v6374 = vmul.f32 %v5574, %v6174
        %v6375 = vmul.f32 %v5575, %v6175
        %v6376 = vmul.f32 %v5576, %v6176
        %v6377 = vmul.f32 %v5577, %v6177
        %v6378 = vmul.f32 %v5578, %v6178
        %v6379 = vmul.f32 %v5579, %v6179
        %v6380 = vmul.f32 %v5580, %v6180
        %v6381 = vmul.f32 %v5581, %v6181
        %v6382 = vmul.f32 %v5582, %v6182
        %v6383 = vmul.f32 %v5583, %v6183
        %v6384 = vmul.f32 %v5584, %v6184
        %v6385 = vmul.f32 %v5585, %v6185
        %v6386 = vmul.f32 %v5586, %v6186
        %v6387 = vmul.f32 %v5587, %v6187
        %v6388 = vmul.f32 %v5588, %v6188
        %v6389 = vmul.f32 %v5589, %v6189
        %v6390 = vmul.f32 %v5590, %v6190
        %v6391 = vmul.f32 %v5591, %v6191
        %v6392 = vmul.f32 %v5592, %v6192
        %v6393 = vmul.f32 %v5593, %v6193
        %v6394 = vmul.f32 %v5594, %v6194
        %v6395 = vmul.f32 %v5595, %v6195
        %v6396 = vmul.f32 %v5596, %v6196
        %v6397 = vmul.f32 %v5597, %v6197
        %v6398 = vmul.f32 %v5598, %v6198
        %v6399 = vmul.f32 %v5599, %v6199
        %v6400 = vmul.f32 %v5600, %v6200
        %v6401 = vmul.f32 %v5601, %v6201
        %v6402 = vmul.f32 %v5602, %v6202
        %v6403 = vmul.f32 %v5603, %v6203
        %v6404 = vmul.f32 %v5604, %v6204
        %v6405 = vmul.f32 %v5605, %v6205
        %v6406 = vmul.f32 %v5606, %v6206
        %v6407 = vmul.f32 %v5607, %v6207
        %v6408 = vmul.f32 %v5608, %v6208
        %v6409 = vmul.f32 %v5609, %v6209
        %v6410 = vmul.f32 %v5610, %v6210
        %v6411 = vmul.f32 %v5611, %v6211
        %v6412 = vmul.f32 %v5612, %v6212
        %v6413 = vmul.f32 %v5613, %v6213
        %v6414 = vmul.f32 %v5614, %v6214
        %v6415 = vmul.f32 %v5615, %v6215
        %v6416 = vmul.f32 %v5616, %v6216
        %v6417 = vmul.f32 %v5617, %v6217
        %v6418 = vmul.f32 %v5618, %v6218
        %v6419 = vmul.f32 %v5619, %v6219
        %v6420 = vmul.f32 %v5620, %v6220
        %v6421 = vmul.f32 %v5621, %v6221
        %v6422 = vmul.f32 %v5622, %v6222
        %v6423 = vmul.f32 %v5623, %v6223
        %v6424 = vmul.f32 %v5624, %v6224
        %v6425 = vmul.f32 %v5625, %v6225
        %v6426 = vmul.f32 %v5626, %v6226
        %v6427 = vmul.f32 %v5627, %v6227
        %v6428 = vmul.f32 %v5628, %v6228
        %v6429 = vmul.f32 %v5629, %v6229
        %v6430 = vmul.f32 %v5630, %v6230
        %v6431 = vmul.f32 %v5631, %v6231
        %v6432 = vmul.f32 %v5632, %v6232
        %v6433 = vmul.f32 %v5633, %v6233
        %v6434 = vmul.f32 %v5634, %v6234
        %v6435 = vmul.f32 %v5635, %v6235
        %v6436 = vmul.f32 %v5636, %v6236
        %v6437 = vmul.f32 %v5637, %v6237
        %v6438 = vmul.f32 %v5638, %v6238
        %v6439 = vmul.f32 %v5639, %v6239
        %v6440 = vmul.f32 %v5640, %v6240
        %v6441 = vmul.f32 %v5641, %v6241
        %v6442 = vmul.f32 %v5642, %v6242
        %v6443 = vmul.f32 %v5643, %v6243
        %v6444 = vmul.f32 %v5644, %v6244
        %v6445 = vmul.f32 %v5645, %v6245
        %v6446 = vmul.f32 %v5646, %v6246
        %v6447 = vmul.f32 %v5647, %v6247
        %v6448 = vmul.f32 %v5648, %v6248
        %v6449 = vmul.f32 %v5649, %v6249
        %v6450 = vmul.f32 %v5650, %v6250
        %v6451 = vmul.f32 %v5651, %v6251
        %v6452 = vmul.f32 %v5652, %v6252
        %v6453 = vmul.f32 %v5653, %v6253
        %v6454 = vmul.f32 %v5654, %v6254
        %v6455 = vmul.f32 %v5655, %v6255
        %v6456 = vmul.f32 %v5656, %v6256
        %v6457 = vmul.f32 %v5657, %v6257
        %v6458 = vmul.f32 %v5658, %v6258
        %v6459 = vmul.f32 %v5659, %v6259
        %v6460 = vmul.f32 %v5660, %v6260
        %v6461 = vld [vmem:[%s501] sm:$0xff]
        %v6462 = vld [vmem:[%s501 + $0x8] sm:$0xff]
        %v6463 = vld [vmem:[%s501 + $0x10] sm:$0xff]
        %v6464 = vld [vmem:[%s501 + $0x18] sm:$0xff]
        %v6465 = vld [vmem:[%s501 + $0x20] sm:$0xff]
        %v6466 = vld [vmem:[%s501 + $0x28] sm:$0xff]
        %v6467 = vld [vmem:[%s501 + $0x30] sm:$0xff]
        %v6468 = vld [vmem:[%s501 + $0x38] sm:$0xff]
        %v6469 = vld [vmem:[%s501 + $0x40] sm:$0xff]
        %v6470 = vld [vmem:[%s501 + $0x48] sm:$0xff]
        %v6471 = vld [vmem:[%s501 + $0x50] sm:$0xff]
        %v6472 = vld [vmem:[%s501 + $0x58] sm:$0xff]
        %v6473 = vld [vmem:[%s501 + $0x60] sm:$0xff]
        %v6474 = vld [vmem:[%s501 + $0x68] sm:$0xff]
        %v6475 = vld [vmem:[%s501 + $0x70] sm:$0xff]
        %v6476 = vld [vmem:[%s501 + $0x78] sm:$0xff]
        %v6477 = vld [vmem:[%s501 + $0x80] sm:$0xff]
        %v6478 = vld [vmem:[%s501 + $0x88] sm:$0xff]
        %v6479 = vld [vmem:[%s501 + $0x90] sm:$0xff]
        %v6480 = vld [vmem:[%s501 + $0x98] sm:$0xff]
        %v6481 = vld [vmem:[%s501 + $0xa0] sm:$0xff]
        %v6482 = vld [vmem:[%s501 + $0xa8] sm:$0xff]
        %v6483 = vld [vmem:[%s501 + $0xb0] sm:$0xff]
        %v6484 = vld [vmem:[%s501 + $0xb8] sm:$0xff]
        %v6485 = vld [vmem:[%s501 + $0xc0] sm:$0xff]
        %v6486 = vld [vmem:[%s501 + $0xc8] sm:$0xff]
        %v6487 = vld [vmem:[%s501 + $0xd0] sm:$0xff]
        %v6488 = vld [vmem:[%s501 + $0xd8] sm:$0xff]
        %v6489 = vld [vmem:[%s501 + $0xe0] sm:$0xff]
        %v6490 = vld [vmem:[%s501 + $0xe8] sm:$0xff]
        %v6491 = vld [vmem:[%s501 + $0xf0] sm:$0xff]
        %v6492 = vld [vmem:[%s501 + $0xf8] sm:$0xff]
        %v6493 = vld [vmem:[%s501 + $0x100] sm:$0xff]
        %v6494 = vld [vmem:[%s501 + $0x108] sm:$0xff]
        %v6495 = vld [vmem:[%s501 + $0x110] sm:$0xff]
        %v6496 = vld [vmem:[%s501 + $0x118] sm:$0xff]
        %v6497 = vld [vmem:[%s501 + $0x120] sm:$0xff]
        %v6498 = vld [vmem:[%s501 + $0x128] sm:$0xff]
        %v6499 = vld [vmem:[%s501 + $0x130] sm:$0xff]
        %v6500 = vld [vmem:[%s501 + $0x138] sm:$0xff]
        %v6501 = vld [vmem:[%s501 + $0x140] sm:$0xff]
        %v6502 = vld [vmem:[%s501 + $0x148] sm:$0xff]
        %v6503 = vld [vmem:[%s501 + $0x150] sm:$0xff]
        %v6504 = vld [vmem:[%s501 + $0x158] sm:$0xff]
        %v6505 = vld [vmem:[%s501 + $0x160] sm:$0xff]
        %v6506 = vld [vmem:[%s501 + $0x168] sm:$0xff]
        %v6507 = vld [vmem:[%s501 + $0x170] sm:$0xff]
        %v6508 = vld [vmem:[%s501 + $0x178] sm:$0xff]
        %v6509 = vld [vmem:[%s501 + $0x180] sm:$0xff]
        %v6510 = vld [vmem:[%s501 + $0x188] sm:$0xff]
        %v6511 = vld [vmem:[%s501 + $0x190] sm:$0xff]
        %v6512 = vld [vmem:[%s501 + $0x198] sm:$0xff]
        %v6513 = vld [vmem:[%s501 + $0x1a0] sm:$0xff]
        %v6514 = vld [vmem:[%s501 + $0x1a8] sm:$0xff]
        %v6515 = vld [vmem:[%s501 + $0x1b0] sm:$0xff]
        %v6516 = vld [vmem:[%s501 + $0x1b8] sm:$0xff]
        %v6517 = vld [vmem:[%s501 + $0x1c0] sm:$0xff]
        %v6518 = vld [vmem:[%s501 + $0x1c8] sm:$0xff]
        %v6519 = vld [vmem:[%s501 + $0x1d0] sm:$0xff]
        %v6520 = vld [vmem:[%s501 + $0x1d8] sm:$0xff]
        %v6521 = vld [vmem:[%s501 + $0x1e0] sm:$0xff]
        %v6522 = vld [vmem:[%s501 + $0x1e8] sm:$0xff]
        %v6523 = vld [vmem:[%s501 + $0x1f0] sm:$0xff]
        %v6524 = vld [vmem:[%s501 + $0x1f8] sm:$0xff]
        %v6525 = vld [vmem:[%s501 + $0x200] sm:$0xff]
        %v6526 = vld [vmem:[%s501 + $0x208] sm:$0xff]
        %v6527 = vld [vmem:[%s501 + $0x210] sm:$0xff]
        %v6528 = vld [vmem:[%s501 + $0x218] sm:$0xff]
        %v6529 = vld [vmem:[%s501 + $0x220] sm:$0xff]
        %v6530 = vld [vmem:[%s501 + $0x228] sm:$0xff]
        %v6531 = vld [vmem:[%s501 + $0x230] sm:$0xff]
        %v6532 = vld [vmem:[%s501 + $0x238] sm:$0xff]
        %v6533 = vld [vmem:[%s501 + $0x240] sm:$0xff]
        %v6534 = vld [vmem:[%s501 + $0x248] sm:$0xff]
        %v6535 = vld [vmem:[%s501 + $0x250] sm:$0xff]
        %v6536 = vld [vmem:[%s501 + $0x258] sm:$0xff]
        %v6537 = vld [vmem:[%s501 + $0x260] sm:$0xff]
        %v6538 = vld [vmem:[%s501 + $0x268] sm:$0xff]
        %v6539 = vld [vmem:[%s501 + $0x270] sm:$0xff]
        %v6540 = vld [vmem:[%s501 + $0x278] sm:$0xff]
        %v6541 = vld [vmem:[%s501 + $0x280] sm:$0xff]
        %v6542 = vld [vmem:[%s501 + $0x288] sm:$0xff]
        %v6543 = vld [vmem:[%s501 + $0x290] sm:$0xff]
        %v6544 = vld [vmem:[%s501 + $0x298] sm:$0xff]
        %v6545 = vld [vmem:[%s501 + $0x2a0] sm:$0xff]
        %v6546 = vld [vmem:[%s501 + $0x2a8] sm:$0xff]
        %v6547 = vld [vmem:[%s501 + $0x2b0] sm:$0xff]
        %v6548 = vld [vmem:[%s501 + $0x2b8] sm:$0xff]
        %v6549 = vld [vmem:[%s501 + $0x2c0] sm:$0xff]
        %v6550 = vld [vmem:[%s501 + $0x2c8] sm:$0xff]
        %v6551 = vld [vmem:[%s501 + $0x2d0] sm:$0xff]
        %v6552 = vld [vmem:[%s501 + $0x2d8] sm:$0xff]
        %v6553 = vld [vmem:[%s501 + $0x2e0] sm:$0xff]
        %v6554 = vld [vmem:[%s501 + $0x2e8] sm:$0xff]
        %v6555 = vld [vmem:[%s501 + $0x2f0] sm:$0xff]
        %v6556 = vld [vmem:[%s501 + $0x2f8] sm:$0xff]
        %v6557 = vld [vmem:[%s501 + $0x300] sm:$0xf]
        %v6558 = vld [vmem:[%s501 + $0x308] sm:$0xf]
        %v6559 = vld [vmem:[%s501 + $0x310] sm:$0xf]
        %v6560 = vld [vmem:[%s501 + $0x318] sm:$0xf]
        %v6561 = vpack.c.bf16 %v6269, %v6261
        %v6562 = vpack.c.bf16 %v6270, %v6262
        %v6563 = vpack.c.bf16 %v6271, %v6263
        %v6564 = vpack.c.bf16 %v6272, %v6264
        %v6565 = vpack.c.bf16 %v6273, %v6265
        %v6566 = vpack.c.bf16 %v6274, %v6266
        %v6567 = vpack.c.bf16 %v6275, %v6267
        %v6568 = vpack.c.bf16 %v6276, %v6268
        %v6569 = vpack.c.bf16 %v6285, %v6277
        %v6570 = vpack.c.bf16 %v6286, %v6278
        %v6571 = vpack.c.bf16 %v6287, %v6279
        %v6572 = vpack.c.bf16 %v6288, %v6280
        %v6573 = vpack.c.bf16 %v6289, %v6281
        %v6574 = vpack.c.bf16 %v6290, %v6282
        %v6575 = vpack.c.bf16 %v6291, %v6283
        %v6576 = vpack.c.bf16 %v6292, %v6284
        %v6577 = vpack.c.bf16 %v6301, %v6293
        %v6578 = vpack.c.bf16 %v6302, %v6294
        %v6579 = vpack.c.bf16 %v6303, %v6295
        %v6580 = vpack.c.bf16 %v6304, %v6296
        %v6581 = vpack.c.bf16 %v6305, %v6297
        %v6582 = vpack.c.bf16 %v6306, %v6298
        %v6583 = vpack.c.bf16 %v6307, %v6299
        %v6584 = vpack.c.bf16 %v6308, %v6300
        %v6585 = vpack.c.bf16 %v6317, %v6309
        %v6586 = vpack.c.bf16 %v6318, %v6310
        %v6587 = vpack.c.bf16 %v6319, %v6311
        %v6588 = vpack.c.bf16 %v6320, %v6312
        %v6589 = vpack.c.bf16 %v6321, %v6313
        %v6590 = vpack.c.bf16 %v6322, %v6314
        %v6591 = vpack.c.bf16 %v6323, %v6315
        %v6592 = vpack.c.bf16 %v6324, %v6316
        %v6593 = vpack.c.bf16 %v6333, %v6325
        %v6594 = vpack.c.bf16 %v6334, %v6326
        %v6595 = vpack.c.bf16 %v6335, %v6327
        %v6596 = vpack.c.bf16 %v6336, %v6328
        %v6597 = vpack.c.bf16 %v6337, %v6329
        %v6598 = vpack.c.bf16 %v6338, %v6330
        %v6599 = vpack.c.bf16 %v6339, %v6331
        %v6600 = vpack.c.bf16 %v6340, %v6332
        %v6601 = vpack.c.bf16 %v6349, %v6341
        %v6602 = vpack.c.bf16 %v6350, %v6342
        %v6603 = vpack.c.bf16 %v6351, %v6343
        %v6604 = vpack.c.bf16 %v6352, %v6344
        %v6605 = vpack.c.bf16 %v6353, %v6345
        %v6606 = vpack.c.bf16 %v6354, %v6346
        %v6607 = vpack.c.bf16 %v6355, %v6347
        %v6608 = vpack.c.bf16 %v6356, %v6348
        %v6609 = vpack.c.bf16 %v6365, %v6357
        %v6610 = vpack.c.bf16 %v6366, %v6358
        %v6611 = vpack.c.bf16 %v6367, %v6359
        %v6612 = vpack.c.bf16 %v6368, %v6360
        %v6613 = vpack.c.bf16 %v6369, %v6361
        %v6614 = vpack.c.bf16 %v6370, %v6362
        %v6615 = vpack.c.bf16 %v6371, %v6363
        %v6616 = vpack.c.bf16 %v6372, %v6364
        %v6617 = vpack.c.bf16 %v6381, %v6373
        %v6618 = vpack.c.bf16 %v6382, %v6374
        %v6619 = vpack.c.bf16 %v6383, %v6375
        %v6620 = vpack.c.bf16 %v6384, %v6376
        %v6621 = vpack.c.bf16 %v6385, %v6377
        %v6622 = vpack.c.bf16 %v6386, %v6378
        %v6623 = vpack.c.bf16 %v6387, %v6379
        %v6624 = vpack.c.bf16 %v6388, %v6380
        %v6625 = vpack.c.bf16 %v6397, %v6389
        %v6626 = vpack.c.bf16 %v6398, %v6390
        %v6627 = vpack.c.bf16 %v6399, %v6391
        %v6628 = vpack.c.bf16 %v6400, %v6392
        %v6629 = vpack.c.bf16 %v6401, %v6393
        %v6630 = vpack.c.bf16 %v6402, %v6394
        %v6631 = vpack.c.bf16 %v6403, %v6395
        %v6632 = vpack.c.bf16 %v6404, %v6396
        %v6633 = vpack.c.bf16 %v6413, %v6405
        %v6634 = vpack.c.bf16 %v6414, %v6406
        %v6635 = vpack.c.bf16 %v6415, %v6407
        %v6636 = vpack.c.bf16 %v6416, %v6408
        %v6637 = vpack.c.bf16 %v6417, %v6409
        %v6638 = vpack.c.bf16 %v6418, %v6410
        %v6639 = vpack.c.bf16 %v6419, %v6411
        %v6640 = vpack.c.bf16 %v6420, %v6412
        %v6641 = vpack.c.bf16 %v6429, %v6421
        %v6642 = vpack.c.bf16 %v6430, %v6422
        %v6643 = vpack.c.bf16 %v6431, %v6423
        %v6644 = vpack.c.bf16 %v6432, %v6424
        %v6645 = vpack.c.bf16 %v6433, %v6425
        %v6646 = vpack.c.bf16 %v6434, %v6426
        %v6647 = vpack.c.bf16 %v6435, %v6427
        %v6648 = vpack.c.bf16 %v6436, %v6428
        %v6649 = vpack.c.bf16 %v6445, %v6437
        %v6650 = vpack.c.bf16 %v6446, %v6438
        %v6651 = vpack.c.bf16 %v6447, %v6439
        %v6652 = vpack.c.bf16 %v6448, %v6440
        %v6653 = vpack.c.bf16 %v6449, %v6441
        %v6654 = vpack.c.bf16 %v6450, %v6442
        %v6655 = vpack.c.bf16 %v6451, %v6443
        %v6656 = vpack.c.bf16 %v6452, %v6444
        %v6657 = vpack.c.bf16 %v6453, %v6453
        %v6658 = vpack.c.bf16 %v6454, %v6454
        %v6659 = vpack.c.bf16 %v6455, %v6455
        %v6660 = vpack.c.bf16 %v6456, %v6456
        %v6661 = vpack.c.bf16 %v6457, %v6457
        %v6662 = vpack.c.bf16 %v6458, %v6458
        %v6663 = vpack.c.bf16 %v6459, %v6459
        %v6664 = vpack.c.bf16 %v6460, %v6460
        %v6665 = vld [vmem:[%s441] sm:$0xff]
        %v6666 = vld [vmem:[%s441 + $0x8] sm:$0xff]
        %v6667 = vld [vmem:[%s441 + $0x10] sm:$0xff]
        %v6668 = vld [vmem:[%s441 + $0x18] sm:$0xff]
        %v6669 = vld [vmem:[%s441 + $0x20] sm:$0xff]
        %v6670 = vld [vmem:[%s441 + $0x28] sm:$0xff]
        %v6671 = vld [vmem:[%s441 + $0x30] sm:$0xff]
        %v6672 = vld [vmem:[%s441 + $0x38] sm:$0xff]
        %v6673 = vld [vmem:[%s441 + $0x40] sm:$0xff]
        %v6674 = vld [vmem:[%s441 + $0x48] sm:$0xff]
        %v6675 = vld [vmem:[%s441 + $0x50] sm:$0xff]
        %v6676 = vld [vmem:[%s441 + $0x58] sm:$0xff]
        %v6677 = vld [vmem:[%s441 + $0x60] sm:$0xff]
        %v6678 = vld [vmem:[%s441 + $0x68] sm:$0xff]
        %v6679 = vld [vmem:[%s441 + $0x70] sm:$0xff]
        %v6680 = vld [vmem:[%s441 + $0x78] sm:$0xff]
        %v6681 = vld [vmem:[%s441 + $0x80] sm:$0xff]
        %v6682 = vld [vmem:[%s441 + $0x88] sm:$0xff]
        %v6683 = vld [vmem:[%s441 + $0x90] sm:$0xff]
        %v6684 = vld [vmem:[%s441 + $0x98] sm:$0xff]
        %v6685 = vld [vmem:[%s441 + $0xa0] sm:$0xff]
        %v6686 = vld [vmem:[%s441 + $0xa8] sm:$0xff]
        %v6687 = vld [vmem:[%s441 + $0xb0] sm:$0xff]
        %v6688 = vld [vmem:[%s441 + $0xb8] sm:$0xff]
        %v6689 = vld [vmem:[%s441 + $0xc0] sm:$0xff]
        %v6690 = vld [vmem:[%s441 + $0xc8] sm:$0xff]
        %v6691 = vld [vmem:[%s441 + $0xd0] sm:$0xff]
        %v6692 = vld [vmem:[%s441 + $0xd8] sm:$0xff]
        %v6693 = vld [vmem:[%s441 + $0xe0] sm:$0xff]
        %v6694 = vld [vmem:[%s441 + $0xe8] sm:$0xff]
        %v6695 = vld [vmem:[%s441 + $0xf0] sm:$0xff]
        %v6696 = vld [vmem:[%s441 + $0xf8] sm:$0xff]
        %v6697 = vld [vmem:[%s441 + $0x100] sm:$0xff]
        %v6698 = vld [vmem:[%s441 + $0x108] sm:$0xff]
        %v6699 = vld [vmem:[%s441 + $0x110] sm:$0xff]
        %v6700 = vld [vmem:[%s441 + $0x118] sm:$0xff]
        %v6701 = vld [vmem:[%s441 + $0x120] sm:$0xff]
        %v6702 = vld [vmem:[%s441 + $0x128] sm:$0xff]
        %v6703 = vld [vmem:[%s441 + $0x130] sm:$0xff]
        %v6704 = vld [vmem:[%s441 + $0x138] sm:$0xff]
        %v6705 = vld [vmem:[%s441 + $0x140] sm:$0xff]
        %v6706 = vld [vmem:[%s441 + $0x148] sm:$0xff]
        %v6707 = vld [vmem:[%s441 + $0x150] sm:$0xff]
        %v6708 = vld [vmem:[%s441 + $0x158] sm:$0xff]
        %v6709 = vld [vmem:[%s441 + $0x160] sm:$0xff]
        %v6710 = vld [vmem:[%s441 + $0x168] sm:$0xff]
        %v6711 = vld [vmem:[%s441 + $0x170] sm:$0xff]
        %v6712 = vld [vmem:[%s441 + $0x178] sm:$0xff]
        %v6713 = vld [vmem:[%s441 + $0x180] sm:$0xff]
        %v6714 = vld [vmem:[%s441 + $0x188] sm:$0xff]
        %v6715 = vld [vmem:[%s441 + $0x190] sm:$0xff]
        %v6716 = vld [vmem:[%s441 + $0x198] sm:$0xff]
        %v6717 = vld [vmem:[%s441 + $0x1a0] sm:$0xff]
        %v6718 = vld [vmem:[%s441 + $0x1a8] sm:$0xff]
        %v6719 = vld [vmem:[%s441 + $0x1b0] sm:$0xff]
        %v6720 = vld [vmem:[%s441 + $0x1b8] sm:$0xff]
        %v6721 = vld [vmem:[%s441 + $0x1c0] sm:$0xff]
        %v6722 = vld [vmem:[%s441 + $0x1c8] sm:$0xff]
        %v6723 = vld [vmem:[%s441 + $0x1d0] sm:$0xff]
        %v6724 = vld [vmem:[%s441 + $0x1d8] sm:$0xff]
        %v6725 = vld [vmem:[%s441 + $0x1e0] sm:$0xff]
        %v6726 = vld [vmem:[%s441 + $0x1e8] sm:$0xff]
        %v6727 = vld [vmem:[%s441 + $0x1f0] sm:$0xff]
        %v6728 = vld [vmem:[%s441 + $0x1f8] sm:$0xff]
        %v6729 = vld [vmem:[%s441 + $0x200] sm:$0xff]
        %v6730 = vld [vmem:[%s441 + $0x208] sm:$0xff]
        %v6731 = vld [vmem:[%s441 + $0x210] sm:$0xff]
        %v6732 = vld [vmem:[%s441 + $0x218] sm:$0xff]
        %v6733 = vld [vmem:[%s441 + $0x220] sm:$0xff]
        %v6734 = vld [vmem:[%s441 + $0x228] sm:$0xff]
        %v6735 = vld [vmem:[%s441 + $0x230] sm:$0xff]
        %v6736 = vld [vmem:[%s441 + $0x238] sm:$0xff]
        %v6737 = vld [vmem:[%s441 + $0x240] sm:$0xff]
        %v6738 = vld [vmem:[%s441 + $0x248] sm:$0xff]
        %v6739 = vld [vmem:[%s441 + $0x250] sm:$0xff]
        %v6740 = vld [vmem:[%s441 + $0x258] sm:$0xff]
        %v6741 = vld [vmem:[%s441 + $0x260] sm:$0xff]
        %v6742 = vld [vmem:[%s441 + $0x268] sm:$0xff]
        %v6743 = vld [vmem:[%s441 + $0x270] sm:$0xff]
        %v6744 = vld [vmem:[%s441 + $0x278] sm:$0xff]
        %v6745 = vld [vmem:[%s441 + $0x280] sm:$0xff]
        %v6746 = vld [vmem:[%s441 + $0x288] sm:$0xff]
        %v6747 = vld [vmem:[%s441 + $0x290] sm:$0xff]
        %v6748 = vld [vmem:[%s441 + $0x298] sm:$0xff]
        %v6749 = vld [vmem:[%s441 + $0x2a0] sm:$0xff]
        %v6750 = vld [vmem:[%s441 + $0x2a8] sm:$0xff]
        %v6751 = vld [vmem:[%s441 + $0x2b0] sm:$0xff]
        %v6752 = vld [vmem:[%s441 + $0x2b8] sm:$0xff]
        %v6753 = vld [vmem:[%s441 + $0x2c0] sm:$0xff]
        %v6754 = vld [vmem:[%s441 + $0x2c8] sm:$0xff]
        %v6755 = vld [vmem:[%s441 + $0x2d0] sm:$0xff]
        %v6756 = vld [vmem:[%s441 + $0x2d8] sm:$0xff]
        %v6757 = vld [vmem:[%s441 + $0x2e0] sm:$0xff]
        %v6758 = vld [vmem:[%s441 + $0x2e8] sm:$0xff]
        %v6759 = vld [vmem:[%s441 + $0x2f0] sm:$0xff]
        %v6760 = vld [vmem:[%s441 + $0x2f8] sm:$0xff]
        %v6761 = vld [vmem:[%s441 + $0x300] sm:$0xff]
        %v6762 = vld [vmem:[%s441 + $0x308] sm:$0xff]
        %v6763 = vld [vmem:[%s441 + $0x310] sm:$0xff]
        %v6764 = vld [vmem:[%s441 + $0x318] sm:$0xff]
        %v6765 = vld [vmem:[%s441 + $0x320] sm:$0xff]
        %v6766 = vld [vmem:[%s441 + $0x328] sm:$0xff]
        %v6767 = vld [vmem:[%s441 + $0x330] sm:$0xff]
        %v6768 = vld [vmem:[%s441 + $0x338] sm:$0xff]
        %v6769 = vld [vmem:[%s441 + $0x340] sm:$0xff]
        %v6770 = vld [vmem:[%s441 + $0x348] sm:$0xff]
        %v6771 = vld [vmem:[%s441 + $0x350] sm:$0xff]
        %v6772 = vld [vmem:[%s441 + $0x358] sm:$0xff]
        %v6773 = vld [vmem:[%s441 + $0x360] sm:$0xff]
        %v6774 = vld [vmem:[%s441 + $0x368] sm:$0xff]
        %v6775 = vld [vmem:[%s441 + $0x370] sm:$0xff]
        %v6776 = vld [vmem:[%s441 + $0x378] sm:$0xff]
        %v6777 = vld [vmem:[%s441 + $0x380] sm:$0xff]
        %v6778 = vld [vmem:[%s441 + $0x388] sm:$0xff]
        %v6779 = vld [vmem:[%s441 + $0x390] sm:$0xff]
        %v6780 = vld [vmem:[%s441 + $0x398] sm:$0xff]
        %v6781 = vld [vmem:[%s441 + $0x3a0] sm:$0xff]
        %v6782 = vld [vmem:[%s441 + $0x3a8] sm:$0xff]
        %v6783 = vld [vmem:[%s441 + $0x3b0] sm:$0xff]
        %v6784 = vld [vmem:[%s441 + $0x3b8] sm:$0xff]
        %v6785 = vld [vmem:[%s441 + $0x3c0] sm:$0xff]
        %v6786 = vld [vmem:[%s441 + $0x3c8] sm:$0xff]
        %v6787 = vld [vmem:[%s441 + $0x3d0] sm:$0xff]
        %v6788 = vld [vmem:[%s441 + $0x3d8] sm:$0xff]
        %v6789 = vld [vmem:[%s441 + $0x3e0] sm:$0xff]
        %v6790 = vld [vmem:[%s441 + $0x3e8] sm:$0xff]
        %v6791 = vld [vmem:[%s441 + $0x3f0] sm:$0xff]
        %v6792 = vld [vmem:[%s441 + $0x3f8] sm:$0xff]
        %v6793 = vld [vmem:[%s441 + $0x400] sm:$0xff]
        %v6794 = vld [vmem:[%s441 + $0x408] sm:$0xff]
        %v6795 = vld [vmem:[%s441 + $0x410] sm:$0xff]
        %v6796 = vld [vmem:[%s441 + $0x418] sm:$0xff]
        %v6797 = vld [vmem:[%s441 + $0x420] sm:$0xff]
        %v6798 = vld [vmem:[%s441 + $0x428] sm:$0xff]
        %v6799 = vld [vmem:[%s441 + $0x430] sm:$0xff]
        %v6800 = vld [vmem:[%s441 + $0x438] sm:$0xff]
        %v6801 = vld [vmem:[%s441 + $0x440] sm:$0xff]
        %v6802 = vld [vmem:[%s441 + $0x448] sm:$0xff]
        %v6803 = vld [vmem:[%s441 + $0x450] sm:$0xff]
        %v6804 = vld [vmem:[%s441 + $0x458] sm:$0xff]
        %v6805 = vld [vmem:[%s441 + $0x460] sm:$0xff]
        %v6806 = vld [vmem:[%s441 + $0x468] sm:$0xff]
        %v6807 = vld [vmem:[%s441 + $0x470] sm:$0xff]
        %v6808 = vld [vmem:[%s441 + $0x478] sm:$0xff]
        %v6809 = vld [vmem:[%s441 + $0x480] sm:$0xff]
        %v6810 = vld [vmem:[%s441 + $0x488] sm:$0xff]
        %v6811 = vld [vmem:[%s441 + $0x490] sm:$0xff]
        %v6812 = vld [vmem:[%s441 + $0x498] sm:$0xff]
        %v6813 = vld [vmem:[%s441 + $0x4a0] sm:$0xff]
        %v6814 = vld [vmem:[%s441 + $0x4a8] sm:$0xff]
        %v6815 = vld [vmem:[%s441 + $0x4b0] sm:$0xff]
        %v6816 = vld [vmem:[%s441 + $0x4b8] sm:$0xff]
        %v6817 = vld [vmem:[%s441 + $0x4c0] sm:$0xff]
        %v6818 = vld [vmem:[%s441 + $0x4c8] sm:$0xff]
        %v6819 = vld [vmem:[%s441 + $0x4d0] sm:$0xff]
        %v6820 = vld [vmem:[%s441 + $0x4d8] sm:$0xff]
        %v6821 = vld [vmem:[%s441 + $0x4e0] sm:$0xff]
        %v6822 = vld [vmem:[%s441 + $0x4e8] sm:$0xff]
        %v6823 = vld [vmem:[%s441 + $0x4f0] sm:$0xff]
        %v6824 = vld [vmem:[%s441 + $0x4f8] sm:$0xff]
        %v6825 = vld [vmem:[%s441 + $0x500] sm:$0xff]
        %v6826 = vld [vmem:[%s441 + $0x508] sm:$0xff]
        %v6827 = vld [vmem:[%s441 + $0x510] sm:$0xff]
        %v6828 = vld [vmem:[%s441 + $0x518] sm:$0xff]
        %v6829 = vld [vmem:[%s441 + $0x520] sm:$0xff]
        %v6830 = vld [vmem:[%s441 + $0x528] sm:$0xff]
        %v6831 = vld [vmem:[%s441 + $0x530] sm:$0xff]
        %v6832 = vld [vmem:[%s441 + $0x538] sm:$0xff]
        %v6833 = vld [vmem:[%s441 + $0x540] sm:$0xff]
        %v6834 = vld [vmem:[%s441 + $0x548] sm:$0xff]
        %v6835 = vld [vmem:[%s441 + $0x550] sm:$0xff]
        %v6836 = vld [vmem:[%s441 + $0x558] sm:$0xff]
        %v6837 = vld [vmem:[%s441 + $0x560] sm:$0xff]
        %v6838 = vld [vmem:[%s441 + $0x568] sm:$0xff]
        %v6839 = vld [vmem:[%s441 + $0x570] sm:$0xff]
        %v6840 = vld [vmem:[%s441 + $0x578] sm:$0xff]
        %v6841 = vld [vmem:[%s441 + $0x580] sm:$0xff]
        %v6842 = vld [vmem:[%s441 + $0x588] sm:$0xff]
        %v6843 = vld [vmem:[%s441 + $0x590] sm:$0xff]
        %v6844 = vld [vmem:[%s441 + $0x598] sm:$0xff]
        %v6845 = vld [vmem:[%s441 + $0x5a0] sm:$0xff]
        %v6846 = vld [vmem:[%s441 + $0x5a8] sm:$0xff]
        %v6847 = vld [vmem:[%s441 + $0x5b0] sm:$0xff]
        %v6848 = vld [vmem:[%s441 + $0x5b8] sm:$0xff]
        %v6849 = vld [vmem:[%s441 + $0x5c0] sm:$0xff]
        %v6850 = vld [vmem:[%s441 + $0x5c8] sm:$0xff]
        %v6851 = vld [vmem:[%s441 + $0x5d0] sm:$0xff]
        %v6852 = vld [vmem:[%s441 + $0x5d8] sm:$0xff]
        %v6853 = vld [vmem:[%s441 + $0x5e0] sm:$0xff]
        %v6854 = vld [vmem:[%s441 + $0x5e8] sm:$0xff]
        %v6855 = vld [vmem:[%s441 + $0x5f0] sm:$0xff]
        %v6856 = vld [vmem:[%s441 + $0x5f8] sm:$0xff]
        %v6857 = vld [vmem:[%s441 + $0x600] sm:$0xff]
        %v6858 = vld [vmem:[%s441 + $0x608] sm:$0xff]
        %v6859 = vld [vmem:[%s441 + $0x610] sm:$0xff]
        %v6860 = vld [vmem:[%s441 + $0x618] sm:$0xff]
        %v6861 = vld [vmem:[%s441 + $0x620] sm:$0xff]
        %v6862 = vld [vmem:[%s441 + $0x628] sm:$0xff]
        %v6863 = vld [vmem:[%s441 + $0x630] sm:$0xff]
        %v6864 = vld [vmem:[%s441 + $0x638] sm:$0xff]
        %v6865 = vld [vmem:[%s441 + $0x640] sm:$0xff]
        %v6866 = vld [vmem:[%s441 + $0x648] sm:$0xff]
        %v6867 = vld [vmem:[%s441 + $0x650] sm:$0xff]
        %v6868 = vld [vmem:[%s441 + $0x658] sm:$0xff]
        %v6869 = vld [vmem:[%s441 + $0x660] sm:$0xff]
        %v6870 = vld [vmem:[%s441 + $0x668] sm:$0xff]
        %v6871 = vld [vmem:[%s441 + $0x670] sm:$0xff]
        %v6872 = vld [vmem:[%s441 + $0x678] sm:$0xff]
        %v6873 = vld [vmem:[%s441 + $0x680] sm:$0xff]
        %v6874 = vld [vmem:[%s441 + $0x688] sm:$0xff]
        %v6875 = vld [vmem:[%s441 + $0x690] sm:$0xff]
        %v6876 = vld [vmem:[%s441 + $0x698] sm:$0xff]
        %v6877 = vld [vmem:[%s441 + $0x6a0] sm:$0xff]
        %v6878 = vld [vmem:[%s441 + $0x6a8] sm:$0xff]
        %v6879 = vld [vmem:[%s441 + $0x6b0] sm:$0xff]
        %v6880 = vld [vmem:[%s441 + $0x6b8] sm:$0xff]
        %v6881 = vld [vmem:[%s441 + $0x6c0] sm:$0xff]
        %v6882 = vld [vmem:[%s441 + $0x6c8] sm:$0xff]
        %v6883 = vld [vmem:[%s441 + $0x6d0] sm:$0xff]
        %v6884 = vld [vmem:[%s441 + $0x6d8] sm:$0xff]
        %v6885 = vld [vmem:[%s441 + $0x6e0] sm:$0xff]
        %v6886 = vld [vmem:[%s441 + $0x6e8] sm:$0xff]
        %v6887 = vld [vmem:[%s441 + $0x6f0] sm:$0xff]
        %v6888 = vld [vmem:[%s441 + $0x6f8] sm:$0xff]
        %v6889 = vld [vmem:[%s441 + $0x700] sm:$0xff]
        %v6890 = vld [vmem:[%s441 + $0x708] sm:$0xff]
        %v6891 = vld [vmem:[%s441 + $0x710] sm:$0xff]
        %v6892 = vld [vmem:[%s441 + $0x718] sm:$0xff]
        %v6893 = vld [vmem:[%s441 + $0x720] sm:$0xff]
        %v6894 = vld [vmem:[%s441 + $0x728] sm:$0xff]
        %v6895 = vld [vmem:[%s441 + $0x730] sm:$0xff]
        %v6896 = vld [vmem:[%s441 + $0x738] sm:$0xff]
        %v6897 = vld [vmem:[%s441 + $0x740] sm:$0xff]
        %v6898 = vld [vmem:[%s441 + $0x748] sm:$0xff]
        %v6899 = vld [vmem:[%s441 + $0x750] sm:$0xff]
        %v6900 = vld [vmem:[%s441 + $0x758] sm:$0xff]
        %v6901 = vld [vmem:[%s441 + $0x760] sm:$0xff]
        %v6902 = vld [vmem:[%s441 + $0x768] sm:$0xff]
        %v6903 = vld [vmem:[%s441 + $0x770] sm:$0xff]
        %v6904 = vld [vmem:[%s441 + $0x778] sm:$0xff]
        %v6905 = vld [vmem:[%s441 + $0x780] sm:$0xff]
        %v6906 = vld [vmem:[%s441 + $0x788] sm:$0xff]
        %v6907 = vld [vmem:[%s441 + $0x790] sm:$0xff]
        %v6908 = vld [vmem:[%s441 + $0x798] sm:$0xff]
        %v6909 = vld [vmem:[%s441 + $0x7a0] sm:$0xff]
        %v6910 = vld [vmem:[%s441 + $0x7a8] sm:$0xff]
        %v6911 = vld [vmem:[%s441 + $0x7b0] sm:$0xff]
        %v6912 = vld [vmem:[%s441 + $0x7b8] sm:$0xff]
        %v6913 = vld [vmem:[%s441 + $0x7c0] sm:$0xff]
        %v6914 = vld [vmem:[%s441 + $0x7c8] sm:$0xff]
        %v6915 = vld [vmem:[%s441 + $0x7d0] sm:$0xff]
        %v6916 = vld [vmem:[%s441 + $0x7d8] sm:$0xff]
        %v6917 = vld [vmem:[%s441 + $0x7e0] sm:$0xff]
        %v6918 = vld [vmem:[%s441 + $0x7e8] sm:$0xff]
        %v6919 = vld [vmem:[%s441 + $0x7f0] sm:$0xff]
        %v6920 = vld [vmem:[%s441 + $0x7f8] sm:$0xff]
        %v7177 = vunpack.c.l.b16 %v6665
        %v7178 = vunpack.c.h.b16 %v6665
        %v7179 = vunpack.c.l.b16 %v6666
        %v7180 = vunpack.c.h.b16 %v6666
        %v7181 = vunpack.c.l.b16 %v6667
        %v7182 = vunpack.c.h.b16 %v6667
        %v7183 = vunpack.c.l.b16 %v6668
        %v7184 = vunpack.c.h.b16 %v6668
        %v7185 = vunpack.c.l.b16 %v6669
        %v7186 = vunpack.c.h.b16 %v6669
        %v7187 = vunpack.c.l.b16 %v6670
        %v7188 = vunpack.c.h.b16 %v6670
        %v7189 = vunpack.c.l.b16 %v6671
        %v7190 = vunpack.c.h.b16 %v6671
        %v7191 = vunpack.c.l.b16 %v6672
        %v7192 = vunpack.c.h.b16 %v6672
        %v7193 = vunpack.c.l.b16 %v6673
        %v7194 = vunpack.c.h.b16 %v6673
        %v7195 = vunpack.c.l.b16 %v6674
        %v7196 = vunpack.c.h.b16 %v6674
        %v7197 = vunpack.c.l.b16 %v6675
        %v7198 = vunpack.c.h.b16 %v6675
        %v7199 = vunpack.c.l.b16 %v6676
        %v7200 = vunpack.c.h.b16 %v6676
        %v7201 = vunpack.c.l.b16 %v6677
        %v7202 = vunpack.c.h.b16 %v6677
        %v7203 = vunpack.c.l.b16 %v6678
        %v7204 = vunpack.c.h.b16 %v6678
        %v7205 = vunpack.c.l.b16 %v6679
        %v7206 = vunpack.c.h.b16 %v6679
        %v7207 = vunpack.c.l.b16 %v6680
        %v7208 = vunpack.c.h.b16 %v6680
        %v7209 = vunpack.c.l.b16 %v6681
        %v7210 = vunpack.c.h.b16 %v6681
        %v7211 = vunpack.c.l.b16 %v6682
        %v7212 = vunpack.c.h.b16 %v6682
        %v7213 = vunpack.c.l.b16 %v6683
        %v7214 = vunpack.c.h.b16 %v6683
        %v7215 = vunpack.c.l.b16 %v6684
        %v7216 = vunpack.c.h.b16 %v6684
        %v7217 = vunpack.c.l.b16 %v6685
        %v7218 = vunpack.c.h.b16 %v6685
        %v7219 = vunpack.c.l.b16 %v6686
        %v7220 = vunpack.c.h.b16 %v6686
        %v7221 = vunpack.c.l.b16 %v6687
        %v7222 = vunpack.c.h.b16 %v6687
        %v7223 = vunpack.c.l.b16 %v6688
        %v7224 = vunpack.c.h.b16 %v6688
        %v7225 = vunpack.c.l.b16 %v6689
        %v7226 = vunpack.c.h.b16 %v6689
        %v7227 = vunpack.c.l.b16 %v6690
        %v7228 = vunpack.c.h.b16 %v6690
        %v7229 = vunpack.c.l.b16 %v6691
        %v7230 = vunpack.c.h.b16 %v6691
        %v7231 = vunpack.c.l.b16 %v6692
        %v7232 = vunpack.c.h.b16 %v6692
        %v7233 = vunpack.c.l.b16 %v6693
        %v7234 = vunpack.c.h.b16 %v6693
        %v7235 = vunpack.c.l.b16 %v6694
        %v7236 = vunpack.c.h.b16 %v6694
        %v7237 = vunpack.c.l.b16 %v6695
        %v7238 = vunpack.c.h.b16 %v6695
        %v7239 = vunpack.c.l.b16 %v6696
        %v7240 = vunpack.c.h.b16 %v6696
        %v7241 = vunpack.c.l.b16 %v6697
        %v7242 = vunpack.c.h.b16 %v6697
        %v7243 = vunpack.c.l.b16 %v6698
        %v7244 = vunpack.c.h.b16 %v6698
        %v7245 = vunpack.c.l.b16 %v6699
        %v7246 = vunpack.c.h.b16 %v6699
        %v7247 = vunpack.c.l.b16 %v6700
        %v7248 = vunpack.c.h.b16 %v6700
        %v7249 = vunpack.c.l.b16 %v6701
        %v7250 = vunpack.c.h.b16 %v6701
        %v7251 = vunpack.c.l.b16 %v6702
        %v7252 = vunpack.c.h.b16 %v6702
        %v7253 = vunpack.c.l.b16 %v6703
        %v7254 = vunpack.c.h.b16 %v6703
        %v7255 = vunpack.c.l.b16 %v6704
        %v7256 = vunpack.c.h.b16 %v6704
        %v7257 = vunpack.c.l.b16 %v6705
        %v7258 = vunpack.c.h.b16 %v6705
        %v7259 = vunpack.c.l.b16 %v6706
        %v7260 = vunpack.c.h.b16 %v6706
        %v7261 = vunpack.c.l.b16 %v6707
        %v7262 = vunpack.c.h.b16 %v6707
        %v7263 = vunpack.c.l.b16 %v6708
        %v7264 = vunpack.c.h.b16 %v6708
        %v7265 = vunpack.c.l.b16 %v6709
        %v7266 = vunpack.c.h.b16 %v6709
        %v7267 = vunpack.c.l.b16 %v6710
        %v7268 = vunpack.c.h.b16 %v6710
        %v7269 = vunpack.c.l.b16 %v6711
        %v7270 = vunpack.c.h.b16 %v6711
        %v7271 = vunpack.c.l.b16 %v6712
        %v7272 = vunpack.c.h.b16 %v6712
        %v7273 = vunpack.c.l.b16 %v6713
        %v7274 = vunpack.c.h.b16 %v6713
        %v7275 = vunpack.c.l.b16 %v6714
        %v7276 = vunpack.c.h.b16 %v6714
        %v7277 = vunpack.c.l.b16 %v6715
        %v7278 = vunpack.c.h.b16 %v6715
        %v7279 = vunpack.c.l.b16 %v6716
        %v7280 = vunpack.c.h.b16 %v6716
        %v7281 = vunpack.c.l.b16 %v6717
        %v7282 = vunpack.c.h.b16 %v6717
        %v7283 = vunpack.c.l.b16 %v6718
        %v7284 = vunpack.c.h.b16 %v6718
        %v7285 = vunpack.c.l.b16 %v6719
        %v7286 = vunpack.c.h.b16 %v6719
        %v7287 = vunpack.c.l.b16 %v6720
        %v7288 = vunpack.c.h.b16 %v6720
        %v7289 = vunpack.c.l.b16 %v6721
        %v7290 = vunpack.c.h.b16 %v6721
        %v7291 = vunpack.c.l.b16 %v6722
        %v7292 = vunpack.c.h.b16 %v6722
        %v7293 = vunpack.c.l.b16 %v6723
        %v7294 = vunpack.c.h.b16 %v6723
        %v7295 = vunpack.c.l.b16 %v6724
        %v7296 = vunpack.c.h.b16 %v6724
        %v7297 = vunpack.c.l.b16 %v6725
        %v7298 = vunpack.c.h.b16 %v6725
        %v7299 = vunpack.c.l.b16 %v6726
        %v7300 = vunpack.c.h.b16 %v6726
        %v7301 = vunpack.c.l.b16 %v6727
        %v7302 = vunpack.c.h.b16 %v6727
        %v7303 = vunpack.c.l.b16 %v6728
        %v7304 = vunpack.c.h.b16 %v6728
        %v7305 = vunpack.c.l.b16 %v6729
        %v7306 = vunpack.c.h.b16 %v6729
        %v7307 = vunpack.c.l.b16 %v6730
        %v7308 = vunpack.c.h.b16 %v6730
        %v7309 = vunpack.c.l.b16 %v6731
        %v7310 = vunpack.c.h.b16 %v6731
        %v7311 = vunpack.c.l.b16 %v6732
        %v7312 = vunpack.c.h.b16 %v6732
        %v7313 = vunpack.c.l.b16 %v6733
        %v7314 = vunpack.c.h.b16 %v6733
        %v7315 = vunpack.c.l.b16 %v6734
        %v7316 = vunpack.c.h.b16 %v6734
        %v7317 = vunpack.c.l.b16 %v6735
        %v7318 = vunpack.c.h.b16 %v6735
        %v7319 = vunpack.c.l.b16 %v6736
        %v7320 = vunpack.c.h.b16 %v6736
        %v7321 = vunpack.c.l.b16 %v6737
        %v7322 = vunpack.c.h.b16 %v6737
        %v7323 = vunpack.c.l.b16 %v6738
        %v7324 = vunpack.c.h.b16 %v6738
        %v7325 = vunpack.c.l.b16 %v6739
        %v7326 = vunpack.c.h.b16 %v6739
        %v7327 = vunpack.c.l.b16 %v6740
        %v7328 = vunpack.c.h.b16 %v6740
        %v7329 = vunpack.c.l.b16 %v6741
        %v7330 = vunpack.c.h.b16 %v6741
        %v7331 = vunpack.c.l.b16 %v6742
        %v7332 = vunpack.c.h.b16 %v6742
        %v7333 = vunpack.c.l.b16 %v6743
        %v7334 = vunpack.c.h.b16 %v6743
        %v7335 = vunpack.c.l.b16 %v6744
        %v7336 = vunpack.c.h.b16 %v6744
        %v7337 = vunpack.c.l.b16 %v6745
        %v7338 = vunpack.c.h.b16 %v6745
        %v7339 = vunpack.c.l.b16 %v6746
        %v7340 = vunpack.c.h.b16 %v6746
        %v7341 = vunpack.c.l.b16 %v6747
        %v7342 = vunpack.c.h.b16 %v6747
        %v7343 = vunpack.c.l.b16 %v6748
        %v7344 = vunpack.c.h.b16 %v6748
        %v7345 = vunpack.c.l.b16 %v6749
        %v7346 = vunpack.c.h.b16 %v6749
        %v7347 = vunpack.c.l.b16 %v6750
        %v7348 = vunpack.c.h.b16 %v6750
        %v7349 = vunpack.c.l.b16 %v6751
        %v7350 = vunpack.c.h.b16 %v6751
        %v7351 = vunpack.c.l.b16 %v6752
        %v7352 = vunpack.c.h.b16 %v6752
        %v7353 = vunpack.c.l.b16 %v6753
        %v7354 = vunpack.c.h.b16 %v6753
        %v7355 = vunpack.c.l.b16 %v6754
        %v7356 = vunpack.c.h.b16 %v6754
        %v7357 = vunpack.c.l.b16 %v6755
        %v7358 = vunpack.c.h.b16 %v6755
        %v7359 = vunpack.c.l.b16 %v6756
        %v7360 = vunpack.c.h.b16 %v6756
        %v7361 = vunpack.c.l.b16 %v6757
        %v7362 = vunpack.c.h.b16 %v6757
        %v7363 = vunpack.c.l.b16 %v6758
        %v7364 = vunpack.c.h.b16 %v6758
        %v7365 = vunpack.c.l.b16 %v6759
        %v7366 = vunpack.c.h.b16 %v6759
        %v7367 = vunpack.c.l.b16 %v6760
        %v7368 = vunpack.c.h.b16 %v6760
        %v7369 = vunpack.c.l.b16 %v6761
        %v7370 = vunpack.c.h.b16 %v6761
        %v7371 = vunpack.c.l.b16 %v6762
        %v7372 = vunpack.c.h.b16 %v6762
        %v7373 = vunpack.c.l.b16 %v6763
        %v7374 = vunpack.c.h.b16 %v6763
        %v7375 = vunpack.c.l.b16 %v6764
        %v7376 = vunpack.c.h.b16 %v6764
        %v7377 = vunpack.c.l.b16 %v6765
        %v7378 = vunpack.c.h.b16 %v6765
        %v7379 = vunpack.c.l.b16 %v6766
        %v7380 = vunpack.c.h.b16 %v6766
        %v7381 = vunpack.c.l.b16 %v6767
        %v7382 = vunpack.c.h.b16 %v6767
        %v7383 = vunpack.c.l.b16 %v6768
        %v7384 = vunpack.c.h.b16 %v6768
        %v7385 = vunpack.c.l.b16 %v6769
        %v7386 = vunpack.c.h.b16 %v6769
        %v7387 = vunpack.c.l.b16 %v6770
        %v7388 = vunpack.c.h.b16 %v6770
        %v7389 = vunpack.c.l.b16 %v6771
        %v7390 = vunpack.c.h.b16 %v6771
        %v7391 = vunpack.c.l.b16 %v6772
        %v7392 = vunpack.c.h.b16 %v6772
        %v7393 = vunpack.c.l.b16 %v6773
        %v7394 = vunpack.c.h.b16 %v6773
        %v7395 = vunpack.c.l.b16 %v6774
        %v7396 = vunpack.c.h.b16 %v6774
        %v7397 = vunpack.c.l.b16 %v6775
        %v7398 = vunpack.c.h.b16 %v6775
        %v7399 = vunpack.c.l.b16 %v6776
        %v7400 = vunpack.c.h.b16 %v6776
        %v7401 = vunpack.c.l.b16 %v6777
        %v7402 = vunpack.c.h.b16 %v6777
        %v7403 = vunpack.c.l.b16 %v6778
        %v7404 = vunpack.c.h.b16 %v6778
        %v7405 = vunpack.c.l.b16 %v6779
        %v7406 = vunpack.c.h.b16 %v6779
        %v7407 = vunpack.c.l.b16 %v6780
        %v7408 = vunpack.c.h.b16 %v6780
        %v7409 = vunpack.c.l.b16 %v6781
        %v7410 = vunpack.c.h.b16 %v6781
        %v7411 = vunpack.c.l.b16 %v6782
        %v7412 = vunpack.c.h.b16 %v6782
        %v7413 = vunpack.c.l.b16 %v6783
        %v7414 = vunpack.c.h.b16 %v6783
        %v7415 = vunpack.c.l.b16 %v6784
        %v7416 = vunpack.c.h.b16 %v6784
        %v7417 = vunpack.c.l.b16 %v6785
        %v7418 = vunpack.c.h.b16 %v6785
        %v7419 = vunpack.c.l.b16 %v6786
        %v7420 = vunpack.c.h.b16 %v6786
        %v7421 = vunpack.c.l.b16 %v6787
        %v7422 = vunpack.c.h.b16 %v6787
        %v7423 = vunpack.c.l.b16 %v6788
        %v7424 = vunpack.c.h.b16 %v6788
        %v7425 = vunpack.c.l.b16 %v6789
        %v7426 = vunpack.c.h.b16 %v6789
        %v7427 = vunpack.c.l.b16 %v6790
        %v7428 = vunpack.c.h.b16 %v6790
        %v7429 = vunpack.c.l.b16 %v6791
        %v7430 = vunpack.c.h.b16 %v6791
        %v7431 = vunpack.c.l.b16 %v6792
        %v7432 = vunpack.c.h.b16 %v6792
        %v7433 = vunpack.c.l.b16 %v6793
        %v7434 = vunpack.c.h.b16 %v6793
        %v7435 = vunpack.c.l.b16 %v6794
        %v7436 = vunpack.c.h.b16 %v6794
        %v7437 = vunpack.c.l.b16 %v6795
        %v7438 = vunpack.c.h.b16 %v6795
        %v7439 = vunpack.c.l.b16 %v6796
        %v7440 = vunpack.c.h.b16 %v6796
        %v7441 = vunpack.c.l.b16 %v6797
        %v7442 = vunpack.c.h.b16 %v6797
        %v7443 = vunpack.c.l.b16 %v6798
        %v7444 = vunpack.c.h.b16 %v6798
        %v7445 = vunpack.c.l.b16 %v6799
        %v7446 = vunpack.c.h.b16 %v6799
        %v7447 = vunpack.c.l.b16 %v6800
        %v7448 = vunpack.c.h.b16 %v6800
        %v7449 = vunpack.c.l.b16 %v6801
        %v7450 = vunpack.c.h.b16 %v6801
        %v7451 = vunpack.c.l.b16 %v6802
        %v7452 = vunpack.c.h.b16 %v6802
        %v7453 = vunpack.c.l.b16 %v6803
        %v7454 = vunpack.c.h.b16 %v6803
        %v7455 = vunpack.c.l.b16 %v6804
        %v7456 = vunpack.c.h.b16 %v6804
        %v7457 = vunpack.c.l.b16 %v6805
        %v7458 = vunpack.c.h.b16 %v6805
        %v7459 = vunpack.c.l.b16 %v6806
        %v7460 = vunpack.c.h.b16 %v6806
        %v7461 = vunpack.c.l.b16 %v6807
        %v7462 = vunpack.c.h.b16 %v6807
        %v7463 = vunpack.c.l.b16 %v6808
        %v7464 = vunpack.c.h.b16 %v6808
        %v7465 = vunpack.c.l.b16 %v6809
        %v7466 = vunpack.c.h.b16 %v6809
        %v7467 = vunpack.c.l.b16 %v6810
        %v7468 = vunpack.c.h.b16 %v6810
        %v7469 = vunpack.c.l.b16 %v6811
        %v7470 = vunpack.c.h.b16 %v6811
        %v7471 = vunpack.c.l.b16 %v6812
        %v7472 = vunpack.c.h.b16 %v6812
        %v7473 = vunpack.c.l.b16 %v6813
        %v7474 = vunpack.c.h.b16 %v6813
        %v7475 = vunpack.c.l.b16 %v6814
        %v7476 = vunpack.c.h.b16 %v6814
        %v7477 = vunpack.c.l.b16 %v6815
        %v7478 = vunpack.c.h.b16 %v6815
        %v7479 = vunpack.c.l.b16 %v6816
        %v7480 = vunpack.c.h.b16 %v6816
        %v7481 = vunpack.c.l.b16 %v6817
        %v7482 = vunpack.c.h.b16 %v6817
        %v7483 = vunpack.c.l.b16 %v6818
        %v7484 = vunpack.c.h.b16 %v6818
        %v7485 = vunpack.c.l.b16 %v6819
        %v7486 = vunpack.c.h.b16 %v6819
        %v7487 = vunpack.c.l.b16 %v6820
        %v7488 = vunpack.c.h.b16 %v6820
        %v7489 = vunpack.c.l.b16 %v6821
        %v7490 = vunpack.c.h.b16 %v6821
        %v7491 = vunpack.c.l.b16 %v6822
        %v7492 = vunpack.c.h.b16 %v6822
        %v7493 = vunpack.c.l.b16 %v6823
        %v7494 = vunpack.c.h.b16 %v6823
        %v7495 = vunpack.c.l.b16 %v6824
        %v7496 = vunpack.c.h.b16 %v6824
        %v7497 = vunpack.c.l.b16 %v6825
        %v7498 = vunpack.c.h.b16 %v6825
        %v7499 = vunpack.c.l.b16 %v6826
        %v7500 = vunpack.c.h.b16 %v6826
        %v7501 = vunpack.c.l.b16 %v6827
        %v7502 = vunpack.c.h.b16 %v6827
        %v7503 = vunpack.c.l.b16 %v6828
        %v7504 = vunpack.c.h.b16 %v6828
        %v7505 = vunpack.c.l.b16 %v6829
        %v7506 = vunpack.c.h.b16 %v6829
        %v7507 = vunpack.c.l.b16 %v6830
        %v7508 = vunpack.c.h.b16 %v6830
        %v7509 = vunpack.c.l.b16 %v6831
        %v7510 = vunpack.c.h.b16 %v6831
        %v7511 = vunpack.c.l.b16 %v6832
        %v7512 = vunpack.c.h.b16 %v6832
        %v7513 = vunpack.c.l.b16 %v6833
        %v7514 = vunpack.c.h.b16 %v6833
        %v7515 = vunpack.c.l.b16 %v6834
        %v7516 = vunpack.c.h.b16 %v6834
        %v7517 = vunpack.c.l.b16 %v6835
        %v7518 = vunpack.c.h.b16 %v6835
        %v7519 = vunpack.c.l.b16 %v6836
        %v7520 = vunpack.c.h.b16 %v6836
        %v7521 = vunpack.c.l.b16 %v6837
        %v7522 = vunpack.c.h.b16 %v6837
        %v7523 = vunpack.c.l.b16 %v6838
        %v7524 = vunpack.c.h.b16 %v6838
        %v7525 = vunpack.c.l.b16 %v6839
        %v7526 = vunpack.c.h.b16 %v6839
        %v7527 = vunpack.c.l.b16 %v6840
        %v7528 = vunpack.c.h.b16 %v6840
        %v7529 = vunpack.c.l.b16 %v6841
        %v7530 = vunpack.c.h.b16 %v6841
        %v7531 = vunpack.c.l.b16 %v6842
        %v7532 = vunpack.c.h.b16 %v6842
        %v7533 = vunpack.c.l.b16 %v6843
        %v7534 = vunpack.c.h.b16 %v6843
        %v7535 = vunpack.c.l.b16 %v6844
        %v7536 = vunpack.c.h.b16 %v6844
        %v7537 = vunpack.c.l.b16 %v6845
        %v7538 = vunpack.c.h.b16 %v6845
        %v7539 = vunpack.c.l.b16 %v6846
        %v7540 = vunpack.c.h.b16 %v6846
        %v7541 = vunpack.c.l.b16 %v6847
        %v7542 = vunpack.c.h.b16 %v6847
        %v7543 = vunpack.c.l.b16 %v6848
        %v7544 = vunpack.c.h.b16 %v6848
        %v7545 = vunpack.c.l.b16 %v6849
        %v7546 = vunpack.c.h.b16 %v6849
        %v7547 = vunpack.c.l.b16 %v6850
        %v7548 = vunpack.c.h.b16 %v6850
        %v7549 = vunpack.c.l.b16 %v6851
        %v7550 = vunpack.c.h.b16 %v6851
        %v7551 = vunpack.c.l.b16 %v6852
        %v7552 = vunpack.c.h.b16 %v6852
        %v7553 = vunpack.c.l.b16 %v6853
        %v7554 = vunpack.c.h.b16 %v6853
        %v7555 = vunpack.c.l.b16 %v6854
        %v7556 = vunpack.c.h.b16 %v6854
        %v7557 = vunpack.c.l.b16 %v6855
        %v7558 = vunpack.c.h.b16 %v6855
        %v7559 = vunpack.c.l.b16 %v6856
        %v7560 = vunpack.c.h.b16 %v6856
        %v7561 = vunpack.c.l.b16 %v6857
        %v7562 = vunpack.c.h.b16 %v6857
        %v7563 = vunpack.c.l.b16 %v6858
        %v7564 = vunpack.c.h.b16 %v6858
        %v7565 = vunpack.c.l.b16 %v6859
        %v7566 = vunpack.c.h.b16 %v6859
        %v7567 = vunpack.c.l.b16 %v6860
        %v7568 = vunpack.c.h.b16 %v6860
        %v7569 = vunpack.c.l.b16 %v6861
        %v7570 = vunpack.c.h.b16 %v6861
        %v7571 = vunpack.c.l.b16 %v6862
        %v7572 = vunpack.c.h.b16 %v6862
        %v7573 = vunpack.c.l.b16 %v6863
        %v7574 = vunpack.c.h.b16 %v6863
        %v7575 = vunpack.c.l.b16 %v6864
        %v7576 = vunpack.c.h.b16 %v6864
        %v7577 = vunpack.c.l.b16 %v6865
        %v7578 = vunpack.c.h.b16 %v6865
        %v7579 = vunpack.c.l.b16 %v6866
        %v7580 = vunpack.c.h.b16 %v6866
        %v7581 = vunpack.c.l.b16 %v6867
        %v7582 = vunpack.c.h.b16 %v6867
        %v7583 = vunpack.c.l.b16 %v6868
        %v7584 = vunpack.c.h.b16 %v6868
        %v7585 = vunpack.c.l.b16 %v6869
        %v7586 = vunpack.c.h.b16 %v6869
        %v7587 = vunpack.c.l.b16 %v6870
        %v7588 = vunpack.c.h.b16 %v6870
        %v7589 = vunpack.c.l.b16 %v6871
        %v7590 = vunpack.c.h.b16 %v6871
        %v7591 = vunpack.c.l.b16 %v6872
        %v7592 = vunpack.c.h.b16 %v6872
        %v7593 = vunpack.c.l.b16 %v6873
        %v7594 = vunpack.c.h.b16 %v6873
        %v7595 = vunpack.c.l.b16 %v6874
        %v7596 = vunpack.c.h.b16 %v6874
        %v7597 = vunpack.c.l.b16 %v6875
        %v7598 = vunpack.c.h.b16 %v6875
        %v7599 = vunpack.c.l.b16 %v6876
        %v7600 = vunpack.c.h.b16 %v6876
        %v7601 = vunpack.c.l.b16 %v6877
        %v7602 = vunpack.c.h.b16 %v6877
        %v7603 = vunpack.c.l.b16 %v6878
        %v7604 = vunpack.c.h.b16 %v6878
        %v7605 = vunpack.c.l.b16 %v6879
        %v7606 = vunpack.c.h.b16 %v6879
        %v7607 = vunpack.c.l.b16 %v6880
        %v7608 = vunpack.c.h.b16 %v6880
        %v7609 = vunpack.c.l.b16 %v6881
        %v7610 = vunpack.c.h.b16 %v6881
        %v7611 = vunpack.c.l.b16 %v6882
        %v7612 = vunpack.c.h.b16 %v6882
        %v7613 = vunpack.c.l.b16 %v6883
        %v7614 = vunpack.c.h.b16 %v6883
        %v7615 = vunpack.c.l.b16 %v6884
        %v7616 = vunpack.c.h.b16 %v6884
        %v7617 = vunpack.c.l.b16 %v6885
        %v7618 = vunpack.c.h.b16 %v6885
        %v7619 = vunpack.c.l.b16 %v6886
        %v7620 = vunpack.c.h.b16 %v6886
        %v7621 = vunpack.c.l.b16 %v6887
        %v7622 = vunpack.c.h.b16 %v6887
        %v7623 = vunpack.c.l.b16 %v6888
        %v7624 = vunpack.c.h.b16 %v6888
        %v7625 = vunpack.c.l.b16 %v6889
        %v7626 = vunpack.c.h.b16 %v6889
        %v7627 = vunpack.c.l.b16 %v6890
        %v7628 = vunpack.c.h.b16 %v6890
        %v7629 = vunpack.c.l.b16 %v6891
        %v7630 = vunpack.c.h.b16 %v6891
        %v7631 = vunpack.c.l.b16 %v6892
        %v7632 = vunpack.c.h.b16 %v6892
        %v7633 = vunpack.c.l.b16 %v6893
        %v7634 = vunpack.c.h.b16 %v6893
        %v7635 = vunpack.c.l.b16 %v6894
        %v7636 = vunpack.c.h.b16 %v6894
        %v7637 = vunpack.c.l.b16 %v6895
        %v7638 = vunpack.c.h.b16 %v6895
        %v7639 = vunpack.c.l.b16 %v6896
        %v7640 = vunpack.c.h.b16 %v6896
        %v7641 = vunpack.c.l.b16 %v6897
        %v7642 = vunpack.c.h.b16 %v6897
        %v7643 = vunpack.c.l.b16 %v6898
        %v7644 = vunpack.c.h.b16 %v6898
        %v7645 = vunpack.c.l.b16 %v6899
        %v7646 = vunpack.c.h.b16 %v6899
        %v7647 = vunpack.c.l.b16 %v6900
        %v7648 = vunpack.c.h.b16 %v6900
        %v7649 = vunpack.c.l.b16 %v6901
        %v7650 = vunpack.c.h.b16 %v6901
        %v7651 = vunpack.c.l.b16 %v6902
        %v7652 = vunpack.c.h.b16 %v6902
        %v7653 = vunpack.c.l.b16 %v6903
        %v7654 = vunpack.c.h.b16 %v6903
        %v7655 = vunpack.c.l.b16 %v6904
        %v7656 = vunpack.c.h.b16 %v6904
        %v7657 = vunpack.c.l.b16 %v6905
        %v7658 = vunpack.c.h.b16 %v6905
        %v7659 = vunpack.c.l.b16 %v6906
        %v7660 = vunpack.c.h.b16 %v6906
        %v7661 = vunpack.c.l.b16 %v6907
        %v7662 = vunpack.c.h.b16 %v6907
        %v7663 = vunpack.c.l.b16 %v6908
        %v7664 = vunpack.c.h.b16 %v6908
        %v7665 = vunpack.c.l.b16 %v6909
        %v7666 = vunpack.c.h.b16 %v6909
        %v7667 = vunpack.c.l.b16 %v6910
        %v7668 = vunpack.c.h.b16 %v6910
        %v7669 = vunpack.c.l.b16 %v6911
        %v7670 = vunpack.c.h.b16 %v6911
        %v7671 = vunpack.c.l.b16 %v6912
        %v7672 = vunpack.c.h.b16 %v6912
        %v7673 = vunpack.c.l.b16 %v6913
        %v7674 = vunpack.c.h.b16 %v6913
        %v7675 = vunpack.c.l.b16 %v6914
        %v7676 = vunpack.c.h.b16 %v6914
        %v7677 = vunpack.c.l.b16 %v6915
        %v7678 = vunpack.c.h.b16 %v6915
        %v7679 = vunpack.c.l.b16 %v6916
        %v7680 = vunpack.c.h.b16 %v6916
        %v7681 = vunpack.c.l.b16 %v6917
        %v7682 = vunpack.c.h.b16 %v6917
        %v7683 = vunpack.c.l.b16 %v6918
        %v7684 = vunpack.c.h.b16 %v6918
        %v7685 = vunpack.c.l.b16 %v6919
        %v7686 = vunpack.c.h.b16 %v6919
        %v7687 = vunpack.c.l.b16 %v6920
        %v7688 = vunpack.c.h.b16 %v6920
        %v7689 = vpack.c.b16 %v7181, %v7177
        %v7690 = vpack.c.b16 %v7182, %v7178
        %v7691 = vpack.c.b16 %v7183, %v7179
        %v7692 = vpack.c.b16 %v7184, %v7180
        %v7693 = vpack.c.b16 %v7189, %v7185
        %v7694 = vpack.c.b16 %v7190, %v7186
        %v7695 = vpack.c.b16 %v7191, %v7187
        %v7696 = vpack.c.b16 %v7192, %v7188
        %v7697 = vpack.c.b16 %v7197, %v7193
        %v7698 = vpack.c.b16 %v7198, %v7194
        %v7699 = vpack.c.b16 %v7199, %v7195
        %v7700 = vpack.c.b16 %v7200, %v7196
        %v7701 = vpack.c.b16 %v7205, %v7201
        %v7702 = vpack.c.b16 %v7206, %v7202
        %v7703 = vpack.c.b16 %v7207, %v7203
        %v7704 = vpack.c.b16 %v7208, %v7204
        %v7705 = vpack.c.b16 %v7213, %v7209
        %v7706 = vpack.c.b16 %v7214, %v7210
        %v7707 = vpack.c.b16 %v7215, %v7211
        %v7708 = vpack.c.b16 %v7216, %v7212
        %v7709 = vpack.c.b16 %v7221, %v7217
        %v7710 = vpack.c.b16 %v7222, %v7218
        %v7711 = vpack.c.b16 %v7223, %v7219
        %v7712 = vpack.c.b16 %v7224, %v7220
        %v7713 = vpack.c.b16 %v7229, %v7225
        %v7714 = vpack.c.b16 %v7230, %v7226
        %v7715 = vpack.c.b16 %v7231, %v7227
        %v7716 = vpack.c.b16 %v7232, %v7228
        %v7717 = vpack.c.b16 %v7237, %v7233
        %v7718 = vpack.c.b16 %v7238, %v7234
        %v7719 = vpack.c.b16 %v7239, %v7235
        %v7720 = vpack.c.b16 %v7240, %v7236
        %v7721 = vpack.c.b16 %v7245, %v7241
        %v7722 = vpack.c.b16 %v7246, %v7242
        %v7723 = vpack.c.b16 %v7247, %v7243
        %v7724 = vpack.c.b16 %v7248, %v7244
        %v7725 = vpack.c.b16 %v7253, %v7249
        %v7726 = vpack.c.b16 %v7254, %v7250
        %v7727 = vpack.c.b16 %v7255, %v7251
        %v7728 = vpack.c.b16 %v7256, %v7252
        %v7729 = vpack.c.b16 %v7261, %v7257
        %v7730 = vpack.c.b16 %v7262, %v7258
        %v7731 = vpack.c.b16 %v7263, %v7259
        %v7732 = vpack.c.b16 %v7264, %v7260
        %v7733 = vpack.c.b16 %v7269, %v7265
        %v7734 = vpack.c.b16 %v7270, %v7266
        %v7735 = vpack.c.b16 %v7271, %v7267
        %v7736 = vpack.c.b16 %v7272, %v7268
        %v7737 = vpack.c.b16 %v7277, %v7273
        %v7738 = vpack.c.b16 %v7278, %v7274
        %v7739 = vpack.c.b16 %v7279, %v7275
        %v7740 = vpack.c.b16 %v7280, %v7276
        %v7741 = vpack.c.b16 %v7285, %v7281
        %v7742 = vpack.c.b16 %v7286, %v7282
        %v7743 = vpack.c.b16 %v7287, %v7283
        %v7744 = vpack.c.b16 %v7288, %v7284
        %v7745 = vpack.c.b16 %v7293, %v7289
        %v7746 = vpack.c.b16 %v7294, %v7290
        %v7747 = vpack.c.b16 %v7295, %v7291
        %v7748 = vpack.c.b16 %v7296, %v7292
        %v7749 = vpack.c.b16 %v7301, %v7297
        %v7750 = vpack.c.b16 %v7302, %v7298
        %v7751 = vpack.c.b16 %v7303, %v7299
        %v7752 = vpack.c.b16 %v7304, %v7300
        %v7753 = vpack.c.b16 %v7309, %v7305
        %v7754 = vpack.c.b16 %v7310, %v7306
        %v7755 = vpack.c.b16 %v7311, %v7307
        %v7756 = vpack.c.b16 %v7312, %v7308
        %v7757 = vpack.c.b16 %v7317, %v7313
        %v7758 = vpack.c.b16 %v7318, %v7314
        %v7759 = vpack.c.b16 %v7319, %v7315
        %v7760 = vpack.c.b16 %v7320, %v7316
        %v7761 = vpack.c.b16 %v7325, %v7321
        %v7762 = vpack.c.b16 %v7326, %v7322
        %v7763 = vpack.c.b16 %v7327, %v7323
        %v7764 = vpack.c.b16 %v7328, %v7324
        %v7765 = vpack.c.b16 %v7333, %v7329
        %v7766 = vpack.c.b16 %v7334, %v7330
        %v7767 = vpack.c.b16 %v7335, %v7331
        %v7768 = vpack.c.b16 %v7336, %v7332
        %v7769 = vpack.c.b16 %v7341, %v7337
        %v7770 = vpack.c.b16 %v7342, %v7338
        %v7771 = vpack.c.b16 %v7343, %v7339
        %v7772 = vpack.c.b16 %v7344, %v7340
        %v7773 = vpack.c.b16 %v7349, %v7345
        %v7774 = vpack.c.b16 %v7350, %v7346
        %v7775 = vpack.c.b16 %v7351, %v7347
        %v7776 = vpack.c.b16 %v7352, %v7348
        %v7777 = vpack.c.b16 %v7357, %v7353
        %v7778 = vpack.c.b16 %v7358, %v7354
        %v7779 = vpack.c.b16 %v7359, %v7355
        %v7780 = vpack.c.b16 %v7360, %v7356
        %v7781 = vpack.c.b16 %v7365, %v7361
        %v7782 = vpack.c.b16 %v7366, %v7362
        %v7783 = vpack.c.b16 %v7367, %v7363
        %v7784 = vpack.c.b16 %v7368, %v7364
        %v7785 = vpack.c.b16 %v7373, %v7369
        %v7786 = vpack.c.b16 %v7374, %v7370
        %v7787 = vpack.c.b16 %v7375, %v7371
        %v7788 = vpack.c.b16 %v7376, %v7372
        %v7789 = vpack.c.b16 %v7381, %v7377
        %v7790 = vpack.c.b16 %v7382, %v7378
        %v7791 = vpack.c.b16 %v7383, %v7379
        %v7792 = vpack.c.b16 %v7384, %v7380
        %v7793 = vpack.c.b16 %v7389, %v7385
        %v7794 = vpack.c.b16 %v7390, %v7386
        %v7795 = vpack.c.b16 %v7391, %v7387
        %v7796 = vpack.c.b16 %v7392, %v7388
        %v7797 = vpack.c.b16 %v7397, %v7393
        %v7798 = vpack.c.b16 %v7398, %v7394
        %v7799 = vpack.c.b16 %v7399, %v7395
        %v7800 = vpack.c.b16 %v7400, %v7396
        %v7801 = vpack.c.b16 %v7405, %v7401
        %v7802 = vpack.c.b16 %v7406, %v7402
        %v7803 = vpack.c.b16 %v7407, %v7403
        %v7804 = vpack.c.b16 %v7408, %v7404
        %v7805 = vpack.c.b16 %v7413, %v7409
        %v7806 = vpack.c.b16 %v7414, %v7410
        %v7807 = vpack.c.b16 %v7415, %v7411
        %v7808 = vpack.c.b16 %v7416, %v7412
        %v7809 = vpack.c.b16 %v7421, %v7417
        %v7810 = vpack.c.b16 %v7422, %v7418
        %v7811 = vpack.c.b16 %v7423, %v7419
        %v7812 = vpack.c.b16 %v7424, %v7420
        %v7813 = vpack.c.b16 %v7429, %v7425
        %v7814 = vpack.c.b16 %v7430, %v7426
        %v7815 = vpack.c.b16 %v7431, %v7427
        %v7816 = vpack.c.b16 %v7432, %v7428
        %v7817 = vpack.c.b16 %v7437, %v7433
        %v7818 = vpack.c.b16 %v7438, %v7434
        %v7819 = vpack.c.b16 %v7439, %v7435
        %v7820 = vpack.c.b16 %v7440, %v7436
        %v7821 = vpack.c.b16 %v7445, %v7441
        %v7822 = vpack.c.b16 %v7446, %v7442
        %v7823 = vpack.c.b16 %v7447, %v7443
        %v7824 = vpack.c.b16 %v7448, %v7444
        %v7825 = vpack.c.b16 %v7453, %v7449
        %v7826 = vpack.c.b16 %v7454, %v7450
        %v7827 = vpack.c.b16 %v7455, %v7451
        %v7828 = vpack.c.b16 %v7456, %v7452
        %v7829 = vpack.c.b16 %v7461, %v7457
        %v7830 = vpack.c.b16 %v7462, %v7458
        %v7831 = vpack.c.b16 %v7463, %v7459
        %v7832 = vpack.c.b16 %v7464, %v7460
        %v7833 = vpack.c.b16 %v7469, %v7465
        %v7834 = vpack.c.b16 %v7470, %v7466
        %v7835 = vpack.c.b16 %v7471, %v7467
        %v7836 = vpack.c.b16 %v7472, %v7468
        %v7837 = vpack.c.b16 %v7477, %v7473
        %v7838 = vpack.c.b16 %v7478, %v7474
        %v7839 = vpack.c.b16 %v7479, %v7475
        %v7840 = vpack.c.b16 %v7480, %v7476
        %v7841 = vpack.c.b16 %v7485, %v7481
        %v7842 = vpack.c.b16 %v7486, %v7482
        %v7843 = vpack.c.b16 %v7487, %v7483
        %v7844 = vpack.c.b16 %v7488, %v7484
        %v7845 = vpack.c.b16 %v7493, %v7489
        %v7846 = vpack.c.b16 %v7494, %v7490
        %v7847 = vpack.c.b16 %v7495, %v7491
        %v7848 = vpack.c.b16 %v7496, %v7492
        %v7849 = vpack.c.b16 %v7501, %v7497
        %v7850 = vpack.c.b16 %v7502, %v7498
        %v7851 = vpack.c.b16 %v7503, %v7499
        %v7852 = vpack.c.b16 %v7504, %v7500
        %v7853 = vpack.c.b16 %v7509, %v7505
        %v7854 = vpack.c.b16 %v7510, %v7506
        %v7855 = vpack.c.b16 %v7511, %v7507
        %v7856 = vpack.c.b16 %v7512, %v7508
        %v7857 = vpack.c.b16 %v7517, %v7513
        %v7858 = vpack.c.b16 %v7518, %v7514
        %v7859 = vpack.c.b16 %v7519, %v7515
        %v7860 = vpack.c.b16 %v7520, %v7516
        %v7861 = vpack.c.b16 %v7525, %v7521
        %v7862 = vpack.c.b16 %v7526, %v7522
        %v7863 = vpack.c.b16 %v7527, %v7523
        %v7864 = vpack.c.b16 %v7528, %v7524
        %v7865 = vpack.c.b16 %v7533, %v7529
        %v7866 = vpack.c.b16 %v7534, %v7530
        %v7867 = vpack.c.b16 %v7535, %v7531
        %v7868 = vpack.c.b16 %v7536, %v7532
        %v7869 = vpack.c.b16 %v7541, %v7537
        %v7870 = vpack.c.b16 %v7542, %v7538
        %v7871 = vpack.c.b16 %v7543, %v7539
        %v7872 = vpack.c.b16 %v7544, %v7540
        %v7873 = vpack.c.b16 %v7549, %v7545
        %v7874 = vpack.c.b16 %v7550, %v7546
        %v7875 = vpack.c.b16 %v7551, %v7547
        %v7876 = vpack.c.b16 %v7552, %v7548
        %v7877 = vpack.c.b16 %v7557, %v7553
        %v7878 = vpack.c.b16 %v7558, %v7554
        %v7879 = vpack.c.b16 %v7559, %v7555
        %v7880 = vpack.c.b16 %v7560, %v7556
        %v7881 = vpack.c.b16 %v7565, %v7561
        %v7882 = vpack.c.b16 %v7566, %v7562
        %v7883 = vpack.c.b16 %v7567, %v7563
        %v7884 = vpack.c.b16 %v7568, %v7564
        %v7885 = vpack.c.b16 %v7573, %v7569
        %v7886 = vpack.c.b16 %v7574, %v7570
        %v7887 = vpack.c.b16 %v7575, %v7571
        %v7888 = vpack.c.b16 %v7576, %v7572
        %v7889 = vpack.c.b16 %v7581, %v7577
        %v7890 = vpack.c.b16 %v7582, %v7578
        %v7891 = vpack.c.b16 %v7583, %v7579
        %v7892 = vpack.c.b16 %v7584, %v7580
        %v7893 = vpack.c.b16 %v7589, %v7585
        %v7894 = vpack.c.b16 %v7590, %v7586
        %v7895 = vpack.c.b16 %v7591, %v7587
        %v7896 = vpack.c.b16 %v7592, %v7588
        %v7897 = vpack.c.b16 %v7597, %v7593
        %v7898 = vpack.c.b16 %v7598, %v7594
        %v7899 = vpack.c.b16 %v7599, %v7595
        %v7900 = vpack.c.b16 %v7600, %v7596
        %v7901 = vpack.c.b16 %v7605, %v7601
        %v7902 = vpack.c.b16 %v7606, %v7602
        %v7903 = vpack.c.b16 %v7607, %v7603
        %v7904 = vpack.c.b16 %v7608, %v7604
        %v7905 = vpack.c.b16 %v7613, %v7609
        %v7906 = vpack.c.b16 %v7614, %v7610
        %v7907 = vpack.c.b16 %v7615, %v7611
        %v7908 = vpack.c.b16 %v7616, %v7612
        %v7909 = vpack.c.b16 %v7621, %v7617
        %v7910 = vpack.c.b16 %v7622, %v7618
        %v7911 = vpack.c.b16 %v7623, %v7619
        %v7912 = vpack.c.b16 %v7624, %v7620
        %v7913 = vpack.c.b16 %v7629, %v7625
        %v7914 = vpack.c.b16 %v7630, %v7626
        %v7915 = vpack.c.b16 %v7631, %v7627
        %v7916 = vpack.c.b16 %v7632, %v7628
        %v7917 = vpack.c.b16 %v7637, %v7633
        %v7918 = vpack.c.b16 %v7638, %v7634
        %v7919 = vpack.c.b16 %v7639, %v7635
        %v7920 = vpack.c.b16 %v7640, %v7636
        %v7921 = vpack.c.b16 %v7645, %v7641
        %v7922 = vpack.c.b16 %v7646, %v7642
        %v7923 = vpack.c.b16 %v7647, %v7643
        %v7924 = vpack.c.b16 %v7648, %v7644
        %v7925 = vpack.c.b16 %v7653, %v7649
        %v7926 = vpack.c.b16 %v7654, %v7650
        %v7927 = vpack.c.b16 %v7655, %v7651
        %v7928 = vpack.c.b16 %v7656, %v7652
        %v7929 = vpack.c.b16 %v7661, %v7657
        %v7930 = vpack.c.b16 %v7662, %v7658
        %v7931 = vpack.c.b16 %v7663, %v7659
        %v7932 = vpack.c.b16 %v7664, %v7660
        %v7933 = vpack.c.b16 %v7669, %v7665
        %v7934 = vpack.c.b16 %v7670, %v7666
        %v7935 = vpack.c.b16 %v7671, %v7667
        %v7936 = vpack.c.b16 %v7672, %v7668
        %v7937 = vpack.c.b16 %v7677, %v7673
        %v7938 = vpack.c.b16 %v7678, %v7674
        %v7939 = vpack.c.b16 %v7679, %v7675
        %v7940 = vpack.c.b16 %v7680, %v7676
        %v7941 = vpack.c.b16 %v7685, %v7681
        %v7942 = vpack.c.b16 %v7686, %v7682
        %v7943 = vpack.c.b16 %v7687, %v7683
        %v7944 = vpack.c.b16 %v7688, %v7684
        %8201 = vmatprep.subr.bf16.mxu0 %v7690
        %8202 = vmatpush1.bf16.msra.mxu0 %v7689
        %8203 = vmatprep.subr.bf16.mxu0 %v7694
        %8204 = vmatpush1.bf16.msra.mxu0 %v7693
        %8205 = vmatprep.subr.bf16.mxu0 %v7698
        %8206 = vmatpush1.bf16.msra.mxu0 %v7697
        %8207 = vmatprep.subr.bf16.mxu0 %v7702
        %8208 = vmatpush1.bf16.msra.mxu0 %v7701
        %8209 = vmatprep.subr.bf16.mxu0 %v7706
        %8210 = vmatpush1.bf16.msra.mxu0 %v7705
        %8211 = vmatprep.subr.bf16.mxu0 %v7710
        %8212 = vmatpush1.bf16.msra.mxu0 %v7709
        %8213 = vmatprep.subr.bf16.mxu0 %v7714
        %8214 = vmatpush1.bf16.msra.mxu0 %v7713
        %8215 = vmatprep.subr.bf16.mxu0 %v7718
        %8216 = vmatpush1.bf16.msra.mxu0 %v7717
        %8217 = vmatprep.subr.bf16.mxu0 %v7722
        %8218 = vmatpush1.bf16.msra.mxu0 %v7721
        %8219 = vmatprep.subr.bf16.mxu0 %v7726
        %8220 = vmatpush1.bf16.msra.mxu0 %v7725
        %8221 = vmatprep.subr.bf16.mxu0 %v7730
        %8222 = vmatpush1.bf16.msra.mxu0 %v7729
        %8223 = vmatprep.subr.bf16.mxu0 %v7734
        %8224 = vmatpush1.bf16.msra.mxu0 %v7733
        %8225 = vmatprep.subr.bf16.mxu0 %v7738
        %8226 = vmatpush1.bf16.msra.mxu0 %v7737
        %8227 = vmatprep.subr.bf16.mxu0 %v7742
        %8228 = vmatpush1.bf16.msra.mxu0 %v7741
        %8229 = vmatprep.subr.bf16.mxu0 %v7746
        %8230 = vmatpush1.bf16.msra.mxu0 %v7745
        %8231 = vmatprep.subr.bf16.mxu0 %v7750
        %8232 = vmatpush1.bf16.msra.mxu0 %v7749
        %8233 = vmatprep.mubr.bf16.mxu0 %v6562
        %8234 = vmatmul.mubr.bf16.gmra.mrb[0].mxu0 %v6561
        %v8235 = vpop.f32.mrb[0].mxu0
        %v8236 = vadd.f32 0.0, %v8235
        %v8237 = vpop.f32.mrb[0].mxu0
        %v8238 = vadd.f32 0.0, %v8237
        %v8239 = vpop.f32.mrb[0].mxu0
        %v8240 = vadd.f32 0.0, %v8239
        %v8241 = vpop.f32.mrb[0].mxu0
        %v8242 = vadd.f32 0.0, %v8241
        %8243 = vmatprep.mubr.bf16.mxu0 %v6570
        %8244 = vmatmul.mubr.bf16.gmra.mrb[0].mxu0 %v6569
        %v8245 = vpop.f32.mrb[0].mxu0
        %v8246 = vadd.f32 0.0, %v8245
        %v8247 = vpop.f32.mrb[0].mxu0
        %v8248 = vadd.f32 0.0, %v8247
        %v8249 = vpop.f32.mrb[0].mxu0
        %v8250 = vadd.f32 0.0, %v8249
        %v8251 = vpop.f32.mrb[0].mxu0
        %v8252 = vadd.f32 0.0, %v8251
        %8253 = vmatprep.mubr.bf16.mxu0 %v6578
        %8254 = vmatmul.mubr.bf16.gmra.mrb[0].mxu0 %v6577
        %v8255 = vpop.f32.mrb[0].mxu0
        %v8256 = vadd.f32 0.0, %v8255
        %v8257 = vpop.f32.mrb[0].mxu0
        %v8258 = vadd.f32 0.0, %v8257
        %v8259 = vpop.f32.mrb[0].mxu0
        %v8260 = vadd.f32 0.0, %v8259
        %v8261 = vpop.f32.mrb[0].mxu0
        %v8262 = vadd.f32 0.0, %v8261
        %8263 = vmatprep.mubr.bf16.mxu0 %v6586
        %8264 = vmatmul.mubr.bf16.gmra.mrb[0].mxu0 %v6585
        %v8265 = vpop.f32.mrb[0].mxu0
        %v8266 = vadd.f32 0.0, %v8265
        %v8267 = vpop.f32.mrb[0].mxu0
        %v8268 = vadd.f32 0.0, %v8267
        %v8269 = vpop.f32.mrb[0].mxu0
        %v8270 = vadd.f32 0.0, %v8269
        %v8271 = vpop.f32.mrb[0].mxu0
        %v8272 = vadd.f32 0.0, %v8271
        %8273 = vmatprep.mubr.bf16.mxu0 %v6594
        %8274 = vmatmul.mubr.bf16.gmra.mrb[0].mxu0 %v6593
        %v8275 = vpop.f32.mrb[0].mxu0
        %v8276 = vadd.f32 0.0, %v8275
        %v8277 = vpop.f32.mrb[0].mxu0
        %v8278 = vadd.f32 0.0, %v8277
        %v8279 = vpop.f32.mrb[0].mxu0
        %v8280 = vadd.f32 0.0, %v8279
        %v8281 = vpop.f32.mrb[0].mxu0
        %v8282 = vadd.f32 0.0, %v8281
        %8283 = vmatprep.mubr.bf16.mxu0 %v6602
        %8284 = vmatmul.mubr.bf16.gmra.mrb[0].mxu0 %v6601
        %v8285 = vpop.f32.mrb[0].mxu0
        %v8286 = vadd.f32 0.0, %v8285
        %v8287 = vpop.f32.mrb[0].mxu0
        %v8288 = vadd.f32 0.0, %v8287
        %v8289 = vpop.f32.mrb[0].mxu0
        %v8290 = vadd.f32 0.0, %v8289
        %v8291 = vpop.f32.mrb[0].mxu0
        %v8292 = vadd.f32 0.0, %v8291
        %8293 = vmatprep.mubr.bf16.mxu0 %v6610
        %8294 = vmatmul.mubr.bf16.gmra.mrb[0].mxu0 %v6609
        %v8295 = vpop.f32.mrb[0].mxu0
        %v8296 = vadd.f32 0.0, %v8295
        %v8297 = vpop.f32.mrb[0].mxu0
        %v8298 = vadd.f32 0.0, %v8297
        %v8299 = vpop.f32.mrb[0].mxu0
        %v8300 = vadd.f32 0.0, %v8299
        %v8301 = vpop.f32.mrb[0].mxu0
        %v8302 = vadd.f32 0.0, %v8301
        %8303 = vmatprep.mubr.bf16.mxu0 %v6618
        %8304 = vmatmul.mubr.bf16.gmra.mrb[0].mxu0 %v6617
        %v8305 = vpop.f32.mrb[0].mxu0
        %v8306 = vadd.f32 0.0, %v8305
        %v8307 = vpop.f32.mrb[0].mxu0
        %v8308 = vadd.f32 0.0, %v8307
        %v8309 = vpop.f32.mrb[0].mxu0
        %v8310 = vadd.f32 0.0, %v8309
        %v8311 = vpop.f32.mrb[0].mxu0
        %v8312 = vadd.f32 0.0, %v8311
        %8313 = vmatprep.mubr.bf16.mxu0 %v6626
        %8314 = vmatmul.mubr.bf16.gmra.mrb[0].mxu0 %v6625
        %v8315 = vpop.f32.mrb[0].mxu0
        %v8316 = vadd.f32 0.0, %v8315
        %v8317 = vpop.f32.mrb[0].mxu0
        %v8318 = vadd.f32 0.0, %v8317
        %v8319 = vpop.f32.mrb[0].mxu0
        %v8320 = vadd.f32 0.0, %v8319
        %v8321 = vpop.f32.mrb[0].mxu0
        %v8322 = vadd.f32 0.0, %v8321
        %8323 = vmatprep.mubr.bf16.mxu0 %v6634
        %8324 = vmatmul.mubr.bf16.gmra.mrb[0].mxu0 %v6633
        %v8325 = vpop.f32.mrb[0].mxu0
        %v8326 = vadd.f32 0.0, %v8325
        %v8327 = vpop.f32.mrb[0].mxu0
        %v8328 = vadd.f32 0.0, %v8327
        %v8329 = vpop.f32.mrb[0].mxu0
        %v8330 = vadd.f32 0.0, %v8329
        %v8331 = vpop.f32.mrb[0].mxu0
        %v8332 = vadd.f32 0.0, %v8331
        %8333 = vmatprep.mubr.bf16.mxu0 %v6642
        %8334 = vmatmul.mubr.bf16.gmra.mrb[0].mxu0 %v6641
        %v8335 = vpop.f32.mrb[0].mxu0
        %v8336 = vadd.f32 0.0, %v8335
        %v8337 = vpop.f32.mrb[0].mxu0
        %v8338 = vadd.f32 0.0, %v8337
        %v8339 = vpop.f32.mrb[0].mxu0
        %v8340 = vadd.f32 0.0, %v8339
        %v8341 = vpop.f32.mrb[0].mxu0
        %v8342 = vadd.f32 0.0, %v8341
        %8343 = vmatprep.mubr.bf16.mxu0 %v6650
        %8344 = vmatmul.mubr.bf16.gmra.mrb[0].mxu0 %v6649
        %v8345 = vpop.f32.mrb[0].mxu0
        %v8346 = vadd.f32 0.0, %v8345
        %v8347 = vpop.f32.mrb[0].mxu0
        %v8348 = vadd.f32 0.0, %v8347
        %v8349 = vpop.f32.mrb[0].mxu0
        %v8350 = vadd.f32 0.0, %v8349
        %v8351 = vpop.f32.mrb[0].mxu0
        %v8352 = vadd.f32 0.0, %v8351
        %8353 = vmatprep.mubr.bf16.mxu0 %v6658
        %8354 = vmatmul.mubr.bf16.gmra.mrb[0].mxu0 %v6657
        %v8355 = vpop.f32.mrb[0].mxu0
        %v8356 = vadd.f32 0.0, %v8355
        %v8357 = vpop.f32.mrb[0].mxu0
        %v8358 = vadd.f32 0.0, %v8357
        %v8359 = vpop.f32.mrb[0].mxu0
        %v8360 = vpop.f32.mrb[0].mxu0
        %8361 = vdwg.mxu0
        %8362 = vmatprep.subr.bf16.mxu0 %v7754
        %8363 = vmatpush1.bf16.msra.mxu0 %v7753
        %8364 = vmatprep.subr.bf16.mxu0 %v7758
        %8365 = vmatpush1.bf16.msra.mxu0 %v7757
        %8366 = vmatprep.subr.bf16.mxu0 %v7762
        %8367 = vmatpush1.bf16.msra.mxu0 %v7761
        %8368 = vmatprep.subr.bf16.mxu0 %v7766
        %8369 = vmatpush1.bf16.msra.mxu0 %v7765
        %8370 = vmatprep.subr.bf16.mxu0 %v7770
        %8371 = vmatpush1.bf16.msra.mxu0 %v7769
        %8372 = vmatprep.subr.bf16.mxu0 %v7774
        %8373 = vmatpush1.bf16.msra.mxu0 %v7773
        %8374 = vmatprep.subr.bf16.mxu0 %v7778
        %8375 = vmatpush1.bf16.msra.mxu0 %v7777
        %8376 = vmatprep.subr.bf16.mxu0 %v7782
        %8377 = vmatpush1.bf16.msra.mxu0 %v7781
        %8378 = vmatprep.subr.bf16.mxu0 %v7786
        %8379 = vmatpush1.bf16.msra.mxu0 %v7785
        %8380 = vmatprep.subr.bf16.mxu0 %v7790
        %8381 = vmatpush1.bf16.msra.mxu0 %v7789
        %8382 = vmatprep.subr.bf16.mxu0 %v7794
        %8383 = vmatpush1.bf16.msra.mxu0 %v7793
        %8384 = vmatprep.subr.bf16.mxu0 %v7798
        %8385 = vmatpush1.bf16.msra.mxu0 %v7797
        %8386 = vmatprep.subr.bf16.mxu0 %v7802
        %8387 = vmatpush1.bf16.msra.mxu0 %v7801
        %8388 = vmatprep.subr.bf16.mxu0 %v7806
        %8389 = vmatpush1.bf16.msra.mxu0 %v7805
        %8390 = vmatprep.subr.bf16.mxu0 %v7810
        %8391 = vmatpush1.bf16.msra.mxu0 %v7809
        %8392 = vmatprep.subr.bf16.mxu0 %v7814
        %8393 = vmatpush1.bf16.msra.mxu0 %v7813
        %8394 = vmatprep.mubr.bf16.mxu0 %v6564
        %8395 = vmatmul.mubr.bf16.gmra.mrb[0].mxu0 %v6563
        %v8396 = vpop.f32.mrb[0].mxu0
        %v8397 = vadd.f32 %v8236, %v8396
        %v8398 = vpop.f32.mrb[0].mxu0
        %v8399 = vadd.f32 %v8238, %v8398
        %v8400 = vpop.f32.mrb[0].mxu0
        %v8401 = vadd.f32 %v8240, %v8400
        %v8402 = vpop.f32.mrb[0].mxu0
        %v8403 = vadd.f32 %v8242, %v8402
        %8404 = vmatprep.mubr.bf16.mxu0 %v6572
        %8405 = vmatmul.mubr.bf16.gmra.mrb[0].mxu0 %v6571
        %v8406 = vpop.f32.mrb[0].mxu0
        %v8407 = vadd.f32 %v8246, %v8406
        %v8408 = vpop.f32.mrb[0].mxu0
        %v8409 = vadd.f32 %v8248, %v8408
        %v8410 = vpop.f32.mrb[0].mxu0
        %v8411 = vadd.f32 %v8250, %v8410
        %v8412 = vpop.f32.mrb[0].mxu0
        %v8413 = vadd.f32 %v8252, %v8412
        %8414 = vmatprep.mubr.bf16.mxu0 %v6580
        %8415 = vmatmul.mubr.bf16.gmra.mrb[0].mxu0 %v6579
        %v8416 = vpop.f32.mrb[0].mxu0
        %v8417 = vadd.f32 %v8256, %v8416
        %v8418 = vpop.f32.mrb[0].mxu0
        %v8419 = vadd.f32 %v8258, %v8418
        %v8420 = vpop.f32.mrb[0].mxu0
        %v8421 = vadd.f32 %v8260, %v8420
        %v8422 = vpop.f32.mrb[0].mxu0
        %v8423 = vadd.f32 %v8262, %v8422
        %8424 = vmatprep.mubr.bf16.mxu0 %v6588
        %8425 = vmatmul.mubr.bf16.gmra.mrb[0].mxu0 %v6587
        %v8426 = vpop.f32.mrb[0].mxu0
        %v8427 = vadd.f32 %v8266, %v8426
        %v8428 = vpop.f32.mrb[0].mxu0
        %v8429 = vadd.f32 %v8268, %v8428
        %v8430 = vpop.f32.mrb[0].mxu0
        %v8431 = vadd.f32 %v8270, %v8430
        %v8432 = vpop.f32.mrb[0].mxu0
        %v8433 = vadd.f32 %v8272, %v8432
        %8434 = vmatprep.mubr.bf16.mxu0 %v6596
        %8435 = vmatmul.mubr.bf16.gmra.mrb[0].mxu0 %v6595
        %v8436 = vpop.f32.mrb[0].mxu0
        %v8437 = vadd.f32 %v8276, %v8436
        %v8438 = vpop.f32.mrb[0].mxu0
        %v8439 = vadd.f32 %v8278, %v8438
        %v8440 = vpop.f32.mrb[0].mxu0
        %v8441 = vadd.f32 %v8280, %v8440
        %v8442 = vpop.f32.mrb[0].mxu0
        %v8443 = vadd.f32 %v8282, %v8442
        %8444 = vmatprep.mubr.bf16.mxu0 %v6604
        %8445 = vmatmul.mubr.bf16.gmra.mrb[0].mxu0 %v6603
        %v8446 = vpop.f32.mrb[0].mxu0
        %v8447 = vadd.f32 %v8286, %v8446
        %v8448 = vpop.f32.mrb[0].mxu0
        %v8449 = vadd.f32 %v8288, %v8448
        %v8450 = vpop.f32.mrb[0].mxu0
        %v8451 = vadd.f32 %v8290, %v8450
        %v8452 = vpop.f32.mrb[0].mxu0
        %v8453 = vadd.f32 %v8292, %v8452
        %8454 = vmatprep.mubr.bf16.mxu0 %v6612
        %8455 = vmatmul.mubr.bf16.gmra.mrb[0].mxu0 %v6611
        %v8456 = vpop.f32.mrb[0].mxu0
        %v8457 = vadd.f32 %v8296, %v8456
        %v8458 = vpop.f32.mrb[0].mxu0
        %v8459 = vadd.f32 %v8298, %v8458
        %v8460 = vpop.f32.mrb[0].mxu0
        %v8461 = vadd.f32 %v8300, %v8460
        %v8462 = vpop.f32.mrb[0].mxu0
        %v8463 = vadd.f32 %v8302, %v8462
        %8464 = vmatprep.mubr.bf16.mxu0 %v6620
        %8465 = vmatmul.mubr.bf16.gmra.mrb[0].mxu0 %v6619
        %v8466 = vpop.f32.mrb[0].mxu0
        %v8467 = vadd.f32 %v8306, %v8466
        %v8468 = vpop.f32.mrb[0].mxu0
        %v8469 = vadd.f32 %v8308, %v8468
        %v8470 = vpop.f32.mrb[0].mxu0
        %v8471 = vadd.f32 %v8310, %v8470
        %v8472 = vpop.f32.mrb[0].mxu0
        %v8473 = vadd.f32 %v8312, %v8472
        %8474 = vmatprep.mubr.bf16.mxu0 %v6628
        %8475 = vmatmul.mubr.bf16.gmra.mrb[0].mxu0 %v6627
        %v8476 = vpop.f32.mrb[0].mxu0
        %v8477 = vadd.f32 %v8316, %v8476
        %v8478 = vpop.f32.mrb[0].mxu0
        %v8479 = vadd.f32 %v8318, %v8478
        %v8480 = vpop.f32.mrb[0].mxu0
        %v8481 = vadd.f32 %v8320, %v8480
        %v8482 = vpop.f32.mrb[0].mxu0
        %v8483 = vadd.f32 %v8322, %v8482
        %8484 = vmatprep.mubr.bf16.mxu0 %v6636
        %8485 = vmatmul.mubr.bf16.gmra.mrb[0].mxu0 %v6635
        %v8486 = vpop.f32.mrb[0].mxu0
        %v8487 = vadd.f32 %v8326, %v8486
        %v8488 = vpop.f32.mrb[0].mxu0
        %v8489 = vadd.f32 %v8328, %v8488
        %v8490 = vpop.f32.mrb[0].mxu0
        %v8491 = vadd.f32 %v8330, %v8490
        %v8492 = vpop.f32.mrb[0].mxu0
        %v8493 = vadd.f32 %v8332, %v8492
        %8494 = vmatprep.mubr.bf16.mxu0 %v6644
        %8495 = vmatmul.mubr.bf16.gmra.mrb[0].mxu0 %v6643
        %v8496 = vpop.f32.mrb[0].mxu0
        %v8497 = vadd.f32 %v8336, %v8496
        %v8498 = vpop.f32.mrb[0].mxu0
        %v8499 = vadd.f32 %v8338, %v8498
        %v8500 = vpop.f32.mrb[0].mxu0
        %v8501 = vadd.f32 %v8340, %v8500
        %v8502 = vpop.f32.mrb[0].mxu0
        %v8503 = vadd.f32 %v8342, %v8502
        %8504 = vmatprep.mubr.bf16.mxu0 %v6652
        %8505 = vmatmul.mubr.bf16.gmra.mrb[0].mxu0 %v6651
        %v8506 = vpop.f32.mrb[0].mxu0
        %v8507 = vadd.f32 %v8346, %v8506
        %v8508 = vpop.f32.mrb[0].mxu0
        %v8509 = vadd.f32 %v8348, %v8508
        %v8510 = vpop.f32.mrb[0].mxu0
        %v8511 = vadd.f32 %v8350, %v8510
        %v8512 = vpop.f32.mrb[0].mxu0
        %v8513 = vadd.f32 %v8352, %v8512
        %8514 = vmatprep.mubr.bf16.mxu0 %v6660
        %8515 = vmatmul.mubr.bf16.gmra.mrb[0].mxu0 %v6659
        %v8516 = vpop.f32.mrb[0].mxu0
        %v8517 = vadd.f32 %v8356, %v8516
        %v8518 = vpop.f32.mrb[0].mxu0
        %v8519 = vadd.f32 %v8358, %v8518
        %v8520 = vpop.f32.mrb[0].mxu0
        %v8521 = vpop.f32.mrb[0].mxu0
        %8522 = vdwg.mxu0
        %8523 = vmatprep.subr.bf16.mxu0 %v7818
        %8524 = vmatpush1.bf16.msra.mxu0 %v7817
        %8525 = vmatprep.subr.bf16.mxu0 %v7822
        %8526 = vmatpush1.bf16.msra.mxu0 %v7821
        %8527 = vmatprep.subr.bf16.mxu0 %v7826
        %8528 = vmatpush1.bf16.msra.mxu0 %v7825
        %8529 = vmatprep.subr.bf16.mxu0 %v7830
        %8530 = vmatpush1.bf16.msra.mxu0 %v7829
        %8531 = vmatprep.subr.bf16.mxu0 %v7834
        %8532 = vmatpush1.bf16.msra.mxu0 %v7833
        %8533 = vmatprep.subr.bf16.mxu0 %v7838
        %8534 = vmatpush1.bf16.msra.mxu0 %v7837
        %8535 = vmatprep.subr.bf16.mxu0 %v7842
        %8536 = vmatpush1.bf16.msra.mxu0 %v7841
        %8537 = vmatprep.subr.bf16.mxu0 %v7846
        %8538 = vmatpush1.bf16.msra.mxu0 %v7845
        %8539 = vmatprep.subr.bf16.mxu0 %v7850
        %8540 = vmatpush1.bf16.msra.mxu0 %v7849
        %8541 = vmatprep.subr.bf16.mxu0 %v7854
        %8542 = vmatpush1.bf16.msra.mxu0 %v7853
        %8543 = vmatprep.subr.bf16.mxu0 %v7858
        %8544 = vmatpush1.bf16.msra.mxu0 %v7857
        %8545 = vmatprep.subr.bf16.mxu0 %v7862
        %8546 = vmatpush1.bf16.msra.mxu0 %v7861
        %8547 = vmatprep.subr.bf16.mxu0 %v7866
        %8548 = vmatpush1.bf16.msra.mxu0 %v7865
        %8549 = vmatprep.subr.bf16.mxu0 %v7870
        %8550 = vmatpush1.bf16.msra.mxu0 %v7869
        %8551 = vmatprep.subr.bf16.mxu0 %v7874
        %8552 = vmatpush1.bf16.msra.mxu0 %v7873
        %8553 = vmatprep.subr.bf16.mxu0 %v7878
        %8554 = vmatpush1.bf16.msra.mxu0 %v7877
        %8555 = vmatprep.mubr.bf16.mxu0 %v6566
        %8556 = vmatmul.mubr.bf16.gmra.mrb[0].mxu0 %v6565
        %v8557 = vpop.f32.mrb[0].mxu0
        %v8558 = vadd.f32 %v8397, %v8557
        %v8559 = vpop.f32.mrb[0].mxu0
        %v8560 = vadd.f32 %v8399, %v8559
        %v8561 = vpop.f32.mrb[0].mxu0
        %v8562 = vadd.f32 %v8401, %v8561
        %v8563 = vpop.f32.mrb[0].mxu0
        %v8564 = vadd.f32 %v8403, %v8563
        %8565 = vmatprep.mubr.bf16.mxu0 %v6574
        %8566 = vmatmul.mubr.bf16.gmra.mrb[0].mxu0 %v6573
        %v8567 = vpop.f32.mrb[0].mxu0
        %v8568 = vadd.f32 %v8407, %v8567
        %v8569 = vpop.f32.mrb[0].mxu0
        %v8570 = vadd.f32 %v8409, %v8569
        %v8571 = vpop.f32.mrb[0].mxu0
        %v8572 = vadd.f32 %v8411, %v8571
        %v8573 = vpop.f32.mrb[0].mxu0
        %v8574 = vadd.f32 %v8413, %v8573
        %8575 = vmatprep.mubr.bf16.mxu0 %v6582
        %8576 = vmatmul.mubr.bf16.gmra.mrb[0].mxu0 %v6581
        %v8577 = vpop.f32.mrb[0].mxu0
        %v8578 = vadd.f32 %v8417, %v8577
        %v8579 = vpop.f32.mrb[0].mxu0
        %v8580 = vadd.f32 %v8419, %v8579
        %v8581 = vpop.f32.mrb[0].mxu0
        %v8582 = vadd.f32 %v8421, %v8581
        %v8583 = vpop.f32.mrb[0].mxu0
        %v8584 = vadd.f32 %v8423, %v8583
        %8585 = vmatprep.mubr.bf16.mxu0 %v6590
        %8586 = vmatmul.mubr.bf16.gmra.mrb[0].mxu0 %v6589
        %v8587 = vpop.f32.mrb[0].mxu0
        %v8588 = vadd.f32 %v8427, %v8587
        %v8589 = vpop.f32.mrb[0].mxu0
        %v8590 = vadd.f32 %v8429, %v8589
        %v8591 = vpop.f32.mrb[0].mxu0
        %v8592 = vadd.f32 %v8431, %v8591
        %v8593 = vpop.f32.mrb[0].mxu0
        %v8594 = vadd.f32 %v8433, %v8593
        %8595 = vmatprep.mubr.bf16.mxu0 %v6598
        %8596 = vmatmul.mubr.bf16.gmra.mrb[0].mxu0 %v6597
        %v8597 = vpop.f32.mrb[0].mxu0
        %v8598 = vadd.f32 %v8437, %v8597
        %v8599 = vpop.f32.mrb[0].mxu0
        %v8600 = vadd.f32 %v8439, %v8599
        %v8601 = vpop.f32.mrb[0].mxu0
        %v8602 = vadd.f32 %v8441, %v8601
        %v8603 = vpop.f32.mrb[0].mxu0
        %v8604 = vadd.f32 %v8443, %v8603
        %8605 = vmatprep.mubr.bf16.mxu0 %v6606
        %8606 = vmatmul.mubr.bf16.gmra.mrb[0].mxu0 %v6605
        %v8607 = vpop.f32.mrb[0].mxu0
        %v8608 = vadd.f32 %v8447, %v8607
        %v8609 = vpop.f32.mrb[0].mxu0
        %v8610 = vadd.f32 %v8449, %v8609
        %v8611 = vpop.f32.mrb[0].mxu0
        %v8612 = vadd.f32 %v8451, %v8611
        %v8613 = vpop.f32.mrb[0].mxu0
        %v8614 = vadd.f32 %v8453, %v8613
        %8615 = vmatprep.mubr.bf16.mxu0 %v6614
        %8616 = vmatmul.mubr.bf16.gmra.mrb[0].mxu0 %v6613
        %v8617 = vpop.f32.mrb[0].mxu0
        %v8618 = vadd.f32 %v8457, %v8617
        %v8619 = vpop.f32.mrb[0].mxu0
        %v8620 = vadd.f32 %v8459, %v8619
        %v8621 = vpop.f32.mrb[0].mxu0
        %v8622 = vadd.f32 %v8461, %v8621
        %v8623 = vpop.f32.mrb[0].mxu0
        %v8624 = vadd.f32 %v8463, %v8623
        %8625 = vmatprep.mubr.bf16.mxu0 %v6622
        %8626 = vmatmul.mubr.bf16.gmra.mrb[0].mxu0 %v6621
        %v8627 = vpop.f32.mrb[0].mxu0
        %v8628 = vadd.f32 %v8467, %v8627
        %v8629 = vpop.f32.mrb[0].mxu0
        %v8630 = vadd.f32 %v8469, %v8629
        %v8631 = vpop.f32.mrb[0].mxu0
        %v8632 = vadd.f32 %v8471, %v8631
        %v8633 = vpop.f32.mrb[0].mxu0
        %v8634 = vadd.f32 %v8473, %v8633
        %8635 = vmatprep.mubr.bf16.mxu0 %v6630
        %8636 = vmatmul.mubr.bf16.gmra.mrb[0].mxu0 %v6629
        %v8637 = vpop.f32.mrb[0].mxu0
        %v8638 = vadd.f32 %v8477, %v8637
        %v8639 = vpop.f32.mrb[0].mxu0
        %v8640 = vadd.f32 %v8479, %v8639
        %v8641 = vpop.f32.mrb[0].mxu0
        %v8642 = vadd.f32 %v8481, %v8641
        %v8643 = vpop.f32.mrb[0].mxu0
        %v8644 = vadd.f32 %v8483, %v8643
        %8645 = vmatprep.mubr.bf16.mxu0 %v6638
        %8646 = vmatmul.mubr.bf16.gmra.mrb[0].mxu0 %v6637
        %v8647 = vpop.f32.mrb[0].mxu0
        %v8648 = vadd.f32 %v8487, %v8647
        %v8649 = vpop.f32.mrb[0].mxu0
        %v8650 = vadd.f32 %v8489, %v8649
        %v8651 = vpop.f32.mrb[0].mxu0
        %v8652 = vadd.f32 %v8491, %v8651
        %v8653 = vpop.f32.mrb[0].mxu0
        %v8654 = vadd.f32 %v8493, %v8653
        %8655 = vmatprep.mubr.bf16.mxu0 %v6646
        %8656 = vmatmul.mubr.bf16.gmra.mrb[0].mxu0 %v6645
        %v8657 = vpop.f32.mrb[0].mxu0
        %v8658 = vadd.f32 %v8497, %v8657
        %v8659 = vpop.f32.mrb[0].mxu0
        %v8660 = vadd.f32 %v8499, %v8659
        %v8661 = vpop.f32.mrb[0].mxu0
        %v8662 = vadd.f32 %v8501, %v8661
        %v8663 = vpop.f32.mrb[0].mxu0
        %v8664 = vadd.f32 %v8503, %v8663
        %8665 = vmatprep.mubr.bf16.mxu0 %v6654
        %8666 = vmatmul.mubr.bf16.gmra.mrb[0].mxu0 %v6653
        %v8667 = vpop.f32.mrb[0].mxu0
        %v8668 = vadd.f32 %v8507, %v8667
        %v8669 = vpop.f32.mrb[0].mxu0
        %v8670 = vadd.f32 %v8509, %v8669
        %v8671 = vpop.f32.mrb[0].mxu0
        %v8672 = vadd.f32 %v8511, %v8671
        %v8673 = vpop.f32.mrb[0].mxu0
        %v8674 = vadd.f32 %v8513, %v8673
        %8675 = vmatprep.mubr.bf16.mxu0 %v6662
        %8676 = vmatmul.mubr.bf16.gmra.mrb[0].mxu0 %v6661
        %v8677 = vpop.f32.mrb[0].mxu0
        %v8678 = vadd.f32 %v8517, %v8677
        %v8679 = vpop.f32.mrb[0].mxu0
        %v8680 = vadd.f32 %v8519, %v8679
        %v8681 = vpop.f32.mrb[0].mxu0
        %v8682 = vpop.f32.mrb[0].mxu0
        %8683 = vdwg.mxu0
        %8684 = vmatprep.subr.bf16.mxu0 %v7882
        %8685 = vmatpush1.bf16.msra.mxu0 %v7881
        %8686 = vmatprep.subr.bf16.mxu0 %v7886
        %8687 = vmatpush1.bf16.msra.mxu0 %v7885
        %8688 = vmatprep.subr.bf16.mxu0 %v7890
        %8689 = vmatpush1.bf16.msra.mxu0 %v7889
        %8690 = vmatprep.subr.bf16.mxu0 %v7894
        %8691 = vmatpush1.bf16.msra.mxu0 %v7893
        %8692 = vmatprep.subr.bf16.mxu0 %v7898
        %8693 = vmatpush1.bf16.msra.mxu0 %v7897
        %8694 = vmatprep.subr.bf16.mxu0 %v7902
        %8695 = vmatpush1.bf16.msra.mxu0 %v7901
        %8696 = vmatprep.subr.bf16.mxu0 %v7906
        %8697 = vmatpush1.bf16.msra.mxu0 %v7905
        %8698 = vmatprep.subr.bf16.mxu0 %v7910
        %8699 = vmatpush1.bf16.msra.mxu0 %v7909
        %8700 = vmatprep.subr.bf16.mxu0 %v7914
        %8701 = vmatpush1.bf16.msra.mxu0 %v7913
        %8702 = vmatprep.subr.bf16.mxu0 %v7918
        %8703 = vmatpush1.bf16.msra.mxu0 %v7917
        %8704 = vmatprep.subr.bf16.mxu0 %v7922
        %8705 = vmatpush1.bf16.msra.mxu0 %v7921
        %8706 = vmatprep.subr.bf16.mxu0 %v7926
        %8707 = vmatpush1.bf16.msra.mxu0 %v7925
        %8708 = vmatprep.subr.bf16.mxu0 %v7930
        %8709 = vmatpush1.bf16.msra.mxu0 %v7929
        %8710 = vmatprep.subr.bf16.mxu0 %v7934
        %8711 = vmatpush1.bf16.msra.mxu0 %v7933
        %8712 = vmatprep.subr.bf16.mxu0 %v7938
        %8713 = vmatpush1.bf16.msra.mxu0 %v7937
        %8714 = vmatprep.subr.bf16.mxu0 %v7942
        %8715 = vmatpush1.bf16.msra.mxu0 %v7941
        %8716 = vmatprep.mubr.bf16.mxu0 %v6568
        %8717 = vmatmul.mubr.bf16.gmra.mrb[0].mxu0 %v6567
        %v8718 = vpop.f32.mrb[0].mxu0
        %v8719 = vadd.f32 %v8558, %v8718
        %v8720 = vpop.f32.mrb[0].mxu0
        %v8721 = vadd.f32 %v8560, %v8720
        %v8722 = vpop.f32.mrb[0].mxu0
        %v8723 = vadd.f32 %v8562, %v8722
        %v8724 = vpop.f32.mrb[0].mxu0
        %v8725 = vadd.f32 %v8564, %v8724
        %8726 = vmatprep.mubr.bf16.mxu0 %v6576
        %8727 = vmatmul.mubr.bf16.gmra.mrb[0].mxu0 %v6575
        %v8728 = vpop.f32.mrb[0].mxu0
        %v8729 = vadd.f32 %v8568, %v8728
        %v8730 = vpop.f32.mrb[0].mxu0
        %v8731 = vadd.f32 %v8570, %v8730
        %v8732 = vpop.f32.mrb[0].mxu0
        %v8733 = vadd.f32 %v8572, %v8732
        %v8734 = vpop.f32.mrb[0].mxu0
        %v8735 = vadd.f32 %v8574, %v8734
        %8736 = vmatprep.mubr.bf16.mxu0 %v6584
        %8737 = vmatmul.mubr.bf16.gmra.mrb[0].mxu0 %v6583
        %v8738 = vpop.f32.mrb[0].mxu0
        %v8739 = vadd.f32 %v8578, %v8738
        %v8740 = vpop.f32.mrb[0].mxu0
        %v8741 = vadd.f32 %v8580, %v8740
        %v8742 = vpop.f32.mrb[0].mxu0
        %v8743 = vadd.f32 %v8582, %v8742
        %v8744 = vpop.f32.mrb[0].mxu0
        %v8745 = vadd.f32 %v8584, %v8744
        %8746 = vmatprep.mubr.bf16.mxu0 %v6592
        %8747 = vmatmul.mubr.bf16.gmra.mrb[0].mxu0 %v6591
        %v8748 = vpop.f32.mrb[0].mxu0
        %v8749 = vadd.f32 %v8588, %v8748
        %v8750 = vpop.f32.mrb[0].mxu0
        %v8751 = vadd.f32 %v8590, %v8750
        %v8752 = vpop.f32.mrb[0].mxu0
        %v8753 = vadd.f32 %v8592, %v8752
        %v8754 = vpop.f32.mrb[0].mxu0
        %v8755 = vadd.f32 %v8594, %v8754
        %8756 = vmatprep.mubr.bf16.mxu0 %v6600
        %8757 = vmatmul.mubr.bf16.gmra.mrb[0].mxu0 %v6599
        %v8758 = vpop.f32.mrb[0].mxu0
        %v8759 = vadd.f32 %v8598, %v8758
        %v8760 = vpop.f32.mrb[0].mxu0
        %v8761 = vadd.f32 %v8600, %v8760
        %v8762 = vpop.f32.mrb[0].mxu0
        %v8763 = vadd.f32 %v8602, %v8762
        %v8764 = vpop.f32.mrb[0].mxu0
        %v8765 = vadd.f32 %v8604, %v8764
        %8766 = vmatprep.mubr.bf16.mxu0 %v6608
        %8767 = vmatmul.mubr.bf16.gmra.mrb[0].mxu0 %v6607
        %v8768 = vpop.f32.mrb[0].mxu0
        %v8769 = vadd.f32 %v8608, %v8768
        %v8770 = vpop.f32.mrb[0].mxu0
        %v8771 = vadd.f32 %v8610, %v8770
        %v8772 = vpop.f32.mrb[0].mxu0
        %v8773 = vadd.f32 %v8612, %v8772
        %v8774 = vpop.f32.mrb[0].mxu0
        %v8775 = vadd.f32 %v8614, %v8774
        %8776 = vmatprep.mubr.bf16.mxu0 %v6616
        %8777 = vmatmul.mubr.bf16.gmra.mrb[0].mxu0 %v6615
        %v8778 = vpop.f32.mrb[0].mxu0
        %v8779 = vadd.f32 %v8618, %v8778
        %v8780 = vpop.f32.mrb[0].mxu0
        %v8781 = vadd.f32 %v8620, %v8780
        %v8782 = vpop.f32.mrb[0].mxu0
        %v8783 = vadd.f32 %v8622, %v8782
        %v8784 = vpop.f32.mrb[0].mxu0
        %v8785 = vadd.f32 %v8624, %v8784
        %8786 = vmatprep.mubr.bf16.mxu0 %v6624
        %8787 = vmatmul.mubr.bf16.gmra.mrb[0].mxu0 %v6623
        %v8788 = vpop.f32.mrb[0].mxu0
        %v8789 = vadd.f32 %v8628, %v8788
        %v8790 = vpop.f32.mrb[0].mxu0
        %v8791 = vadd.f32 %v8630, %v8790
        %v8792 = vpop.f32.mrb[0].mxu0
        %v8793 = vadd.f32 %v8632, %v8792
        %v8794 = vpop.f32.mrb[0].mxu0
        %v8795 = vadd.f32 %v8634, %v8794
        %8796 = vmatprep.mubr.bf16.mxu0 %v6632
        %8797 = vmatmul.mubr.bf16.gmra.mrb[0].mxu0 %v6631
        %v8798 = vpop.f32.mrb[0].mxu0
        %v8799 = vadd.f32 %v8638, %v8798
        %v8800 = vpop.f32.mrb[0].mxu0
        %v8801 = vadd.f32 %v8640, %v8800
        %v8802 = vpop.f32.mrb[0].mxu0
        %v8803 = vadd.f32 %v8642, %v8802
        %v8804 = vpop.f32.mrb[0].mxu0
        %v8805 = vadd.f32 %v8644, %v8804
        %8806 = vmatprep.mubr.bf16.mxu0 %v6640
        %8807 = vmatmul.mubr.bf16.gmra.mrb[0].mxu0 %v6639
        %v8808 = vpop.f32.mrb[0].mxu0
        %v8809 = vadd.f32 %v8648, %v8808
        %v8810 = vpop.f32.mrb[0].mxu0
        %v8811 = vadd.f32 %v8650, %v8810
        %v8812 = vpop.f32.mrb[0].mxu0
        %v8813 = vadd.f32 %v8652, %v8812
        %v8814 = vpop.f32.mrb[0].mxu0
        %v8815 = vadd.f32 %v8654, %v8814
        %8816 = vmatprep.mubr.bf16.mxu0 %v6648
        %8817 = vmatmul.mubr.bf16.gmra.mrb[0].mxu0 %v6647
        %v8818 = vpop.f32.mrb[0].mxu0
        %v8819 = vadd.f32 %v8658, %v8818
        %v8820 = vpop.f32.mrb[0].mxu0
        %v8821 = vadd.f32 %v8660, %v8820
        %v8822 = vpop.f32.mrb[0].mxu0
        %v8823 = vadd.f32 %v8662, %v8822
        %v8824 = vpop.f32.mrb[0].mxu0
        %v8825 = vadd.f32 %v8664, %v8824
        %8826 = vmatprep.mubr.bf16.mxu0 %v6656
        %8827 = vmatmul.mubr.bf16.gmra.mrb[0].mxu0 %v6655
        %v8828 = vpop.f32.mrb[0].mxu0
        %v8829 = vadd.f32 %v8668, %v8828
        %v8830 = vpop.f32.mrb[0].mxu0
        %v8831 = vadd.f32 %v8670, %v8830
        %v8832 = vpop.f32.mrb[0].mxu0
        %v8833 = vadd.f32 %v8672, %v8832
        %v8834 = vpop.f32.mrb[0].mxu0
        %v8835 = vadd.f32 %v8674, %v8834
        %8836 = vmatprep.mubr.bf16.mxu0 %v6664
        %8837 = vmatmul.mubr.bf16.gmra.mrb[0].mxu0 %v6663
        %v8838 = vpop.f32.mrb[0].mxu0
        %v8839 = vadd.f32 %v8678, %v8838
        %v8840 = vpop.f32.mrb[0].mxu0
        %v8841 = vadd.f32 %v8680, %v8840
        %v8842 = vpop.f32.mrb[0].mxu0
        %v8843 = vpop.f32.mrb[0].mxu0
        %8844 = vdwg.mxu0
        %8845 = vmatprep.subr.bf16.mxu0 %v7692
        %8846 = vmatpush1.bf16.msra.mxu0 %v7691
        %8847 = vmatprep.subr.bf16.mxu0 %v7696
        %8848 = vmatpush1.bf16.msra.mxu0 %v7695
        %8849 = vmatprep.subr.bf16.mxu0 %v7700
        %8850 = vmatpush1.bf16.msra.mxu0 %v7699
        %8851 = vmatprep.subr.bf16.mxu0 %v7704
        %8852 = vmatpush1.bf16.msra.mxu0 %v7703
        %8853 = vmatprep.subr.bf16.mxu0 %v7708
        %8854 = vmatpush1.bf16.msra.mxu0 %v7707
        %8855 = vmatprep.subr.bf16.mxu0 %v7712
        %8856 = vmatpush1.bf16.msra.mxu0 %v7711
        %8857 = vmatprep.subr.bf16.mxu0 %v7716
        %8858 = vmatpush1.bf16.msra.mxu0 %v7715
        %8859 = vmatprep.subr.bf16.mxu0 %v7720
        %8860 = vmatpush1.bf16.msra.mxu0 %v7719
        %8861 = vmatprep.subr.bf16.mxu0 %v7724
        %8862 = vmatpush1.bf16.msra.mxu0 %v7723
        %8863 = vmatprep.subr.bf16.mxu0 %v7728
        %8864 = vmatpush1.bf16.msra.mxu0 %v7727
        %8865 = vmatprep.subr.bf16.mxu0 %v7732
        %8866 = vmatpush1.bf16.msra.mxu0 %v7731
        %8867 = vmatprep.subr.bf16.mxu0 %v7736
        %8868 = vmatpush1.bf16.msra.mxu0 %v7735
        %8869 = vmatprep.subr.bf16.mxu0 %v7740
        %8870 = vmatpush1.bf16.msra.mxu0 %v7739
        %8871 = vmatprep.subr.bf16.mxu0 %v7744
        %8872 = vmatpush1.bf16.msra.mxu0 %v7743
        %8873 = vmatprep.subr.bf16.mxu0 %v7748
        %8874 = vmatpush1.bf16.msra.mxu0 %v7747
        %8875 = vmatprep.subr.bf16.mxu0 %v7752
        %8876 = vmatpush1.bf16.msra.mxu0 %v7751
        %8877 = vmatprep.mubr.bf16.mxu0 %v6562
        %8878 = vmatmul.mubr.bf16.gmra.mrb[0].mxu0 %v6561
        %v8879 = vpop.f32.mrb[0].mxu0
        %v8880 = vadd.f32 0.0, %v8879
        %v8881 = vpop.f32.mrb[0].mxu0
        %v8882 = vadd.f32 0.0, %v8881
        %v8883 = vpop.f32.mrb[0].mxu0
        %v8884 = vadd.f32 0.0, %v8883
        %v8885 = vpop.f32.mrb[0].mxu0
        %v8886 = vadd.f32 0.0, %v8885
        %8887 = vmatprep.mubr.bf16.mxu0 %v6570
        %8888 = vmatmul.mubr.bf16.gmra.mrb[0].mxu0 %v6569
        %v8889 = vpop.f32.mrb[0].mxu0
        %v8890 = vadd.f32 0.0, %v8889
        %v8891 = vpop.f32.mrb[0].mxu0
        %v8892 = vadd.f32 0.0, %v8891
        %v8893 = vpop.f32.mrb[0].mxu0
        %v8894 = vadd.f32 0.0, %v8893
        %v8895 = vpop.f32.mrb[0].mxu0
        %v8896 = vadd.f32 0.0, %v8895
        %8897 = vmatprep.mubr.bf16.mxu0 %v6578
        %8898 = vmatmul.mubr.bf16.gmra.mrb[0].mxu0 %v6577
        %v8899 = vpop.f32.mrb[0].mxu0
        %v8900 = vadd.f32 0.0, %v8899
        %v8901 = vpop.f32.mrb[0].mxu0
        %v8902 = vadd.f32 0.0, %v8901
        %v8903 = vpop.f32.mrb[0].mxu0
        %v8904 = vadd.f32 0.0, %v8903
        %v8905 = vpop.f32.mrb[0].mxu0
        %v8906 = vadd.f32 0.0, %v8905
        %8907 = vmatprep.mubr.bf16.mxu0 %v6586
        %8908 = vmatmul.mubr.bf16.gmra.mrb[0].mxu0 %v6585
        %v8909 = vpop.f32.mrb[0].mxu0
        %v8910 = vadd.f32 0.0, %v8909
        %v8911 = vpop.f32.mrb[0].mxu0
        %v8912 = vadd.f32 0.0, %v8911
        %v8913 = vpop.f32.mrb[0].mxu0
        %v8914 = vadd.f32 0.0, %v8913
        %v8915 = vpop.f32.mrb[0].mxu0
        %v8916 = vadd.f32 0.0, %v8915
        %8917 = vmatprep.mubr.bf16.mxu0 %v6594
        %8918 = vmatmul.mubr.bf16.gmra.mrb[0].mxu0 %v6593
        %v8919 = vpop.f32.mrb[0].mxu0
        %v8920 = vadd.f32 0.0, %v8919
        %v8921 = vpop.f32.mrb[0].mxu0
        %v8922 = vadd.f32 0.0, %v8921
        %v8923 = vpop.f32.mrb[0].mxu0
        %v8924 = vadd.f32 0.0, %v8923
        %v8925 = vpop.f32.mrb[0].mxu0
        %v8926 = vadd.f32 0.0, %v8925
        %8927 = vmatprep.mubr.bf16.mxu0 %v6602
        %8928 = vmatmul.mubr.bf16.gmra.mrb[0].mxu0 %v6601
        %v8929 = vpop.f32.mrb[0].mxu0
        %v8930 = vadd.f32 0.0, %v8929
        %v8931 = vpop.f32.mrb[0].mxu0
        %v8932 = vadd.f32 0.0, %v8931
        %v8933 = vpop.f32.mrb[0].mxu0
        %v8934 = vadd.f32 0.0, %v8933
        %v8935 = vpop.f32.mrb[0].mxu0
        %v8936 = vadd.f32 0.0, %v8935
        %8937 = vmatprep.mubr.bf16.mxu0 %v6610
        %8938 = vmatmul.mubr.bf16.gmra.mrb[0].mxu0 %v6609
        %v8939 = vpop.f32.mrb[0].mxu0
        %v8940 = vadd.f32 0.0, %v8939
        %v8941 = vpop.f32.mrb[0].mxu0
        %v8942 = vadd.f32 0.0, %v8941
        %v8943 = vpop.f32.mrb[0].mxu0
        %v8944 = vadd.f32 0.0, %v8943
        %v8945 = vpop.f32.mrb[0].mxu0
        %v8946 = vadd.f32 0.0, %v8945
        %8947 = vmatprep.mubr.bf16.mxu0 %v6618
        %8948 = vmatmul.mubr.bf16.gmra.mrb[0].mxu0 %v6617
        %v8949 = vpop.f32.mrb[0].mxu0
        %v8950 = vadd.f32 0.0, %v8949
        %v8951 = vpop.f32.mrb[0].mxu0
        %v8952 = vadd.f32 0.0, %v8951
        %v8953 = vpop.f32.mrb[0].mxu0
        %v8954 = vadd.f32 0.0, %v8953
        %v8955 = vpop.f32.mrb[0].mxu0
        %v8956 = vadd.f32 0.0, %v8955
        %8957 = vmatprep.mubr.bf16.mxu0 %v6626
        %8958 = vmatmul.mubr.bf16.gmra.mrb[0].mxu0 %v6625
        %v8959 = vpop.f32.mrb[0].mxu0
        %v8960 = vadd.f32 0.0, %v8959
        %v8961 = vpop.f32.mrb[0].mxu0
        %v8962 = vadd.f32 0.0, %v8961
        %v8963 = vpop.f32.mrb[0].mxu0
        %v8964 = vadd.f32 0.0, %v8963
        %v8965 = vpop.f32.mrb[0].mxu0
        %v8966 = vadd.f32 0.0, %v8965
        %8967 = vmatprep.mubr.bf16.mxu0 %v6634
        %8968 = vmatmul.mubr.bf16.gmra.mrb[0].mxu0 %v6633
        %v8969 = vpop.f32.mrb[0].mxu0
        %v8970 = vadd.f32 0.0, %v8969
        %v8971 = vpop.f32.mrb[0].mxu0
        %v8972 = vadd.f32 0.0, %v8971
        %v8973 = vpop.f32.mrb[0].mxu0
        %v8974 = vadd.f32 0.0, %v8973
        %v8975 = vpop.f32.mrb[0].mxu0
        %v8976 = vadd.f32 0.0, %v8975
        %8977 = vmatprep.mubr.bf16.mxu0 %v6642
        %8978 = vmatmul.mubr.bf16.gmra.mrb[0].mxu0 %v6641
        %v8979 = vpop.f32.mrb[0].mxu0
        %v8980 = vadd.f32 0.0, %v8979
        %v8981 = vpop.f32.mrb[0].mxu0
        %v8982 = vadd.f32 0.0, %v8981
        %v8983 = vpop.f32.mrb[0].mxu0
        %v8984 = vadd.f32 0.0, %v8983
        %v8985 = vpop.f32.mrb[0].mxu0
        %v8986 = vadd.f32 0.0, %v8985
        %8987 = vmatprep.mubr.bf16.mxu0 %v6650
        %8988 = vmatmul.mubr.bf16.gmra.mrb[0].mxu0 %v6649
        %v8989 = vpop.f32.mrb[0].mxu0
        %v8990 = vadd.f32 0.0, %v8989
        %v8991 = vpop.f32.mrb[0].mxu0
        %v8992 = vadd.f32 0.0, %v8991
        %v8993 = vpop.f32.mrb[0].mxu0
        %v8994 = vadd.f32 0.0, %v8993
        %v8995 = vpop.f32.mrb[0].mxu0
        %v8996 = vadd.f32 0.0, %v8995
        %8997 = vmatprep.mubr.bf16.mxu0 %v6658
        %8998 = vmatmul.mubr.bf16.gmra.mrb[0].mxu0 %v6657
        %v8999 = vpop.f32.mrb[0].mxu0
        %v9000 = vadd.f32 0.0, %v8999
        %v9001 = vpop.f32.mrb[0].mxu0
        %v9002 = vadd.f32 0.0, %v9001
        %v9003 = vpop.f32.mrb[0].mxu0
        %v9004 = vpop.f32.mrb[0].mxu0
        %9005 = vdwg.mxu0
        %9006 = vmatprep.subr.bf16.mxu0 %v7756
        %9007 = vmatpush1.bf16.msra.mxu0 %v7755
        %9008 = vmatprep.subr.bf16.mxu0 %v7760
        %9009 = vmatpush1.bf16.msra.mxu0 %v7759
        %9010 = vmatprep.subr.bf16.mxu0 %v7764
        %9011 = vmatpush1.bf16.msra.mxu0 %v7763
        %9012 = vmatprep.subr.bf16.mxu0 %v7768
        %9013 = vmatpush1.bf16.msra.mxu0 %v7767
        %9014 = vmatprep.subr.bf16.mxu0 %v7772
        %9015 = vmatpush1.bf16.msra.mxu0 %v7771
        %9016 = vmatprep.subr.bf16.mxu0 %v7776
        %9017 = vmatpush1.bf16.msra.mxu0 %v7775
        %9018 = vmatprep.subr.bf16.mxu0 %v7780
        %9019 = vmatpush1.bf16.msra.mxu0 %v7779
        %9020 = vmatprep.subr.bf16.mxu0 %v7784
        %9021 = vmatpush1.bf16.msra.mxu0 %v7783
        %9022 = vmatprep.subr.bf16.mxu0 %v7788
        %9023 = vmatpush1.bf16.msra.mxu0 %v7787
        %9024 = vmatprep.subr.bf16.mxu0 %v7792
        %9025 = vmatpush1.bf16.msra.mxu0 %v7791
        %9026 = vmatprep.subr.bf16.mxu0 %v7796
        %9027 = vmatpush1.bf16.msra.mxu0 %v7795
        %9028 = vmatprep.subr.bf16.mxu0 %v7800
        %9029 = vmatpush1.bf16.msra.mxu0 %v7799
        %9030 = vmatprep.subr.bf16.mxu0 %v7804
        %9031 = vmatpush1.bf16.msra.mxu0 %v7803
        %9032 = vmatprep.subr.bf16.mxu0 %v7808
        %9033 = vmatpush1.bf16.msra.mxu0 %v7807
        %9034 = vmatprep.subr.bf16.mxu0 %v7812
        %9035 = vmatpush1.bf16.msra.mxu0 %v7811
        %9036 = vmatprep.subr.bf16.mxu0 %v7816
        %9037 = vmatpush1.bf16.msra.mxu0 %v7815
        %9038 = vmatprep.mubr.bf16.mxu0 %v6564
        %9039 = vmatmul.mubr.bf16.gmra.mrb[0].mxu0 %v6563
        %v9040 = vpop.f32.mrb[0].mxu0
        %v9041 = vadd.f32 %v8880, %v9040
        %v9042 = vpop.f32.mrb[0].mxu0
        %v9043 = vadd.f32 %v8882, %v9042
        %v9044 = vpop.f32.mrb[0].mxu0
        %v9045 = vadd.f32 %v8884, %v9044
        %v9046 = vpop.f32.mrb[0].mxu0
        %v9047 = vadd.f32 %v8886, %v9046
        %9048 = vmatprep.mubr.bf16.mxu0 %v6572
        %9049 = vmatmul.mubr.bf16.gmra.mrb[0].mxu0 %v6571
        %v9050 = vpop.f32.mrb[0].mxu0
        %v9051 = vadd.f32 %v8890, %v9050
        %v9052 = vpop.f32.mrb[0].mxu0
        %v9053 = vadd.f32 %v8892, %v9052
        %v9054 = vpop.f32.mrb[0].mxu0
        %v9055 = vadd.f32 %v8894, %v9054
        %v9056 = vpop.f32.mrb[0].mxu0
        %v9057 = vadd.f32 %v8896, %v9056
        %9058 = vmatprep.mubr.bf16.mxu0 %v6580
        %9059 = vmatmul.mubr.bf16.gmra.mrb[0].mxu0 %v6579
        %v9060 = vpop.f32.mrb[0].mxu0
        %v9061 = vadd.f32 %v8900, %v9060
        %v9062 = vpop.f32.mrb[0].mxu0
        %v9063 = vadd.f32 %v8902, %v9062
        %v9064 = vpop.f32.mrb[0].mxu0
        %v9065 = vadd.f32 %v8904, %v9064
        %v9066 = vpop.f32.mrb[0].mxu0
        %v9067 = vadd.f32 %v8906, %v9066
        %9068 = vmatprep.mubr.bf16.mxu0 %v6588
        %9069 = vmatmul.mubr.bf16.gmra.mrb[0].mxu0 %v6587
        %v9070 = vpop.f32.mrb[0].mxu0
        %v9071 = vadd.f32 %v8910, %v9070
        %v9072 = vpop.f32.mrb[0].mxu0
        %v9073 = vadd.f32 %v8912, %v9072
        %v9074 = vpop.f32.mrb[0].mxu0
        %v9075 = vadd.f32 %v8914, %v9074
        %v9076 = vpop.f32.mrb[0].mxu0
        %v9077 = vadd.f32 %v8916, %v9076
        %9078 = vmatprep.mubr.bf16.mxu0 %v6596
        %9079 = vmatmul.mubr.bf16.gmra.mrb[0].mxu0 %v6595
        %v9080 = vpop.f32.mrb[0].mxu0
        %v9081 = vadd.f32 %v8920, %v9080
        %v9082 = vpop.f32.mrb[0].mxu0
        %v9083 = vadd.f32 %v8922, %v9082
        %v9084 = vpop.f32.mrb[0].mxu0
        %v9085 = vadd.f32 %v8924, %v9084
        %v9086 = vpop.f32.mrb[0].mxu0
        %v9087 = vadd.f32 %v8926, %v9086
        %9088 = vmatprep.mubr.bf16.mxu0 %v6604
        %9089 = vmatmul.mubr.bf16.gmra.mrb[0].mxu0 %v6603
        %v9090 = vpop.f32.mrb[0].mxu0
        %v9091 = vadd.f32 %v8930, %v9090
        %v9092 = vpop.f32.mrb[0].mxu0
        %v9093 = vadd.f32 %v8932, %v9092
        %v9094 = vpop.f32.mrb[0].mxu0
        %v9095 = vadd.f32 %v8934, %v9094
        %v9096 = vpop.f32.mrb[0].mxu0
        %v9097 = vadd.f32 %v8936, %v9096
        %9098 = vmatprep.mubr.bf16.mxu0 %v6612
        %9099 = vmatmul.mubr.bf16.gmra.mrb[0].mxu0 %v6611
        %v9100 = vpop.f32.mrb[0].mxu0
        %v9101 = vadd.f32 %v8940, %v9100
        %v9102 = vpop.f32.mrb[0].mxu0
        %v9103 = vadd.f32 %v8942, %v9102
        %v9104 = vpop.f32.mrb[0].mxu0
        %v9105 = vadd.f32 %v8944, %v9104
        %v9106 = vpop.f32.mrb[0].mxu0
        %v9107 = vadd.f32 %v8946, %v9106
        %9108 = vmatprep.mubr.bf16.mxu0 %v6620
        %9109 = vmatmul.mubr.bf16.gmra.mrb[0].mxu0 %v6619
        %v9110 = vpop.f32.mrb[0].mxu0
        %v9111 = vadd.f32 %v8950, %v9110
        %v9112 = vpop.f32.mrb[0].mxu0
        %v9113 = vadd.f32 %v8952, %v9112
        %v9114 = vpop.f32.mrb[0].mxu0
        %v9115 = vadd.f32 %v8954, %v9114
        %v9116 = vpop.f32.mrb[0].mxu0
        %v9117 = vadd.f32 %v8956, %v9116
        %9118 = vmatprep.mubr.bf16.mxu0 %v6628
        %9119 = vmatmul.mubr.bf16.gmra.mrb[0].mxu0 %v6627
        %v9120 = vpop.f32.mrb[0].mxu0
        %v9121 = vadd.f32 %v8960, %v9120
        %v9122 = vpop.f32.mrb[0].mxu0
        %v9123 = vadd.f32 %v8962, %v9122
        %v9124 = vpop.f32.mrb[0].mxu0
        %v9125 = vadd.f32 %v8964, %v9124
        %v9126 = vpop.f32.mrb[0].mxu0
        %v9127 = vadd.f32 %v8966, %v9126
        %9128 = vmatprep.mubr.bf16.mxu0 %v6636
        %9129 = vmatmul.mubr.bf16.gmra.mrb[0].mxu0 %v6635
        %v9130 = vpop.f32.mrb[0].mxu0
        %v9131 = vadd.f32 %v8970, %v9130
        %v9132 = vpop.f32.mrb[0].mxu0
        %v9133 = vadd.f32 %v8972, %v9132
        %v9134 = vpop.f32.mrb[0].mxu0
        %v9135 = vadd.f32 %v8974, %v9134
        %v9136 = vpop.f32.mrb[0].mxu0
        %v9137 = vadd.f32 %v8976, %v9136
        %9138 = vmatprep.mubr.bf16.mxu0 %v6644
        %9139 = vmatmul.mubr.bf16.gmra.mrb[0].mxu0 %v6643
        %v9140 = vpop.f32.mrb[0].mxu0
        %v9141 = vadd.f32 %v8980, %v9140
        %v9142 = vpop.f32.mrb[0].mxu0
        %v9143 = vadd.f32 %v8982, %v9142
        %v9144 = vpop.f32.mrb[0].mxu0
        %v9145 = vadd.f32 %v8984, %v9144
        %v9146 = vpop.f32.mrb[0].mxu0
        %v9147 = vadd.f32 %v8986, %v9146
        %9148 = vmatprep.mubr.bf16.mxu0 %v6652
        %9149 = vmatmul.mubr.bf16.gmra.mrb[0].mxu0 %v6651
        %v9150 = vpop.f32.mrb[0].mxu0
        %v9151 = vadd.f32 %v8990, %v9150
        %v9152 = vpop.f32.mrb[0].mxu0
        %v9153 = vadd.f32 %v8992, %v9152
        %v9154 = vpop.f32.mrb[0].mxu0
        %v9155 = vadd.f32 %v8994, %v9154
        %v9156 = vpop.f32.mrb[0].mxu0
        %v9157 = vadd.f32 %v8996, %v9156
        %9158 = vmatprep.mubr.bf16.mxu0 %v6660
        %9159 = vmatmul.mubr.bf16.gmra.mrb[0].mxu0 %v6659
        %v9160 = vpop.f32.mrb[0].mxu0
        %v9161 = vadd.f32 %v9000, %v9160
        %v9162 = vpop.f32.mrb[0].mxu0
        %v9163 = vadd.f32 %v9002, %v9162
        %v9164 = vpop.f32.mrb[0].mxu0
        %v9165 = vpop.f32.mrb[0].mxu0
        %9166 = vdwg.mxu0
        %9167 = vmatprep.subr.bf16.mxu0 %v7820
        %9168 = vmatpush1.bf16.msra.mxu0 %v7819
        %9169 = vmatprep.subr.bf16.mxu0 %v7824
        %9170 = vmatpush1.bf16.msra.mxu0 %v7823
        %9171 = vmatprep.subr.bf16.mxu0 %v7828
        %9172 = vmatpush1.bf16.msra.mxu0 %v7827
        %9173 = vmatprep.subr.bf16.mxu0 %v7832
        %9174 = vmatpush1.bf16.msra.mxu0 %v7831
        %9175 = vmatprep.subr.bf16.mxu0 %v7836
        %9176 = vmatpush1.bf16.msra.mxu0 %v7835
        %9177 = vmatprep.subr.bf16.mxu0 %v7840
        %9178 = vmatpush1.bf16.msra.mxu0 %v7839
        %9179 = vmatprep.subr.bf16.mxu0 %v7844
        %9180 = vmatpush1.bf16.msra.mxu0 %v7843
        %9181 = vmatprep.subr.bf16.mxu0 %v7848
        %9182 = vmatpush1.bf16.msra.mxu0 %v7847
        %9183 = vmatprep.subr.bf16.mxu0 %v7852
        %9184 = vmatpush1.bf16.msra.mxu0 %v7851
        %9185 = vmatprep.subr.bf16.mxu0 %v7856
        %9186 = vmatpush1.bf16.msra.mxu0 %v7855
        %9187 = vmatprep.subr.bf16.mxu0 %v7860
        %9188 = vmatpush1.bf16.msra.mxu0 %v7859
        %9189 = vmatprep.subr.bf16.mxu0 %v7864
        %9190 = vmatpush1.bf16.msra.mxu0 %v7863
        %9191 = vmatprep.subr.bf16.mxu0 %v7868
        %9192 = vmatpush1.bf16.msra.mxu0 %v7867
        %9193 = vmatprep.subr.bf16.mxu0 %v7872
        %9194 = vmatpush1.bf16.msra.mxu0 %v7871
        %9195 = vmatprep.subr.bf16.mxu0 %v7876
        %9196 = vmatpush1.bf16.msra.mxu0 %v7875
        %9197 = vmatprep.subr.bf16.mxu0 %v7880
        %9198 = vmatpush1.bf16.msra.mxu0 %v7879
        %9199 = vmatprep.mubr.bf16.mxu0 %v6566
        %9200 = vmatmul.mubr.bf16.gmra.mrb[0].mxu0 %v6565
        %v9201 = vpop.f32.mrb[0].mxu0
        %v9202 = vadd.f32 %v9041, %v9201
        %v9203 = vpop.f32.mrb[0].mxu0
        %v9204 = vadd.f32 %v9043, %v9203
        %v9205 = vpop.f32.mrb[0].mxu0
        %v9206 = vadd.f32 %v9045, %v9205
        %v9207 = vpop.f32.mrb[0].mxu0
        %v9208 = vadd.f32 %v9047, %v9207
        %9209 = vmatprep.mubr.bf16.mxu0 %v6574
        %9210 = vmatmul.mubr.bf16.gmra.mrb[0].mxu0 %v6573
        %v9211 = vpop.f32.mrb[0].mxu0
        %v9212 = vadd.f32 %v9051, %v9211
        %v9213 = vpop.f32.mrb[0].mxu0
        %v9214 = vadd.f32 %v9053, %v9213
        %v9215 = vpop.f32.mrb[0].mxu0
        %v9216 = vadd.f32 %v9055, %v9215
        %v9217 = vpop.f32.mrb[0].mxu0
        %v9218 = vadd.f32 %v9057, %v9217
        %9219 = vmatprep.mubr.bf16.mxu0 %v6582
        %9220 = vmatmul.mubr.bf16.gmra.mrb[0].mxu0 %v6581
        %v9221 = vpop.f32.mrb[0].mxu0
        %v9222 = vadd.f32 %v9061, %v9221
        %v9223 = vpop.f32.mrb[0].mxu0
        %v9224 = vadd.f32 %v9063, %v9223
        %v9225 = vpop.f32.mrb[0].mxu0
        %v9226 = vadd.f32 %v9065, %v9225
        %v9227 = vpop.f32.mrb[0].mxu0
        %v9228 = vadd.f32 %v9067, %v9227
        %9229 = vmatprep.mubr.bf16.mxu0 %v6590
        %9230 = vmatmul.mubr.bf16.gmra.mrb[0].mxu0 %v6589
        %v9231 = vpop.f32.mrb[0].mxu0
        %v9232 = vadd.f32 %v9071, %v9231
        %v9233 = vpop.f32.mrb[0].mxu0
        %v9234 = vadd.f32 %v9073, %v9233
        %v9235 = vpop.f32.mrb[0].mxu0
        %v9236 = vadd.f32 %v9075, %v9235
        %v9237 = vpop.f32.mrb[0].mxu0
        %v9238 = vadd.f32 %v9077, %v9237
        %9239 = vmatprep.mubr.bf16.mxu0 %v6598
        %9240 = vmatmul.mubr.bf16.gmra.mrb[0].mxu0 %v6597
        %v9241 = vpop.f32.mrb[0].mxu0
        %v9242 = vadd.f32 %v9081, %v9241
        %v9243 = vpop.f32.mrb[0].mxu0
        %v9244 = vadd.f32 %v9083, %v9243
        %v9245 = vpop.f32.mrb[0].mxu0
        %v9246 = vadd.f32 %v9085, %v9245
        %v9247 = vpop.f32.mrb[0].mxu0
        %v9248 = vadd.f32 %v9087, %v9247
        %9249 = vmatprep.mubr.bf16.mxu0 %v6606
        %9250 = vmatmul.mubr.bf16.gmra.mrb[0].mxu0 %v6605
        %v9251 = vpop.f32.mrb[0].mxu0
        %v9252 = vadd.f32 %v9091, %v9251
        %v9253 = vpop.f32.mrb[0].mxu0
        %v9254 = vadd.f32 %v9093, %v9253
        %v9255 = vpop.f32.mrb[0].mxu0
        %v9256 = vadd.f32 %v9095, %v9255
        %v9257 = vpop.f32.mrb[0].mxu0
        %v9258 = vadd.f32 %v9097, %v9257
        %9259 = vmatprep.mubr.bf16.mxu0 %v6614
        %9260 = vmatmul.mubr.bf16.gmra.mrb[0].mxu0 %v6613
        %v9261 = vpop.f32.mrb[0].mxu0
        %v9262 = vadd.f32 %v9101, %v9261
        %v9263 = vpop.f32.mrb[0].mxu0
        %v9264 = vadd.f32 %v9103, %v9263
        %v9265 = vpop.f32.mrb[0].mxu0
        %v9266 = vadd.f32 %v9105, %v9265
        %v9267 = vpop.f32.mrb[0].mxu0
        %v9268 = vadd.f32 %v9107, %v9267
        %9269 = vmatprep.mubr.bf16.mxu0 %v6622
        %9270 = vmatmul.mubr.bf16.gmra.mrb[0].mxu0 %v6621
        %v9271 = vpop.f32.mrb[0].mxu0
        %v9272 = vadd.f32 %v9111, %v9271
        %v9273 = vpop.f32.mrb[0].mxu0
        %v9274 = vadd.f32 %v9113, %v9273
        %v9275 = vpop.f32.mrb[0].mxu0
        %v9276 = vadd.f32 %v9115, %v9275
        %v9277 = vpop.f32.mrb[0].mxu0
        %v9278 = vadd.f32 %v9117, %v9277
        %9279 = vmatprep.mubr.bf16.mxu0 %v6630
        %9280 = vmatmul.mubr.bf16.gmra.mrb[0].mxu0 %v6629
        %v9281 = vpop.f32.mrb[0].mxu0
        %v9282 = vadd.f32 %v9121, %v9281
        %v9283 = vpop.f32.mrb[0].mxu0
        %v9284 = vadd.f32 %v9123, %v9283
        %v9285 = vpop.f32.mrb[0].mxu0
        %v9286 = vadd.f32 %v9125, %v9285
        %v9287 = vpop.f32.mrb[0].mxu0
        %v9288 = vadd.f32 %v9127, %v9287
        %9289 = vmatprep.mubr.bf16.mxu0 %v6638
        %9290 = vmatmul.mubr.bf16.gmra.mrb[0].mxu0 %v6637
        %v9291 = vpop.f32.mrb[0].mxu0
        %v9292 = vadd.f32 %v9131, %v9291
        %v9293 = vpop.f32.mrb[0].mxu0
        %v9294 = vadd.f32 %v9133, %v9293
        %v9295 = vpop.f32.mrb[0].mxu0
        %v9296 = vadd.f32 %v9135, %v9295
        %v9297 = vpop.f32.mrb[0].mxu0
        %v9298 = vadd.f32 %v9137, %v9297
        %9299 = vmatprep.mubr.bf16.mxu0 %v6646
        %9300 = vmatmul.mubr.bf16.gmra.mrb[0].mxu0 %v6645
        %v9301 = vpop.f32.mrb[0].mxu0
        %v9302 = vadd.f32 %v9141, %v9301
        %v9303 = vpop.f32.mrb[0].mxu0
        %v9304 = vadd.f32 %v9143, %v9303
        %v9305 = vpop.f32.mrb[0].mxu0
        %v9306 = vadd.f32 %v9145, %v9305
        %v9307 = vpop.f32.mrb[0].mxu0
        %v9308 = vadd.f32 %v9147, %v9307
        %9309 = vmatprep.mubr.bf16.mxu0 %v6654
        %9310 = vmatmul.mubr.bf16.gmra.mrb[0].mxu0 %v6653
        %v9311 = vpop.f32.mrb[0].mxu0
        %v9312 = vadd.f32 %v9151, %v9311
        %v9313 = vpop.f32.mrb[0].mxu0
        %v9314 = vadd.f32 %v9153, %v9313
        %v9315 = vpop.f32.mrb[0].mxu0
        %v9316 = vadd.f32 %v9155, %v9315
        %v9317 = vpop.f32.mrb[0].mxu0
        %v9318 = vadd.f32 %v9157, %v9317
        %9319 = vmatprep.mubr.bf16.mxu0 %v6662
        %9320 = vmatmul.mubr.bf16.gmra.mrb[0].mxu0 %v6661
        %v9321 = vpop.f32.mrb[0].mxu0
        %v9322 = vadd.f32 %v9161, %v9321
        %v9323 = vpop.f32.mrb[0].mxu0
        %v9324 = vadd.f32 %v9163, %v9323
        %v9325 = vpop.f32.mrb[0].mxu0
        %v9326 = vpop.f32.mrb[0].mxu0
        %9327 = vdwg.mxu0
        %9328 = vmatprep.subr.bf16.mxu0 %v7884
        %9329 = vmatpush1.bf16.msra.mxu0 %v7883
        %9330 = vmatprep.subr.bf16.mxu0 %v7888
        %9331 = vmatpush1.bf16.msra.mxu0 %v7887
        %9332 = vmatprep.subr.bf16.mxu0 %v7892
        %9333 = vmatpush1.bf16.msra.mxu0 %v7891
        %9334 = vmatprep.subr.bf16.mxu0 %v7896
        %9335 = vmatpush1.bf16.msra.mxu0 %v7895
        %9336 = vmatprep.subr.bf16.mxu0 %v7900
        %9337 = vmatpush1.bf16.msra.mxu0 %v7899
        %9338 = vmatprep.subr.bf16.mxu0 %v7904
        %9339 = vmatpush1.bf16.msra.mxu0 %v7903
        %9340 = vmatprep.subr.bf16.mxu0 %v7908
        %9341 = vmatpush1.bf16.msra.mxu0 %v7907
        %9342 = vmatprep.subr.bf16.mxu0 %v7912
        %9343 = vmatpush1.bf16.msra.mxu0 %v7911
        %9344 = vmatprep.subr.bf16.mxu0 %v7916
        %9345 = vmatpush1.bf16.msra.mxu0 %v7915
        %9346 = vmatprep.subr.bf16.mxu0 %v7920
        %9347 = vmatpush1.bf16.msra.mxu0 %v7919
        %9348 = vmatprep.subr.bf16.mxu0 %v7924
        %9349 = vmatpush1.bf16.msra.mxu0 %v7923
        %9350 = vmatprep.subr.bf16.mxu0 %v7928
        %9351 = vmatpush1.bf16.msra.mxu0 %v7927
        %9352 = vmatprep.subr.bf16.mxu0 %v7932
        %9353 = vmatpush1.bf16.msra.mxu0 %v7931
        %9354 = vmatprep.subr.bf16.mxu0 %v7936
        %9355 = vmatpush1.bf16.msra.mxu0 %v7935
        %9356 = vmatprep.subr.bf16.mxu0 %v7940
        %9357 = vmatpush1.bf16.msra.mxu0 %v7939
        %9358 = vmatprep.subr.bf16.mxu0 %v7944
        %9359 = vmatpush1.bf16.msra.mxu0 %v7943
        %9360 = vmatprep.mubr.bf16.mxu0 %v6568
        %9361 = vmatmul.mubr.bf16.gmra.mrb[0].mxu0 %v6567
        %v9362 = vpop.f32.mrb[0].mxu0
        %v9363 = vadd.f32 %v9202, %v9362
        %v9364 = vpop.f32.mrb[0].mxu0
        %v9365 = vadd.f32 %v9204, %v9364
        %v9366 = vpop.f32.mrb[0].mxu0
        %v9367 = vadd.f32 %v9206, %v9366
        %v9368 = vpop.f32.mrb[0].mxu0
        %v9369 = vadd.f32 %v9208, %v9368
        %9370 = vmatprep.mubr.bf16.mxu0 %v6576
        %9371 = vmatmul.mubr.bf16.gmra.mrb[0].mxu0 %v6575
        %v9372 = vpop.f32.mrb[0].mxu0
        %v9373 = vadd.f32 %v9212, %v9372
        %v9374 = vpop.f32.mrb[0].mxu0
        %v9375 = vadd.f32 %v9214, %v9374
        %v9376 = vpop.f32.mrb[0].mxu0
        %v9377 = vadd.f32 %v9216, %v9376
        %v9378 = vpop.f32.mrb[0].mxu0
        %v9379 = vadd.f32 %v9218, %v9378
        %9380 = vmatprep.mubr.bf16.mxu0 %v6584
        %9381 = vmatmul.mubr.bf16.gmra.mrb[0].mxu0 %v6583
        %v9382 = vpop.f32.mrb[0].mxu0
        %v9383 = vadd.f32 %v9222, %v9382
        %v9384 = vpop.f32.mrb[0].mxu0
        %v9385 = vadd.f32 %v9224, %v9384
        %v9386 = vpop.f32.mrb[0].mxu0
        %v9387 = vadd.f32 %v9226, %v9386
        %v9388 = vpop.f32.mrb[0].mxu0
        %v9389 = vadd.f32 %v9228, %v9388
        %9390 = vmatprep.mubr.bf16.mxu0 %v6592
        %9391 = vmatmul.mubr.bf16.gmra.mrb[0].mxu0 %v6591
        %v9392 = vpop.f32.mrb[0].mxu0
        %v9393 = vadd.f32 %v9232, %v9392
        %v9394 = vpop.f32.mrb[0].mxu0
        %v9395 = vadd.f32 %v9234, %v9394
        %v9396 = vpop.f32.mrb[0].mxu0
        %v9397 = vadd.f32 %v9236, %v9396
        %v9398 = vpop.f32.mrb[0].mxu0
        %v9399 = vadd.f32 %v9238, %v9398
        %9400 = vmatprep.mubr.bf16.mxu0 %v6600
        %9401 = vmatmul.mubr.bf16.gmra.mrb[0].mxu0 %v6599
        %v9402 = vpop.f32.mrb[0].mxu0
        %v9403 = vadd.f32 %v9242, %v9402
        %v9404 = vpop.f32.mrb[0].mxu0
        %v9405 = vadd.f32 %v9244, %v9404
        %v9406 = vpop.f32.mrb[0].mxu0
        %v9407 = vadd.f32 %v9246, %v9406
        %v9408 = vpop.f32.mrb[0].mxu0
        %v9409 = vadd.f32 %v9248, %v9408
        %9410 = vmatprep.mubr.bf16.mxu0 %v6608
        %9411 = vmatmul.mubr.bf16.gmra.mrb[0].mxu0 %v6607
        %v9412 = vpop.f32.mrb[0].mxu0
        %v9413 = vadd.f32 %v9252, %v9412
        %v9414 = vpop.f32.mrb[0].mxu0
        %v9415 = vadd.f32 %v9254, %v9414
        %v9416 = vpop.f32.mrb[0].mxu0
        %v9417 = vadd.f32 %v9256, %v9416
        %v9418 = vpop.f32.mrb[0].mxu0
        %v9419 = vadd.f32 %v9258, %v9418
        %9420 = vmatprep.mubr.bf16.mxu0 %v6616
        %9421 = vmatmul.mubr.bf16.gmra.mrb[0].mxu0 %v6615
        %v9422 = vpop.f32.mrb[0].mxu0
        %v9423 = vadd.f32 %v9262, %v9422
        %v9424 = vpop.f32.mrb[0].mxu0
        %v9425 = vadd.f32 %v9264, %v9424
        %v9426 = vpop.f32.mrb[0].mxu0
        %v9427 = vadd.f32 %v9266, %v9426
        %v9428 = vpop.f32.mrb[0].mxu0
        %v9429 = vadd.f32 %v9268, %v9428
        %9430 = vmatprep.mubr.bf16.mxu0 %v6624
        %9431 = vmatmul.mubr.bf16.gmra.mrb[0].mxu0 %v6623
        %v9432 = vpop.f32.mrb[0].mxu0
        %v9433 = vadd.f32 %v9272, %v9432
        %v9434 = vpop.f32.mrb[0].mxu0
        %v9435 = vadd.f32 %v9274, %v9434
        %v9436 = vpop.f32.mrb[0].mxu0
        %v9437 = vadd.f32 %v9276, %v9436
        %v9438 = vpop.f32.mrb[0].mxu0
        %v9439 = vadd.f32 %v9278, %v9438
        %9440 = vmatprep.mubr.bf16.mxu0 %v6632
        %9441 = vmatmul.mubr.bf16.gmra.mrb[0].mxu0 %v6631
        %v9442 = vpop.f32.mrb[0].mxu0
        %v9443 = vadd.f32 %v9282, %v9442
        %v9444 = vpop.f32.mrb[0].mxu0
        %v9445 = vadd.f32 %v9284, %v9444
        %v9446 = vpop.f32.mrb[0].mxu0
        %v9447 = vadd.f32 %v9286, %v9446
        %v9448 = vpop.f32.mrb[0].mxu0
        %v9449 = vadd.f32 %v9288, %v9448
        %9450 = vmatprep.mubr.bf16.mxu0 %v6640
        %9451 = vmatmul.mubr.bf16.gmra.mrb[0].mxu0 %v6639
        %v9452 = vpop.f32.mrb[0].mxu0
        %v9453 = vadd.f32 %v9292, %v9452
        %v9454 = vpop.f32.mrb[0].mxu0
        %v9455 = vadd.f32 %v9294, %v9454
        %v9456 = vpop.f32.mrb[0].mxu0
        %v9457 = vadd.f32 %v9296, %v9456
        %v9458 = vpop.f32.mrb[0].mxu0
        %v9459 = vadd.f32 %v9298, %v9458
        %9460 = vmatprep.mubr.bf16.mxu0 %v6648
        %9461 = vmatmul.mubr.bf16.gmra.mrb[0].mxu0 %v6647
        %v9462 = vpop.f32.mrb[0].mxu0
        %v9463 = vadd.f32 %v9302, %v9462
        %v9464 = vpop.f32.mrb[0].mxu0
        %v9465 = vadd.f32 %v9304, %v9464
        %v9466 = vpop.f32.mrb[0].mxu0
        %v9467 = vadd.f32 %v9306, %v9466
        %v9468 = vpop.f32.mrb[0].mxu0
        %v9469 = vadd.f32 %v9308, %v9468
        %9470 = vmatprep.mubr.bf16.mxu0 %v6656
        %9471 = vmatmul.mubr.bf16.gmra.mrb[0].mxu0 %v6655
        %v9472 = vpop.f32.mrb[0].mxu0
        %v9473 = vadd.f32 %v9312, %v9472
        %v9474 = vpop.f32.mrb[0].mxu0
        %v9475 = vadd.f32 %v9314, %v9474
        %v9476 = vpop.f32.mrb[0].mxu0
        %v9477 = vadd.f32 %v9316, %v9476
        %v9478 = vpop.f32.mrb[0].mxu0
        %v9479 = vadd.f32 %v9318, %v9478
        %9480 = vmatprep.mubr.bf16.mxu0 %v6664
        %9481 = vmatmul.mubr.bf16.gmra.mrb[0].mxu0 %v6663
        %v9482 = vpop.f32.mrb[0].mxu0
        %v9483 = vadd.f32 %v9322, %v9482
        %v9484 = vpop.f32.mrb[0].mxu0
        %v9485 = vadd.f32 %v9324, %v9484
        %v9486 = vpop.f32.mrb[0].mxu0
        %v9487 = vpop.f32.mrb[0].mxu0
        %9488 = vdwg.mxu0
        %v9489 = vadd.f32 %v6461, %v8719
        %v9490 = vadd.f32 %v6462, %v8721
        %v9491 = vadd.f32 %v6463, %v9363
        %v9492 = vadd.f32 %v6464, %v9365
        %v9493 = vadd.f32 %v6465, %v8723
        %v9494 = vadd.f32 %v6466, %v8725
        %v9495 = vadd.f32 %v6467, %v9367
        %v9496 = vadd.f32 %v6468, %v9369
        %v9497 = vadd.f32 %v6469, %v8729
        %v9498 = vadd.f32 %v6470, %v8731
        %v9499 = vadd.f32 %v6471, %v9373
        %v9500 = vadd.f32 %v6472, %v9375
        %v9501 = vadd.f32 %v6473, %v8733
        %v9502 = vadd.f32 %v6474, %v8735
        %v9503 = vadd.f32 %v6475, %v9377
        %v9504 = vadd.f32 %v6476, %v9379
        %v9505 = vadd.f32 %v6477, %v8739
        %v9506 = vadd.f32 %v6478, %v8741
        %v9507 = vadd.f32 %v6479, %v9383
        %v9508 = vadd.f32 %v6480, %v9385
        %v9509 = vadd.f32 %v6481, %v8743
        %v9510 = vadd.f32 %v6482, %v8745
        %v9511 = vadd.f32 %v6483, %v9387
        %v9512 = vadd.f32 %v6484, %v9389
        %v9513 = vadd.f32 %v6485, %v8749
        %v9514 = vadd.f32 %v6486, %v8751
        %v9515 = vadd.f32 %v6487, %v9393
        %v9516 = vadd.f32 %v6488, %v9395
        %v9517 = vadd.f32 %v6489, %v8753
        %v9518 = vadd.f32 %v6490, %v8755
        %v9519 = vadd.f32 %v6491, %v9397
        %v9520 = vadd.f32 %v6492, %v9399
        %v9521 = vadd.f32 %v6493, %v8759
        %v9522 = vadd.f32 %v6494, %v8761
        %v9523 = vadd.f32 %v6495, %v9403
        %v9524 = vadd.f32 %v6496, %v9405
        %v9525 = vadd.f32 %v6497, %v8763
        %v9526 = vadd.f32 %v6498, %v8765
        %v9527 = vadd.f32 %v6499, %v9407
        %v9528 = vadd.f32 %v6500, %v9409
        %v9529 = vadd.f32 %v6501, %v8769
        %v9530 = vadd.f32 %v6502, %v8771
        %v9531 = vadd.f32 %v6503, %v9413
        %v9532 = vadd.f32 %v6504, %v9415
        %v9533 = vadd.f32 %v6505, %v8773
        %v9534 = vadd.f32 %v6506, %v8775
        %v9535 = vadd.f32 %v6507, %v9417
        %v9536 = vadd.f32 %v6508, %v9419
        %v9537 = vadd.f32 %v6509, %v8779
        %v9538 = vadd.f32 %v6510, %v8781
        %v9539 = vadd.f32 %v6511, %v9423
        %v9540 = vadd.f32 %v6512, %v9425
        %v9541 = vadd.f32 %v6513, %v8783
        %v9542 = vadd.f32 %v6514, %v8785
        %v9543 = vadd.f32 %v6515, %v9427
        %v9544 = vadd.f32 %v6516, %v9429
        %v9545 = vadd.f32 %v6517, %v8789
        %v9546 = vadd.f32 %v6518, %v8791
        %v9547 = vadd.f32 %v6519, %v9433
        %v9548 = vadd.f32 %v6520, %v9435
        %v9549 = vadd.f32 %v6521, %v8793
        %v9550 = vadd.f32 %v6522, %v8795
        %v9551 = vadd.f32 %v6523, %v9437
        %v9552 = vadd.f32 %v6524, %v9439
        %v9553 = vadd.f32 %v6525, %v8799
        %v9554 = vadd.f32 %v6526, %v8801
        %v9555 = vadd.f32 %v6527, %v9443
        %v9556 = vadd.f32 %v6528, %v9445
        %v9557 = vadd.f32 %v6529, %v8803
        %v9558 = vadd.f32 %v6530, %v8805
        %v9559 = vadd.f32 %v6531, %v9447
        %v9560 = vadd.f32 %v6532, %v9449
        %v9561 = vadd.f32 %v6533, %v8809
        %v9562 = vadd.f32 %v6534, %v8811
        %v9563 = vadd.f32 %v6535, %v9453
        %v9564 = vadd.f32 %v6536, %v9455
        %v9565 = vadd.f32 %v6537, %v8813
        %v9566 = vadd.f32 %v6538, %v8815
        %v9567 = vadd.f32 %v6539, %v9457
        %v9568 = vadd.f32 %v6540, %v9459
        %v9569 = vadd.f32 %v6541, %v8819
        %v9570 = vadd.f32 %v6542, %v8821
        %v9571 = vadd.f32 %v6543, %v9463
        %v9572 = vadd.f32 %v6544, %v9465
        %v9573 = vadd.f32 %v6545, %v8823
        %v9574 = vadd.f32 %v6546, %v8825
        %v9575 = vadd.f32 %v6547, %v9467
        %v9576 = vadd.f32 %v6548, %v9469
        %v9577 = vadd.f32 %v6549, %v8829
        %v9578 = vadd.f32 %v6550, %v8831
        %v9579 = vadd.f32 %v6551, %v9473
        %v9580 = vadd.f32 %v6552, %v9475
        %v9581 = vadd.f32 %v6553, %v8833
        %v9582 = vadd.f32 %v6554, %v8835
        %v9583 = vadd.f32 %v6555, %v9477
        %v9584 = vadd.f32 %v6556, %v9479
        %v9585 = vadd.f32 %v6557, %v8839
        %v9586 = vadd.f32 %v6558, %v8841
        %v9587 = vadd.f32 %v6559, %v9483
        %v9588 = vadd.f32 %v6560, %v9485
        %9589 = vst [vmem:[%s501] sm:$0xff] %v9489
        %9590 = vst [vmem:[%s501 + $0x8] sm:$0xff] %v9490
        %9591 = vst [vmem:[%s501 + $0x10] sm:$0xff] %v9491
        %9592 = vst [vmem:[%s501 + $0x18] sm:$0xff] %v9492
        %9593 = vst [vmem:[%s501 + $0x20] sm:$0xff] %v9493
        %9594 = vst [vmem:[%s501 + $0x28] sm:$0xff] %v9494
        %9595 = vst [vmem:[%s501 + $0x30] sm:$0xff] %v9495
        %9596 = vst [vmem:[%s501 + $0x38] sm:$0xff] %v9496
        %9597 = vst [vmem:[%s501 + $0x40] sm:$0xff] %v9497
        %9598 = vst [vmem:[%s501 + $0x48] sm:$0xff] %v9498
        %9599 = vst [vmem:[%s501 + $0x50] sm:$0xff] %v9499
        %9600 = vst [vmem:[%s501 + $0x58] sm:$0xff] %v9500
        %9601 = vst [vmem:[%s501 + $0x60] sm:$0xff] %v9501
        %9602 = vst [vmem:[%s501 + $0x68] sm:$0xff] %v9502
        %9603 = vst [vmem:[%s501 + $0x70] sm:$0xff] %v9503
        %9604 = vst [vmem:[%s501 + $0x78] sm:$0xff] %v9504
        %9605 = vst [vmem:[%s501 + $0x80] sm:$0xff] %v9505
        %9606 = vst [vmem:[%s501 + $0x88] sm:$0xff] %v9506
        %9607 = vst [vmem:[%s501 + $0x90] sm:$0xff] %v9507
        %9608 = vst [vmem:[%s501 + $0x98] sm:$0xff] %v9508
        %9609 = vst [vmem:[%s501 + $0xa0] sm:$0xff] %v9509
        %9610 = vst [vmem:[%s501 + $0xa8] sm:$0xff] %v9510
        %9611 = vst [vmem:[%s501 + $0xb0] sm:$0xff] %v9511
        %9612 = vst [vmem:[%s501 + $0xb8] sm:$0xff] %v9512
        %9613 = vst [vmem:[%s501 + $0xc0] sm:$0xff] %v9513
        %9614 = vst [vmem:[%s501 + $0xc8] sm:$0xff] %v9514
        %9615 = vst [vmem:[%s501 + $0xd0] sm:$0xff] %v9515
        %9616 = vst [vmem:[%s501 + $0xd8] sm:$0xff] %v9516
        %9617 = vst [vmem:[%s501 + $0xe0] sm:$0xff] %v9517
        %9618 = vst [vmem:[%s501 + $0xe8] sm:$0xff] %v9518
        %9619 = vst [vmem:[%s501 + $0xf0] sm:$0xff] %v9519
        %9620 = vst [vmem:[%s501 + $0xf8] sm:$0xff] %v9520
        %9621 = vst [vmem:[%s501 + $0x100] sm:$0xff] %v9521
        %9622 = vst [vmem:[%s501 + $0x108] sm:$0xff] %v9522
        %9623 = vst [vmem:[%s501 + $0x110] sm:$0xff] %v9523
        %9624 = vst [vmem:[%s501 + $0x118] sm:$0xff] %v9524
        %9625 = vst [vmem:[%s501 + $0x120] sm:$0xff] %v9525
        %9626 = vst [vmem:[%s501 + $0x128] sm:$0xff] %v9526
        %9627 = vst [vmem:[%s501 + $0x130] sm:$0xff] %v9527
        %9628 = vst [vmem:[%s501 + $0x138] sm:$0xff] %v9528
        %9629 = vst [vmem:[%s501 + $0x140] sm:$0xff] %v9529
        %9630 = vst [vmem:[%s501 + $0x148] sm:$0xff] %v9530
        %9631 = vst [vmem:[%s501 + $0x150] sm:$0xff] %v9531
        %9632 = vst [vmem:[%s501 + $0x158] sm:$0xff] %v9532
        %9633 = vst [vmem:[%s501 + $0x160] sm:$0xff] %v9533
        %9634 = vst [vmem:[%s501 + $0x168] sm:$0xff] %v9534
        %9635 = vst [vmem:[%s501 + $0x170] sm:$0xff] %v9535
        %9636 = vst [vmem:[%s501 + $0x178] sm:$0xff] %v9536
        %9637 = vst [vmem:[%s501 + $0x180] sm:$0xff] %v9537
        %9638 = vst [vmem:[%s501 + $0x188] sm:$0xff] %v9538
        %9639 = vst [vmem:[%s501 + $0x190] sm:$0xff] %v9539
        %9640 = vst [vmem:[%s501 + $0x198] sm:$0xff] %v9540
        %9641 = vst [vmem:[%s501 + $0x1a0] sm:$0xff] %v9541
        %9642 = vst [vmem:[%s501 + $0x1a8] sm:$0xff] %v9542
        %9643 = vst [vmem:[%s501 + $0x1b0] sm:$0xff] %v9543
        %9644 = vst [vmem:[%s501 + $0x1b8] sm:$0xff] %v9544
        %9645 = vst [vmem:[%s501 + $0x1c0] sm:$0xff] %v9545
        %9646 = vst [vmem:[%s501 + $0x1c8] sm:$0xff] %v9546
        %9647 = vst [vmem:[%s501 + $0x1d0] sm:$0xff] %v9547
        %9648 = vst [vmem:[%s501 + $0x1d8] sm:$0xff] %v9548
        %9649 = vst [vmem:[%s501 + $0x1e0] sm:$0xff] %v9549
        %9650 = vst [vmem:[%s501 + $0x1e8] sm:$0xff] %v9550
        %9651 = vst [vmem:[%s501 + $0x1f0] sm:$0xff] %v9551
        %9652 = vst [vmem:[%s501 + $0x1f8] sm:$0xff] %v9552
        %9653 = vst [vmem:[%s501 + $0x200] sm:$0xff] %v9553
        %9654 = vst [vmem:[%s501 + $0x208] sm:$0xff] %v9554
        %9655 = vst [vmem:[%s501 + $0x210] sm:$0xff] %v9555
        %9656 = vst [vmem:[%s501 + $0x218] sm:$0xff] %v9556
        %9657 = vst [vmem:[%s501 + $0x220] sm:$0xff] %v9557
        %9658 = vst [vmem:[%s501 + $0x228] sm:$0xff] %v9558
        %9659 = vst [vmem:[%s501 + $0x230] sm:$0xff] %v9559
        %9660 = vst [vmem:[%s501 + $0x238] sm:$0xff] %v9560
        %9661 = vst [vmem:[%s501 + $0x240] sm:$0xff] %v9561
        %9662 = vst [vmem:[%s501 + $0x248] sm:$0xff] %v9562
        %9663 = vst [vmem:[%s501 + $0x250] sm:$0xff] %v9563
        %9664 = vst [vmem:[%s501 + $0x258] sm:$0xff] %v9564
        %9665 = vst [vmem:[%s501 + $0x260] sm:$0xff] %v9565
        %9666 = vst [vmem:[%s501 + $0x268] sm:$0xff] %v9566
        %9667 = vst [vmem:[%s501 + $0x270] sm:$0xff] %v9567
        %9668 = vst [vmem:[%s501 + $0x278] sm:$0xff] %v9568
        %9669 = vst [vmem:[%s501 + $0x280] sm:$0xff] %v9569
        %9670 = vst [vmem:[%s501 + $0x288] sm:$0xff] %v9570
        %9671 = vst [vmem:[%s501 + $0x290] sm:$0xff] %v9571
        %9672 = vst [vmem:[%s501 + $0x298] sm:$0xff] %v9572
        %9673 = vst [vmem:[%s501 + $0x2a0] sm:$0xff] %v9573
        %9674 = vst [vmem:[%s501 + $0x2a8] sm:$0xff] %v9574
        %9675 = vst [vmem:[%s501 + $0x2b0] sm:$0xff] %v9575
        %9676 = vst [vmem:[%s501 + $0x2b8] sm:$0xff] %v9576
        %9677 = vst [vmem:[%s501 + $0x2c0] sm:$0xff] %v9577
        %9678 = vst [vmem:[%s501 + $0x2c8] sm:$0xff] %v9578
        %9679 = vst [vmem:[%s501 + $0x2d0] sm:$0xff] %v9579
        %9680 = vst [vmem:[%s501 + $0x2d8] sm:$0xff] %v9580
        %9681 = vst [vmem:[%s501 + $0x2e0] sm:$0xff] %v9581
        %9682 = vst [vmem:[%s501 + $0x2e8] sm:$0xff] %v9582
        %9683 = vst [vmem:[%s501 + $0x2f0] sm:$0xff] %v9583
        %9684 = vst [vmem:[%s501 + $0x2f8] sm:$0xff] %v9584
        %9685 = vst [vmem:[%s501 + $0x300] sm:$0xf] %v9585
        %9686 = vst [vmem:[%s501 + $0x308] sm:$0xf] %v9586
        %9687 = vst [vmem:[%s501 + $0x310] sm:$0xf] %v9587
        %9688 = vst [vmem:[%s501 + $0x318] sm:$0xf] %v9588
        %p9689 = scmp.lt.s32.totalorder %s26, 0
        %s9690 = scalar_select %p9689, %s26, 0
        %s9691 = smul.addr %s9690, 100
        %s9692 = smul.addr %s9691, 8
        %s9693 = scalar_lea.vmem %s8, %s9692
        // Predicated region
        $region89: #{tpu_custom_call.1} parent=51 // pred_check
          %p9694 = pneg %p247
        $region90: #{tpu_custom_call.1} parent=51 // pred_check_branch
          %9696 = sbr.rel (%p9694) target = $region92
        $region91: #{tpu_custom_call.1} parent=51 // pred_region
          _
        $region92: #{tpu_custom_call.1} parent=51 // pred_fallthru
          _
        // Predicated region
        $region93: #{tpu_custom_call.1} parent=51 // pred_check
          %p9697 = pneg %p247
        $region94: #{tpu_custom_call.1} parent=51 // pred_check_branch
          %9699 = sbr.rel (%p9697) target = $region96
        $region95: #{tpu_custom_call.1} parent=51 // pred_region
          %p9700 = scmp.lt.s32.totalorder %s26, 0
          %s9701 = scalar_select %p9700, %s26, 0
          %s9702 = smul.addr %s9701, 100
          %s9703 = smul.addr %s9702, 8
          %s9704 = scalar_lea.vmem %s8, %s9703
        $region96: #{tpu_custom_call.1} parent=51 // pred_fallthru
          _
      $region52: #{tpu_custom_call.1} parent=5 // pred_fallthru
        _
      %p9705 = scmp.le.s32.totalorder 2, %s17
      // Predicated region
      $region97: #{tpu_custom_call.1} parent=5 // pred_check
        %p9706 = pneg %p9705
      $region98: #{tpu_custom_call.1} parent=5 // pred_check_branch
        %9708 = sbr.rel (%p9706) target = $region100
      $region99: #{tpu_custom_call.1} parent=5 // pred_region
        %s9709 = ssub.s32 %s17, 2
      $region100: #{tpu_custom_call.1} parent=5 // pred_fallthru
        _
    $region6: #{tpu_custom_call.1} parent=1 // loop_footer
      %s21 = sadd.s32 1, %s17
    $region7: #{tpu_custom_call.1} parent=1 // loop_footer_branch
      %16 = sbr.rel target = $region3
    $region8: #{tpu_custom_call.1} parent=1 // loop_exit
      _
    %9710 = vsyncpa [#allocation4], 1
    %s9711 = scalar_lea.sflag [#allocation4], 1
    %9712 = vsyncpa %s9711, 1
    %9713 = vsyncpa [#allocation6], 1
    %9714 = vsyncpa [#allocation9], 1

</llo_original>
